<compile_context>
chip_gen: v5e
topology: v5e:2x2
jax: 0.10.0
libtpu: 0.0.40
codegen_flags: <defaults>
</compile_context>

<pallas_src>
import math
import jax
import jax.numpy as jnp
from jax.experimental import pallas as pl
from jax.experimental.pallas import tpu as pltpu

# ---------------- hyperparameters (stand-ins for `params.*`) ----------------
B = 2               # batch size
S = 8               # sequence length (critic applied point-wise per token)
D_MODEL = 32        # params.d_model
IN_F = 3 * D_MODEL  # Critic.in_features = 3 * d_model
L = 1024            # layer_size
N = B * S           # rows processed in the single fused kernel invocation


# ------------------------------- Pallas kernel -------------------------------
def critic_kernel(v_ref, p_ref, a_ref, w1_ref, w2q_hbm, w3q_hbm, scl_ref, w4_ref,
                  b_ref, out_ref, w2_buf, w3_buf, dma_sem):
    """q = ReLU(L4(ReLU(L3(ReLU(L2(ReLU(L1([v|p|a])))))))) for one fused (N, .) tile."""
    # Kick off the big int8 weight streams (HBM -> VMEM) so they overlap compute.
    cp2 = pltpu.make_async_copy(w2q_hbm, w2_buf, dma_sem.at[0])
    cp3 = pltpu.make_async_copy(w3q_hbm, w3_buf, dma_sem.at[1])
    cp2.start()
    cp3.start()

    # ---- Layer 1: Linear(3*D -> L) + ReLU, with the concat folded into three
    #      accumulating K=D dots on static row-slices of w1 (all f32).
    h = (jnp.dot(v_ref[...], w1_ref[0:D_MODEL, :], preferred_element_type=jnp.float32)
         + jnp.dot(p_ref[...], w1_ref[D_MODEL:2 * D_MODEL, :],
                   preferred_element_type=jnp.float32)
         + jnp.dot(a_ref[...], w1_ref[2 * D_MODEL:3 * D_MODEL, :],
                   preferred_element_type=jnp.float32)
         + b_ref[0:1, :])
    h = jnp.maximum(h, 0.0)

    # ---- Layer 2: Linear(L -> L) + ReLU. int8 weights, per-output-channel scale
    #      folded into the (N, L) epilogue (free VPU work under the DMA).
    cp2.wait()
    w2 = w2_buf[...].astype(jnp.bfloat16)            # exact upcast of int8 values
    h = jnp.dot(h.astype(jnp.bfloat16), w2, preferred_element_type=jnp.float32)
    h = jnp.maximum(h * scl_ref[0:1, :] + b_ref[1:2, :], 0.0)

    # ---- Layer 3: Linear(L -> L) + ReLU (same int8 scheme).
    cp3.wait()
    w3 = w3_buf[...].astype(jnp.bfloat16)
    h = jnp.dot(h.astype(jnp.bfloat16), w3, preferred_element_type=jnp.float32)
    h = jnp.maximum(h * scl_ref[1:2, :] + b_ref[2:3, :], 0.0)

    # ---- Layer 4: Linear(L -> 1) + ReLU as a lane reduce (VPU mul + XLU sum),
    #      cheaper than an N=1 MXU matmul.
    q = jnp.sum(h * w4_ref[...], axis=-1, keepdims=True) + b_ref[3:4, 0:1]
    out_ref[...] = jnp.maximum(q, 0.0)                # (N, 1)


# --------------------------------- wrapper -----------------------------------
def critic_forward_pallas(vision, proprio, action, p):
    """vision/proprio/action: (B, S, d_model) f32.  Returns q_value: (B, S, 1) f32."""
    b, s, d = vision.shape
    n = b * s
    v = vision.reshape(n, d)
    pr = proprio.reshape(n, d)
    a = action.reshape(n, d)

    vmem = pl.BlockSpec(memory_space=pltpu.MemorySpace.VMEM)
    hbm = pl.BlockSpec(memory_space=pl.ANY)

    flops = 2 * n * (IN_F * L + 2 * L * L + L)
    bytes_accessed = (
        p['w1'].size * 4 + p['w2q'].size * 1 + p['w3q'].size * 1 + p['w4'].size * 4
        + p['scl'].size * 4 + p['b'].size * 4
        + 3 * n * d * 4 + n * 1 * 4)

    fn = pl.pallas_call(
        critic_kernel,
        in_specs=[vmem, vmem, vmem,   # v, p, a activations
                  vmem,               # w1 (f32, small)
                  hbm, hbm,           # w2q, w3q stay in HBM; streamed manually
                  vmem, vmem, vmem],  # scales, w4, biases
        out_specs=vmem,
        out_shape=jax.ShapeDtypeStruct((n, 1), jnp.float32),
        scratch_shapes=[pltpu.VMEM((L, L), jnp.int8),      # w2 landing buffer
                        pltpu.VMEM((L, L), jnp.int8),      # w3 landing buffer
                        pltpu.SemaphoreType.DMA((2,))],
        cost_estimate=pl.CostEstimate(flops=flops, transcendentals=0,
                                      bytes_accessed=bytes_accessed),
    )
    q = fn(v, pr, a, p['w1'], p['w2q'], p['w3q'], p['scl'], p['w4'], p['b'])
    return q.reshape(b, s, 1)


# ------------------------------ parameter init -------------------------------
def _quantize_per_out_channel(w):
    """w: (K, L) f32 -> (int8 (K, L), f32 (1, L) scale). Per-output-channel symmetric."""
    amax = jnp.maximum(jnp.max(jnp.abs(w), axis=0, keepdims=True), 1e-8)
    scale = amax / 127.0
    q = jnp.clip(jnp.round(w / scale), -127, 127).astype(jnp.int8)
    return q, scale


def init_params(key):
    """PyTorch nn.Linear-style init; weights stored (in, out)."""
    ks = jax.random.split(key, 8)

    def linear(kw, kb, fan_in, fan_out):
        lim = 1.0 / math.sqrt(fan_in)
        w = jax.random.uniform(kw, (fan_in, fan_out), jnp.float32, -lim, lim)
        bb = jax.random.uniform(kb, (fan_out,), jnp.float32, -lim, lim)
        return w, bb

    w1, b1 = linear(ks[0], ks[1], IN_F, L)
    w2, b2 = linear(ks[2], ks[3], L, L)
    w3, b3 = linear(ks[4], ks[5], L, L)
    w4, b4 = linear(ks[6], ks[7], L, 1)

    w2q, s2 = _quantize_per_out_channel(w2)
    w3q, s3 = _quantize_per_out_channel(w3)

    bias = jnp.zeros((4, L), jnp.float32)
    bias = bias.at[0].set(b1).at[1].set(b2).at[2].set(b3).at[3, 0].set(b4[0])
    scl = jnp.concatenate([s2, s3], axis=0)           # (2, L)

    return {
        'w1': w1,                     # (3*D, L) f32  (tiny, kept full precision)
        'w2q': w2q, 'w3q': w3q,       # (L, L) int8   (the dominant HBM streams)
        'scl': scl,                   # (2, L) f32    per-output-channel dequant scales
        'w4': w4.reshape(1, L),       # (1, L) f32    used as a lane reduce
        'b': bias,                    # (4, L) f32    b1 | b2 | b3 | [b4, 0, ...]
        # full-precision copies, only for the fidelity reference below
        '_w2_f32': w2, '_w3_f32': w3,
    }


# --------------------------- pure-JAX references ------------------------------
def ref_forward_mirror(vision, proprio, action, p):
    """Mirrors the kernel's numerics (int8-dequant bf16 dots, f32 accumulation)."""
    b, s, d = vision.shape
    x = jnp.concatenate([vision, proprio, action], axis=-1).reshape(b * s, 3 * d)
    h = jnp.maximum(jnp.dot(x, p['w1'], preferred_element_type=jnp.float32)
                    + p['b'][0], 0.0)
    w2 = p['w2q'].astype(jnp.bfloat16)
    h = jnp.dot(h.astype(jnp.bfloat16), w2, preferred_element_type=jnp.float32)
    h = jnp.maximum(h * p['scl'][0] + p['b'][1], 0.0)
    w3 = p['w3q'].astype(jnp.bfloat16)
    h = jnp.dot(h.astype(jnp.bfloat16), w3, preferred_element_type=jnp.float32)
    h = jnp.maximum(h * p['scl'][1] + p['b'][2], 0.0)
    q = jnp.maximum(jnp.sum(h * p['w4'], axis=-1, keepdims=True) + p['b'][3, 0], 0.0)
    return q.reshape(b, s, 1)


def ref_forward_f32(vision, proprio, action, p):
    """All-f32 reference of the original torch module (fidelity check)."""
    b, s, d = vision.shape
    x = jnp.concatenate([vision, proprio, action], axis=-1).reshape(b * s, 3 * d)
    h = jnp.maximum(x @ p['w1'] + p['b'][0], 0.0)
    h = jnp.maximum(h @ p['_w2_f32'] + p['b'][1], 0.0)
    h = jnp.maximum(h @ p['_w3_f32'] + p['b'][2], 0.0)
    q = jnp.maximum(jnp.sum(h * p['w4'], axis=-1, keepdims=True) + p['b'][3, 0], 0.0)
    return q.reshape(b, s, 1)


# ------------------------------------ main -----------------------------------
if __name__ == "__main__":
    key = jax.random.PRNGKey(0)
    kp, kv, kpr, ka = jax.random.split(key, 4)
    params = init_params(kp)

    vision = jax.random.normal(kv, (B, S, D_MODEL), jnp.float32)
    proprio = jax.random.normal(kpr, (B, S, D_MODEL), jnp.float32)
    action = jax.random.normal(ka, (B, S, D_MODEL), jnp.float32)

    q = critic_forward_pallas(vision, proprio, action, params)
    jax.block_until_ready(q)

    assert q.shape == (B, S, 1)
    assert bool(jnp.all(q >= 0.0))  # final ReLU

    # Kernel math check (same quantized numerics): tight tolerance.
    q_mirror = ref_forward_mirror(vision, proprio, action, params)
    assert jnp.allclose(q, q_mirror, atol=2e-3, rtol=2e-3), \
        f"mirror max abs diff {float(jnp.max(jnp.abs(q - q_mirror)))}"

    # Fidelity vs. the original all-f32 torch Critic: loose tolerance
    # (covers the int8 weight quantization + bf16 activation rounding).
    q_f32 = ref_forward_f32(vision, proprio, action, params)
    assert jnp.allclose(q, q_f32, atol=2e-2, rtol=2e-2), \
        f"f32 max abs diff {float(jnp.max(jnp.abs(q - q_f32)))}"

    print("KERNEL_OK")
</pallas_src>

<mosaic_0001>
module attributes {stable_mosaic.version = 11 : i64} {
  func.func @critic_kernel(%arg0: memref<16x32xf32, #tpu.memory_space<vmem>>, %arg1: memref<16x32xf32, #tpu.memory_space<vmem>>, %arg2: memref<16x32xf32, #tpu.memory_space<vmem>>, %arg3: memref<96x1024xf32, #tpu.memory_space<vmem>>, %arg4: memref<1024x1024xi8, #tpu.memory_space<any>>, %arg5: memref<1024x1024xi8, #tpu.memory_space<any>>, %arg6: memref<2x1024xf32, #tpu.memory_space<vmem>>, %arg7: memref<1x1024xf32, #tpu.memory_space<vmem>>, %arg8: memref<4x1024xf32, #tpu.memory_space<vmem>>, %arg9: memref<16x1xf32, #tpu.memory_space<vmem>>, %arg10: memref<1024x1024xi8, #tpu.memory_space<vmem>>, %arg11: memref<1024x1024xi8, #tpu.memory_space<vmem>>, %arg12: memref<2x!tpu.dma_semaphore, #tpu.memory_space<semaphore_mem>>) attributes {dimension_semantics = [], scalar_prefetch = 0 : i64, scratch_operands = 3 : i64, tpu.core_type = #tpu.core_type<tc>} {
    %c0_i32 = arith.constant 0 : i32
    %0 = tpu.memref_slice %arg12[%c0_i32] : memref<2x!tpu.dma_semaphore, #tpu.memory_space<semaphore_mem>> -> memref<1x!tpu.dma_semaphore, #tpu.memory_space<semaphore_mem>>
    %1 = tpu.memref_squeeze %0 : memref<1x!tpu.dma_semaphore, #tpu.memory_space<semaphore_mem>> -> memref<!tpu.dma_semaphore, #tpu.memory_space<semaphore_mem>>
    tpu.enqueue_dma source(%arg4 : memref<1024x1024xi8, #tpu.memory_space<any>>) target(%arg10 : memref<1024x1024xi8, #tpu.memory_space<vmem>>) target_semaphore(%1 : memref<!tpu.dma_semaphore, #tpu.memory_space<semaphore_mem>>)
    %c1_i32 = arith.constant 1 : i32
    %2 = tpu.memref_slice %arg12[%c1_i32] : memref<2x!tpu.dma_semaphore, #tpu.memory_space<semaphore_mem>> -> memref<1x!tpu.dma_semaphore, #tpu.memory_space<semaphore_mem>>
    %3 = tpu.memref_squeeze %2 : memref<1x!tpu.dma_semaphore, #tpu.memory_space<semaphore_mem>> -> memref<!tpu.dma_semaphore, #tpu.memory_space<semaphore_mem>>
    tpu.enqueue_dma source(%arg5 : memref<1024x1024xi8, #tpu.memory_space<any>>) target(%arg11 : memref<1024x1024xi8, #tpu.memory_space<vmem>>) target_semaphore(%3 : memref<!tpu.dma_semaphore, #tpu.memory_space<semaphore_mem>>)
    %c0 = arith.constant 0 : index
    %c0_0 = arith.constant 0 : index
    %4 = vector.load %arg0[%c0, %c0_0] : memref<16x32xf32, #tpu.memory_space<vmem>>, vector<16x32xf32>
    %c0_1 = arith.constant 0 : index
    %c0_2 = arith.constant 0 : index
    %5 = vector.load %arg3[%c0_1, %c0_2] : memref<96x1024xf32, #tpu.memory_space<vmem>>, vector<32x1024xf32>
    %cst = arith.constant dense<0.000000e+00> : vector<16x1024xf32>
    %6 = tpu.matmul %4, %5, %cst {dimension_numbers = #tpu.dot_dimension_numbers<[1], [0], [0], [1], [0, 0, 1, 1], [], []>} : vector<16x32xf32>, vector<32x1024xf32>, vector<16x1024xf32> -> vector<16x1024xf32>
    %c0_3 = arith.constant 0 : index
    %c0_4 = arith.constant 0 : index
    %7 = vector.load %arg1[%c0_3, %c0_4] : memref<16x32xf32, #tpu.memory_space<vmem>>, vector<16x32xf32>
    %c32 = arith.constant 32 : index
    %c0_5 = arith.constant 0 : index
    %8 = vector.load %arg3[%c32, %c0_5] : memref<96x1024xf32, #tpu.memory_space<vmem>>, vector<32x1024xf32>
    %cst_6 = arith.constant dense<0.000000e+00> : vector<16x1024xf32>
    %9 = tpu.matmul %7, %8, %cst_6 {dimension_numbers = #tpu.dot_dimension_numbers<[1], [0], [0], [1], [0, 0, 1, 1], [], []>} : vector<16x32xf32>, vector<32x1024xf32>, vector<16x1024xf32> -> vector<16x1024xf32>
    %10 = arith.addf %6, %9 : vector<16x1024xf32>
    %c0_7 = arith.constant 0 : index
    %c0_8 = arith.constant 0 : index
    %11 = vector.load %arg2[%c0_7, %c0_8] : memref<16x32xf32, #tpu.memory_space<vmem>>, vector<16x32xf32>
    %c64 = arith.constant 64 : index
    %c0_9 = arith.constant 0 : index
    %12 = vector.load %arg3[%c64, %c0_9] : memref<96x1024xf32, #tpu.memory_space<vmem>>, vector<32x1024xf32>
    %cst_10 = arith.constant dense<0.000000e+00> : vector<16x1024xf32>
    %13 = tpu.matmul %11, %12, %cst_10 {dimension_numbers = #tpu.dot_dimension_numbers<[1], [0], [0], [1], [0, 0, 1, 1], [], []>} : vector<16x32xf32>, vector<32x1024xf32>, vector<16x1024xf32> -> vector<16x1024xf32>
    %14 = arith.addf %10, %13 : vector<16x1024xf32>
    %c0_11 = arith.constant 0 : index
    %c0_12 = arith.constant 0 : index
    %15 = vector.load %arg8[%c0_11, %c0_12] : memref<4x1024xf32, #tpu.memory_space<vmem>>, vector<1x1024xf32>
    %16 = vector.broadcast %15 : vector<1x1024xf32> to vector<16x1024xf32>
    %17 = arith.addf %14, %16 : vector<16x1024xf32>
    %cst_13 = arith.constant 0.000000e+00 : f32
    %18 = vector.broadcast %cst_13 : f32 to vector<16x1024xf32>
    %19 = arith.maximumf %17, %18 : vector<16x1024xf32>
    %c0_i32_14 = arith.constant 0 : i32
    %20 = tpu.memref_slice %arg12[%c0_i32_14] : memref<2x!tpu.dma_semaphore, #tpu.memory_space<semaphore_mem>> -> memref<1x!tpu.dma_semaphore, #tpu.memory_space<semaphore_mem>>
    %21 = tpu.memref_squeeze %20 : memref<1x!tpu.dma_semaphore, #tpu.memory_space<semaphore_mem>> -> memref<!tpu.dma_semaphore, #tpu.memory_space<semaphore_mem>>
    tpu.wait_dma2 semaphore(%21 : memref<!tpu.dma_semaphore, #tpu.memory_space<semaphore_mem>>) src(%arg4 : memref<1024x1024xi8, #tpu.memory_space<any>>) dst(%arg10 : memref<1024x1024xi8, #tpu.memory_space<vmem>>)
    %c0_15 = arith.constant 0 : index
    %c0_16 = arith.constant 0 : index
    %22 = vector.load %arg10[%c0_15, %c0_16] : memref<1024x1024xi8, #tpu.memory_space<vmem>>, vector<1024x1024xi8>
    %23 = arith.sitofp %22 : vector<1024x1024xi8> to vector<1024x1024xbf16>
    %24 = arith.truncf %19 : vector<16x1024xf32> to vector<16x1024xbf16>
    %cst_17 = arith.constant dense<0.000000e+00> : vector<16x1024xf32>
    %25 = tpu.matmul %24, %23, %cst_17 {dimension_numbers = #tpu.dot_dimension_numbers<[1], [0], [0], [1], [0, 0, 1, 1], [], []>} : vector<16x1024xbf16>, vector<1024x1024xbf16>, vector<16x1024xf32> -> vector<16x1024xf32>
    %c0_18 = arith.constant 0 : index
    %c0_19 = arith.constant 0 : index
    %26 = vector.load %arg6[%c0_18, %c0_19] : memref<2x1024xf32, #tpu.memory_space<vmem>>, vector<1x1024xf32>
    %27 = vector.broadcast %26 : vector<1x1024xf32> to vector<16x1024xf32>
    %28 = arith.mulf %25, %27 : vector<16x1024xf32>
    %c1 = arith.constant 1 : index
    %c0_20 = arith.constant 0 : index
    %29 = vector.load %arg8[%c1, %c0_20] : memref<4x1024xf32, #tpu.memory_space<vmem>>, vector<1x1024xf32>
    %30 = vector.broadcast %29 : vector<1x1024xf32> to vector<16x1024xf32>
    %31 = arith.addf %28, %30 : vector<16x1024xf32>
    %cst_21 = arith.constant 0.000000e+00 : f32
    %32 = vector.broadcast %cst_21 : f32 to vector<16x1024xf32>
    %33 = arith.maximumf %31, %32 : vector<16x1024xf32>
    %c1_i32_22 = arith.constant 1 : i32
    %34 = tpu.memref_slice %arg12[%c1_i32_22] : memref<2x!tpu.dma_semaphore, #tpu.memory_space<semaphore_mem>> -> memref<1x!tpu.dma_semaphore, #tpu.memory_space<semaphore_mem>>
    %35 = tpu.memref_squeeze %34 : memref<1x!tpu.dma_semaphore, #tpu.memory_space<semaphore_mem>> -> memref<!tpu.dma_semaphore, #tpu.memory_space<semaphore_mem>>
    tpu.wait_dma2 semaphore(%35 : memref<!tpu.dma_semaphore, #tpu.memory_space<semaphore_mem>>) src(%arg5 : memref<1024x1024xi8, #tpu.memory_space<any>>) dst(%arg11 : memref<1024x1024xi8, #tpu.memory_space<vmem>>)
    %c0_23 = arith.constant 0 : index
    %c0_24 = arith.constant 0 : index
    %36 = vector.load %arg11[%c0_23, %c0_24] : memref<1024x1024xi8, #tpu.memory_space<vmem>>, vector<1024x1024xi8>
    %37 = arith.sitofp %36 : vector<1024x1024xi8> to vector<1024x1024xbf16>
    %38 = arith.truncf %33 : vector<16x1024xf32> to vector<16x1024xbf16>
    %cst_25 = arith.constant dense<0.000000e+00> : vector<16x1024xf32>
    %39 = tpu.matmul %38, %37, %cst_25 {dimension_numbers = #tpu.dot_dimension_numbers<[1], [0], [0], [1], [0, 0, 1, 1], [], []>} : vector<16x1024xbf16>, vector<1024x1024xbf16>, vector<16x1024xf32> -> vector<16x1024xf32>
    %c1_26 = arith.constant 1 : index
    %c0_27 = arith.constant 0 : index
    %40 = vector.load %arg6[%c1_26, %c0_27] : memref<2x1024xf32, #tpu.memory_space<vmem>>, vector<1x1024xf32>
    %41 = vector.broadcast %40 : vector<1x1024xf32> to vector<16x1024xf32>
    %42 = arith.mulf %39, %41 : vector<16x1024xf32>
    %c2 = arith.constant 2 : index
    %c0_28 = arith.constant 0 : index
    %43 = vector.load %arg8[%c2, %c0_28] : memref<4x1024xf32, #tpu.memory_space<vmem>>, vector<1x1024xf32>
    %44 = vector.broadcast %43 : vector<1x1024xf32> to vector<16x1024xf32>
    %45 = arith.addf %42, %44 : vector<16x1024xf32>
    %cst_29 = arith.constant 0.000000e+00 : f32
    %46 = vector.broadcast %cst_29 : f32 to vector<16x1024xf32>
    %47 = arith.maximumf %45, %46 : vector<16x1024xf32>
    %c0_30 = arith.constant 0 : index
    %c0_31 = arith.constant 0 : index
    %48 = vector.load %arg7[%c0_30, %c0_31] : memref<1x1024xf32, #tpu.memory_space<vmem>>, vector<1x1024xf32>
    %49 = vector.broadcast %48 : vector<1x1024xf32> to vector<16x1024xf32>
    %50 = arith.mulf %47, %49 : vector<16x1024xf32>
    %cst_32 = arith.constant dense<0.000000e+00> : vector<16xf32>
    %51 = vector.multi_reduction <add>, %50, %cst_32 [1] : vector<16x1024xf32> to vector<16xf32>
    %52 = vector.shape_cast %51 : vector<16xf32> to vector<16x1xf32>
    %c3 = arith.constant 3 : index
    %c0_33 = arith.constant 0 : index
    %53 = vector.load %arg8[%c3, %c0_33] : memref<4x1024xf32, #tpu.memory_space<vmem>>, vector<1x1xf32>
    %54 = vector.broadcast %53 : vector<1x1xf32> to vector<16x1xf32>
    %55 = arith.addf %52, %54 : vector<16x1xf32>
    %cst_34 = arith.constant 0.000000e+00 : f32
    %56 = vector.broadcast %cst_34 : f32 to vector<16x1xf32>
    %57 = arith.maximumf %55, %56 : vector<16x1xf32>
    %c0_35 = arith.constant 0 : index
    %c0_36 = arith.constant 0 : index
    %58 = vector.load %arg9[%c0_35, %c0_36] : memref<16x1xf32, #tpu.memory_space<vmem>>, vector<16x1xf32>
    tpu.vector_store %arg9[%c0_35, %c0_36], %57 {strides = array<i32>} : memref<16x1xf32, #tpu.memory_space<vmem>>, vector<16x1xf32>,
    return
  }
}

</mosaic_0001>

<llo_original>
// kernel: tpu_custom_call.1
$region0: #{tpu_custom_call.1}
  #allocation0 [shape = 'u32[]', space=smem, size = 0x4, offset = 0x4, fixed_abs, tag = 'smem constant byte address 0x4 - core index']
  #allocation1 [shape = 'u32[72,128]{1,0:T(1,128)}', space=vmem, size = 0x9000, scoped, tag = 'internal scratch']
  #allocation2 [shape = 's8[1024,1024]{1,0:T(32,128)(4,1)}', space=vmem, size = 0x100000, scoped, tag = 'scratch operand']
  #allocation3 [shape = 's8[1024,1024]{1,0:T(32,128)(4,1)}', space=vmem, size = 0x100000, scoped, tag = 'scratch operand']
  #allocation4 [shape = 's32[2]{0}', space=sflag, size = 0x8, scoped, tag = 'scratch operand']
  #allocation16 [shape = 's32[]', space=sflag, size = 0x4, offset = 0, fixed_abs, tag = 'sflag constant byte address 0x0 - dummy sync flag']
  #allocation17 [shape = 's32[]', space=sflag, size = 0x4, offset = 0, fixed_abs, tag = 'sflag constant byte address 0x0 - dummy sync flag']
  #allocation18 [shape = 'u32[]', space=smem, size = 0x4, offset = 0x44, fixed_abs, tag = 'smem constant byte address 0x44 - assertion arg 0']
  #allocation19 [shape = 'u32[]', space=smem, size = 0x4, offset = 0x48, fixed_abs, tag = 'smem constant byte address 0x48 - assertion arg 1']
  #allocation20 [shape = 's32[]', space=sflag, size = 0x4, offset = 0, fixed_abs, tag = 'sflag constant byte address 0x0 - dummy sync flag']
  #allocation21 [shape = 's32[]', space=sflag, size = 0x4, offset = 0, fixed_abs, tag = 'sflag constant byte address 0x0 - dummy sync flag']
  %s0 = inlined_call_operand.hbm [shape: f32[16,32], index: 0, kind: input, shape index: {}]
  %s1 = inlined_call_operand.hbm [shape: f32[16,32], index: 1, kind: input, shape index: {}]
  %s2 = inlined_call_operand.hbm [shape: f32[16,32], index: 2, kind: input, shape index: {}]
  %s3 = inlined_call_operand.hbm [shape: f32[96,1024], index: 3, kind: input, shape index: {}]
  %s4 = inlined_call_operand.hbm [shape: s8[1024,1024], index: 4, kind: input, shape index: {}]
  %s5 = inlined_call_operand.hbm [shape: s8[1024,1024], index: 5, kind: input, shape index: {}]
  %s6 = inlined_call_operand.hbm [shape: f32[2,1024], index: 6, kind: input, shape index: {}]
  %s7 = inlined_call_operand.hbm [shape: f32[1,1024], index: 7, kind: input, shape index: {}]
  %s8 = inlined_call_operand.hbm [shape: f32[4,1024], index: 8, kind: input, shape index: {}]
  %s9 = inlined_call_operand.vmem [shape: f32[16,1], index: 9, kind: output, shape index: {}]
  %s10 = sld [smem:[#allocation0]]
  $region74: #{tpu_custom_call.1} parent=0
    _
  %s12 = ssub.s32 1, %s10
  %s13 = scalar_select 0, %s12, %s10
  $region1: #{tpu_custom_call.1} parent=0
    #allocation5 [shape = 'u8[8192]{0}', space=vmem, size = 0x2000, scoped, tag = 'input window, operand 0, single buffered']
    #allocation6 [shape = 's32[1]{0}', space=sflag, size = 0x4, scoped, tag = 'scoped memory for tpu_custom_call.1']
    #allocation7 [shape = 'u8[8192]{0}', space=vmem, size = 0x2000, scoped, tag = 'input window, operand 1, single buffered']
    #allocation8 [shape = 's32[1]{0}', space=sflag, size = 0x4, scoped, tag = 'scoped memory for tpu_custom_call.1']
    #allocation9 [shape = 'u8[8192]{0}', space=vmem, size = 0x2000, scoped, tag = 'input window, operand 2, single buffered']
    #allocation10 [shape = 'u8[393216]{0}', space=vmem, size = 0x60000, scoped, tag = 'input window, operand 3, single buffered']
    #allocation11 [shape = 's32[1]{0}', space=sflag, size = 0x4, scoped, tag = 'scoped memory for tpu_custom_call.1']
    #allocation12 [shape = 'u8[8192]{0}', space=vmem, size = 0x2000, scoped, tag = 'input window, operand 6, single buffered']
    #allocation13 [shape = 'u8[4096]{0}', space=vmem, size = 0x1000, scoped, tag = 'input window, operand 7, single buffered']
    #allocation14 [shape = 's32[1]{0}', space=sflag, size = 0x4, scoped, tag = 'scoped memory for tpu_custom_call.1']
    #allocation15 [shape = 'u8[16384]{0}', space=vmem, size = 0x4000, scoped, tag = 'input window, operand 8, single buffered']
    %14 = vsyncpa [#allocation6], 0
    %15 = vsyncpa [#allocation8], 0
    %16 = vsyncpa [#allocation11], 0
    %17 = vsyncpa [#allocation14], 0
    // Predicated region
    $region2: #{tpu_custom_call.1} parent=1 // pred_check
      _
    $region3: #{tpu_custom_call.1} parent=1 // pred_check_branch
      %19 = sbr.rel (0) target = $region5
    $region4: #{tpu_custom_call.1} parent=1 // pred_region
      %21 = vsyncadd [#allocation6], 0
      %s22 = sshll.u32 %s0, 4
      %s23 = int_to_ptr.hbm [resolvable:$true] %s22
      %s24 = sshll.u32 [#allocation5], 4
      %s25 = int_to_ptr.vmem [resolvable:$true] %s24
      %30 = dma.hbm_to_vmem [thread:$0]  %s23, 256, %s25, [#allocation6], 128, 128, 8
    $region5: #{tpu_custom_call.1} parent=1 // pred_fallthru
      _
    // Predicated region
    $region6: #{tpu_custom_call.1} parent=1 // pred_check
      _
    $region7: #{tpu_custom_call.1} parent=1 // pred_check_branch
      %32 = sbr.rel (0) target = $region9
    $region8: #{tpu_custom_call.1} parent=1 // pred_region
      %34 = vsyncadd [#allocation8], 0
      %s35 = sshll.u32 %s1, 4
      %s36 = int_to_ptr.hbm [resolvable:$true] %s35
      %s37 = sshll.u32 [#allocation7], 4
      %s38 = int_to_ptr.vmem [resolvable:$true] %s37
      %43 = dma.hbm_to_vmem [thread:$0]  %s36, 256, %s38, [#allocation8], 128, 128, 8
    $region9: #{tpu_custom_call.1} parent=1 // pred_fallthru
      _
    // Predicated region
    $region10: #{tpu_custom_call.1} parent=1 // pred_check
      _
    $region11: #{tpu_custom_call.1} parent=1 // pred_check_branch
      %45 = sbr.rel (0) target = $region13
    $region12: #{tpu_custom_call.1} parent=1 // pred_region
      %47 = vsyncadd [#allocation8], 0
      %s48 = sshll.u32 %s2, 4
      %s49 = int_to_ptr.hbm [resolvable:$true] %s48
      %s50 = sshll.u32 [#allocation9], 4
      %s51 = int_to_ptr.vmem [resolvable:$true] %s50
      %56 = dma.hbm_to_vmem [thread:$0]  %s49, 256, %s51, [#allocation8], 128, 128, 8
    $region13: #{tpu_custom_call.1} parent=1 // pred_fallthru
      _
    // Predicated region
    $region14: #{tpu_custom_call.1} parent=1 // pred_check
      _
    $region15: #{tpu_custom_call.1} parent=1 // pred_check_branch
      %58 = sbr.rel (0) target = $region17
    $region16: #{tpu_custom_call.1} parent=1 // pred_region
      %60 = vsyncadd [#allocation11], 0
      %s61 = sshll.u32 %s3, 4
      %s62 = int_to_ptr.hbm [resolvable:$true] %s61
      %s63 = sshll.u32 [#allocation10], 4
      %s64 = int_to_ptr.vmem [resolvable:$true] %s63
      %69 = dma.hbm_to_vmem [thread:$0]  %s62, 12288, %s64, [#allocation11], 1024, 1024, 64
    $region17: #{tpu_custom_call.1} parent=1 // pred_fallthru
      _
    // Predicated region
    $region18: #{tpu_custom_call.1} parent=1 // pred_check
      _
    $region19: #{tpu_custom_call.1} parent=1 // pred_check_branch
      %71 = sbr.rel (0) target = $region21
    $region20: #{tpu_custom_call.1} parent=1 // pred_region
      %73 = vsyncadd [#allocation11], 0
      %s75 = sshll.u32 %s6, 4
      %s76 = int_to_ptr.hbm [resolvable:$true] %s75
      %s77 = sshll.u32 [#allocation12], 4
      %s78 = int_to_ptr.vmem [resolvable:$true] %s77
      %80 = dma.hbm_to_vmem [thread:$0]  %s76, 256, %s78, [#allocation11]
    $region21: #{tpu_custom_call.1} parent=1 // pred_fallthru
      _
    // Predicated region
    $region22: #{tpu_custom_call.1} parent=1 // pred_check
      _
    $region23: #{tpu_custom_call.1} parent=1 // pred_check_branch
      %82 = sbr.rel (0) target = $region25
    $region24: #{tpu_custom_call.1} parent=1 // pred_region
      %84 = vsyncadd [#allocation14], 0
      %s86 = sshll.u32 %s7, 4
      %s87 = int_to_ptr.hbm [resolvable:$true] %s86
      %s88 = sshll.u32 [#allocation13], 4
      %s89 = int_to_ptr.vmem [resolvable:$true] %s88
      %91 = dma.hbm_to_vmem [thread:$0]  %s87, 128, %s89, [#allocation14]
    $region25: #{tpu_custom_call.1} parent=1 // pred_fallthru
      _
    // Predicated region
    $region26: #{tpu_custom_call.1} parent=1 // pred_check
      _
    $region27: #{tpu_custom_call.1} parent=1 // pred_check_branch
      %93 = sbr.rel (0) target = $region29
    $region28: #{tpu_custom_call.1} parent=1 // pred_region
      %95 = vsyncadd [#allocation14], 0
      %s97 = sshll.u32 %s8, 4
      %s98 = int_to_ptr.hbm [resolvable:$true] %s97
      %s99 = sshll.u32 [#allocation15], 4
      %s100 = int_to_ptr.vmem [resolvable:$true] %s99
      %102 = dma.hbm_to_vmem [thread:$0]  %s98, 512, %s100, [#allocation14]
    $region29: #{tpu_custom_call.1} parent=1 // pred_fallthru
      _
    // Predicated region
    $region30: #{tpu_custom_call.1} parent=1 // pred_check
      _
    $region31: #{tpu_custom_call.1} parent=1 // pred_check_branch
      %104 = sbr.rel (0) target = $region33
    $region32: #{tpu_custom_call.1} parent=1 // pred_region
      %106 = dma.done [#allocation6], 256
    $region33: #{tpu_custom_call.1} parent=1 // pred_fallthru
      _
    // Predicated region
    $region34: #{tpu_custom_call.1} parent=1 // pred_check
      _
    $region35: #{tpu_custom_call.1} parent=1 // pred_check_branch
      %108 = sbr.rel (0) target = $region37
    $region36: #{tpu_custom_call.1} parent=1 // pred_region
      %110 = dma.done [#allocation8], 256
    $region37: #{tpu_custom_call.1} parent=1 // pred_fallthru
      _
    // Predicated region
    $region38: #{tpu_custom_call.1} parent=1 // pred_check
      _
    $region39: #{tpu_custom_call.1} parent=1 // pred_check_branch
      %112 = sbr.rel (0) target = $region41
    $region40: #{tpu_custom_call.1} parent=1 // pred_region
      %114 = dma.done [#allocation8], 256
    $region41: #{tpu_custom_call.1} parent=1 // pred_fallthru
      _
    // Predicated region
    $region42: #{tpu_custom_call.1} parent=1 // pred_check
      _
    $region43: #{tpu_custom_call.1} parent=1 // pred_check_branch
      %116 = sbr.rel (0) target = $region45
    $region44: #{tpu_custom_call.1} parent=1 // pred_region
      %118 = dma.done [#allocation11], 12288
    $region45: #{tpu_custom_call.1} parent=1 // pred_fallthru
      _
    // Predicated region
    $region46: #{tpu_custom_call.1} parent=1 // pred_check
      _
    $region47: #{tpu_custom_call.1} parent=1 // pred_check_branch
      %120 = sbr.rel (0) target = $region49
    $region48: #{tpu_custom_call.1} parent=1 // pred_region
      %122 = dma.done [#allocation11], 256
    $region49: #{tpu_custom_call.1} parent=1 // pred_fallthru
      _
    // Predicated region
    $region50: #{tpu_custom_call.1} parent=1 // pred_check
      _
    $region51: #{tpu_custom_call.1} parent=1 // pred_check_branch
      %124 = sbr.rel (0) target = $region53
    $region52: #{tpu_custom_call.1} parent=1 // pred_region
      %126 = dma.done [#allocation14], 128
    $region53: #{tpu_custom_call.1} parent=1 // pred_fallthru
      _
    // Predicated region
    $region54: #{tpu_custom_call.1} parent=1 // pred_check
      _
    $region55: #{tpu_custom_call.1} parent=1 // pred_check_branch
      %128 = sbr.rel (0) target = $region57
    $region56: #{tpu_custom_call.1} parent=1 // pred_region
      %130 = dma.done [#allocation14], 512
    $region57: #{tpu_custom_call.1} parent=1 // pred_fallthru
      _
    // Predicated region
    $region58: #{tpu_custom_call.1} parent=1 // pred_check
      _
    $region59: #{tpu_custom_call.1} parent=1 // pred_check_branch
      %132 = sbr.rel target = $region61
    $region60: #{tpu_custom_call.1} parent=1 // pred_region
      %133 = sst [smem:[#allocation18]] [#allocation17]
      %134 = sst [smem:[#allocation19]] [#allocation16]
    $region61: #{tpu_custom_call.1} parent=1 // pred_fallthru
      _
    %136 = shalt.err (0)
    %s138 = sshll.u32 %s4, 4
    %s139 = int_to_ptr.hbm [resolvable:$true] %s138
    %s140 = sshll.u32 [#allocation2], 4
    %s141 = int_to_ptr.vmem [resolvable:$true] %s140
    %143 = dma.hbm_to_vmem [thread:$0]  %s139, 32768, %s141, [#allocation4]
    %s144 = scalar_lea.sflag [#allocation4], 1
    // Predicated region
    $region62: #{tpu_custom_call.1} parent=1 // pred_check
      _
    $region63: #{tpu_custom_call.1} parent=1 // pred_check_branch
      %146 = sbr.rel target = $region65
    $region64: #{tpu_custom_call.1} parent=1 // pred_region
      %147 = sst [smem:[#allocation18]] [#allocation21]
      %148 = sst [smem:[#allocation19]] [#allocation20]
    $region65: #{tpu_custom_call.1} parent=1 // pred_fallthru
      _
    %150 = shalt.err (0)
    %s152 = sshll.u32 %s5, 4
    %s153 = int_to_ptr.hbm [resolvable:$true] %s152
    %s154 = sshll.u32 [#allocation3], 4
    %s155 = int_to_ptr.vmem [resolvable:$true] %s154
    %157 = dma.hbm_to_vmem [thread:$0]  %s153, 32768, %s155, %s144
    %v158 = vld [vmem:[#allocation5] sm:$0xff]
    %v159 = vld [vmem:[#allocation5 + $0x8] sm:$0xff]
    %v160 = vld [vmem:[#allocation10] sm:$0xff]
    %v161 = vld [vmem:[#allocation10 + $0x8] sm:$0xff]
    %v162 = vld [vmem:[#allocation10 + $0x10] sm:$0xff]
    %v163 = vld [vmem:[#allocation10 + $0x18] sm:$0xff]
    %v164 = vld [vmem:[#allocation10 + $0x20] sm:$0xff]
    %v165 = vld [vmem:[#allocation10 + $0x28] sm:$0xff]
    %v166 = vld [vmem:[#allocation10 + $0x30] sm:$0xff]
    %v167 = vld [vmem:[#allocation10 + $0x38] sm:$0xff]
    %v168 = vld [vmem:[#allocation10 + $0x40] sm:$0xff]
    %v169 = vld [vmem:[#allocation10 + $0x48] sm:$0xff]
    %v170 = vld [vmem:[#allocation10 + $0x50] sm:$0xff]
    %v171 = vld [vmem:[#allocation10 + $0x58] sm:$0xff]
    %v172 = vld [vmem:[#allocation10 + $0x60] sm:$0xff]
    %v173 = vld [vmem:[#allocation10 + $0x68] sm:$0xff]
    %v174 = vld [vmem:[#allocation10 + $0x70] sm:$0xff]
    %v175 = vld [vmem:[#allocation10 + $0x78] sm:$0xff]
    %v176 = vld [vmem:[#allocation10 + $0x80] sm:$0xff]
    %v177 = vld [vmem:[#allocation10 + $0x88] sm:$0xff]
    %v178 = vld [vmem:[#allocation10 + $0x90] sm:$0xff]
    %v179 = vld [vmem:[#allocation10 + $0x98] sm:$0xff]
    %v180 = vld [vmem:[#allocation10 + $0xa0] sm:$0xff]
    %v181 = vld [vmem:[#allocation10 + $0xa8] sm:$0xff]
    %v182 = vld [vmem:[#allocation10 + $0xb0] sm:$0xff]
    %v183 = vld [vmem:[#allocation10 + $0xb8] sm:$0xff]
    %v184 = vld [vmem:[#allocation10 + $0xc0] sm:$0xff]
    %v185 = vld [vmem:[#allocation10 + $0xc8] sm:$0xff]
    %v186 = vld [vmem:[#allocation10 + $0xd0] sm:$0xff]
    %v187 = vld [vmem:[#allocation10 + $0xd8] sm:$0xff]
    %v188 = vld [vmem:[#allocation10 + $0xe0] sm:$0xff]
    %v189 = vld [vmem:[#allocation10 + $0xe8] sm:$0xff]
    %v190 = vld [vmem:[#allocation10 + $0xf0] sm:$0xff]
    %v191 = vld [vmem:[#allocation10 + $0xf8] sm:$0xff]
    %v192 = vld [vmem:[#allocation7] sm:$0xff]
    %v193 = vld [vmem:[#allocation7 + $0x8] sm:$0xff]
    %v194 = vld [vmem:[#allocation10 + $0x100] sm:$0xff]
    %v195 = vld [vmem:[#allocation10 + $0x108] sm:$0xff]
    %v196 = vld [vmem:[#allocation10 + $0x110] sm:$0xff]
    %v197 = vld [vmem:[#allocation10 + $0x118] sm:$0xff]
    %v198 = vld [vmem:[#allocation10 + $0x120] sm:$0xff]
    %v199 = vld [vmem:[#allocation10 + $0x128] sm:$0xff]
    %v200 = vld [vmem:[#allocation10 + $0x130] sm:$0xff]
    %v201 = vld [vmem:[#allocation10 + $0x138] sm:$0xff]
    %v202 = vld [vmem:[#allocation10 + $0x140] sm:$0xff]
    %v203 = vld [vmem:[#allocation10 + $0x148] sm:$0xff]
    %v204 = vld [vmem:[#allocation10 + $0x150] sm:$0xff]
    %v205 = vld [vmem:[#allocation10 + $0x158] sm:$0xff]
    %v206 = vld [vmem:[#allocation10 + $0x160] sm:$0xff]
    %v207 = vld [vmem:[#allocation10 + $0x168] sm:$0xff]
    %v208 = vld [vmem:[#allocation10 + $0x170] sm:$0xff]
    %v209 = vld [vmem:[#allocation10 + $0x178] sm:$0xff]
    %v210 = vld [vmem:[#allocation10 + $0x180] sm:$0xff]
    %v211 = vld [vmem:[#allocation10 + $0x188] sm:$0xff]
    %v212 = vld [vmem:[#allocation10 + $0x190] sm:$0xff]
    %v213 = vld [vmem:[#allocation10 + $0x198] sm:$0xff]
    %v214 = vld [vmem:[#allocation10 + $0x1a0] sm:$0xff]
    %v215 = vld [vmem:[#allocation10 + $0x1a8] sm:$0xff]
    %v216 = vld [vmem:[#allocation10 + $0x1b0] sm:$0xff]
    %v217 = vld [vmem:[#allocation10 + $0x1b8] sm:$0xff]
    %v218 = vld [vmem:[#allocation10 + $0x1c0] sm:$0xff]
    %v219 = vld [vmem:[#allocation10 + $0x1c8] sm:$0xff]
    %v220 = vld [vmem:[#allocation10 + $0x1d0] sm:$0xff]
    %v221 = vld [vmem:[#allocation10 + $0x1d8] sm:$0xff]
    %v222 = vld [vmem:[#allocation10 + $0x1e0] sm:$0xff]
    %v223 = vld [vmem:[#allocation10 + $0x1e8] sm:$0xff]
    %v224 = vld [vmem:[#allocation10 + $0x1f0] sm:$0xff]
    %v225 = vld [vmem:[#allocation10 + $0x1f8] sm:$0xff]
    %vm226 = vcmask 261120
    %v228 = vsel %vm226, %v192, 0
    %v231 = vsel %vm226, %v193, 0
    %233 = vmatpush.msra.mxu0 0.0
    %234 = vmatpush.msra.mxu0 0.0
    %235 = vmatpush.msra.mxu0 0.0
    %236 = vmatpush.msra.mxu0 0.0
    %237 = vmatpush.msra.mxu0 0.0
    %238 = vmatpush.msra.mxu0 0.0
    %239 = vmatpush.msra.mxu0 0.0
    %240 = vmatpush.msra.mxu0 0.0
    %241 = vmatpush.msra.mxu0 0.0
    %242 = vmatpush.msra.mxu0 0.0
    %243 = vmatpush.msra.mxu0 0.0
    %244 = vmatpush.msra.mxu0 0.0
    %245 = vmatpush.msra.mxu0 %v218
    %246 = vmatpush.msra.mxu0 %v210
    %247 = vmatpush.msra.mxu0 %v202
    %248 = vmatpush.msra.mxu0 %v194
    %249 = vmatmul.f32.gmra.mxu0 %v228
    %v250 = vpop.f32.mrf.mxu0
    %v251 = vadd.f32 0.0, %v250
    %252 = vmatmul.f32.gmra.mxu0 %v231
    %v253 = vpop.f32.mrf.mxu0
    %v254 = vadd.f32 0.0, %v253
    %255 = vdwg.mxu0
    %256 = vmatpush.msra.mxu0 0.0
    %257 = vmatpush.msra.mxu0 0.0
    %258 = vmatpush.msra.mxu0 0.0
    %259 = vmatpush.msra.mxu0 0.0
    %260 = vmatpush.msra.mxu0 0.0
    %261 = vmatpush.msra.mxu0 0.0
    %262 = vmatpush.msra.mxu0 0.0
    %263 = vmatpush.msra.mxu0 0.0
    %264 = vmatpush.msra.mxu0 0.0
    %265 = vmatpush.msra.mxu0 0.0
    %266 = vmatpush.msra.mxu0 0.0
    %267 = vmatpush.msra.mxu0 0.0
    %268 = vmatpush.msra.mxu0 %v219
    %269 = vmatpush.msra.mxu0 %v211
    %270 = vmatpush.msra.mxu0 %v203
    %271 = vmatpush.msra.mxu0 %v195
    %272 = vmatmul.f32.gmra.mxu0 %v228
    %v273 = vpop.f32.mrf.mxu0
    %v274 = vadd.f32 0.0, %v273
    %275 = vmatmul.f32.gmra.mxu0 %v231
    %v276 = vpop.f32.mrf.mxu0
    %v277 = vadd.f32 0.0, %v276
    %278 = vdwg.mxu0
    %279 = vmatpush.msra.mxu0 0.0
    %280 = vmatpush.msra.mxu0 0.0
    %281 = vmatpush.msra.mxu0 0.0
    %282 = vmatpush.msra.mxu0 0.0
    %283 = vmatpush.msra.mxu0 0.0
    %284 = vmatpush.msra.mxu0 0.0
    %285 = vmatpush.msra.mxu0 0.0
    %286 = vmatpush.msra.mxu0 0.0
    %287 = vmatpush.msra.mxu0 0.0
    %288 = vmatpush.msra.mxu0 0.0
    %289 = vmatpush.msra.mxu0 0.0
    %290 = vmatpush.msra.mxu0 0.0
    %291 = vmatpush.msra.mxu0 %v220
    %292 = vmatpush.msra.mxu0 %v212
    %293 = vmatpush.msra.mxu0 %v204
    %294 = vmatpush.msra.mxu0 %v196
    %295 = vmatmul.f32.gmra.mxu0 %v228
    %v296 = vpop.f32.mrf.mxu0
    %v297 = vadd.f32 0.0, %v296
    %298 = vmatmul.f32.gmra.mxu0 %v231
    %v299 = vpop.f32.mrf.mxu0
    %v300 = vadd.f32 0.0, %v299
    %301 = vdwg.mxu0
    %302 = vmatpush.msra.mxu0 0.0
    %303 = vmatpush.msra.mxu0 0.0
    %304 = vmatpush.msra.mxu0 0.0
    %305 = vmatpush.msra.mxu0 0.0
    %306 = vmatpush.msra.mxu0 0.0
    %307 = vmatpush.msra.mxu0 0.0
    %308 = vmatpush.msra.mxu0 0.0
    %309 = vmatpush.msra.mxu0 0.0
    %310 = vmatpush.msra.mxu0 0.0
    %311 = vmatpush.msra.mxu0 0.0
    %312 = vmatpush.msra.mxu0 0.0
    %313 = vmatpush.msra.mxu0 0.0
    %314 = vmatpush.msra.mxu0 %v221
    %315 = vmatpush.msra.mxu0 %v213
    %316 = vmatpush.msra.mxu0 %v205
    %317 = vmatpush.msra.mxu0 %v197
    %318 = vmatmul.f32.gmra.mxu0 %v228
    %v319 = vpop.f32.mrf.mxu0
    %v320 = vadd.f32 0.0, %v319
    %321 = vmatmul.f32.gmra.mxu0 %v231
    %v322 = vpop.f32.mrf.mxu0
    %v323 = vadd.f32 0.0, %v322
    %324 = vdwg.mxu0
    %325 = vmatpush.msra.mxu0 0.0
    %326 = vmatpush.msra.mxu0 0.0
    %327 = vmatpush.msra.mxu0 0.0
    %328 = vmatpush.msra.mxu0 0.0
    %329 = vmatpush.msra.mxu0 0.0
    %330 = vmatpush.msra.mxu0 0.0
    %331 = vmatpush.msra.mxu0 0.0
    %332 = vmatpush.msra.mxu0 0.0
    %333 = vmatpush.msra.mxu0 0.0
    %334 = vmatpush.msra.mxu0 0.0
    %335 = vmatpush.msra.mxu0 0.0
    %336 = vmatpush.msra.mxu0 0.0
    %337 = vmatpush.msra.mxu0 %v222
    %338 = vmatpush.msra.mxu0 %v214
    %339 = vmatpush.msra.mxu0 %v206
    %340 = vmatpush.msra.mxu0 %v198
    %341 = vmatmul.f32.gmra.mxu0 %v228
    %v342 = vpop.f32.mrf.mxu0
    %v343 = vadd.f32 0.0, %v342
    %344 = vmatmul.f32.gmra.mxu0 %v231
    %v345 = vpop.f32.mrf.mxu0
    %v346 = vadd.f32 0.0, %v345
    %347 = vdwg.mxu0
    %348 = vmatpush.msra.mxu0 0.0
    %349 = vmatpush.msra.mxu0 0.0
    %350 = vmatpush.msra.mxu0 0.0
    %351 = vmatpush.msra.mxu0 0.0
    %352 = vmatpush.msra.mxu0 0.0
    %353 = vmatpush.msra.mxu0 0.0
    %354 = vmatpush.msra.mxu0 0.0
    %355 = vmatpush.msra.mxu0 0.0
    %356 = vmatpush.msra.mxu0 0.0
    %357 = vmatpush.msra.mxu0 0.0
    %358 = vmatpush.msra.mxu0 0.0
    %359 = vmatpush.msra.mxu0 0.0
    %360 = vmatpush.msra.mxu0 %v223
    %361 = vmatpush.msra.mxu0 %v215
    %362 = vmatpush.msra.mxu0 %v207
    %363 = vmatpush.msra.mxu0 %v199
    %364 = vmatmul.f32.gmra.mxu0 %v228
    %v365 = vpop.f32.mrf.mxu0
    %v366 = vadd.f32 0.0, %v365
    %367 = vmatmul.f32.gmra.mxu0 %v231
    %v368 = vpop.f32.mrf.mxu0
    %v369 = vadd.f32 0.0, %v368
    %370 = vdwg.mxu0
    %371 = vmatpush.msra.mxu0 0.0
    %372 = vmatpush.msra.mxu0 0.0
    %373 = vmatpush.msra.mxu0 0.0
    %374 = vmatpush.msra.mxu0 0.0
    %375 = vmatpush.msra.mxu0 0.0
    %376 = vmatpush.msra.mxu0 0.0
    %377 = vmatpush.msra.mxu0 0.0
    %378 = vmatpush.msra.mxu0 0.0
    %379 = vmatpush.msra.mxu0 0.0
    %380 = vmatpush.msra.mxu0 0.0
    %381 = vmatpush.msra.mxu0 0.0
    %382 = vmatpush.msra.mxu0 0.0
    %383 = vmatpush.msra.mxu0 %v224
    %384 = vmatpush.msra.mxu0 %v216
    %385 = vmatpush.msra.mxu0 %v208
    %386 = vmatpush.msra.mxu0 %v200
    %387 = vmatmul.f32.gmra.mxu0 %v228
    %v388 = vpop.f32.mrf.mxu0
    %v389 = vadd.f32 0.0, %v388
    %390 = vmatmul.f32.gmra.mxu0 %v231
    %v391 = vpop.f32.mrf.mxu0
    %v392 = vadd.f32 0.0, %v391
    %393 = vdwg.mxu0
    %394 = vmatpush.msra.mxu0 0.0
    %395 = vmatpush.msra.mxu0 0.0
    %396 = vmatpush.msra.mxu0 0.0
    %397 = vmatpush.msra.mxu0 0.0
    %398 = vmatpush.msra.mxu0 0.0
    %399 = vmatpush.msra.mxu0 0.0
    %400 = vmatpush.msra.mxu0 0.0
    %401 = vmatpush.msra.mxu0 0.0
    %402 = vmatpush.msra.mxu0 0.0
    %403 = vmatpush.msra.mxu0 0.0
    %404 = vmatpush.msra.mxu0 0.0
    %405 = vmatpush.msra.mxu0 0.0
    %406 = vmatpush.msra.mxu0 %v225
    %407 = vmatpush.msra.mxu0 %v217
    %408 = vmatpush.msra.mxu0 %v209
    %409 = vmatpush.msra.mxu0 %v201
    %410 = vmatmul.f32.gmra.mxu0 %v228
    %v411 = vpop.f32.mrf.mxu0
    %v412 = vadd.f32 0.0, %v411
    %413 = vmatmul.f32.gmra.mxu0 %v231
    %v414 = vpop.f32.mrf.mxu0
    %v415 = vadd.f32 0.0, %v414
    %416 = vdwg.mxu0
    %v418 = vsel %vm226, %v158, 0
    %v421 = vsel %vm226, %v159, 0
    %423 = vmatpush.msra.mxu0 0.0
    %424 = vmatpush.msra.mxu0 0.0
    %425 = vmatpush.msra.mxu0 0.0
    %426 = vmatpush.msra.mxu0 0.0
    %427 = vmatpush.msra.mxu0 0.0
    %428 = vmatpush.msra.mxu0 0.0
    %429 = vmatpush.msra.mxu0 0.0
    %430 = vmatpush.msra.mxu0 0.0
    %431 = vmatpush.msra.mxu0 0.0
    %432 = vmatpush.msra.mxu0 0.0
    %433 = vmatpush.msra.mxu0 0.0
    %434 = vmatpush.msra.mxu0 0.0
    %435 = vmatpush.msra.mxu0 %v184
    %436 = vmatpush.msra.mxu0 %v176
    %437 = vmatpush.msra.mxu0 %v168
    %438 = vmatpush.msra.mxu0 %v160
    %439 = vmatmul.f32.gmra.mxu0 %v418
    %v440 = vpop.f32.mrf.mxu0
    %v441 = vadd.f32 %v251, %v440
    %442 = vmatmul.f32.gmra.mxu0 %v421
    %v443 = vpop.f32.mrf.mxu0
    %v444 = vadd.f32 %v254, %v443
    %445 = vdwg.mxu0
    %446 = vmatpush.msra.mxu0 0.0
    %447 = vmatpush.msra.mxu0 0.0
    %448 = vmatpush.msra.mxu0 0.0
    %449 = vmatpush.msra.mxu0 0.0
    %450 = vmatpush.msra.mxu0 0.0
    %451 = vmatpush.msra.mxu0 0.0
    %452 = vmatpush.msra.mxu0 0.0
    %453 = vmatpush.msra.mxu0 0.0
    %454 = vmatpush.msra.mxu0 0.0
    %455 = vmatpush.msra.mxu0 0.0
    %456 = vmatpush.msra.mxu0 0.0
    %457 = vmatpush.msra.mxu0 0.0
    %458 = vmatpush.msra.mxu0 %v185
    %459 = vmatpush.msra.mxu0 %v177
    %460 = vmatpush.msra.mxu0 %v169
    %461 = vmatpush.msra.mxu0 %v161
    %462 = vmatmul.f32.gmra.mxu0 %v418
    %v463 = vpop.f32.mrf.mxu0
    %v464 = vadd.f32 %v274, %v463
    %465 = vmatmul.f32.gmra.mxu0 %v421
    %v466 = vpop.f32.mrf.mxu0
    %v467 = vadd.f32 %v277, %v466
    %468 = vdwg.mxu0
    %469 = vmatpush.msra.mxu0 0.0
    %470 = vmatpush.msra.mxu0 0.0
    %471 = vmatpush.msra.mxu0 0.0
    %472 = vmatpush.msra.mxu0 0.0
    %473 = vmatpush.msra.mxu0 0.0
    %474 = vmatpush.msra.mxu0 0.0
    %475 = vmatpush.msra.mxu0 0.0
    %476 = vmatpush.msra.mxu0 0.0
    %477 = vmatpush.msra.mxu0 0.0
    %478 = vmatpush.msra.mxu0 0.0
    %479 = vmatpush.msra.mxu0 0.0
    %480 = vmatpush.msra.mxu0 0.0
    %481 = vmatpush.msra.mxu0 %v186
    %482 = vmatpush.msra.mxu0 %v178
    %483 = vmatpush.msra.mxu0 %v170
    %484 = vmatpush.msra.mxu0 %v162
    %485 = vmatmul.f32.gmra.mxu0 %v418
    %v486 = vpop.f32.mrf.mxu0
    %v487 = vadd.f32 %v297, %v486
    %488 = vmatmul.f32.gmra.mxu0 %v421
    %v489 = vpop.f32.mrf.mxu0
    %v490 = vadd.f32 %v300, %v489
    %491 = vdwg.mxu0
    %492 = vmatpush.msra.mxu0 0.0
    %493 = vmatpush.msra.mxu0 0.0
    %494 = vmatpush.msra.mxu0 0.0
    %495 = vmatpush.msra.mxu0 0.0
    %496 = vmatpush.msra.mxu0 0.0
    %497 = vmatpush.msra.mxu0 0.0
    %498 = vmatpush.msra.mxu0 0.0
    %499 = vmatpush.msra.mxu0 0.0
    %500 = vmatpush.msra.mxu0 0.0
    %501 = vmatpush.msra.mxu0 0.0
    %502 = vmatpush.msra.mxu0 0.0
    %503 = vmatpush.msra.mxu0 0.0
    %504 = vmatpush.msra.mxu0 %v187
    %505 = vmatpush.msra.mxu0 %v179
    %506 = vmatpush.msra.mxu0 %v171
    %507 = vmatpush.msra.mxu0 %v163
    %508 = vmatmul.f32.gmra.mxu0 %v418
    %v509 = vpop.f32.mrf.mxu0
    %v510 = vadd.f32 %v320, %v509
    %511 = vmatmul.f32.gmra.mxu0 %v421
    %v512 = vpop.f32.mrf.mxu0
    %v513 = vadd.f32 %v323, %v512
    %514 = vdwg.mxu0
    %515 = vmatpush.msra.mxu0 0.0
    %516 = vmatpush.msra.mxu0 0.0
    %517 = vmatpush.msra.mxu0 0.0
    %518 = vmatpush.msra.mxu0 0.0
    %519 = vmatpush.msra.mxu0 0.0
    %520 = vmatpush.msra.mxu0 0.0
    %521 = vmatpush.msra.mxu0 0.0
    %522 = vmatpush.msra.mxu0 0.0
    %523 = vmatpush.msra.mxu0 0.0
    %524 = vmatpush.msra.mxu0 0.0
    %525 = vmatpush.msra.mxu0 0.0
    %526 = vmatpush.msra.mxu0 0.0
    %527 = vmatpush.msra.mxu0 %v188
    %528 = vmatpush.msra.mxu0 %v180
    %529 = vmatpush.msra.mxu0 %v172
    %530 = vmatpush.msra.mxu0 %v164
    %531 = vmatmul.f32.gmra.mxu0 %v418
    %v532 = vpop.f32.mrf.mxu0
    %v533 = vadd.f32 %v343, %v532
    %534 = vmatmul.f32.gmra.mxu0 %v421
    %v535 = vpop.f32.mrf.mxu0
    %v536 = vadd.f32 %v346, %v535
    %537 = vdwg.mxu0
    %538 = vmatpush.msra.mxu0 0.0
    %539 = vmatpush.msra.mxu0 0.0
    %540 = vmatpush.msra.mxu0 0.0
    %541 = vmatpush.msra.mxu0 0.0
    %542 = vmatpush.msra.mxu0 0.0
    %543 = vmatpush.msra.mxu0 0.0
    %544 = vmatpush.msra.mxu0 0.0
    %545 = vmatpush.msra.mxu0 0.0
    %546 = vmatpush.msra.mxu0 0.0
    %547 = vmatpush.msra.mxu0 0.0
    %548 = vmatpush.msra.mxu0 0.0
    %549 = vmatpush.msra.mxu0 0.0
    %550 = vmatpush.msra.mxu0 %v189
    %551 = vmatpush.msra.mxu0 %v181
    %552 = vmatpush.msra.mxu0 %v173
    %553 = vmatpush.msra.mxu0 %v165
    %554 = vmatmul.f32.gmra.mxu0 %v418
    %v555 = vpop.f32.mrf.mxu0
    %v556 = vadd.f32 %v366, %v555
    %557 = vmatmul.f32.gmra.mxu0 %v421
    %v558 = vpop.f32.mrf.mxu0
    %v559 = vadd.f32 %v369, %v558
    %560 = vdwg.mxu0
    %561 = vmatpush.msra.mxu0 0.0
    %562 = vmatpush.msra.mxu0 0.0
    %563 = vmatpush.msra.mxu0 0.0
    %564 = vmatpush.msra.mxu0 0.0
    %565 = vmatpush.msra.mxu0 0.0
    %566 = vmatpush.msra.mxu0 0.0
    %567 = vmatpush.msra.mxu0 0.0
    %568 = vmatpush.msra.mxu0 0.0
    %569 = vmatpush.msra.mxu0 0.0
    %570 = vmatpush.msra.mxu0 0.0
    %571 = vmatpush.msra.mxu0 0.0
    %572 = vmatpush.msra.mxu0 0.0
    %573 = vmatpush.msra.mxu0 %v190
    %574 = vmatpush.msra.mxu0 %v182
    %575 = vmatpush.msra.mxu0 %v174
    %576 = vmatpush.msra.mxu0 %v166
    %577 = vmatmul.f32.gmra.mxu0 %v418
    %v578 = vpop.f32.mrf.mxu0
    %v579 = vadd.f32 %v389, %v578
    %580 = vmatmul.f32.gmra.mxu0 %v421
    %v581 = vpop.f32.mrf.mxu0
    %v582 = vadd.f32 %v392, %v581
    %583 = vdwg.mxu0
    %584 = vmatpush.msra.mxu0 0.0
    %585 = vmatpush.msra.mxu0 0.0
    %586 = vmatpush.msra.mxu0 0.0
    %587 = vmatpush.msra.mxu0 0.0
    %588 = vmatpush.msra.mxu0 0.0
    %589 = vmatpush.msra.mxu0 0.0
    %590 = vmatpush.msra.mxu0 0.0
    %591 = vmatpush.msra.mxu0 0.0
    %592 = vmatpush.msra.mxu0 0.0
    %593 = vmatpush.msra.mxu0 0.0
    %594 = vmatpush.msra.mxu0 0.0
    %595 = vmatpush.msra.mxu0 0.0
    %596 = vmatpush.msra.mxu0 %v191
    %597 = vmatpush.msra.mxu0 %v183
    %598 = vmatpush.msra.mxu0 %v175
    %599 = vmatpush.msra.mxu0 %v167
    %600 = vmatmul.f32.gmra.mxu0 %v418
    %v601 = vpop.f32.mrf.mxu0
    %v602 = vadd.f32 %v412, %v601
    %603 = vmatmul.f32.gmra.mxu0 %v421
    %v604 = vpop.f32.mrf.mxu0
    %v605 = vadd.f32 %v415, %v604
    %606 = vdwg.mxu0
    %v607 = vld [vmem:[#allocation9] sm:$0xff]
    %v608 = vld [vmem:[#allocation9 + $0x8] sm:$0xff]
    %v609 = vld [vmem:[#allocation10 + $0x200] sm:$0xff]
    %v610 = vld [vmem:[#allocation10 + $0x208] sm:$0xff]
    %v611 = vld [vmem:[#allocation10 + $0x210] sm:$0xff]
    %v612 = vld [vmem:[#allocation10 + $0x218] sm:$0xff]
    %v613 = vld [vmem:[#allocation10 + $0x220] sm:$0xff]
    %v614 = vld [vmem:[#allocation10 + $0x228] sm:$0xff]
    %v615 = vld [vmem:[#allocation10 + $0x230] sm:$0xff]
    %v616 = vld [vmem:[#allocation10 + $0x238] sm:$0xff]
    %v617 = vld [vmem:[#allocation10 + $0x240] sm:$0xff]
    %v618 = vld [vmem:[#allocation10 + $0x248] sm:$0xff]
    %v619 = vld [vmem:[#allocation10 + $0x250] sm:$0xff]
    %v620 = vld [vmem:[#allocation10 + $0x258] sm:$0xff]
    %v621 = vld [vmem:[#allocation10 + $0x260] sm:$0xff]
    %v622 = vld [vmem:[#allocation10 + $0x268] sm:$0xff]
    %v623 = vld [vmem:[#allocation10 + $0x270] sm:$0xff]
    %v624 = vld [vmem:[#allocation10 + $0x278] sm:$0xff]
    %v625 = vld [vmem:[#allocation10 + $0x280] sm:$0xff]
    %v626 = vld [vmem:[#allocation10 + $0x288] sm:$0xff]
    %v627 = vld [vmem:[#allocation10 + $0x290] sm:$0xff]
    %v628 = vld [vmem:[#allocation10 + $0x298] sm:$0xff]
    %v629 = vld [vmem:[#allocation10 + $0x2a0] sm:$0xff]
    %v630 = vld [vmem:[#allocation10 + $0x2a8] sm:$0xff]
    %v631 = vld [vmem:[#allocation10 + $0x2b0] sm:$0xff]
    %v632 = vld [vmem:[#allocation10 + $0x2b8] sm:$0xff]
    %v633 = vld [vmem:[#allocation10 + $0x2c0] sm:$0xff]
    %v634 = vld [vmem:[#allocation10 + $0x2c8] sm:$0xff]
    %v635 = vld [vmem:[#allocation10 + $0x2d0] sm:$0xff]
    %v636 = vld [vmem:[#allocation10 + $0x2d8] sm:$0xff]
    %v637 = vld [vmem:[#allocation10 + $0x2e0] sm:$0xff]
    %v638 = vld [vmem:[#allocation10 + $0x2e8] sm:$0xff]
    %v639 = vld [vmem:[#allocation10 + $0x2f0] sm:$0xff]
    %v640 = vld [vmem:[#allocation10 + $0x2f8] sm:$0xff]
    %v642 = vsel %vm226, %v607, 0
    %v645 = vsel %vm226, %v608, 0
    %647 = vmatpush.msra.mxu0 0.0
    %648 = vmatpush.msra.mxu0 0.0
    %649 = vmatpush.msra.mxu0 0.0
    %650 = vmatpush.msra.mxu0 0.0
    %651 = vmatpush.msra.mxu0 0.0
    %652 = vmatpush.msra.mxu0 0.0
    %653 = vmatpush.msra.mxu0 0.0
    %654 = vmatpush.msra.mxu0 0.0
    %655 = vmatpush.msra.mxu0 0.0
    %656 = vmatpush.msra.mxu0 0.0
    %657 = vmatpush.msra.mxu0 0.0
    %658 = vmatpush.msra.mxu0 0.0
    %659 = vmatpush.msra.mxu0 %v633
    %660 = vmatpush.msra.mxu0 %v625
    %661 = vmatpush.msra.mxu0 %v617
    %662 = vmatpush.msra.mxu0 %v609
    %663 = vmatmul.f32.gmra.mxu0 %v642
    %v664 = vpop.f32.mrf.mxu0
    %v665 = vadd.f32 0.0, %v664
    %666 = vmatmul.f32.gmra.mxu0 %v645
    %v667 = vpop.f32.mrf.mxu0
    %v668 = vadd.f32 0.0, %v667
    %669 = vdwg.mxu0
    %670 = vmatpush.msra.mxu0 0.0
    %671 = vmatpush.msra.mxu0 0.0
    %672 = vmatpush.msra.mxu0 0.0
    %673 = vmatpush.msra.mxu0 0.0
    %674 = vmatpush.msra.mxu0 0.0
    %675 = vmatpush.msra.mxu0 0.0
    %676 = vmatpush.msra.mxu0 0.0
    %677 = vmatpush.msra.mxu0 0.0
    %678 = vmatpush.msra.mxu0 0.0
    %679 = vmatpush.msra.mxu0 0.0
    %680 = vmatpush.msra.mxu0 0.0
    %681 = vmatpush.msra.mxu0 0.0
    %682 = vmatpush.msra.mxu0 %v634
    %683 = vmatpush.msra.mxu0 %v626
    %684 = vmatpush.msra.mxu0 %v618
    %685 = vmatpush.msra.mxu0 %v610
    %686 = vmatmul.f32.gmra.mxu0 %v642
    %v687 = vpop.f32.mrf.mxu0
    %v688 = vadd.f32 0.0, %v687
    %689 = vmatmul.f32.gmra.mxu0 %v645
    %v690 = vpop.f32.mrf.mxu0
    %v691 = vadd.f32 0.0, %v690
    %692 = vdwg.mxu0
    %693 = vmatpush.msra.mxu0 0.0
    %694 = vmatpush.msra.mxu0 0.0
    %695 = vmatpush.msra.mxu0 0.0
    %696 = vmatpush.msra.mxu0 0.0
    %697 = vmatpush.msra.mxu0 0.0
    %698 = vmatpush.msra.mxu0 0.0
    %699 = vmatpush.msra.mxu0 0.0
    %700 = vmatpush.msra.mxu0 0.0
    %701 = vmatpush.msra.mxu0 0.0
    %702 = vmatpush.msra.mxu0 0.0
    %703 = vmatpush.msra.mxu0 0.0
    %704 = vmatpush.msra.mxu0 0.0
    %705 = vmatpush.msra.mxu0 %v635
    %706 = vmatpush.msra.mxu0 %v627
    %707 = vmatpush.msra.mxu0 %v619
    %708 = vmatpush.msra.mxu0 %v611
    %709 = vmatmul.f32.gmra.mxu0 %v642
    %v710 = vpop.f32.mrf.mxu0
    %v711 = vadd.f32 0.0, %v710
    %712 = vmatmul.f32.gmra.mxu0 %v645
    %v713 = vpop.f32.mrf.mxu0
    %v714 = vadd.f32 0.0, %v713
    %715 = vdwg.mxu0
    %716 = vmatpush.msra.mxu0 0.0
    %717 = vmatpush.msra.mxu0 0.0
    %718 = vmatpush.msra.mxu0 0.0
    %719 = vmatpush.msra.mxu0 0.0
    %720 = vmatpush.msra.mxu0 0.0
    %721 = vmatpush.msra.mxu0 0.0
    %722 = vmatpush.msra.mxu0 0.0
    %723 = vmatpush.msra.mxu0 0.0
    %724 = vmatpush.msra.mxu0 0.0
    %725 = vmatpush.msra.mxu0 0.0
    %726 = vmatpush.msra.mxu0 0.0
    %727 = vmatpush.msra.mxu0 0.0
    %728 = vmatpush.msra.mxu0 %v636
    %729 = vmatpush.msra.mxu0 %v628
    %730 = vmatpush.msra.mxu0 %v620
    %731 = vmatpush.msra.mxu0 %v612
    %732 = vmatmul.f32.gmra.mxu0 %v642
    %v733 = vpop.f32.mrf.mxu0
    %v734 = vadd.f32 0.0, %v733
    %735 = vmatmul.f32.gmra.mxu0 %v645
    %v736 = vpop.f32.mrf.mxu0
    %v737 = vadd.f32 0.0, %v736
    %738 = vdwg.mxu0
    %739 = vmatpush.msra.mxu0 0.0
    %740 = vmatpush.msra.mxu0 0.0
    %741 = vmatpush.msra.mxu0 0.0
    %742 = vmatpush.msra.mxu0 0.0
    %743 = vmatpush.msra.mxu0 0.0
    %744 = vmatpush.msra.mxu0 0.0
    %745 = vmatpush.msra.mxu0 0.0
    %746 = vmatpush.msra.mxu0 0.0
    %747 = vmatpush.msra.mxu0 0.0
    %748 = vmatpush.msra.mxu0 0.0
    %749 = vmatpush.msra.mxu0 0.0
    %750 = vmatpush.msra.mxu0 0.0
    %751 = vmatpush.msra.mxu0 %v637
    %752 = vmatpush.msra.mxu0 %v629
    %753 = vmatpush.msra.mxu0 %v621
    %754 = vmatpush.msra.mxu0 %v613
    %755 = vmatmul.f32.gmra.mxu0 %v642
    %v756 = vpop.f32.mrf.mxu0
    %v757 = vadd.f32 0.0, %v756
    %758 = vmatmul.f32.gmra.mxu0 %v645
    %v759 = vpop.f32.mrf.mxu0
    %v760 = vadd.f32 0.0, %v759
    %761 = vdwg.mxu0
    %762 = vmatpush.msra.mxu0 0.0
    %763 = vmatpush.msra.mxu0 0.0
    %764 = vmatpush.msra.mxu0 0.0
    %765 = vmatpush.msra.mxu0 0.0
    %766 = vmatpush.msra.mxu0 0.0
    %767 = vmatpush.msra.mxu0 0.0
    %768 = vmatpush.msra.mxu0 0.0
    %769 = vmatpush.msra.mxu0 0.0
    %770 = vmatpush.msra.mxu0 0.0
    %771 = vmatpush.msra.mxu0 0.0
    %772 = vmatpush.msra.mxu0 0.0
    %773 = vmatpush.msra.mxu0 0.0
    %774 = vmatpush.msra.mxu0 %v638
    %775 = vmatpush.msra.mxu0 %v630
    %776 = vmatpush.msra.mxu0 %v622
    %777 = vmatpush.msra.mxu0 %v614
    %778 = vmatmul.f32.gmra.mxu0 %v642
    %v779 = vpop.f32.mrf.mxu0
    %v780 = vadd.f32 0.0, %v779
    %781 = vmatmul.f32.gmra.mxu0 %v645
    %v782 = vpop.f32.mrf.mxu0
    %v783 = vadd.f32 0.0, %v782
    %784 = vdwg.mxu0
    %785 = vmatpush.msra.mxu0 0.0
    %786 = vmatpush.msra.mxu0 0.0
    %787 = vmatpush.msra.mxu0 0.0
    %788 = vmatpush.msra.mxu0 0.0
    %789 = vmatpush.msra.mxu0 0.0
    %790 = vmatpush.msra.mxu0 0.0
    %791 = vmatpush.msra.mxu0 0.0
    %792 = vmatpush.msra.mxu0 0.0
    %793 = vmatpush.msra.mxu0 0.0
    %794 = vmatpush.msra.mxu0 0.0
    %795 = vmatpush.msra.mxu0 0.0
    %796 = vmatpush.msra.mxu0 0.0
    %797 = vmatpush.msra.mxu0 %v639
    %798 = vmatpush.msra.mxu0 %v631
    %799 = vmatpush.msra.mxu0 %v623
    %800 = vmatpush.msra.mxu0 %v615
    %801 = vmatmul.f32.gmra.mxu0 %v642
    %v802 = vpop.f32.mrf.mxu0
    %v803 = vadd.f32 0.0, %v802
    %804 = vmatmul.f32.gmra.mxu0 %v645
    %v805 = vpop.f32.mrf.mxu0
    %v806 = vadd.f32 0.0, %v805
    %807 = vdwg.mxu0
    %808 = vmatpush.msra.mxu0 0.0
    %809 = vmatpush.msra.mxu0 0.0
    %810 = vmatpush.msra.mxu0 0.0
    %811 = vmatpush.msra.mxu0 0.0
    %812 = vmatpush.msra.mxu0 0.0
    %813 = vmatpush.msra.mxu0 0.0
    %814 = vmatpush.msra.mxu0 0.0
    %815 = vmatpush.msra.mxu0 0.0
    %816 = vmatpush.msra.mxu0 0.0
    %817 = vmatpush.msra.mxu0 0.0
    %818 = vmatpush.msra.mxu0 0.0
    %819 = vmatpush.msra.mxu0 0.0
    %820 = vmatpush.msra.mxu0 %v640
    %821 = vmatpush.msra.mxu0 %v632
    %822 = vmatpush.msra.mxu0 %v624
    %823 = vmatpush.msra.mxu0 %v616
    %824 = vmatmul.f32.gmra.mxu0 %v642
    %v825 = vpop.f32.mrf.mxu0
    %v826 = vadd.f32 0.0, %v825
    %827 = vmatmul.f32.gmra.mxu0 %v645
    %v828 = vpop.f32.mrf.mxu0
    %v829 = vadd.f32 0.0, %v828
    %830 = vdwg.mxu0
    %v831 = vadd.f32 %v441, %v665
    %v832 = vadd.f32 %v464, %v688
    %v833 = vadd.f32 %v487, %v711
    %v834 = vadd.f32 %v510, %v734
    %v835 = vadd.f32 %v533, %v757
    %v836 = vadd.f32 %v556, %v780
    %v837 = vadd.f32 %v579, %v803
    %v838 = vadd.f32 %v602, %v826
    %v839 = vadd.f32 %v444, %v668
    %v840 = vadd.f32 %v467, %v691
    %v841 = vadd.f32 %v490, %v714
    %v842 = vadd.f32 %v513, %v737
    %v843 = vadd.f32 %v536, %v760
    %v844 = vadd.f32 %v559, %v783
    %v845 = vadd.f32 %v582, %v806
    %v846 = vadd.f32 %v605, %v829
    %v847 = vld [vmem:[#allocation15] ss:$4 sm:$0xff]
    %v849 = vperm.slane %v847, 0
    %v850 = vperm.slane %v847, 1
    %v851 = vperm.slane %v847, 2
    %v852 = vperm.slane %v847, 3
    %v853 = vperm.slane %v847, 4
    %v854 = vperm.slane %v847, 5
    %v855 = vperm.slane %v847, 6
    %v856 = vperm.slane %v847, 7
    %v865 = vadd.f32 %v831, %v849
    %v866 = vadd.f32 %v832, %v850
    %v867 = vadd.f32 %v833, %v851
    %v868 = vadd.f32 %v834, %v852
    %v869 = vadd.f32 %v835, %v853
    %v870 = vadd.f32 %v836, %v854
    %v871 = vadd.f32 %v837, %v855
    %v872 = vadd.f32 %v838, %v856
    %v873 = vadd.f32 %v839, %v849
    %v874 = vadd.f32 %v840, %v850
    %v875 = vadd.f32 %v841, %v851
    %v876 = vadd.f32 %v842, %v852
    %v877 = vadd.f32 %v843, %v853
    %v878 = vadd.f32 %v844, %v854
    %v879 = vadd.f32 %v845, %v855
    %v880 = vadd.f32 %v846, %v856
    %v881 = vmax.f32 %v865, 0.0
    %v882 = vmax.f32 %v866, 0.0
    %v883 = vmax.f32 %v867, 0.0
    %v884 = vmax.f32 %v868, 0.0
    %v885 = vmax.f32 %v869, 0.0
    %v886 = vmax.f32 %v870, 0.0
    %v887 = vmax.f32 %v871, 0.0
    %v888 = vmax.f32 %v872, 0.0
    %v889 = vmax.f32 %v873, 0.0
    %v890 = vmax.f32 %v874, 0.0
    %v891 = vmax.f32 %v875, 0.0
    %v892 = vmax.f32 %v876, 0.0
    %v893 = vmax.f32 %v877, 0.0
    %v894 = vmax.f32 %v878, 0.0
    %v895 = vmax.f32 %v879, 0.0
    %v896 = vmax.f32 %v880, 0.0
    %s897 = smul.u32 2, 128
    %s898 = smul.u32 %s897, 8
    %s899 = sshll.u32 %s898, 4
    %900 = dma.done [#allocation4], %s899
    %v901 = vld [vmem:[#allocation2] sm:$0xff]
    %v902 = vld [vmem:[#allocation2 + $0x8] sm:$0xff]
    %v903 = vld [vmem:[#allocation2 + $0x10] sm:$0xff]
    %v904 = vld [vmem:[#allocation2 + $0x18] sm:$0xff]
    %v905 = vld [vmem:[#allocation2 + $0x20] sm:$0xff]
    %v906 = vld [vmem:[#allocation2 + $0x28] sm:$0xff]
    %v907 = vld [vmem:[#allocation2 + $0x30] sm:$0xff]
    %v908 = vld [vmem:[#allocation2 + $0x38] sm:$0xff]
    %v909 = vld [vmem:[#allocation2 + $0x40] sm:$0xff]
    %v910 = vld [vmem:[#allocation2 + $0x48] sm:$0xff]
    %v911 = vld [vmem:[#allocation2 + $0x50] sm:$0xff]
    %v912 = vld [vmem:[#allocation2 + $0x58] sm:$0xff]
    %v913 = vld [vmem:[#allocation2 + $0x60] sm:$0xff]
    %v914 = vld [vmem:[#allocation2 + $0x68] sm:$0xff]
    %v915 = vld [vmem:[#allocation2 + $0x70] sm:$0xff]
    %v916 = vld [vmem:[#allocation2 + $0x78] sm:$0xff]
    %v917 = vld [vmem:[#allocation2 + $0x80] sm:$0xff]
    %v918 = vld [vmem:[#allocation2 + $0x88] sm:$0xff]
    %v919 = vld [vmem:[#allocation2 + $0x90] sm:$0xff]
    %v920 = vld [vmem:[#allocation2 + $0x98] sm:$0xff]
    %v921 = vld [vmem:[#allocation2 + $0xa0] sm:$0xff]
    %v922 = vld [vmem:[#allocation2 + $0xa8] sm:$0xff]
    %v923 = vld [vmem:[#allocation2 + $0xb0] sm:$0xff]
    %v924 = vld [vmem:[#allocation2 + $0xb8] sm:$0xff]
    %v925 = vld [vmem:[#allocation2 + $0xc0] sm:$0xff]
    %v926 = vld [vmem:[#allocation2 + $0xc8] sm:$0xff]
    %v927 = vld [vmem:[#allocation2 + $0xd0] sm:$0xff]
    %v928 = vld [vmem:[#allocation2 + $0xd8] sm:$0xff]
    %v929 = vld [vmem:[#allocation2 + $0xe0] sm:$0xff]
    %v930 = vld [vmem:[#allocation2 + $0xe8] sm:$0xff]
    %v931 = vld [vmem:[#allocation2 + $0xf0] sm:$0xff]
    %v932 = vld [vmem:[#allocation2 + $0xf8] sm:$0xff]
    %v933 = vld [vmem:[#allocation2 + $0x100] sm:$0xff]
    %v934 = vld [vmem:[#allocation2 + $0x108] sm:$0xff]
    %v935 = vld [vmem:[#allocation2 + $0x110] sm:$0xff]
    %v936 = vld [vmem:[#allocation2 + $0x118] sm:$0xff]
    %v937 = vld [vmem:[#allocation2 + $0x120] sm:$0xff]
    %v938 = vld [vmem:[#allocation2 + $0x128] sm:$0xff]
    %v939 = vld [vmem:[#allocation2 + $0x130] sm:$0xff]
    %v940 = vld [vmem:[#allocation2 + $0x138] sm:$0xff]
    %v941 = vld [vmem:[#allocation2 + $0x140] sm:$0xff]
    %v942 = vld [vmem:[#allocation2 + $0x148] sm:$0xff]
    %v943 = vld [vmem:[#allocation2 + $0x150] sm:$0xff]
    %v944 = vld [vmem:[#allocation2 + $0x158] sm:$0xff]
    %v945 = vld [vmem:[#allocation2 + $0x160] sm:$0xff]
    %v946 = vld [vmem:[#allocation2 + $0x168] sm:$0xff]
    %v947 = vld [vmem:[#allocation2 + $0x170] sm:$0xff]
    %v948 = vld [vmem:[#allocation2 + $0x178] sm:$0xff]
    %v949 = vld [vmem:[#allocation2 + $0x180] sm:$0xff]
    %v950 = vld [vmem:[#allocation2 + $0x188] sm:$0xff]
    %v951 = vld [vmem:[#allocation2 + $0x190] sm:$0xff]
    %v952 = vld [vmem:[#allocation2 + $0x198] sm:$0xff]
    %v953 = vld [vmem:[#allocation2 + $0x1a0] sm:$0xff]
    %v954 = vld [vmem:[#allocation2 + $0x1a8] sm:$0xff]
    %v955 = vld [vmem:[#allocation2 + $0x1b0] sm:$0xff]
    %v956 = vld [vmem:[#allocation2 + $0x1b8] sm:$0xff]
    %v957 = vld [vmem:[#allocation2 + $0x1c0] sm:$0xff]
    %v958 = vld [vmem:[#allocation2 + $0x1c8] sm:$0xff]
    %v959 = vld [vmem:[#allocation2 + $0x1d0] sm:$0xff]
    %v960 = vld [vmem:[#allocation2 + $0x1d8] sm:$0xff]
    %v961 = vld [vmem:[#allocation2 + $0x1e0] sm:$0xff]
    %v962 = vld [vmem:[#allocation2 + $0x1e8] sm:$0xff]
    %v963 = vld [vmem:[#allocation2 + $0x1f0] sm:$0xff]
    %v964 = vld [vmem:[#allocation2 + $0x1f8] sm:$0xff]
    %v965 = vld [vmem:[#allocation2 + $0x200] sm:$0xff]
    %v966 = vld [vmem:[#allocation2 + $0x208] sm:$0xff]
    %v967 = vld [vmem:[#allocation2 + $0x210] sm:$0xff]
    %v968 = vld [vmem:[#allocation2 + $0x218] sm:$0xff]
    %v969 = vld [vmem:[#allocation2 + $0x220] sm:$0xff]
    %v970 = vld [vmem:[#allocation2 + $0x228] sm:$0xff]
    %v971 = vld [vmem:[#allocation2 + $0x230] sm:$0xff]
    %v972 = vld [vmem:[#allocation2 + $0x238] sm:$0xff]
    %v973 = vld [vmem:[#allocation2 + $0x240] sm:$0xff]
    %v974 = vld [vmem:[#allocation2 + $0x248] sm:$0xff]
    %v975 = vld [vmem:[#allocation2 + $0x250] sm:$0xff]
    %v976 = vld [vmem:[#allocation2 + $0x258] sm:$0xff]
    %v977 = vld [vmem:[#allocation2 + $0x260] sm:$0xff]
    %v978 = vld [vmem:[#allocation2 + $0x268] sm:$0xff]
    %v979 = vld [vmem:[#allocation2 + $0x270] sm:$0xff]
    %v980 = vld [vmem:[#allocation2 + $0x278] sm:$0xff]
    %v981 = vld [vmem:[#allocation2 + $0x280] sm:$0xff]
    %v982 = vld [vmem:[#allocation2 + $0x288] sm:$0xff]
    %v983 = vld [vmem:[#allocation2 + $0x290] sm:$0xff]
    %v984 = vld [vmem:[#allocation2 + $0x298] sm:$0xff]
    %v985 = vld [vmem:[#allocation2 + $0x2a0] sm:$0xff]
    %v986 = vld [vmem:[#allocation2 + $0x2a8] sm:$0xff]
    %v987 = vld [vmem:[#allocation2 + $0x2b0] sm:$0xff]
    %v988 = vld [vmem:[#allocation2 + $0x2b8] sm:$0xff]
    %v989 = vld [vmem:[#allocation2 + $0x2c0] sm:$0xff]
    %v990 = vld [vmem:[#allocation2 + $0x2c8] sm:$0xff]
    %v991 = vld [vmem:[#allocation2 + $0x2d0] sm:$0xff]
    %v992 = vld [vmem:[#allocation2 + $0x2d8] sm:$0xff]
    %v993 = vld [vmem:[#allocation2 + $0x2e0] sm:$0xff]
    %v994 = vld [vmem:[#allocation2 + $0x2e8] sm:$0xff]
    %v995 = vld [vmem:[#allocation2 + $0x2f0] sm:$0xff]
    %v996 = vld [vmem:[#allocation2 + $0x2f8] sm:$0xff]
    %v997 = vld [vmem:[#allocation2 + $0x300] sm:$0xff]
    %v998 = vld [vmem:[#allocation2 + $0x308] sm:$0xff]
    %v999 = vld [vmem:[#allocation2 + $0x310] sm:$0xff]
    %v1000 = vld [vmem:[#allocation2 + $0x318] sm:$0xff]
    %v1001 = vld [vmem:[#allocation2 + $0x320] sm:$0xff]
    %v1002 = vld [vmem:[#allocation2 + $0x328] sm:$0xff]
    %v1003 = vld [vmem:[#allocation2 + $0x330] sm:$0xff]
    %v1004 = vld [vmem:[#allocation2 + $0x338] sm:$0xff]
    %v1005 = vld [vmem:[#allocation2 + $0x340] sm:$0xff]
    %v1006 = vld [vmem:[#allocation2 + $0x348] sm:$0xff]
    %v1007 = vld [vmem:[#allocation2 + $0x350] sm:$0xff]
    %v1008 = vld [vmem:[#allocation2 + $0x358] sm:$0xff]
    %v1009 = vld [vmem:[#allocation2 + $0x360] sm:$0xff]
    %v1010 = vld [vmem:[#allocation2 + $0x368] sm:$0xff]
    %v1011 = vld [vmem:[#allocation2 + $0x370] sm:$0xff]
    %v1012 = vld [vmem:[#allocation2 + $0x378] sm:$0xff]
    %v1013 = vld [vmem:[#allocation2 + $0x380] sm:$0xff]
    %v1014 = vld [vmem:[#allocation2 + $0x388] sm:$0xff]
    %v1015 = vld [vmem:[#allocation2 + $0x390] sm:$0xff]
    %v1016 = vld [vmem:[#allocation2 + $0x398] sm:$0xff]
    %v1017 = vld [vmem:[#allocation2 + $0x3a0] sm:$0xff]
    %v1018 = vld [vmem:[#allocation2 + $0x3a8] sm:$0xff]
    %v1019 = vld [vmem:[#allocation2 + $0x3b0] sm:$0xff]
    %v1020 = vld [vmem:[#allocation2 + $0x3b8] sm:$0xff]
    %v1021 = vld [vmem:[#allocation2 + $0x3c0] sm:$0xff]
    %v1022 = vld [vmem:[#allocation2 + $0x3c8] sm:$0xff]
    %v1023 = vld [vmem:[#allocation2 + $0x3d0] sm:$0xff]
    %v1024 = vld [vmem:[#allocation2 + $0x3d8] sm:$0xff]
    %v1025 = vld [vmem:[#allocation2 + $0x3e0] sm:$0xff]
    %v1026 = vld [vmem:[#allocation2 + $0x3e8] sm:$0xff]
    %v1027 = vld [vmem:[#allocation2 + $0x3f0] sm:$0xff]
    %v1028 = vld [vmem:[#allocation2 + $0x3f8] sm:$0xff]
    %v1029 = vld [vmem:[#allocation2 + $0x400] sm:$0xff]
    %v1030 = vld [vmem:[#allocation2 + $0x408] sm:$0xff]
    %v1031 = vld [vmem:[#allocation2 + $0x410] sm:$0xff]
    %v1032 = vld [vmem:[#allocation2 + $0x418] sm:$0xff]
    %v1033 = vld [vmem:[#allocation2 + $0x420] sm:$0xff]
    %v1034 = vld [vmem:[#allocation2 + $0x428] sm:$0xff]
    %v1035 = vld [vmem:[#allocation2 + $0x430] sm:$0xff]
    %v1036 = vld [vmem:[#allocation2 + $0x438] sm:$0xff]
    %v1037 = vld [vmem:[#allocation2 + $0x440] sm:$0xff]
    %v1038 = vld [vmem:[#allocation2 + $0x448] sm:$0xff]
    %v1039 = vld [vmem:[#allocation2 + $0x450] sm:$0xff]
    %v1040 = vld [vmem:[#allocation2 + $0x458] sm:$0xff]
    %v1041 = vld [vmem:[#allocation2 + $0x460] sm:$0xff]
    %v1042 = vld [vmem:[#allocation2 + $0x468] sm:$0xff]
    %v1043 = vld [vmem:[#allocation2 + $0x470] sm:$0xff]
    %v1044 = vld [vmem:[#allocation2 + $0x478] sm:$0xff]
    %v1045 = vld [vmem:[#allocation2 + $0x480] sm:$0xff]
    %v1046 = vld [vmem:[#allocation2 + $0x488] sm:$0xff]
    %v1047 = vld [vmem:[#allocation2 + $0x490] sm:$0xff]
    %v1048 = vld [vmem:[#allocation2 + $0x498] sm:$0xff]
    %v1049 = vld [vmem:[#allocation2 + $0x4a0] sm:$0xff]
    %v1050 = vld [vmem:[#allocation2 + $0x4a8] sm:$0xff]
    %v1051 = vld [vmem:[#allocation2 + $0x4b0] sm:$0xff]
    %v1052 = vld [vmem:[#allocation2 + $0x4b8] sm:$0xff]
    %v1053 = vld [vmem:[#allocation2 + $0x4c0] sm:$0xff]
    %v1054 = vld [vmem:[#allocation2 + $0x4c8] sm:$0xff]
    %v1055 = vld [vmem:[#allocation2 + $0x4d0] sm:$0xff]
    %v1056 = vld [vmem:[#allocation2 + $0x4d8] sm:$0xff]
    %v1057 = vld [vmem:[#allocation2 + $0x4e0] sm:$0xff]
    %v1058 = vld [vmem:[#allocation2 + $0x4e8] sm:$0xff]
    %v1059 = vld [vmem:[#allocation2 + $0x4f0] sm:$0xff]
    %v1060 = vld [vmem:[#allocation2 + $0x4f8] sm:$0xff]
    %v1061 = vld [vmem:[#allocation2 + $0x500] sm:$0xff]
    %v1062 = vld [vmem:[#allocation2 + $0x508] sm:$0xff]
    %v1063 = vld [vmem:[#allocation2 + $0x510] sm:$0xff]
    %v1064 = vld [vmem:[#allocation2 + $0x518] sm:$0xff]
    %v1065 = vld [vmem:[#allocation2 + $0x520] sm:$0xff]
    %v1066 = vld [vmem:[#allocation2 + $0x528] sm:$0xff]
    %v1067 = vld [vmem:[#allocation2 + $0x530] sm:$0xff]
    %v1068 = vld [vmem:[#allocation2 + $0x538] sm:$0xff]
    %v1069 = vld [vmem:[#allocation2 + $0x540] sm:$0xff]
    %v1070 = vld [vmem:[#allocation2 + $0x548] sm:$0xff]
    %v1071 = vld [vmem:[#allocation2 + $0x550] sm:$0xff]
    %v1072 = vld [vmem:[#allocation2 + $0x558] sm:$0xff]
    %v1073 = vld [vmem:[#allocation2 + $0x560] sm:$0xff]
    %v1074 = vld [vmem:[#allocation2 + $0x568] sm:$0xff]
    %v1075 = vld [vmem:[#allocation2 + $0x570] sm:$0xff]
    %v1076 = vld [vmem:[#allocation2 + $0x578] sm:$0xff]
    %v1077 = vld [vmem:[#allocation2 + $0x580] sm:$0xff]
    %v1078 = vld [vmem:[#allocation2 + $0x588] sm:$0xff]
    %v1079 = vld [vmem:[#allocation2 + $0x590] sm:$0xff]
    %v1080 = vld [vmem:[#allocation2 + $0x598] sm:$0xff]
    %v1081 = vld [vmem:[#allocation2 + $0x5a0] sm:$0xff]
    %v1082 = vld [vmem:[#allocation2 + $0x5a8] sm:$0xff]
    %v1083 = vld [vmem:[#allocation2 + $0x5b0] sm:$0xff]
    %v1084 = vld [vmem:[#allocation2 + $0x5b8] sm:$0xff]
    %v1085 = vld [vmem:[#allocation2 + $0x5c0] sm:$0xff]
    %v1086 = vld [vmem:[#allocation2 + $0x5c8] sm:$0xff]
    %v1087 = vld [vmem:[#allocation2 + $0x5d0] sm:$0xff]
    %v1088 = vld [vmem:[#allocation2 + $0x5d8] sm:$0xff]
    %v1089 = vld [vmem:[#allocation2 + $0x5e0] sm:$0xff]
    %v1090 = vld [vmem:[#allocation2 + $0x5e8] sm:$0xff]
    %v1091 = vld [vmem:[#allocation2 + $0x5f0] sm:$0xff]
    %v1092 = vld [vmem:[#allocation2 + $0x5f8] sm:$0xff]
    %v1093 = vld [vmem:[#allocation2 + $0x600] sm:$0xff]
    %v1094 = vld [vmem:[#allocation2 + $0x608] sm:$0xff]
    %v1095 = vld [vmem:[#allocation2 + $0x610] sm:$0xff]
    %v1096 = vld [vmem:[#allocation2 + $0x618] sm:$0xff]
    %v1097 = vld [vmem:[#allocation2 + $0x620] sm:$0xff]
    %v1098 = vld [vmem:[#allocation2 + $0x628] sm:$0xff]
    %v1099 = vld [vmem:[#allocation2 + $0x630] sm:$0xff]
    %v1100 = vld [vmem:[#allocation2 + $0x638] sm:$0xff]
    %v1101 = vld [vmem:[#allocation2 + $0x640] sm:$0xff]
    %v1102 = vld [vmem:[#allocation2 + $0x648] sm:$0xff]
    %v1103 = vld [vmem:[#allocation2 + $0x650] sm:$0xff]
    %v1104 = vld [vmem:[#allocation2 + $0x658] sm:$0xff]
    %v1105 = vld [vmem:[#allocation2 + $0x660] sm:$0xff]
    %v1106 = vld [vmem:[#allocation2 + $0x668] sm:$0xff]
    %v1107 = vld [vmem:[#allocation2 + $0x670] sm:$0xff]
    %v1108 = vld [vmem:[#allocation2 + $0x678] sm:$0xff]
    %v1109 = vld [vmem:[#allocation2 + $0x680] sm:$0xff]
    %v1110 = vld [vmem:[#allocation2 + $0x688] sm:$0xff]
    %v1111 = vld [vmem:[#allocation2 + $0x690] sm:$0xff]
    %v1112 = vld [vmem:[#allocation2 + $0x698] sm:$0xff]
    %v1113 = vld [vmem:[#allocation2 + $0x6a0] sm:$0xff]
    %v1114 = vld [vmem:[#allocation2 + $0x6a8] sm:$0xff]
    %v1115 = vld [vmem:[#allocation2 + $0x6b0] sm:$0xff]
    %v1116 = vld [vmem:[#allocation2 + $0x6b8] sm:$0xff]
    %v1117 = vld [vmem:[#allocation2 + $0x6c0] sm:$0xff]
    %v1118 = vld [vmem:[#allocation2 + $0x6c8] sm:$0xff]
    %v1119 = vld [vmem:[#allocation2 + $0x6d0] sm:$0xff]
    %v1120 = vld [vmem:[#allocation2 + $0x6d8] sm:$0xff]
    %v1121 = vld [vmem:[#allocation2 + $0x6e0] sm:$0xff]
    %v1122 = vld [vmem:[#allocation2 + $0x6e8] sm:$0xff]
    %v1123 = vld [vmem:[#allocation2 + $0x6f0] sm:$0xff]
    %v1124 = vld [vmem:[#allocation2 + $0x6f8] sm:$0xff]
    %v1125 = vld [vmem:[#allocation2 + $0x700] sm:$0xff]
    %v1126 = vld [vmem:[#allocation2 + $0x708] sm:$0xff]
    %v1127 = vld [vmem:[#allocation2 + $0x710] sm:$0xff]
    %v1128 = vld [vmem:[#allocation2 + $0x718] sm:$0xff]
    %v1129 = vld [vmem:[#allocation2 + $0x720] sm:$0xff]
    %v1130 = vld [vmem:[#allocation2 + $0x728] sm:$0xff]
    %v1131 = vld [vmem:[#allocation2 + $0x730] sm:$0xff]
    %v1132 = vld [vmem:[#allocation2 + $0x738] sm:$0xff]
    %v1133 = vld [vmem:[#allocation2 + $0x740] sm:$0xff]
    %v1134 = vld [vmem:[#allocation2 + $0x748] sm:$0xff]
    %v1135 = vld [vmem:[#allocation2 + $0x750] sm:$0xff]
    %v1136 = vld [vmem:[#allocation2 + $0x758] sm:$0xff]
    %v1137 = vld [vmem:[#allocation2 + $0x760] sm:$0xff]
    %v1138 = vld [vmem:[#allocation2 + $0x768] sm:$0xff]
    %v1139 = vld [vmem:[#allocation2 + $0x770] sm:$0xff]
    %v1140 = vld [vmem:[#allocation2 + $0x778] sm:$0xff]
    %v1141 = vld [vmem:[#allocation2 + $0x780] sm:$0xff]
    %v1142 = vld [vmem:[#allocation2 + $0x788] sm:$0xff]
    %v1143 = vld [vmem:[#allocation2 + $0x790] sm:$0xff]
    %v1144 = vld [vmem:[#allocation2 + $0x798] sm:$0xff]
    %v1145 = vld [vmem:[#allocation2 + $0x7a0] sm:$0xff]
    %v1146 = vld [vmem:[#allocation2 + $0x7a8] sm:$0xff]
    %v1147 = vld [vmem:[#allocation2 + $0x7b0] sm:$0xff]
    %v1148 = vld [vmem:[#allocation2 + $0x7b8] sm:$0xff]
    %v1149 = vld [vmem:[#allocation2 + $0x7c0] sm:$0xff]
    %v1150 = vld [vmem:[#allocation2 + $0x7c8] sm:$0xff]
    %v1151 = vld [vmem:[#allocation2 + $0x7d0] sm:$0xff]
    %v1152 = vld [vmem:[#allocation2 + $0x7d8] sm:$0xff]
    %v1153 = vld [vmem:[#allocation2 + $0x7e0] sm:$0xff]
    %v1154 = vld [vmem:[#allocation2 + $0x7e8] sm:$0xff]
    %v1155 = vld [vmem:[#allocation2 + $0x7f0] sm:$0xff]
    %v1156 = vld [vmem:[#allocation2 + $0x7f8] sm:$0xff]
    %v1157 = vunpack.c.0.s8 %v901
    %v1158 = vunpack.c.0.s8 %v902
    %v1159 = vunpack.c.0.s8 %v903
    %v1160 = vunpack.c.0.s8 %v904
    %v1161 = vunpack.c.0.s8 %v905
    %v1162 = vunpack.c.0.s8 %v906
    %v1163 = vunpack.c.0.s8 %v907
    %v1164 = vunpack.c.0.s8 %v908
    %v1165 = vunpack.c.1.s8 %v901
    %v1166 = vunpack.c.1.s8 %v902
    %v1167 = vunpack.c.1.s8 %v903
    %v1168 = vunpack.c.1.s8 %v904
    %v1169 = vunpack.c.1.s8 %v905
    %v1170 = vunpack.c.1.s8 %v906
    %v1171 = vunpack.c.1.s8 %v907
    %v1172 = vunpack.c.1.s8 %v908
    %v1173 = vunpack.c.2.s8 %v901
    %v1174 = vunpack.c.2.s8 %v902
    %v1175 = vunpack.c.2.s8 %v903
    %v1176 = vunpack.c.2.s8 %v904
    %v1177 = vunpack.c.2.s8 %v905
    %v1178 = vunpack.c.2.s8 %v906
    %v1179 = vunpack.c.2.s8 %v907
    %v1180 = vunpack.c.2.s8 %v908
    %v1181 = vunpack.c.3.s8 %v901
    %v1182 = vunpack.c.3.s8 %v902
    %v1183 = vunpack.c.3.s8 %v903
    %v1184 = vunpack.c.3.s8 %v904
    %v1185 = vunpack.c.3.s8 %v905
    %v1186 = vunpack.c.3.s8 %v906
    %v1187 = vunpack.c.3.s8 %v907
    %v1188 = vunpack.c.3.s8 %v908
    %v1189 = vunpack.c.0.s8 %v909
    %v1190 = vunpack.c.0.s8 %v910
    %v1191 = vunpack.c.0.s8 %v911
    %v1192 = vunpack.c.0.s8 %v912
    %v1193 = vunpack.c.0.s8 %v913
    %v1194 = vunpack.c.0.s8 %v914
    %v1195 = vunpack.c.0.s8 %v915
    %v1196 = vunpack.c.0.s8 %v916
    %v1197 = vunpack.c.1.s8 %v909
    %v1198 = vunpack.c.1.s8 %v910
    %v1199 = vunpack.c.1.s8 %v911
    %v1200 = vunpack.c.1.s8 %v912
    %v1201 = vunpack.c.1.s8 %v913
    %v1202 = vunpack.c.1.s8 %v914
    %v1203 = vunpack.c.1.s8 %v915
    %v1204 = vunpack.c.1.s8 %v916
    %v1205 = vunpack.c.2.s8 %v909
    %v1206 = vunpack.c.2.s8 %v910
    %v1207 = vunpack.c.2.s8 %v911
    %v1208 = vunpack.c.2.s8 %v912
    %v1209 = vunpack.c.2.s8 %v913
    %v1210 = vunpack.c.2.s8 %v914
    %v1211 = vunpack.c.2.s8 %v915
    %v1212 = vunpack.c.2.s8 %v916
    %v1213 = vunpack.c.3.s8 %v909
    %v1214 = vunpack.c.3.s8 %v910
    %v1215 = vunpack.c.3.s8 %v911
    %v1216 = vunpack.c.3.s8 %v912
    %v1217 = vunpack.c.3.s8 %v913
    %v1218 = vunpack.c.3.s8 %v914
    %v1219 = vunpack.c.3.s8 %v915
    %v1220 = vunpack.c.3.s8 %v916
    %v1221 = vunpack.c.0.s8 %v917
    %v1222 = vunpack.c.0.s8 %v918
    %v1223 = vunpack.c.0.s8 %v919
    %v1224 = vunpack.c.0.s8 %v920
    %v1225 = vunpack.c.0.s8 %v921
    %v1226 = vunpack.c.0.s8 %v922
    %v1227 = vunpack.c.0.s8 %v923
    %v1228 = vunpack.c.0.s8 %v924
    %v1229 = vunpack.c.1.s8 %v917
    %v1230 = vunpack.c.1.s8 %v918
    %v1231 = vunpack.c.1.s8 %v919
    %v1232 = vunpack.c.1.s8 %v920
    %v1233 = vunpack.c.1.s8 %v921
    %v1234 = vunpack.c.1.s8 %v922
    %v1235 = vunpack.c.1.s8 %v923
    %v1236 = vunpack.c.1.s8 %v924
    %v1237 = vunpack.c.2.s8 %v917
    %v1238 = vunpack.c.2.s8 %v918
    %v1239 = vunpack.c.2.s8 %v919
    %v1240 = vunpack.c.2.s8 %v920
    %v1241 = vunpack.c.2.s8 %v921
    %v1242 = vunpack.c.2.s8 %v922
    %v1243 = vunpack.c.2.s8 %v923
    %v1244 = vunpack.c.2.s8 %v924
    %v1245 = vunpack.c.3.s8 %v917
    %v1246 = vunpack.c.3.s8 %v918
    %v1247 = vunpack.c.3.s8 %v919
    %v1248 = vunpack.c.3.s8 %v920
    %v1249 = vunpack.c.3.s8 %v921
    %v1250 = vunpack.c.3.s8 %v922
    %v1251 = vunpack.c.3.s8 %v923
    %v1252 = vunpack.c.3.s8 %v924
    %v1253 = vunpack.c.0.s8 %v925
    %v1254 = vunpack.c.0.s8 %v926
    %v1255 = vunpack.c.0.s8 %v927
    %v1256 = vunpack.c.0.s8 %v928
    %v1257 = vunpack.c.0.s8 %v929
    %v1258 = vunpack.c.0.s8 %v930
    %v1259 = vunpack.c.0.s8 %v931
    %v1260 = vunpack.c.0.s8 %v932
    %v1261 = vunpack.c.1.s8 %v925
    %v1262 = vunpack.c.1.s8 %v926
    %v1263 = vunpack.c.1.s8 %v927
    %v1264 = vunpack.c.1.s8 %v928
    %v1265 = vunpack.c.1.s8 %v929
    %v1266 = vunpack.c.1.s8 %v930
    %v1267 = vunpack.c.1.s8 %v931
    %v1268 = vunpack.c.1.s8 %v932
    %v1269 = vunpack.c.2.s8 %v925
    %v1270 = vunpack.c.2.s8 %v926
    %v1271 = vunpack.c.2.s8 %v927
    %v1272 = vunpack.c.2.s8 %v928
    %v1273 = vunpack.c.2.s8 %v929
    %v1274 = vunpack.c.2.s8 %v930
    %v1275 = vunpack.c.2.s8 %v931
    %v1276 = vunpack.c.2.s8 %v932
    %v1277 = vunpack.c.3.s8 %v925
    %v1278 = vunpack.c.3.s8 %v926
    %v1279 = vunpack.c.3.s8 %v927
    %v1280 = vunpack.c.3.s8 %v928
    %v1281 = vunpack.c.3.s8 %v929
    %v1282 = vunpack.c.3.s8 %v930
    %v1283 = vunpack.c.3.s8 %v931
    %v1284 = vunpack.c.3.s8 %v932
    %v1285 = vunpack.c.0.s8 %v933
    %v1286 = vunpack.c.0.s8 %v934
    %v1287 = vunpack.c.0.s8 %v935
    %v1288 = vunpack.c.0.s8 %v936
    %v1289 = vunpack.c.0.s8 %v937
    %v1290 = vunpack.c.0.s8 %v938
    %v1291 = vunpack.c.0.s8 %v939
    %v1292 = vunpack.c.0.s8 %v940
    %v1293 = vunpack.c.1.s8 %v933
    %v1294 = vunpack.c.1.s8 %v934
    %v1295 = vunpack.c.1.s8 %v935
    %v1296 = vunpack.c.1.s8 %v936
    %v1297 = vunpack.c.1.s8 %v937
    %v1298 = vunpack.c.1.s8 %v938
    %v1299 = vunpack.c.1.s8 %v939
    %v1300 = vunpack.c.1.s8 %v940
    %v1301 = vunpack.c.2.s8 %v933
    %v1302 = vunpack.c.2.s8 %v934
    %v1303 = vunpack.c.2.s8 %v935
    %v1304 = vunpack.c.2.s8 %v936
    %v1305 = vunpack.c.2.s8 %v937
    %v1306 = vunpack.c.2.s8 %v938
    %v1307 = vunpack.c.2.s8 %v939
    %v1308 = vunpack.c.2.s8 %v940
    %v1309 = vunpack.c.3.s8 %v933
    %v1310 = vunpack.c.3.s8 %v934
    %v1311 = vunpack.c.3.s8 %v935
    %v1312 = vunpack.c.3.s8 %v936
    %v1313 = vunpack.c.3.s8 %v937
    %v1314 = vunpack.c.3.s8 %v938
    %v1315 = vunpack.c.3.s8 %v939
    %v1316 = vunpack.c.3.s8 %v940
    %v1317 = vunpack.c.0.s8 %v941
    %v1318 = vunpack.c.0.s8 %v942
    %v1319 = vunpack.c.0.s8 %v943
    %v1320 = vunpack.c.0.s8 %v944
    %v1321 = vunpack.c.0.s8 %v945
    %v1322 = vunpack.c.0.s8 %v946
    %v1323 = vunpack.c.0.s8 %v947
    %v1324 = vunpack.c.0.s8 %v948
    %v1325 = vunpack.c.1.s8 %v941
    %v1326 = vunpack.c.1.s8 %v942
    %v1327 = vunpack.c.1.s8 %v943
    %v1328 = vunpack.c.1.s8 %v944
    %v1329 = vunpack.c.1.s8 %v945
    %v1330 = vunpack.c.1.s8 %v946
    %v1331 = vunpack.c.1.s8 %v947
    %v1332 = vunpack.c.1.s8 %v948
    %v1333 = vunpack.c.2.s8 %v941
    %v1334 = vunpack.c.2.s8 %v942
    %v1335 = vunpack.c.2.s8 %v943
    %v1336 = vunpack.c.2.s8 %v944
    %v1337 = vunpack.c.2.s8 %v945
    %v1338 = vunpack.c.2.s8 %v946
    %v1339 = vunpack.c.2.s8 %v947
    %v1340 = vunpack.c.2.s8 %v948
    %v1341 = vunpack.c.3.s8 %v941
    %v1342 = vunpack.c.3.s8 %v942
    %v1343 = vunpack.c.3.s8 %v943
    %v1344 = vunpack.c.3.s8 %v944
    %v1345 = vunpack.c.3.s8 %v945
    %v1346 = vunpack.c.3.s8 %v946
    %v1347 = vunpack.c.3.s8 %v947
    %v1348 = vunpack.c.3.s8 %v948
    %v1349 = vunpack.c.0.s8 %v949
    %v1350 = vunpack.c.0.s8 %v950
    %v1351 = vunpack.c.0.s8 %v951
    %v1352 = vunpack.c.0.s8 %v952
    %v1353 = vunpack.c.0.s8 %v953
    %v1354 = vunpack.c.0.s8 %v954
    %v1355 = vunpack.c.0.s8 %v955
    %v1356 = vunpack.c.0.s8 %v956
    %v1357 = vunpack.c.1.s8 %v949
    %v1358 = vunpack.c.1.s8 %v950
    %v1359 = vunpack.c.1.s8 %v951
    %v1360 = vunpack.c.1.s8 %v952
    %v1361 = vunpack.c.1.s8 %v953
    %v1362 = vunpack.c.1.s8 %v954
    %v1363 = vunpack.c.1.s8 %v955
    %v1364 = vunpack.c.1.s8 %v956
    %v1365 = vunpack.c.2.s8 %v949
    %v1366 = vunpack.c.2.s8 %v950
    %v1367 = vunpack.c.2.s8 %v951
    %v1368 = vunpack.c.2.s8 %v952
    %v1369 = vunpack.c.2.s8 %v953
    %v1370 = vunpack.c.2.s8 %v954
    %v1371 = vunpack.c.2.s8 %v955
    %v1372 = vunpack.c.2.s8 %v956
    %v1373 = vunpack.c.3.s8 %v949
    %v1374 = vunpack.c.3.s8 %v950
    %v1375 = vunpack.c.3.s8 %v951
    %v1376 = vunpack.c.3.s8 %v952
    %v1377 = vunpack.c.3.s8 %v953
    %v1378 = vunpack.c.3.s8 %v954
    %v1379 = vunpack.c.3.s8 %v955
    %v1380 = vunpack.c.3.s8 %v956
    %v1381 = vunpack.c.0.s8 %v957
    %v1382 = vunpack.c.0.s8 %v958
    %v1383 = vunpack.c.0.s8 %v959
    %v1384 = vunpack.c.0.s8 %v960
    %v1385 = vunpack.c.0.s8 %v961
    %v1386 = vunpack.c.0.s8 %v962
    %v1387 = vunpack.c.0.s8 %v963
    %v1388 = vunpack.c.0.s8 %v964
    %v1389 = vunpack.c.1.s8 %v957
    %v1390 = vunpack.c.1.s8 %v958
    %v1391 = vunpack.c.1.s8 %v959
    %v1392 = vunpack.c.1.s8 %v960
    %v1393 = vunpack.c.1.s8 %v961
    %v1394 = vunpack.c.1.s8 %v962
    %v1395 = vunpack.c.1.s8 %v963
    %v1396 = vunpack.c.1.s8 %v964
    %v1397 = vunpack.c.2.s8 %v957
    %v1398 = vunpack.c.2.s8 %v958
    %v1399 = vunpack.c.2.s8 %v959
    %v1400 = vunpack.c.2.s8 %v960
    %v1401 = vunpack.c.2.s8 %v961
    %v1402 = vunpack.c.2.s8 %v962
    %v1403 = vunpack.c.2.s8 %v963
    %v1404 = vunpack.c.2.s8 %v964
    %v1405 = vunpack.c.3.s8 %v957
    %v1406 = vunpack.c.3.s8 %v958
    %v1407 = vunpack.c.3.s8 %v959
    %v1408 = vunpack.c.3.s8 %v960
    %v1409 = vunpack.c.3.s8 %v961
    %v1410 = vunpack.c.3.s8 %v962
    %v1411 = vunpack.c.3.s8 %v963
    %v1412 = vunpack.c.3.s8 %v964
    %v1413 = vunpack.c.0.s8 %v965
    %v1414 = vunpack.c.0.s8 %v966
    %v1415 = vunpack.c.0.s8 %v967
    %v1416 = vunpack.c.0.s8 %v968
    %v1417 = vunpack.c.0.s8 %v969
    %v1418 = vunpack.c.0.s8 %v970
    %v1419 = vunpack.c.0.s8 %v971
    %v1420 = vunpack.c.0.s8 %v972
    %v1421 = vunpack.c.1.s8 %v965
    %v1422 = vunpack.c.1.s8 %v966
    %v1423 = vunpack.c.1.s8 %v967
    %v1424 = vunpack.c.1.s8 %v968
    %v1425 = vunpack.c.1.s8 %v969
    %v1426 = vunpack.c.1.s8 %v970
    %v1427 = vunpack.c.1.s8 %v971
    %v1428 = vunpack.c.1.s8 %v972
    %v1429 = vunpack.c.2.s8 %v965
    %v1430 = vunpack.c.2.s8 %v966
    %v1431 = vunpack.c.2.s8 %v967
    %v1432 = vunpack.c.2.s8 %v968
    %v1433 = vunpack.c.2.s8 %v969
    %v1434 = vunpack.c.2.s8 %v970
    %v1435 = vunpack.c.2.s8 %v971
    %v1436 = vunpack.c.2.s8 %v972
    %v1437 = vunpack.c.3.s8 %v965
    %v1438 = vunpack.c.3.s8 %v966
    %v1439 = vunpack.c.3.s8 %v967
    %v1440 = vunpack.c.3.s8 %v968
    %v1441 = vunpack.c.3.s8 %v969
    %v1442 = vunpack.c.3.s8 %v970
    %v1443 = vunpack.c.3.s8 %v971
    %v1444 = vunpack.c.3.s8 %v972
    %v1445 = vunpack.c.0.s8 %v973
    %v1446 = vunpack.c.0.s8 %v974
    %v1447 = vunpack.c.0.s8 %v975
    %v1448 = vunpack.c.0.s8 %v976
    %v1449 = vunpack.c.0.s8 %v977
    %v1450 = vunpack.c.0.s8 %v978
    %v1451 = vunpack.c.0.s8 %v979
    %v1452 = vunpack.c.0.s8 %v980
    %v1453 = vunpack.c.1.s8 %v973
    %v1454 = vunpack.c.1.s8 %v974
    %v1455 = vunpack.c.1.s8 %v975
    %v1456 = vunpack.c.1.s8 %v976
    %v1457 = vunpack.c.1.s8 %v977
    %v1458 = vunpack.c.1.s8 %v978
    %v1459 = vunpack.c.1.s8 %v979
    %v1460 = vunpack.c.1.s8 %v980
    %v1461 = vunpack.c.2.s8 %v973
    %v1462 = vunpack.c.2.s8 %v974
    %v1463 = vunpack.c.2.s8 %v975
    %v1464 = vunpack.c.2.s8 %v976
    %v1465 = vunpack.c.2.s8 %v977
    %v1466 = vunpack.c.2.s8 %v978
    %v1467 = vunpack.c.2.s8 %v979
    %v1468 = vunpack.c.2.s8 %v980
    %v1469 = vunpack.c.3.s8 %v973
    %v1470 = vunpack.c.3.s8 %v974
    %v1471 = vunpack.c.3.s8 %v975
    %v1472 = vunpack.c.3.s8 %v976
    %v1473 = vunpack.c.3.s8 %v977
    %v1474 = vunpack.c.3.s8 %v978
    %v1475 = vunpack.c.3.s8 %v979
    %v1476 = vunpack.c.3.s8 %v980
    %v1477 = vunpack.c.0.s8 %v981
    %v1478 = vunpack.c.0.s8 %v982
    %v1479 = vunpack.c.0.s8 %v983
    %v1480 = vunpack.c.0.s8 %v984
    %v1481 = vunpack.c.0.s8 %v985
    %v1482 = vunpack.c.0.s8 %v986
    %v1483 = vunpack.c.0.s8 %v987
    %v1484 = vunpack.c.0.s8 %v988
    %v1485 = vunpack.c.1.s8 %v981
    %v1486 = vunpack.c.1.s8 %v982
    %v1487 = vunpack.c.1.s8 %v983
    %v1488 = vunpack.c.1.s8 %v984
    %v1489 = vunpack.c.1.s8 %v985
    %v1490 = vunpack.c.1.s8 %v986
    %v1491 = vunpack.c.1.s8 %v987
    %v1492 = vunpack.c.1.s8 %v988
    %v1493 = vunpack.c.2.s8 %v981
    %v1494 = vunpack.c.2.s8 %v982
    %v1495 = vunpack.c.2.s8 %v983
    %v1496 = vunpack.c.2.s8 %v984
    %v1497 = vunpack.c.2.s8 %v985
    %v1498 = vunpack.c.2.s8 %v986
    %v1499 = vunpack.c.2.s8 %v987
    %v1500 = vunpack.c.2.s8 %v988
    %v1501 = vunpack.c.3.s8 %v981
    %v1502 = vunpack.c.3.s8 %v982
    %v1503 = vunpack.c.3.s8 %v983
    %v1504 = vunpack.c.3.s8 %v984
    %v1505 = vunpack.c.3.s8 %v985
    %v1506 = vunpack.c.3.s8 %v986
    %v1507 = vunpack.c.3.s8 %v987
    %v1508 = vunpack.c.3.s8 %v988
    %v1509 = vunpack.c.0.s8 %v989
    %v1510 = vunpack.c.0.s8 %v990
    %v1511 = vunpack.c.0.s8 %v991
    %v1512 = vunpack.c.0.s8 %v992
    %v1513 = vunpack.c.0.s8 %v993
    %v1514 = vunpack.c.0.s8 %v994
    %v1515 = vunpack.c.0.s8 %v995
    %v1516 = vunpack.c.0.s8 %v996
    %v1517 = vunpack.c.1.s8 %v989
    %v1518 = vunpack.c.1.s8 %v990
    %v1519 = vunpack.c.1.s8 %v991
    %v1520 = vunpack.c.1.s8 %v992
    %v1521 = vunpack.c.1.s8 %v993
    %v1522 = vunpack.c.1.s8 %v994
    %v1523 = vunpack.c.1.s8 %v995
    %v1524 = vunpack.c.1.s8 %v996
    %v1525 = vunpack.c.2.s8 %v989
    %v1526 = vunpack.c.2.s8 %v990
    %v1527 = vunpack.c.2.s8 %v991
    %v1528 = vunpack.c.2.s8 %v992
    %v1529 = vunpack.c.2.s8 %v993
    %v1530 = vunpack.c.2.s8 %v994
    %v1531 = vunpack.c.2.s8 %v995
    %v1532 = vunpack.c.2.s8 %v996
    %v1533 = vunpack.c.3.s8 %v989
    %v1534 = vunpack.c.3.s8 %v990
    %v1535 = vunpack.c.3.s8 %v991
    %v1536 = vunpack.c.3.s8 %v992
    %v1537 = vunpack.c.3.s8 %v993
    %v1538 = vunpack.c.3.s8 %v994
    %v1539 = vunpack.c.3.s8 %v995
    %v1540 = vunpack.c.3.s8 %v996
    %v1541 = vunpack.c.0.s8 %v997
    %v1542 = vunpack.c.0.s8 %v998
    %v1543 = vunpack.c.0.s8 %v999
    %v1544 = vunpack.c.0.s8 %v1000
    %v1545 = vunpack.c.0.s8 %v1001
    %v1546 = vunpack.c.0.s8 %v1002
    %v1547 = vunpack.c.0.s8 %v1003
    %v1548 = vunpack.c.0.s8 %v1004
    %v1549 = vunpack.c.1.s8 %v997
    %v1550 = vunpack.c.1.s8 %v998
    %v1551 = vunpack.c.1.s8 %v999
    %v1552 = vunpack.c.1.s8 %v1000
    %v1553 = vunpack.c.1.s8 %v1001
    %v1554 = vunpack.c.1.s8 %v1002
    %v1555 = vunpack.c.1.s8 %v1003
    %v1556 = vunpack.c.1.s8 %v1004
    %v1557 = vunpack.c.2.s8 %v997
    %v1558 = vunpack.c.2.s8 %v998
    %v1559 = vunpack.c.2.s8 %v999
    %v1560 = vunpack.c.2.s8 %v1000
    %v1561 = vunpack.c.2.s8 %v1001
    %v1562 = vunpack.c.2.s8 %v1002
    %v1563 = vunpack.c.2.s8 %v1003
    %v1564 = vunpack.c.2.s8 %v1004
    %v1565 = vunpack.c.3.s8 %v997
    %v1566 = vunpack.c.3.s8 %v998
    %v1567 = vunpack.c.3.s8 %v999
    %v1568 = vunpack.c.3.s8 %v1000
    %v1569 = vunpack.c.3.s8 %v1001
    %v1570 = vunpack.c.3.s8 %v1002
    %v1571 = vunpack.c.3.s8 %v1003
    %v1572 = vunpack.c.3.s8 %v1004
    %v1573 = vunpack.c.0.s8 %v1005
    %v1574 = vunpack.c.0.s8 %v1006
    %v1575 = vunpack.c.0.s8 %v1007
    %v1576 = vunpack.c.0.s8 %v1008
    %v1577 = vunpack.c.0.s8 %v1009
    %v1578 = vunpack.c.0.s8 %v1010
    %v1579 = vunpack.c.0.s8 %v1011
    %v1580 = vunpack.c.0.s8 %v1012
    %v1581 = vunpack.c.1.s8 %v1005
    %v1582 = vunpack.c.1.s8 %v1006
    %v1583 = vunpack.c.1.s8 %v1007
    %v1584 = vunpack.c.1.s8 %v1008
    %v1585 = vunpack.c.1.s8 %v1009
    %v1586 = vunpack.c.1.s8 %v1010
    %v1587 = vunpack.c.1.s8 %v1011
    %v1588 = vunpack.c.1.s8 %v1012
    %v1589 = vunpack.c.2.s8 %v1005
    %v1590 = vunpack.c.2.s8 %v1006
    %v1591 = vunpack.c.2.s8 %v1007
    %v1592 = vunpack.c.2.s8 %v1008
    %v1593 = vunpack.c.2.s8 %v1009
    %v1594 = vunpack.c.2.s8 %v1010
    %v1595 = vunpack.c.2.s8 %v1011
    %v1596 = vunpack.c.2.s8 %v1012
    %v1597 = vunpack.c.3.s8 %v1005
    %v1598 = vunpack.c.3.s8 %v1006
    %v1599 = vunpack.c.3.s8 %v1007
    %v1600 = vunpack.c.3.s8 %v1008
    %v1601 = vunpack.c.3.s8 %v1009
    %v1602 = vunpack.c.3.s8 %v1010
    %v1603 = vunpack.c.3.s8 %v1011
    %v1604 = vunpack.c.3.s8 %v1012
    %v1605 = vunpack.c.0.s8 %v1013
    %v1606 = vunpack.c.0.s8 %v1014
    %v1607 = vunpack.c.0.s8 %v1015
    %v1608 = vunpack.c.0.s8 %v1016
    %v1609 = vunpack.c.0.s8 %v1017
    %v1610 = vunpack.c.0.s8 %v1018
    %v1611 = vunpack.c.0.s8 %v1019
    %v1612 = vunpack.c.0.s8 %v1020
    %v1613 = vunpack.c.1.s8 %v1013
    %v1614 = vunpack.c.1.s8 %v1014
    %v1615 = vunpack.c.1.s8 %v1015
    %v1616 = vunpack.c.1.s8 %v1016
    %v1617 = vunpack.c.1.s8 %v1017
    %v1618 = vunpack.c.1.s8 %v1018
    %v1619 = vunpack.c.1.s8 %v1019
    %v1620 = vunpack.c.1.s8 %v1020
    %v1621 = vunpack.c.2.s8 %v1013
    %v1622 = vunpack.c.2.s8 %v1014
    %v1623 = vunpack.c.2.s8 %v1015
    %v1624 = vunpack.c.2.s8 %v1016
    %v1625 = vunpack.c.2.s8 %v1017
    %v1626 = vunpack.c.2.s8 %v1018
    %v1627 = vunpack.c.2.s8 %v1019
    %v1628 = vunpack.c.2.s8 %v1020
    %v1629 = vunpack.c.3.s8 %v1013
    %v1630 = vunpack.c.3.s8 %v1014
    %v1631 = vunpack.c.3.s8 %v1015
    %v1632 = vunpack.c.3.s8 %v1016
    %v1633 = vunpack.c.3.s8 %v1017
    %v1634 = vunpack.c.3.s8 %v1018
    %v1635 = vunpack.c.3.s8 %v1019
    %v1636 = vunpack.c.3.s8 %v1020
    %v1637 = vunpack.c.0.s8 %v1021
    %v1638 = vunpack.c.0.s8 %v1022
    %v1639 = vunpack.c.0.s8 %v1023
    %v1640 = vunpack.c.0.s8 %v1024
    %v1641 = vunpack.c.0.s8 %v1025
    %v1642 = vunpack.c.0.s8 %v1026
    %v1643 = vunpack.c.0.s8 %v1027
    %v1644 = vunpack.c.0.s8 %v1028
    %v1645 = vunpack.c.1.s8 %v1021
    %v1646 = vunpack.c.1.s8 %v1022
    %v1647 = vunpack.c.1.s8 %v1023
    %v1648 = vunpack.c.1.s8 %v1024
    %v1649 = vunpack.c.1.s8 %v1025
    %v1650 = vunpack.c.1.s8 %v1026
    %v1651 = vunpack.c.1.s8 %v1027
    %v1652 = vunpack.c.1.s8 %v1028
    %v1653 = vunpack.c.2.s8 %v1021
    %v1654 = vunpack.c.2.s8 %v1022
    %v1655 = vunpack.c.2.s8 %v1023
    %v1656 = vunpack.c.2.s8 %v1024
    %v1657 = vunpack.c.2.s8 %v1025
    %v1658 = vunpack.c.2.s8 %v1026
    %v1659 = vunpack.c.2.s8 %v1027
    %v1660 = vunpack.c.2.s8 %v1028
    %v1661 = vunpack.c.3.s8 %v1021
    %v1662 = vunpack.c.3.s8 %v1022
    %v1663 = vunpack.c.3.s8 %v1023
    %v1664 = vunpack.c.3.s8 %v1024
    %v1665 = vunpack.c.3.s8 %v1025
    %v1666 = vunpack.c.3.s8 %v1026
    %v1667 = vunpack.c.3.s8 %v1027
    %v1668 = vunpack.c.3.s8 %v1028
    %v1669 = vunpack.c.0.s8 %v1029
    %v1670 = vunpack.c.0.s8 %v1030
    %v1671 = vunpack.c.0.s8 %v1031
    %v1672 = vunpack.c.0.s8 %v1032
    %v1673 = vunpack.c.0.s8 %v1033
    %v1674 = vunpack.c.0.s8 %v1034
    %v1675 = vunpack.c.0.s8 %v1035
    %v1676 = vunpack.c.0.s8 %v1036
    %v1677 = vunpack.c.1.s8 %v1029
    %v1678 = vunpack.c.1.s8 %v1030
    %v1679 = vunpack.c.1.s8 %v1031
    %v1680 = vunpack.c.1.s8 %v1032
    %v1681 = vunpack.c.1.s8 %v1033
    %v1682 = vunpack.c.1.s8 %v1034
    %v1683 = vunpack.c.1.s8 %v1035
    %v1684 = vunpack.c.1.s8 %v1036
    %v1685 = vunpack.c.2.s8 %v1029
    %v1686 = vunpack.c.2.s8 %v1030
    %v1687 = vunpack.c.2.s8 %v1031
    %v1688 = vunpack.c.2.s8 %v1032
    %v1689 = vunpack.c.2.s8 %v1033
    %v1690 = vunpack.c.2.s8 %v1034
    %v1691 = vunpack.c.2.s8 %v1035
    %v1692 = vunpack.c.2.s8 %v1036
    %v1693 = vunpack.c.3.s8 %v1029
    %v1694 = vunpack.c.3.s8 %v1030
    %v1695 = vunpack.c.3.s8 %v1031
    %v1696 = vunpack.c.3.s8 %v1032
    %v1697 = vunpack.c.3.s8 %v1033
    %v1698 = vunpack.c.3.s8 %v1034
    %v1699 = vunpack.c.3.s8 %v1035
    %v1700 = vunpack.c.3.s8 %v1036
    %v1701 = vunpack.c.0.s8 %v1037
    %v1702 = vunpack.c.0.s8 %v1038
    %v1703 = vunpack.c.0.s8 %v1039
    %v1704 = vunpack.c.0.s8 %v1040
    %v1705 = vunpack.c.0.s8 %v1041
    %v1706 = vunpack.c.0.s8 %v1042
    %v1707 = vunpack.c.0.s8 %v1043
    %v1708 = vunpack.c.0.s8 %v1044
    %v1709 = vunpack.c.1.s8 %v1037
    %v1710 = vunpack.c.1.s8 %v1038
    %v1711 = vunpack.c.1.s8 %v1039
    %v1712 = vunpack.c.1.s8 %v1040
    %v1713 = vunpack.c.1.s8 %v1041
    %v1714 = vunpack.c.1.s8 %v1042
    %v1715 = vunpack.c.1.s8 %v1043
    %v1716 = vunpack.c.1.s8 %v1044
    %v1717 = vunpack.c.2.s8 %v1037
    %v1718 = vunpack.c.2.s8 %v1038
    %v1719 = vunpack.c.2.s8 %v1039
    %v1720 = vunpack.c.2.s8 %v1040
    %v1721 = vunpack.c.2.s8 %v1041
    %v1722 = vunpack.c.2.s8 %v1042
    %v1723 = vunpack.c.2.s8 %v1043
    %v1724 = vunpack.c.2.s8 %v1044
    %v1725 = vunpack.c.3.s8 %v1037
    %v1726 = vunpack.c.3.s8 %v1038
    %v1727 = vunpack.c.3.s8 %v1039
    %v1728 = vunpack.c.3.s8 %v1040
    %v1729 = vunpack.c.3.s8 %v1041
    %v1730 = vunpack.c.3.s8 %v1042
    %v1731 = vunpack.c.3.s8 %v1043
    %v1732 = vunpack.c.3.s8 %v1044
    %v1733 = vunpack.c.0.s8 %v1045
    %v1734 = vunpack.c.0.s8 %v1046
    %v1735 = vunpack.c.0.s8 %v1047
    %v1736 = vunpack.c.0.s8 %v1048
    %v1737 = vunpack.c.0.s8 %v1049
    %v1738 = vunpack.c.0.s8 %v1050
    %v1739 = vunpack.c.0.s8 %v1051
    %v1740 = vunpack.c.0.s8 %v1052
    %v1741 = vunpack.c.1.s8 %v1045
    %v1742 = vunpack.c.1.s8 %v1046
    %v1743 = vunpack.c.1.s8 %v1047
    %v1744 = vunpack.c.1.s8 %v1048
    %v1745 = vunpack.c.1.s8 %v1049
    %v1746 = vunpack.c.1.s8 %v1050
    %v1747 = vunpack.c.1.s8 %v1051
    %v1748 = vunpack.c.1.s8 %v1052
    %v1749 = vunpack.c.2.s8 %v1045
    %v1750 = vunpack.c.2.s8 %v1046
    %v1751 = vunpack.c.2.s8 %v1047
    %v1752 = vunpack.c.2.s8 %v1048
    %v1753 = vunpack.c.2.s8 %v1049
    %v1754 = vunpack.c.2.s8 %v1050
    %v1755 = vunpack.c.2.s8 %v1051
    %v1756 = vunpack.c.2.s8 %v1052
    %v1757 = vunpack.c.3.s8 %v1045
    %v1758 = vunpack.c.3.s8 %v1046
    %v1759 = vunpack.c.3.s8 %v1047
    %v1760 = vunpack.c.3.s8 %v1048
    %v1761 = vunpack.c.3.s8 %v1049
    %v1762 = vunpack.c.3.s8 %v1050
    %v1763 = vunpack.c.3.s8 %v1051
    %v1764 = vunpack.c.3.s8 %v1052
    %v1765 = vunpack.c.0.s8 %v1053
    %v1766 = vunpack.c.0.s8 %v1054
    %v1767 = vunpack.c.0.s8 %v1055
    %v1768 = vunpack.c.0.s8 %v1056
    %v1769 = vunpack.c.0.s8 %v1057
    %v1770 = vunpack.c.0.s8 %v1058
    %v1771 = vunpack.c.0.s8 %v1059
    %v1772 = vunpack.c.0.s8 %v1060
    %v1773 = vunpack.c.1.s8 %v1053
    %v1774 = vunpack.c.1.s8 %v1054
    %v1775 = vunpack.c.1.s8 %v1055
    %v1776 = vunpack.c.1.s8 %v1056
    %v1777 = vunpack.c.1.s8 %v1057
    %v1778 = vunpack.c.1.s8 %v1058
    %v1779 = vunpack.c.1.s8 %v1059
    %v1780 = vunpack.c.1.s8 %v1060
    %v1781 = vunpack.c.2.s8 %v1053
    %v1782 = vunpack.c.2.s8 %v1054
    %v1783 = vunpack.c.2.s8 %v1055
    %v1784 = vunpack.c.2.s8 %v1056
    %v1785 = vunpack.c.2.s8 %v1057
    %v1786 = vunpack.c.2.s8 %v1058
    %v1787 = vunpack.c.2.s8 %v1059
    %v1788 = vunpack.c.2.s8 %v1060
    %v1789 = vunpack.c.3.s8 %v1053
    %v1790 = vunpack.c.3.s8 %v1054
    %v1791 = vunpack.c.3.s8 %v1055
    %v1792 = vunpack.c.3.s8 %v1056
    %v1793 = vunpack.c.3.s8 %v1057
    %v1794 = vunpack.c.3.s8 %v1058
    %v1795 = vunpack.c.3.s8 %v1059
    %v1796 = vunpack.c.3.s8 %v1060
    %v1797 = vunpack.c.0.s8 %v1061
    %v1798 = vunpack.c.0.s8 %v1062
    %v1799 = vunpack.c.0.s8 %v1063
    %v1800 = vunpack.c.0.s8 %v1064
    %v1801 = vunpack.c.0.s8 %v1065
    %v1802 = vunpack.c.0.s8 %v1066
    %v1803 = vunpack.c.0.s8 %v1067
    %v1804 = vunpack.c.0.s8 %v1068
    %v1805 = vunpack.c.1.s8 %v1061
    %v1806 = vunpack.c.1.s8 %v1062
    %v1807 = vunpack.c.1.s8 %v1063
    %v1808 = vunpack.c.1.s8 %v1064
    %v1809 = vunpack.c.1.s8 %v1065
    %v1810 = vunpack.c.1.s8 %v1066
    %v1811 = vunpack.c.1.s8 %v1067
    %v1812 = vunpack.c.1.s8 %v1068
    %v1813 = vunpack.c.2.s8 %v1061
    %v1814 = vunpack.c.2.s8 %v1062
    %v1815 = vunpack.c.2.s8 %v1063
    %v1816 = vunpack.c.2.s8 %v1064
    %v1817 = vunpack.c.2.s8 %v1065
    %v1818 = vunpack.c.2.s8 %v1066
    %v1819 = vunpack.c.2.s8 %v1067
    %v1820 = vunpack.c.2.s8 %v1068
    %v1821 = vunpack.c.3.s8 %v1061
    %v1822 = vunpack.c.3.s8 %v1062
    %v1823 = vunpack.c.3.s8 %v1063
    %v1824 = vunpack.c.3.s8 %v1064
    %v1825 = vunpack.c.3.s8 %v1065
    %v1826 = vunpack.c.3.s8 %v1066
    %v1827 = vunpack.c.3.s8 %v1067
    %v1828 = vunpack.c.3.s8 %v1068
    %v1829 = vunpack.c.0.s8 %v1069
    %v1830 = vunpack.c.0.s8 %v1070
    %v1831 = vunpack.c.0.s8 %v1071
    %v1832 = vunpack.c.0.s8 %v1072
    %v1833 = vunpack.c.0.s8 %v1073
    %v1834 = vunpack.c.0.s8 %v1074
    %v1835 = vunpack.c.0.s8 %v1075
    %v1836 = vunpack.c.0.s8 %v1076
    %v1837 = vunpack.c.1.s8 %v1069
    %v1838 = vunpack.c.1.s8 %v1070
    %v1839 = vunpack.c.1.s8 %v1071
    %v1840 = vunpack.c.1.s8 %v1072
    %v1841 = vunpack.c.1.s8 %v1073
    %v1842 = vunpack.c.1.s8 %v1074
    %v1843 = vunpack.c.1.s8 %v1075
    %v1844 = vunpack.c.1.s8 %v1076
    %v1845 = vunpack.c.2.s8 %v1069
    %v1846 = vunpack.c.2.s8 %v1070
    %v1847 = vunpack.c.2.s8 %v1071
    %v1848 = vunpack.c.2.s8 %v1072
    %v1849 = vunpack.c.2.s8 %v1073
    %v1850 = vunpack.c.2.s8 %v1074
    %v1851 = vunpack.c.2.s8 %v1075
    %v1852 = vunpack.c.2.s8 %v1076
    %v1853 = vunpack.c.3.s8 %v1069
    %v1854 = vunpack.c.3.s8 %v1070
    %v1855 = vunpack.c.3.s8 %v1071
    %v1856 = vunpack.c.3.s8 %v1072
    %v1857 = vunpack.c.3.s8 %v1073
    %v1858 = vunpack.c.3.s8 %v1074
    %v1859 = vunpack.c.3.s8 %v1075
    %v1860 = vunpack.c.3.s8 %v1076
    %v1861 = vunpack.c.0.s8 %v1077
    %v1862 = vunpack.c.0.s8 %v1078
    %v1863 = vunpack.c.0.s8 %v1079
    %v1864 = vunpack.c.0.s8 %v1080
    %v1865 = vunpack.c.0.s8 %v1081
    %v1866 = vunpack.c.0.s8 %v1082
    %v1867 = vunpack.c.0.s8 %v1083
    %v1868 = vunpack.c.0.s8 %v1084
    %v1869 = vunpack.c.1.s8 %v1077
    %v1870 = vunpack.c.1.s8 %v1078
    %v1871 = vunpack.c.1.s8 %v1079
    %v1872 = vunpack.c.1.s8 %v1080
    %v1873 = vunpack.c.1.s8 %v1081
    %v1874 = vunpack.c.1.s8 %v1082
    %v1875 = vunpack.c.1.s8 %v1083
    %v1876 = vunpack.c.1.s8 %v1084
    %v1877 = vunpack.c.2.s8 %v1077
    %v1878 = vunpack.c.2.s8 %v1078
    %v1879 = vunpack.c.2.s8 %v1079
    %v1880 = vunpack.c.2.s8 %v1080
    %v1881 = vunpack.c.2.s8 %v1081
    %v1882 = vunpack.c.2.s8 %v1082
    %v1883 = vunpack.c.2.s8 %v1083
    %v1884 = vunpack.c.2.s8 %v1084
    %v1885 = vunpack.c.3.s8 %v1077
    %v1886 = vunpack.c.3.s8 %v1078
    %v1887 = vunpack.c.3.s8 %v1079
    %v1888 = vunpack.c.3.s8 %v1080
    %v1889 = vunpack.c.3.s8 %v1081
    %v1890 = vunpack.c.3.s8 %v1082
    %v1891 = vunpack.c.3.s8 %v1083
    %v1892 = vunpack.c.3.s8 %v1084
    %v1893 = vunpack.c.0.s8 %v1085
    %v1894 = vunpack.c.0.s8 %v1086
    %v1895 = vunpack.c.0.s8 %v1087
    %v1896 = vunpack.c.0.s8 %v1088
    %v1897 = vunpack.c.0.s8 %v1089
    %v1898 = vunpack.c.0.s8 %v1090
    %v1899 = vunpack.c.0.s8 %v1091
    %v1900 = vunpack.c.0.s8 %v1092
    %v1901 = vunpack.c.1.s8 %v1085
    %v1902 = vunpack.c.1.s8 %v1086
    %v1903 = vunpack.c.1.s8 %v1087
    %v1904 = vunpack.c.1.s8 %v1088
    %v1905 = vunpack.c.1.s8 %v1089
    %v1906 = vunpack.c.1.s8 %v1090
    %v1907 = vunpack.c.1.s8 %v1091
    %v1908 = vunpack.c.1.s8 %v1092
    %v1909 = vunpack.c.2.s8 %v1085
    %v1910 = vunpack.c.2.s8 %v1086
    %v1911 = vunpack.c.2.s8 %v1087
    %v1912 = vunpack.c.2.s8 %v1088
    %v1913 = vunpack.c.2.s8 %v1089
    %v1914 = vunpack.c.2.s8 %v1090
    %v1915 = vunpack.c.2.s8 %v1091
    %v1916 = vunpack.c.2.s8 %v1092
    %v1917 = vunpack.c.3.s8 %v1085
    %v1918 = vunpack.c.3.s8 %v1086
    %v1919 = vunpack.c.3.s8 %v1087
    %v1920 = vunpack.c.3.s8 %v1088
    %v1921 = vunpack.c.3.s8 %v1089
    %v1922 = vunpack.c.3.s8 %v1090
    %v1923 = vunpack.c.3.s8 %v1091
    %v1924 = vunpack.c.3.s8 %v1092
    %v1925 = vunpack.c.0.s8 %v1093
    %v1926 = vunpack.c.0.s8 %v1094
    %v1927 = vunpack.c.0.s8 %v1095
    %v1928 = vunpack.c.0.s8 %v1096
    %v1929 = vunpack.c.0.s8 %v1097
    %v1930 = vunpack.c.0.s8 %v1098
    %v1931 = vunpack.c.0.s8 %v1099
    %v1932 = vunpack.c.0.s8 %v1100
    %v1933 = vunpack.c.1.s8 %v1093
    %v1934 = vunpack.c.1.s8 %v1094
    %v1935 = vunpack.c.1.s8 %v1095
    %v1936 = vunpack.c.1.s8 %v1096
    %v1937 = vunpack.c.1.s8 %v1097
    %v1938 = vunpack.c.1.s8 %v1098
    %v1939 = vunpack.c.1.s8 %v1099
    %v1940 = vunpack.c.1.s8 %v1100
    %v1941 = vunpack.c.2.s8 %v1093
    %v1942 = vunpack.c.2.s8 %v1094
    %v1943 = vunpack.c.2.s8 %v1095
    %v1944 = vunpack.c.2.s8 %v1096
    %v1945 = vunpack.c.2.s8 %v1097
    %v1946 = vunpack.c.2.s8 %v1098
    %v1947 = vunpack.c.2.s8 %v1099
    %v1948 = vunpack.c.2.s8 %v1100
    %v1949 = vunpack.c.3.s8 %v1093
    %v1950 = vunpack.c.3.s8 %v1094
    %v1951 = vunpack.c.3.s8 %v1095
    %v1952 = vunpack.c.3.s8 %v1096
    %v1953 = vunpack.c.3.s8 %v1097
    %v1954 = vunpack.c.3.s8 %v1098
    %v1955 = vunpack.c.3.s8 %v1099
    %v1956 = vunpack.c.3.s8 %v1100
    %v1957 = vunpack.c.0.s8 %v1101
    %v1958 = vunpack.c.0.s8 %v1102
    %v1959 = vunpack.c.0.s8 %v1103
    %v1960 = vunpack.c.0.s8 %v1104
    %v1961 = vunpack.c.0.s8 %v1105
    %v1962 = vunpack.c.0.s8 %v1106
    %v1963 = vunpack.c.0.s8 %v1107
    %v1964 = vunpack.c.0.s8 %v1108
    %v1965 = vunpack.c.1.s8 %v1101
    %v1966 = vunpack.c.1.s8 %v1102
    %v1967 = vunpack.c.1.s8 %v1103
    %v1968 = vunpack.c.1.s8 %v1104
    %v1969 = vunpack.c.1.s8 %v1105
    %v1970 = vunpack.c.1.s8 %v1106
    %v1971 = vunpack.c.1.s8 %v1107
    %v1972 = vunpack.c.1.s8 %v1108
    %v1973 = vunpack.c.2.s8 %v1101
    %v1974 = vunpack.c.2.s8 %v1102
    %v1975 = vunpack.c.2.s8 %v1103
    %v1976 = vunpack.c.2.s8 %v1104
    %v1977 = vunpack.c.2.s8 %v1105
    %v1978 = vunpack.c.2.s8 %v1106
    %v1979 = vunpack.c.2.s8 %v1107
    %v1980 = vunpack.c.2.s8 %v1108
    %v1981 = vunpack.c.3.s8 %v1101
    %v1982 = vunpack.c.3.s8 %v1102
    %v1983 = vunpack.c.3.s8 %v1103
    %v1984 = vunpack.c.3.s8 %v1104
    %v1985 = vunpack.c.3.s8 %v1105
    %v1986 = vunpack.c.3.s8 %v1106
    %v1987 = vunpack.c.3.s8 %v1107
    %v1988 = vunpack.c.3.s8 %v1108
    %v1989 = vunpack.c.0.s8 %v1109
    %v1990 = vunpack.c.0.s8 %v1110
    %v1991 = vunpack.c.0.s8 %v1111
    %v1992 = vunpack.c.0.s8 %v1112
    %v1993 = vunpack.c.0.s8 %v1113
    %v1994 = vunpack.c.0.s8 %v1114
    %v1995 = vunpack.c.0.s8 %v1115
    %v1996 = vunpack.c.0.s8 %v1116
    %v1997 = vunpack.c.1.s8 %v1109
    %v1998 = vunpack.c.1.s8 %v1110
    %v1999 = vunpack.c.1.s8 %v1111
    %v2000 = vunpack.c.1.s8 %v1112
    %v2001 = vunpack.c.1.s8 %v1113
    %v2002 = vunpack.c.1.s8 %v1114
    %v2003 = vunpack.c.1.s8 %v1115
    %v2004 = vunpack.c.1.s8 %v1116
    %v2005 = vunpack.c.2.s8 %v1109
    %v2006 = vunpack.c.2.s8 %v1110
    %v2007 = vunpack.c.2.s8 %v1111
    %v2008 = vunpack.c.2.s8 %v1112
    %v2009 = vunpack.c.2.s8 %v1113
    %v2010 = vunpack.c.2.s8 %v1114
    %v2011 = vunpack.c.2.s8 %v1115
    %v2012 = vunpack.c.2.s8 %v1116
    %v2013 = vunpack.c.3.s8 %v1109
    %v2014 = vunpack.c.3.s8 %v1110
    %v2015 = vunpack.c.3.s8 %v1111
    %v2016 = vunpack.c.3.s8 %v1112
    %v2017 = vunpack.c.3.s8 %v1113
    %v2018 = vunpack.c.3.s8 %v1114
    %v2019 = vunpack.c.3.s8 %v1115
    %v2020 = vunpack.c.3.s8 %v1116
    %v2021 = vunpack.c.0.s8 %v1117
    %v2022 = vunpack.c.0.s8 %v1118
    %v2023 = vunpack.c.0.s8 %v1119
    %v2024 = vunpack.c.0.s8 %v1120
    %v2025 = vunpack.c.0.s8 %v1121
    %v2026 = vunpack.c.0.s8 %v1122
    %v2027 = vunpack.c.0.s8 %v1123
    %v2028 = vunpack.c.0.s8 %v1124
    %v2029 = vunpack.c.1.s8 %v1117
    %v2030 = vunpack.c.1.s8 %v1118
    %v2031 = vunpack.c.1.s8 %v1119
    %v2032 = vunpack.c.1.s8 %v1120
    %v2033 = vunpack.c.1.s8 %v1121
    %v2034 = vunpack.c.1.s8 %v1122
    %v2035 = vunpack.c.1.s8 %v1123
    %v2036 = vunpack.c.1.s8 %v1124
    %v2037 = vunpack.c.2.s8 %v1117
    %v2038 = vunpack.c.2.s8 %v1118
    %v2039 = vunpack.c.2.s8 %v1119
    %v2040 = vunpack.c.2.s8 %v1120
    %v2041 = vunpack.c.2.s8 %v1121
    %v2042 = vunpack.c.2.s8 %v1122
    %v2043 = vunpack.c.2.s8 %v1123
    %v2044 = vunpack.c.2.s8 %v1124
    %v2045 = vunpack.c.3.s8 %v1117
    %v2046 = vunpack.c.3.s8 %v1118
    %v2047 = vunpack.c.3.s8 %v1119
    %v2048 = vunpack.c.3.s8 %v1120
    %v2049 = vunpack.c.3.s8 %v1121
    %v2050 = vunpack.c.3.s8 %v1122
    %v2051 = vunpack.c.3.s8 %v1123
    %v2052 = vunpack.c.3.s8 %v1124
    %v2053 = vunpack.c.0.s8 %v1125
    %v2054 = vunpack.c.0.s8 %v1126
    %v2055 = vunpack.c.0.s8 %v1127
    %v2056 = vunpack.c.0.s8 %v1128
    %v2057 = vunpack.c.0.s8 %v1129
    %v2058 = vunpack.c.0.s8 %v1130
    %v2059 = vunpack.c.0.s8 %v1131
    %v2060 = vunpack.c.0.s8 %v1132
    %v2061 = vunpack.c.1.s8 %v1125
    %v2062 = vunpack.c.1.s8 %v1126
    %v2063 = vunpack.c.1.s8 %v1127
    %v2064 = vunpack.c.1.s8 %v1128
    %v2065 = vunpack.c.1.s8 %v1129
    %v2066 = vunpack.c.1.s8 %v1130
    %v2067 = vunpack.c.1.s8 %v1131
    %v2068 = vunpack.c.1.s8 %v1132
    %v2069 = vunpack.c.2.s8 %v1125
    %v2070 = vunpack.c.2.s8 %v1126
    %v2071 = vunpack.c.2.s8 %v1127
    %v2072 = vunpack.c.2.s8 %v1128
    %v2073 = vunpack.c.2.s8 %v1129
    %v2074 = vunpack.c.2.s8 %v1130
    %v2075 = vunpack.c.2.s8 %v1131
    %v2076 = vunpack.c.2.s8 %v1132
    %v2077 = vunpack.c.3.s8 %v1125
    %v2078 = vunpack.c.3.s8 %v1126
    %v2079 = vunpack.c.3.s8 %v1127
    %v2080 = vunpack.c.3.s8 %v1128
    %v2081 = vunpack.c.3.s8 %v1129
    %v2082 = vunpack.c.3.s8 %v1130
    %v2083 = vunpack.c.3.s8 %v1131
    %v2084 = vunpack.c.3.s8 %v1132
    %v2085 = vunpack.c.0.s8 %v1133
    %v2086 = vunpack.c.0.s8 %v1134
    %v2087 = vunpack.c.0.s8 %v1135
    %v2088 = vunpack.c.0.s8 %v1136
    %v2089 = vunpack.c.0.s8 %v1137
    %v2090 = vunpack.c.0.s8 %v1138
    %v2091 = vunpack.c.0.s8 %v1139
    %v2092 = vunpack.c.0.s8 %v1140
    %v2093 = vunpack.c.1.s8 %v1133
    %v2094 = vunpack.c.1.s8 %v1134
    %v2095 = vunpack.c.1.s8 %v1135
    %v2096 = vunpack.c.1.s8 %v1136
    %v2097 = vunpack.c.1.s8 %v1137
    %v2098 = vunpack.c.1.s8 %v1138
    %v2099 = vunpack.c.1.s8 %v1139
    %v2100 = vunpack.c.1.s8 %v1140
    %v2101 = vunpack.c.2.s8 %v1133
    %v2102 = vunpack.c.2.s8 %v1134
    %v2103 = vunpack.c.2.s8 %v1135
    %v2104 = vunpack.c.2.s8 %v1136
    %v2105 = vunpack.c.2.s8 %v1137
    %v2106 = vunpack.c.2.s8 %v1138
    %v2107 = vunpack.c.2.s8 %v1139
    %v2108 = vunpack.c.2.s8 %v1140
    %v2109 = vunpack.c.3.s8 %v1133
    %v2110 = vunpack.c.3.s8 %v1134
    %v2111 = vunpack.c.3.s8 %v1135
    %v2112 = vunpack.c.3.s8 %v1136
    %v2113 = vunpack.c.3.s8 %v1137
    %v2114 = vunpack.c.3.s8 %v1138
    %v2115 = vunpack.c.3.s8 %v1139
    %v2116 = vunpack.c.3.s8 %v1140
    %v2117 = vunpack.c.0.s8 %v1141
    %v2118 = vunpack.c.0.s8 %v1142
    %v2119 = vunpack.c.0.s8 %v1143
    %v2120 = vunpack.c.0.s8 %v1144
    %v2121 = vunpack.c.0.s8 %v1145
    %v2122 = vunpack.c.0.s8 %v1146
    %v2123 = vunpack.c.0.s8 %v1147
    %v2124 = vunpack.c.0.s8 %v1148
    %v2125 = vunpack.c.1.s8 %v1141
    %v2126 = vunpack.c.1.s8 %v1142
    %v2127 = vunpack.c.1.s8 %v1143
    %v2128 = vunpack.c.1.s8 %v1144
    %v2129 = vunpack.c.1.s8 %v1145
    %v2130 = vunpack.c.1.s8 %v1146
    %v2131 = vunpack.c.1.s8 %v1147
    %v2132 = vunpack.c.1.s8 %v1148
    %v2133 = vunpack.c.2.s8 %v1141
    %v2134 = vunpack.c.2.s8 %v1142
    %v2135 = vunpack.c.2.s8 %v1143
    %v2136 = vunpack.c.2.s8 %v1144
    %v2137 = vunpack.c.2.s8 %v1145
    %v2138 = vunpack.c.2.s8 %v1146
    %v2139 = vunpack.c.2.s8 %v1147
    %v2140 = vunpack.c.2.s8 %v1148
    %v2141 = vunpack.c.3.s8 %v1141
    %v2142 = vunpack.c.3.s8 %v1142
    %v2143 = vunpack.c.3.s8 %v1143
    %v2144 = vunpack.c.3.s8 %v1144
    %v2145 = vunpack.c.3.s8 %v1145
    %v2146 = vunpack.c.3.s8 %v1146
    %v2147 = vunpack.c.3.s8 %v1147
    %v2148 = vunpack.c.3.s8 %v1148
    %v2149 = vunpack.c.0.s8 %v1149
    %v2150 = vunpack.c.0.s8 %v1150
    %v2151 = vunpack.c.0.s8 %v1151
    %v2152 = vunpack.c.0.s8 %v1152
    %v2153 = vunpack.c.0.s8 %v1153
    %v2154 = vunpack.c.0.s8 %v1154
    %v2155 = vunpack.c.0.s8 %v1155
    %v2156 = vunpack.c.0.s8 %v1156
    %v2157 = vunpack.c.1.s8 %v1149
    %v2158 = vunpack.c.1.s8 %v1150
    %v2159 = vunpack.c.1.s8 %v1151
    %v2160 = vunpack.c.1.s8 %v1152
    %v2161 = vunpack.c.1.s8 %v1153
    %v2162 = vunpack.c.1.s8 %v1154
    %v2163 = vunpack.c.1.s8 %v1155
    %v2164 = vunpack.c.1.s8 %v1156
    %v2165 = vunpack.c.2.s8 %v1149
    %v2166 = vunpack.c.2.s8 %v1150
    %v2167 = vunpack.c.2.s8 %v1151
    %v2168 = vunpack.c.2.s8 %v1152
    %v2169 = vunpack.c.2.s8 %v1153
    %v2170 = vunpack.c.2.s8 %v1154
    %v2171 = vunpack.c.2.s8 %v1155
    %v2172 = vunpack.c.2.s8 %v1156
    %v2173 = vunpack.c.3.s8 %v1149
    %v2174 = vunpack.c.3.s8 %v1150
    %v2175 = vunpack.c.3.s8 %v1151
    %v2176 = vunpack.c.3.s8 %v1152
    %v2177 = vunpack.c.3.s8 %v1153
    %v2178 = vunpack.c.3.s8 %v1154
    %v2179 = vunpack.c.3.s8 %v1155
    %v2180 = vunpack.c.3.s8 %v1156
    %v2181 = vcvt.s32.f32 %v1157
    %v2182 = vcvt.s32.f32 %v1158
    %v2183 = vcvt.s32.f32 %v1159
    %v2184 = vcvt.s32.f32 %v1160
    %v2185 = vcvt.s32.f32 %v1161
    %v2186 = vcvt.s32.f32 %v1162
    %v2187 = vcvt.s32.f32 %v1163
    %v2188 = vcvt.s32.f32 %v1164
    %v2189 = vcvt.s32.f32 %v1165
    %v2190 = vcvt.s32.f32 %v1166
    %v2191 = vcvt.s32.f32 %v1167
    %v2192 = vcvt.s32.f32 %v1168
    %v2193 = vcvt.s32.f32 %v1169
    %v2194 = vcvt.s32.f32 %v1170
    %v2195 = vcvt.s32.f32 %v1171
    %v2196 = vcvt.s32.f32 %v1172
    %v2197 = vcvt.s32.f32 %v1173
    %v2198 = vcvt.s32.f32 %v1174
    %v2199 = vcvt.s32.f32 %v1175
    %v2200 = vcvt.s32.f32 %v1176
    %v2201 = vcvt.s32.f32 %v1177
    %v2202 = vcvt.s32.f32 %v1178
    %v2203 = vcvt.s32.f32 %v1179
    %v2204 = vcvt.s32.f32 %v1180
    %v2205 = vcvt.s32.f32 %v1181
    %v2206 = vcvt.s32.f32 %v1182
    %v2207 = vcvt.s32.f32 %v1183
    %v2208 = vcvt.s32.f32 %v1184
    %v2209 = vcvt.s32.f32 %v1185
    %v2210 = vcvt.s32.f32 %v1186
    %v2211 = vcvt.s32.f32 %v1187
    %v2212 = vcvt.s32.f32 %v1188
    %v2213 = vcvt.s32.f32 %v1189
    %v2214 = vcvt.s32.f32 %v1190
    %v2215 = vcvt.s32.f32 %v1191
    %v2216 = vcvt.s32.f32 %v1192
    %v2217 = vcvt.s32.f32 %v1193
    %v2218 = vcvt.s32.f32 %v1194
    %v2219 = vcvt.s32.f32 %v1195
    %v2220 = vcvt.s32.f32 %v1196
    %v2221 = vcvt.s32.f32 %v1197
    %v2222 = vcvt.s32.f32 %v1198
    %v2223 = vcvt.s32.f32 %v1199
    %v2224 = vcvt.s32.f32 %v1200
    %v2225 = vcvt.s32.f32 %v1201
    %v2226 = vcvt.s32.f32 %v1202
    %v2227 = vcvt.s32.f32 %v1203
    %v2228 = vcvt.s32.f32 %v1204
    %v2229 = vcvt.s32.f32 %v1205
    %v2230 = vcvt.s32.f32 %v1206
    %v2231 = vcvt.s32.f32 %v1207
    %v2232 = vcvt.s32.f32 %v1208
    %v2233 = vcvt.s32.f32 %v1209
    %v2234 = vcvt.s32.f32 %v1210
    %v2235 = vcvt.s32.f32 %v1211
    %v2236 = vcvt.s32.f32 %v1212
    %v2237 = vcvt.s32.f32 %v1213
    %v2238 = vcvt.s32.f32 %v1214
    %v2239 = vcvt.s32.f32 %v1215
    %v2240 = vcvt.s32.f32 %v1216
    %v2241 = vcvt.s32.f32 %v1217
    %v2242 = vcvt.s32.f32 %v1218
    %v2243 = vcvt.s32.f32 %v1219
    %v2244 = vcvt.s32.f32 %v1220
    %v2245 = vcvt.s32.f32 %v1221
    %v2246 = vcvt.s32.f32 %v1222
    %v2247 = vcvt.s32.f32 %v1223
    %v2248 = vcvt.s32.f32 %v1224
    %v2249 = vcvt.s32.f32 %v1225
    %v2250 = vcvt.s32.f32 %v1226
    %v2251 = vcvt.s32.f32 %v1227
    %v2252 = vcvt.s32.f32 %v1228
    %v2253 = vcvt.s32.f32 %v1229
    %v2254 = vcvt.s32.f32 %v1230
    %v2255 = vcvt.s32.f32 %v1231
    %v2256 = vcvt.s32.f32 %v1232
    %v2257 = vcvt.s32.f32 %v1233
    %v2258 = vcvt.s32.f32 %v1234
    %v2259 = vcvt.s32.f32 %v1235
    %v2260 = vcvt.s32.f32 %v1236
    %v2261 = vcvt.s32.f32 %v1237
    %v2262 = vcvt.s32.f32 %v1238
    %v2263 = vcvt.s32.f32 %v1239
    %v2264 = vcvt.s32.f32 %v1240
    %v2265 = vcvt.s32.f32 %v1241
    %v2266 = vcvt.s32.f32 %v1242
    %v2267 = vcvt.s32.f32 %v1243
    %v2268 = vcvt.s32.f32 %v1244
    %v2269 = vcvt.s32.f32 %v1245
    %v2270 = vcvt.s32.f32 %v1246
    %v2271 = vcvt.s32.f32 %v1247
    %v2272 = vcvt.s32.f32 %v1248
    %v2273 = vcvt.s32.f32 %v1249
    %v2274 = vcvt.s32.f32 %v1250
    %v2275 = vcvt.s32.f32 %v1251
    %v2276 = vcvt.s32.f32 %v1252
    %v2277 = vcvt.s32.f32 %v1253
    %v2278 = vcvt.s32.f32 %v1254
    %v2279 = vcvt.s32.f32 %v1255
    %v2280 = vcvt.s32.f32 %v1256
    %v2281 = vcvt.s32.f32 %v1257
    %v2282 = vcvt.s32.f32 %v1258
    %v2283 = vcvt.s32.f32 %v1259
    %v2284 = vcvt.s32.f32 %v1260
    %v2285 = vcvt.s32.f32 %v1261
    %v2286 = vcvt.s32.f32 %v1262
    %v2287 = vcvt.s32.f32 %v1263
    %v2288 = vcvt.s32.f32 %v1264
    %v2289 = vcvt.s32.f32 %v1265
    %v2290 = vcvt.s32.f32 %v1266
    %v2291 = vcvt.s32.f32 %v1267
    %v2292 = vcvt.s32.f32 %v1268
    %v2293 = vcvt.s32.f32 %v1269
    %v2294 = vcvt.s32.f32 %v1270
    %v2295 = vcvt.s32.f32 %v1271
    %v2296 = vcvt.s32.f32 %v1272
    %v2297 = vcvt.s32.f32 %v1273
    %v2298 = vcvt.s32.f32 %v1274
    %v2299 = vcvt.s32.f32 %v1275
    %v2300 = vcvt.s32.f32 %v1276
    %v2301 = vcvt.s32.f32 %v1277
    %v2302 = vcvt.s32.f32 %v1278
    %v2303 = vcvt.s32.f32 %v1279
    %v2304 = vcvt.s32.f32 %v1280
    %v2305 = vcvt.s32.f32 %v1281
    %v2306 = vcvt.s32.f32 %v1282
    %v2307 = vcvt.s32.f32 %v1283
    %v2308 = vcvt.s32.f32 %v1284
    %v2309 = vcvt.s32.f32 %v1285
    %v2310 = vcvt.s32.f32 %v1286
    %v2311 = vcvt.s32.f32 %v1287
    %v2312 = vcvt.s32.f32 %v1288
    %v2313 = vcvt.s32.f32 %v1289
    %v2314 = vcvt.s32.f32 %v1290
    %v2315 = vcvt.s32.f32 %v1291
    %v2316 = vcvt.s32.f32 %v1292
    %v2317 = vcvt.s32.f32 %v1293
    %v2318 = vcvt.s32.f32 %v1294
    %v2319 = vcvt.s32.f32 %v1295
    %v2320 = vcvt.s32.f32 %v1296
    %v2321 = vcvt.s32.f32 %v1297
    %v2322 = vcvt.s32.f32 %v1298
    %v2323 = vcvt.s32.f32 %v1299
    %v2324 = vcvt.s32.f32 %v1300
    %v2325 = vcvt.s32.f32 %v1301
    %v2326 = vcvt.s32.f32 %v1302
    %v2327 = vcvt.s32.f32 %v1303
    %v2328 = vcvt.s32.f32 %v1304
    %v2329 = vcvt.s32.f32 %v1305
    %v2330 = vcvt.s32.f32 %v1306
    %v2331 = vcvt.s32.f32 %v1307
    %v2332 = vcvt.s32.f32 %v1308
    %v2333 = vcvt.s32.f32 %v1309
    %v2334 = vcvt.s32.f32 %v1310
    %v2335 = vcvt.s32.f32 %v1311
    %v2336 = vcvt.s32.f32 %v1312
    %v2337 = vcvt.s32.f32 %v1313
    %v2338 = vcvt.s32.f32 %v1314
    %v2339 = vcvt.s32.f32 %v1315
    %v2340 = vcvt.s32.f32 %v1316
    %v2341 = vcvt.s32.f32 %v1317
    %v2342 = vcvt.s32.f32 %v1318
    %v2343 = vcvt.s32.f32 %v1319
    %v2344 = vcvt.s32.f32 %v1320
    %v2345 = vcvt.s32.f32 %v1321
    %v2346 = vcvt.s32.f32 %v1322
    %v2347 = vcvt.s32.f32 %v1323
    %v2348 = vcvt.s32.f32 %v1324
    %v2349 = vcvt.s32.f32 %v1325
    %v2350 = vcvt.s32.f32 %v1326
    %v2351 = vcvt.s32.f32 %v1327
    %v2352 = vcvt.s32.f32 %v1328
    %v2353 = vcvt.s32.f32 %v1329
    %v2354 = vcvt.s32.f32 %v1330
    %v2355 = vcvt.s32.f32 %v1331
    %v2356 = vcvt.s32.f32 %v1332
    %v2357 = vcvt.s32.f32 %v1333
    %v2358 = vcvt.s32.f32 %v1334
    %v2359 = vcvt.s32.f32 %v1335
    %v2360 = vcvt.s32.f32 %v1336
    %v2361 = vcvt.s32.f32 %v1337
    %v2362 = vcvt.s32.f32 %v1338
    %v2363 = vcvt.s32.f32 %v1339
    %v2364 = vcvt.s32.f32 %v1340
    %v2365 = vcvt.s32.f32 %v1341
    %v2366 = vcvt.s32.f32 %v1342
    %v2367 = vcvt.s32.f32 %v1343
    %v2368 = vcvt.s32.f32 %v1344
    %v2369 = vcvt.s32.f32 %v1345
    %v2370 = vcvt.s32.f32 %v1346
    %v2371 = vcvt.s32.f32 %v1347
    %v2372 = vcvt.s32.f32 %v1348
    %v2373 = vcvt.s32.f32 %v1349
    %v2374 = vcvt.s32.f32 %v1350
    %v2375 = vcvt.s32.f32 %v1351
    %v2376 = vcvt.s32.f32 %v1352
    %v2377 = vcvt.s32.f32 %v1353
    %v2378 = vcvt.s32.f32 %v1354
    %v2379 = vcvt.s32.f32 %v1355
    %v2380 = vcvt.s32.f32 %v1356
    %v2381 = vcvt.s32.f32 %v1357
    %v2382 = vcvt.s32.f32 %v1358
    %v2383 = vcvt.s32.f32 %v1359
    %v2384 = vcvt.s32.f32 %v1360
    %v2385 = vcvt.s32.f32 %v1361
    %v2386 = vcvt.s32.f32 %v1362
    %v2387 = vcvt.s32.f32 %v1363
    %v2388 = vcvt.s32.f32 %v1364
    %v2389 = vcvt.s32.f32 %v1365
    %v2390 = vcvt.s32.f32 %v1366
    %v2391 = vcvt.s32.f32 %v1367
    %v2392 = vcvt.s32.f32 %v1368
    %v2393 = vcvt.s32.f32 %v1369
    %v2394 = vcvt.s32.f32 %v1370
    %v2395 = vcvt.s32.f32 %v1371
    %v2396 = vcvt.s32.f32 %v1372
    %v2397 = vcvt.s32.f32 %v1373
    %v2398 = vcvt.s32.f32 %v1374
    %v2399 = vcvt.s32.f32 %v1375
    %v2400 = vcvt.s32.f32 %v1376
    %v2401 = vcvt.s32.f32 %v1377
    %v2402 = vcvt.s32.f32 %v1378
    %v2403 = vcvt.s32.f32 %v1379
    %v2404 = vcvt.s32.f32 %v1380
    %v2405 = vcvt.s32.f32 %v1381
    %v2406 = vcvt.s32.f32 %v1382
    %v2407 = vcvt.s32.f32 %v1383
    %v2408 = vcvt.s32.f32 %v1384
    %v2409 = vcvt.s32.f32 %v1385
    %v2410 = vcvt.s32.f32 %v1386
    %v2411 = vcvt.s32.f32 %v1387
    %v2412 = vcvt.s32.f32 %v1388
    %v2413 = vcvt.s32.f32 %v1389
    %v2414 = vcvt.s32.f32 %v1390
    %v2415 = vcvt.s32.f32 %v1391
    %v2416 = vcvt.s32.f32 %v1392
    %v2417 = vcvt.s32.f32 %v1393
    %v2418 = vcvt.s32.f32 %v1394
    %v2419 = vcvt.s32.f32 %v1395
    %v2420 = vcvt.s32.f32 %v1396
    %v2421 = vcvt.s32.f32 %v1397
    %v2422 = vcvt.s32.f32 %v1398
    %v2423 = vcvt.s32.f32 %v1399
    %v2424 = vcvt.s32.f32 %v1400
    %v2425 = vcvt.s32.f32 %v1401
    %v2426 = vcvt.s32.f32 %v1402
    %v2427 = vcvt.s32.f32 %v1403
    %v2428 = vcvt.s32.f32 %v1404
    %v2429 = vcvt.s32.f32 %v1405
    %v2430 = vcvt.s32.f32 %v1406
    %v2431 = vcvt.s32.f32 %v1407
    %v2432 = vcvt.s32.f32 %v1408
    %v2433 = vcvt.s32.f32 %v1409
    %v2434 = vcvt.s32.f32 %v1410
    %v2435 = vcvt.s32.f32 %v1411
    %v2436 = vcvt.s32.f32 %v1412
    %v2437 = vcvt.s32.f32 %v1413
    %v2438 = vcvt.s32.f32 %v1414
    %v2439 = vcvt.s32.f32 %v1415
    %v2440 = vcvt.s32.f32 %v1416
    %v2441 = vcvt.s32.f32 %v1417
    %v2442 = vcvt.s32.f32 %v1418
    %v2443 = vcvt.s32.f32 %v1419
    %v2444 = vcvt.s32.f32 %v1420
    %v2445 = vcvt.s32.f32 %v1421
    %v2446 = vcvt.s32.f32 %v1422
    %v2447 = vcvt.s32.f32 %v1423
    %v2448 = vcvt.s32.f32 %v1424
    %v2449 = vcvt.s32.f32 %v1425
    %v2450 = vcvt.s32.f32 %v1426
    %v2451 = vcvt.s32.f32 %v1427
    %v2452 = vcvt.s32.f32 %v1428
    %v2453 = vcvt.s32.f32 %v1429
    %v2454 = vcvt.s32.f32 %v1430
    %v2455 = vcvt.s32.f32 %v1431
    %v2456 = vcvt.s32.f32 %v1432
    %v2457 = vcvt.s32.f32 %v1433
    %v2458 = vcvt.s32.f32 %v1434
    %v2459 = vcvt.s32.f32 %v1435
    %v2460 = vcvt.s32.f32 %v1436
    %v2461 = vcvt.s32.f32 %v1437
    %v2462 = vcvt.s32.f32 %v1438
    %v2463 = vcvt.s32.f32 %v1439
    %v2464 = vcvt.s32.f32 %v1440
    %v2465 = vcvt.s32.f32 %v1441
    %v2466 = vcvt.s32.f32 %v1442
    %v2467 = vcvt.s32.f32 %v1443
    %v2468 = vcvt.s32.f32 %v1444
    %v2469 = vcvt.s32.f32 %v1445
    %v2470 = vcvt.s32.f32 %v1446
    %v2471 = vcvt.s32.f32 %v1447
    %v2472 = vcvt.s32.f32 %v1448
    %v2473 = vcvt.s32.f32 %v1449
    %v2474 = vcvt.s32.f32 %v1450
    %v2475 = vcvt.s32.f32 %v1451
    %v2476 = vcvt.s32.f32 %v1452
    %v2477 = vcvt.s32.f32 %v1453
    %v2478 = vcvt.s32.f32 %v1454
    %v2479 = vcvt.s32.f32 %v1455
    %v2480 = vcvt.s32.f32 %v1456
    %v2481 = vcvt.s32.f32 %v1457
    %v2482 = vcvt.s32.f32 %v1458
    %v2483 = vcvt.s32.f32 %v1459
    %v2484 = vcvt.s32.f32 %v1460
    %v2485 = vcvt.s32.f32 %v1461
    %v2486 = vcvt.s32.f32 %v1462
    %v2487 = vcvt.s32.f32 %v1463
    %v2488 = vcvt.s32.f32 %v1464
    %v2489 = vcvt.s32.f32 %v1465
    %v2490 = vcvt.s32.f32 %v1466
    %v2491 = vcvt.s32.f32 %v1467
    %v2492 = vcvt.s32.f32 %v1468
    %v2493 = vcvt.s32.f32 %v1469
    %v2494 = vcvt.s32.f32 %v1470
    %v2495 = vcvt.s32.f32 %v1471
    %v2496 = vcvt.s32.f32 %v1472
    %v2497 = vcvt.s32.f32 %v1473
    %v2498 = vcvt.s32.f32 %v1474
    %v2499 = vcvt.s32.f32 %v1475
    %v2500 = vcvt.s32.f32 %v1476
    %v2501 = vcvt.s32.f32 %v1477
    %v2502 = vcvt.s32.f32 %v1478
    %v2503 = vcvt.s32.f32 %v1479
    %v2504 = vcvt.s32.f32 %v1480
    %v2505 = vcvt.s32.f32 %v1481
    %v2506 = vcvt.s32.f32 %v1482
    %v2507 = vcvt.s32.f32 %v1483
    %v2508 = vcvt.s32.f32 %v1484
    %v2509 = vcvt.s32.f32 %v1485
    %v2510 = vcvt.s32.f32 %v1486
    %v2511 = vcvt.s32.f32 %v1487
    %v2512 = vcvt.s32.f32 %v1488
    %v2513 = vcvt.s32.f32 %v1489
    %v2514 = vcvt.s32.f32 %v1490
    %v2515 = vcvt.s32.f32 %v1491
    %v2516 = vcvt.s32.f32 %v1492
    %v2517 = vcvt.s32.f32 %v1493
    %v2518 = vcvt.s32.f32 %v1494
    %v2519 = vcvt.s32.f32 %v1495
    %v2520 = vcvt.s32.f32 %v1496
    %v2521 = vcvt.s32.f32 %v1497
    %v2522 = vcvt.s32.f32 %v1498
    %v2523 = vcvt.s32.f32 %v1499
    %v2524 = vcvt.s32.f32 %v1500
    %v2525 = vcvt.s32.f32 %v1501
    %v2526 = vcvt.s32.f32 %v1502
    %v2527 = vcvt.s32.f32 %v1503
    %v2528 = vcvt.s32.f32 %v1504
    %v2529 = vcvt.s32.f32 %v1505
    %v2530 = vcvt.s32.f32 %v1506
    %v2531 = vcvt.s32.f32 %v1507
    %v2532 = vcvt.s32.f32 %v1508
    %v2533 = vcvt.s32.f32 %v1509
    %v2534 = vcvt.s32.f32 %v1510
    %v2535 = vcvt.s32.f32 %v1511
    %v2536 = vcvt.s32.f32 %v1512
    %v2537 = vcvt.s32.f32 %v1513
    %v2538 = vcvt.s32.f32 %v1514
    %v2539 = vcvt.s32.f32 %v1515
    %v2540 = vcvt.s32.f32 %v1516
    %v2541 = vcvt.s32.f32 %v1517
    %v2542 = vcvt.s32.f32 %v1518
    %v2543 = vcvt.s32.f32 %v1519
    %v2544 = vcvt.s32.f32 %v1520
    %v2545 = vcvt.s32.f32 %v1521
    %v2546 = vcvt.s32.f32 %v1522
    %v2547 = vcvt.s32.f32 %v1523
    %v2548 = vcvt.s32.f32 %v1524
    %v2549 = vcvt.s32.f32 %v1525
    %v2550 = vcvt.s32.f32 %v1526
    %v2551 = vcvt.s32.f32 %v1527
    %v2552 = vcvt.s32.f32 %v1528
    %v2553 = vcvt.s32.f32 %v1529
    %v2554 = vcvt.s32.f32 %v1530
    %v2555 = vcvt.s32.f32 %v1531
    %v2556 = vcvt.s32.f32 %v1532
    %v2557 = vcvt.s32.f32 %v1533
    %v2558 = vcvt.s32.f32 %v1534
    %v2559 = vcvt.s32.f32 %v1535
    %v2560 = vcvt.s32.f32 %v1536
    %v2561 = vcvt.s32.f32 %v1537
    %v2562 = vcvt.s32.f32 %v1538
    %v2563 = vcvt.s32.f32 %v1539
    %v2564 = vcvt.s32.f32 %v1540
    %v2565 = vcvt.s32.f32 %v1541
    %v2566 = vcvt.s32.f32 %v1542
    %v2567 = vcvt.s32.f32 %v1543
    %v2568 = vcvt.s32.f32 %v1544
    %v2569 = vcvt.s32.f32 %v1545
    %v2570 = vcvt.s32.f32 %v1546
    %v2571 = vcvt.s32.f32 %v1547
    %v2572 = vcvt.s32.f32 %v1548
    %v2573 = vcvt.s32.f32 %v1549
    %v2574 = vcvt.s32.f32 %v1550
    %v2575 = vcvt.s32.f32 %v1551
    %v2576 = vcvt.s32.f32 %v1552
    %v2577 = vcvt.s32.f32 %v1553
    %v2578 = vcvt.s32.f32 %v1554
    %v2579 = vcvt.s32.f32 %v1555
    %v2580 = vcvt.s32.f32 %v1556
    %v2581 = vcvt.s32.f32 %v1557
    %v2582 = vcvt.s32.f32 %v1558
    %v2583 = vcvt.s32.f32 %v1559
    %v2584 = vcvt.s32.f32 %v1560
    %v2585 = vcvt.s32.f32 %v1561
    %v2586 = vcvt.s32.f32 %v1562
    %v2587 = vcvt.s32.f32 %v1563
    %v2588 = vcvt.s32.f32 %v1564
    %v2589 = vcvt.s32.f32 %v1565
    %v2590 = vcvt.s32.f32 %v1566
    %v2591 = vcvt.s32.f32 %v1567
    %v2592 = vcvt.s32.f32 %v1568
    %v2593 = vcvt.s32.f32 %v1569
    %v2594 = vcvt.s32.f32 %v1570
    %v2595 = vcvt.s32.f32 %v1571
    %v2596 = vcvt.s32.f32 %v1572
    %v2597 = vcvt.s32.f32 %v1573
    %v2598 = vcvt.s32.f32 %v1574
    %v2599 = vcvt.s32.f32 %v1575
    %v2600 = vcvt.s32.f32 %v1576
    %v2601 = vcvt.s32.f32 %v1577
    %v2602 = vcvt.s32.f32 %v1578
    %v2603 = vcvt.s32.f32 %v1579
    %v2604 = vcvt.s32.f32 %v1580
    %v2605 = vcvt.s32.f32 %v1581
    %v2606 = vcvt.s32.f32 %v1582
    %v2607 = vcvt.s32.f32 %v1583
    %v2608 = vcvt.s32.f32 %v1584
    %v2609 = vcvt.s32.f32 %v1585
    %v2610 = vcvt.s32.f32 %v1586
    %v2611 = vcvt.s32.f32 %v1587
    %v2612 = vcvt.s32.f32 %v1588
    %v2613 = vcvt.s32.f32 %v1589
    %v2614 = vcvt.s32.f32 %v1590
    %v2615 = vcvt.s32.f32 %v1591
    %v2616 = vcvt.s32.f32 %v1592
    %v2617 = vcvt.s32.f32 %v1593
    %v2618 = vcvt.s32.f32 %v1594
    %v2619 = vcvt.s32.f32 %v1595
    %v2620 = vcvt.s32.f32 %v1596
    %v2621 = vcvt.s32.f32 %v1597
    %v2622 = vcvt.s32.f32 %v1598
    %v2623 = vcvt.s32.f32 %v1599
    %v2624 = vcvt.s32.f32 %v1600
    %v2625 = vcvt.s32.f32 %v1601
    %v2626 = vcvt.s32.f32 %v1602
    %v2627 = vcvt.s32.f32 %v1603
    %v2628 = vcvt.s32.f32 %v1604
    %v2629 = vcvt.s32.f32 %v1605
    %v2630 = vcvt.s32.f32 %v1606
    %v2631 = vcvt.s32.f32 %v1607
    %v2632 = vcvt.s32.f32 %v1608
    %v2633 = vcvt.s32.f32 %v1609
    %v2634 = vcvt.s32.f32 %v1610
    %v2635 = vcvt.s32.f32 %v1611
    %v2636 = vcvt.s32.f32 %v1612
    %v2637 = vcvt.s32.f32 %v1613
    %v2638 = vcvt.s32.f32 %v1614
    %v2639 = vcvt.s32.f32 %v1615
    %v2640 = vcvt.s32.f32 %v1616
    %v2641 = vcvt.s32.f32 %v1617
    %v2642 = vcvt.s32.f32 %v1618
    %v2643 = vcvt.s32.f32 %v1619
    %v2644 = vcvt.s32.f32 %v1620
    %v2645 = vcvt.s32.f32 %v1621
    %v2646 = vcvt.s32.f32 %v1622
    %v2647 = vcvt.s32.f32 %v1623
    %v2648 = vcvt.s32.f32 %v1624
    %v2649 = vcvt.s32.f32 %v1625
    %v2650 = vcvt.s32.f32 %v1626
    %v2651 = vcvt.s32.f32 %v1627
    %v2652 = vcvt.s32.f32 %v1628
    %v2653 = vcvt.s32.f32 %v1629
    %v2654 = vcvt.s32.f32 %v1630
    %v2655 = vcvt.s32.f32 %v1631
    %v2656 = vcvt.s32.f32 %v1632
    %v2657 = vcvt.s32.f32 %v1633
    %v2658 = vcvt.s32.f32 %v1634
    %v2659 = vcvt.s32.f32 %v1635
    %v2660 = vcvt.s32.f32 %v1636
    %v2661 = vcvt.s32.f32 %v1637
    %v2662 = vcvt.s32.f32 %v1638
    %v2663 = vcvt.s32.f32 %v1639
    %v2664 = vcvt.s32.f32 %v1640
    %v2665 = vcvt.s32.f32 %v1641
    %v2666 = vcvt.s32.f32 %v1642
    %v2667 = vcvt.s32.f32 %v1643
    %v2668 = vcvt.s32.f32 %v1644
    %v2669 = vcvt.s32.f32 %v1645
    %v2670 = vcvt.s32.f32 %v1646
    %v2671 = vcvt.s32.f32 %v1647
    %v2672 = vcvt.s32.f32 %v1648
    %v2673 = vcvt.s32.f32 %v1649
    %v2674 = vcvt.s32.f32 %v1650
    %v2675 = vcvt.s32.f32 %v1651
    %v2676 = vcvt.s32.f32 %v1652
    %v2677 = vcvt.s32.f32 %v1653
    %v2678 = vcvt.s32.f32 %v1654
    %v2679 = vcvt.s32.f32 %v1655
    %v2680 = vcvt.s32.f32 %v1656
    %v2681 = vcvt.s32.f32 %v1657
    %v2682 = vcvt.s32.f32 %v1658
    %v2683 = vcvt.s32.f32 %v1659
    %v2684 = vcvt.s32.f32 %v1660
    %v2685 = vcvt.s32.f32 %v1661
    %v2686 = vcvt.s32.f32 %v1662
    %v2687 = vcvt.s32.f32 %v1663
    %v2688 = vcvt.s32.f32 %v1664
    %v2689 = vcvt.s32.f32 %v1665
    %v2690 = vcvt.s32.f32 %v1666
    %v2691 = vcvt.s32.f32 %v1667
    %v2692 = vcvt.s32.f32 %v1668
    %v2693 = vcvt.s32.f32 %v1669
    %v2694 = vcvt.s32.f32 %v1670
    %v2695 = vcvt.s32.f32 %v1671
    %v2696 = vcvt.s32.f32 %v1672
    %v2697 = vcvt.s32.f32 %v1673
    %v2698 = vcvt.s32.f32 %v1674
    %v2699 = vcvt.s32.f32 %v1675
    %v2700 = vcvt.s32.f32 %v1676
    %v2701 = vcvt.s32.f32 %v1677
    %v2702 = vcvt.s32.f32 %v1678
    %v2703 = vcvt.s32.f32 %v1679
    %v2704 = vcvt.s32.f32 %v1680
    %v2705 = vcvt.s32.f32 %v1681
    %v2706 = vcvt.s32.f32 %v1682
    %v2707 = vcvt.s32.f32 %v1683
    %v2708 = vcvt.s32.f32 %v1684
    %v2709 = vcvt.s32.f32 %v1685
    %v2710 = vcvt.s32.f32 %v1686
    %v2711 = vcvt.s32.f32 %v1687
    %v2712 = vcvt.s32.f32 %v1688
    %v2713 = vcvt.s32.f32 %v1689
    %v2714 = vcvt.s32.f32 %v1690
    %v2715 = vcvt.s32.f32 %v1691
    %v2716 = vcvt.s32.f32 %v1692
    %v2717 = vcvt.s32.f32 %v1693
    %v2718 = vcvt.s32.f32 %v1694
    %v2719 = vcvt.s32.f32 %v1695
    %v2720 = vcvt.s32.f32 %v1696
    %v2721 = vcvt.s32.f32 %v1697
    %v2722 = vcvt.s32.f32 %v1698
    %v2723 = vcvt.s32.f32 %v1699
    %v2724 = vcvt.s32.f32 %v1700
    %v2725 = vcvt.s32.f32 %v1701
    %v2726 = vcvt.s32.f32 %v1702
    %v2727 = vcvt.s32.f32 %v1703
    %v2728 = vcvt.s32.f32 %v1704
    %v2729 = vcvt.s32.f32 %v1705
    %v2730 = vcvt.s32.f32 %v1706
    %v2731 = vcvt.s32.f32 %v1707
    %v2732 = vcvt.s32.f32 %v1708
    %v2733 = vcvt.s32.f32 %v1709
    %v2734 = vcvt.s32.f32 %v1710
    %v2735 = vcvt.s32.f32 %v1711
    %v2736 = vcvt.s32.f32 %v1712
    %v2737 = vcvt.s32.f32 %v1713
    %v2738 = vcvt.s32.f32 %v1714
    %v2739 = vcvt.s32.f32 %v1715
    %v2740 = vcvt.s32.f32 %v1716
    %v2741 = vcvt.s32.f32 %v1717
    %v2742 = vcvt.s32.f32 %v1718
    %v2743 = vcvt.s32.f32 %v1719
    %v2744 = vcvt.s32.f32 %v1720
    %v2745 = vcvt.s32.f32 %v1721
    %v2746 = vcvt.s32.f32 %v1722
    %v2747 = vcvt.s32.f32 %v1723
    %v2748 = vcvt.s32.f32 %v1724
    %v2749 = vcvt.s32.f32 %v1725
    %v2750 = vcvt.s32.f32 %v1726
    %v2751 = vcvt.s32.f32 %v1727
    %v2752 = vcvt.s32.f32 %v1728
    %v2753 = vcvt.s32.f32 %v1729
    %v2754 = vcvt.s32.f32 %v1730
    %v2755 = vcvt.s32.f32 %v1731
    %v2756 = vcvt.s32.f32 %v1732
    %v2757 = vcvt.s32.f32 %v1733
    %v2758 = vcvt.s32.f32 %v1734
    %v2759 = vcvt.s32.f32 %v1735
    %v2760 = vcvt.s32.f32 %v1736
    %v2761 = vcvt.s32.f32 %v1737
    %v2762 = vcvt.s32.f32 %v1738
    %v2763 = vcvt.s32.f32 %v1739
    %v2764 = vcvt.s32.f32 %v1740
    %v2765 = vcvt.s32.f32 %v1741
    %v2766 = vcvt.s32.f32 %v1742
    %v2767 = vcvt.s32.f32 %v1743
    %v2768 = vcvt.s32.f32 %v1744
    %v2769 = vcvt.s32.f32 %v1745
    %v2770 = vcvt.s32.f32 %v1746
    %v2771 = vcvt.s32.f32 %v1747
    %v2772 = vcvt.s32.f32 %v1748
    %v2773 = vcvt.s32.f32 %v1749
    %v2774 = vcvt.s32.f32 %v1750
    %v2775 = vcvt.s32.f32 %v1751
    %v2776 = vcvt.s32.f32 %v1752
    %v2777 = vcvt.s32.f32 %v1753
    %v2778 = vcvt.s32.f32 %v1754
    %v2779 = vcvt.s32.f32 %v1755
    %v2780 = vcvt.s32.f32 %v1756
    %v2781 = vcvt.s32.f32 %v1757
    %v2782 = vcvt.s32.f32 %v1758
    %v2783 = vcvt.s32.f32 %v1759
    %v2784 = vcvt.s32.f32 %v1760
    %v2785 = vcvt.s32.f32 %v1761
    %v2786 = vcvt.s32.f32 %v1762
    %v2787 = vcvt.s32.f32 %v1763
    %v2788 = vcvt.s32.f32 %v1764
    %v2789 = vcvt.s32.f32 %v1765
    %v2790 = vcvt.s32.f32 %v1766
    %v2791 = vcvt.s32.f32 %v1767
    %v2792 = vcvt.s32.f32 %v1768
    %v2793 = vcvt.s32.f32 %v1769
    %v2794 = vcvt.s32.f32 %v1770
    %v2795 = vcvt.s32.f32 %v1771
    %v2796 = vcvt.s32.f32 %v1772
    %v2797 = vcvt.s32.f32 %v1773
    %v2798 = vcvt.s32.f32 %v1774
    %v2799 = vcvt.s32.f32 %v1775
    %v2800 = vcvt.s32.f32 %v1776
    %v2801 = vcvt.s32.f32 %v1777
    %v2802 = vcvt.s32.f32 %v1778
    %v2803 = vcvt.s32.f32 %v1779
    %v2804 = vcvt.s32.f32 %v1780
    %v2805 = vcvt.s32.f32 %v1781
    %v2806 = vcvt.s32.f32 %v1782
    %v2807 = vcvt.s32.f32 %v1783
    %v2808 = vcvt.s32.f32 %v1784
    %v2809 = vcvt.s32.f32 %v1785
    %v2810 = vcvt.s32.f32 %v1786
    %v2811 = vcvt.s32.f32 %v1787
    %v2812 = vcvt.s32.f32 %v1788
    %v2813 = vcvt.s32.f32 %v1789
    %v2814 = vcvt.s32.f32 %v1790
    %v2815 = vcvt.s32.f32 %v1791
    %v2816 = vcvt.s32.f32 %v1792
    %v2817 = vcvt.s32.f32 %v1793
    %v2818 = vcvt.s32.f32 %v1794
    %v2819 = vcvt.s32.f32 %v1795
    %v2820 = vcvt.s32.f32 %v1796
    %v2821 = vcvt.s32.f32 %v1797
    %v2822 = vcvt.s32.f32 %v1798
    %v2823 = vcvt.s32.f32 %v1799
    %v2824 = vcvt.s32.f32 %v1800
    %v2825 = vcvt.s32.f32 %v1801
    %v2826 = vcvt.s32.f32 %v1802
    %v2827 = vcvt.s32.f32 %v1803
    %v2828 = vcvt.s32.f32 %v1804
    %v2829 = vcvt.s32.f32 %v1805
    %v2830 = vcvt.s32.f32 %v1806
    %v2831 = vcvt.s32.f32 %v1807
    %v2832 = vcvt.s32.f32 %v1808
    %v2833 = vcvt.s32.f32 %v1809
    %v2834 = vcvt.s32.f32 %v1810
    %v2835 = vcvt.s32.f32 %v1811
    %v2836 = vcvt.s32.f32 %v1812
    %v2837 = vcvt.s32.f32 %v1813
    %v2838 = vcvt.s32.f32 %v1814
    %v2839 = vcvt.s32.f32 %v1815
    %v2840 = vcvt.s32.f32 %v1816
    %v2841 = vcvt.s32.f32 %v1817
    %v2842 = vcvt.s32.f32 %v1818
    %v2843 = vcvt.s32.f32 %v1819
    %v2844 = vcvt.s32.f32 %v1820
    %v2845 = vcvt.s32.f32 %v1821
    %v2846 = vcvt.s32.f32 %v1822
    %v2847 = vcvt.s32.f32 %v1823
    %v2848 = vcvt.s32.f32 %v1824
    %v2849 = vcvt.s32.f32 %v1825
    %v2850 = vcvt.s32.f32 %v1826
    %v2851 = vcvt.s32.f32 %v1827
    %v2852 = vcvt.s32.f32 %v1828
    %v2853 = vcvt.s32.f32 %v1829
    %v2854 = vcvt.s32.f32 %v1830
    %v2855 = vcvt.s32.f32 %v1831
    %v2856 = vcvt.s32.f32 %v1832
    %v2857 = vcvt.s32.f32 %v1833
    %v2858 = vcvt.s32.f32 %v1834
    %v2859 = vcvt.s32.f32 %v1835
    %v2860 = vcvt.s32.f32 %v1836
    %v2861 = vcvt.s32.f32 %v1837
    %v2862 = vcvt.s32.f32 %v1838
    %v2863 = vcvt.s32.f32 %v1839
    %v2864 = vcvt.s32.f32 %v1840
    %v2865 = vcvt.s32.f32 %v1841
    %v2866 = vcvt.s32.f32 %v1842
    %v2867 = vcvt.s32.f32 %v1843
    %v2868 = vcvt.s32.f32 %v1844
    %v2869 = vcvt.s32.f32 %v1845
    %v2870 = vcvt.s32.f32 %v1846
    %v2871 = vcvt.s32.f32 %v1847
    %v2872 = vcvt.s32.f32 %v1848
    %v2873 = vcvt.s32.f32 %v1849
    %v2874 = vcvt.s32.f32 %v1850
    %v2875 = vcvt.s32.f32 %v1851
    %v2876 = vcvt.s32.f32 %v1852
    %v2877 = vcvt.s32.f32 %v1853
    %v2878 = vcvt.s32.f32 %v1854
    %v2879 = vcvt.s32.f32 %v1855
    %v2880 = vcvt.s32.f32 %v1856
    %v2881 = vcvt.s32.f32 %v1857
    %v2882 = vcvt.s32.f32 %v1858
    %v2883 = vcvt.s32.f32 %v1859
    %v2884 = vcvt.s32.f32 %v1860
    %v2885 = vcvt.s32.f32 %v1861
    %v2886 = vcvt.s32.f32 %v1862
    %v2887 = vcvt.s32.f32 %v1863
    %v2888 = vcvt.s32.f32 %v1864
    %v2889 = vcvt.s32.f32 %v1865
    %v2890 = vcvt.s32.f32 %v1866
    %v2891 = vcvt.s32.f32 %v1867
    %v2892 = vcvt.s32.f32 %v1868
    %v2893 = vcvt.s32.f32 %v1869
    %v2894 = vcvt.s32.f32 %v1870
    %v2895 = vcvt.s32.f32 %v1871
    %v2896 = vcvt.s32.f32 %v1872
    %v2897 = vcvt.s32.f32 %v1873
    %v2898 = vcvt.s32.f32 %v1874
    %v2899 = vcvt.s32.f32 %v1875
    %v2900 = vcvt.s32.f32 %v1876
    %v2901 = vcvt.s32.f32 %v1877
    %v2902 = vcvt.s32.f32 %v1878
    %v2903 = vcvt.s32.f32 %v1879
    %v2904 = vcvt.s32.f32 %v1880
    %v2905 = vcvt.s32.f32 %v1881
    %v2906 = vcvt.s32.f32 %v1882
    %v2907 = vcvt.s32.f32 %v1883
    %v2908 = vcvt.s32.f32 %v1884
    %v2909 = vcvt.s32.f32 %v1885
    %v2910 = vcvt.s32.f32 %v1886
    %v2911 = vcvt.s32.f32 %v1887
    %v2912 = vcvt.s32.f32 %v1888
    %v2913 = vcvt.s32.f32 %v1889
    %v2914 = vcvt.s32.f32 %v1890
    %v2915 = vcvt.s32.f32 %v1891
    %v2916 = vcvt.s32.f32 %v1892
    %v2917 = vcvt.s32.f32 %v1893
    %v2918 = vcvt.s32.f32 %v1894
    %v2919 = vcvt.s32.f32 %v1895
    %v2920 = vcvt.s32.f32 %v1896
    %v2921 = vcvt.s32.f32 %v1897
    %v2922 = vcvt.s32.f32 %v1898
    %v2923 = vcvt.s32.f32 %v1899
    %v2924 = vcvt.s32.f32 %v1900
    %v2925 = vcvt.s32.f32 %v1901
    %v2926 = vcvt.s32.f32 %v1902
    %v2927 = vcvt.s32.f32 %v1903
    %v2928 = vcvt.s32.f32 %v1904
    %v2929 = vcvt.s32.f32 %v1905
    %v2930 = vcvt.s32.f32 %v1906
    %v2931 = vcvt.s32.f32 %v1907
    %v2932 = vcvt.s32.f32 %v1908
    %v2933 = vcvt.s32.f32 %v1909
    %v2934 = vcvt.s32.f32 %v1910
    %v2935 = vcvt.s32.f32 %v1911
    %v2936 = vcvt.s32.f32 %v1912
    %v2937 = vcvt.s32.f32 %v1913
    %v2938 = vcvt.s32.f32 %v1914
    %v2939 = vcvt.s32.f32 %v1915
    %v2940 = vcvt.s32.f32 %v1916
    %v2941 = vcvt.s32.f32 %v1917
    %v2942 = vcvt.s32.f32 %v1918
    %v2943 = vcvt.s32.f32 %v1919
    %v2944 = vcvt.s32.f32 %v1920
    %v2945 = vcvt.s32.f32 %v1921
    %v2946 = vcvt.s32.f32 %v1922
    %v2947 = vcvt.s32.f32 %v1923
    %v2948 = vcvt.s32.f32 %v1924
    %v2949 = vcvt.s32.f32 %v1925
    %v2950 = vcvt.s32.f32 %v1926
    %v2951 = vcvt.s32.f32 %v1927
    %v2952 = vcvt.s32.f32 %v1928
    %v2953 = vcvt.s32.f32 %v1929
    %v2954 = vcvt.s32.f32 %v1930
    %v2955 = vcvt.s32.f32 %v1931
    %v2956 = vcvt.s32.f32 %v1932
    %v2957 = vcvt.s32.f32 %v1933
    %v2958 = vcvt.s32.f32 %v1934
    %v2959 = vcvt.s32.f32 %v1935
    %v2960 = vcvt.s32.f32 %v1936
    %v2961 = vcvt.s32.f32 %v1937
    %v2962 = vcvt.s32.f32 %v1938
    %v2963 = vcvt.s32.f32 %v1939
    %v2964 = vcvt.s32.f32 %v1940
    %v2965 = vcvt.s32.f32 %v1941
    %v2966 = vcvt.s32.f32 %v1942
    %v2967 = vcvt.s32.f32 %v1943
    %v2968 = vcvt.s32.f32 %v1944
    %v2969 = vcvt.s32.f32 %v1945
    %v2970 = vcvt.s32.f32 %v1946
    %v2971 = vcvt.s32.f32 %v1947
    %v2972 = vcvt.s32.f32 %v1948
    %v2973 = vcvt.s32.f32 %v1949
    %v2974 = vcvt.s32.f32 %v1950
    %v2975 = vcvt.s32.f32 %v1951
    %v2976 = vcvt.s32.f32 %v1952
    %v2977 = vcvt.s32.f32 %v1953
    %v2978 = vcvt.s32.f32 %v1954
    %v2979 = vcvt.s32.f32 %v1955
    %v2980 = vcvt.s32.f32 %v1956
    %v2981 = vcvt.s32.f32 %v1957
    %v2982 = vcvt.s32.f32 %v1958
    %v2983 = vcvt.s32.f32 %v1959
    %v2984 = vcvt.s32.f32 %v1960
    %v2985 = vcvt.s32.f32 %v1961
    %v2986 = vcvt.s32.f32 %v1962
    %v2987 = vcvt.s32.f32 %v1963
    %v2988 = vcvt.s32.f32 %v1964
    %v2989 = vcvt.s32.f32 %v1965
    %v2990 = vcvt.s32.f32 %v1966
    %v2991 = vcvt.s32.f32 %v1967
    %v2992 = vcvt.s32.f32 %v1968
    %v2993 = vcvt.s32.f32 %v1969
    %v2994 = vcvt.s32.f32 %v1970
    %v2995 = vcvt.s32.f32 %v1971
    %v2996 = vcvt.s32.f32 %v1972
    %v2997 = vcvt.s32.f32 %v1973
    %v2998 = vcvt.s32.f32 %v1974
    %v2999 = vcvt.s32.f32 %v1975
    %v3000 = vcvt.s32.f32 %v1976
    %v3001 = vcvt.s32.f32 %v1977
    %v3002 = vcvt.s32.f32 %v1978
    %v3003 = vcvt.s32.f32 %v1979
    %v3004 = vcvt.s32.f32 %v1980
    %v3005 = vcvt.s32.f32 %v1981
    %v3006 = vcvt.s32.f32 %v1982
    %v3007 = vcvt.s32.f32 %v1983
    %v3008 = vcvt.s32.f32 %v1984
    %v3009 = vcvt.s32.f32 %v1985
    %v3010 = vcvt.s32.f32 %v1986
    %v3011 = vcvt.s32.f32 %v1987
    %v3012 = vcvt.s32.f32 %v1988
    %v3013 = vcvt.s32.f32 %v1989
    %v3014 = vcvt.s32.f32 %v1990
    %v3015 = vcvt.s32.f32 %v1991
    %v3016 = vcvt.s32.f32 %v1992
    %v3017 = vcvt.s32.f32 %v1993
    %v3018 = vcvt.s32.f32 %v1994
    %v3019 = vcvt.s32.f32 %v1995
    %v3020 = vcvt.s32.f32 %v1996
    %v3021 = vcvt.s32.f32 %v1997
    %v3022 = vcvt.s32.f32 %v1998
    %v3023 = vcvt.s32.f32 %v1999
    %v3024 = vcvt.s32.f32 %v2000
    %v3025 = vcvt.s32.f32 %v2001
    %v3026 = vcvt.s32.f32 %v2002
    %v3027 = vcvt.s32.f32 %v2003
    %v3028 = vcvt.s32.f32 %v2004
    %v3029 = vcvt.s32.f32 %v2005
    %v3030 = vcvt.s32.f32 %v2006
    %v3031 = vcvt.s32.f32 %v2007
    %v3032 = vcvt.s32.f32 %v2008
    %v3033 = vcvt.s32.f32 %v2009
    %v3034 = vcvt.s32.f32 %v2010
    %v3035 = vcvt.s32.f32 %v2011
    %v3036 = vcvt.s32.f32 %v2012
    %v3037 = vcvt.s32.f32 %v2013
    %v3038 = vcvt.s32.f32 %v2014
    %v3039 = vcvt.s32.f32 %v2015
    %v3040 = vcvt.s32.f32 %v2016
    %v3041 = vcvt.s32.f32 %v2017
    %v3042 = vcvt.s32.f32 %v2018
    %v3043 = vcvt.s32.f32 %v2019
    %v3044 = vcvt.s32.f32 %v2020
    %v3045 = vcvt.s32.f32 %v2021
    %v3046 = vcvt.s32.f32 %v2022
    %v3047 = vcvt.s32.f32 %v2023
    %v3048 = vcvt.s32.f32 %v2024
    %v3049 = vcvt.s32.f32 %v2025
    %v3050 = vcvt.s32.f32 %v2026
    %v3051 = vcvt.s32.f32 %v2027
    %v3052 = vcvt.s32.f32 %v2028
    %v3053 = vcvt.s32.f32 %v2029
    %v3054 = vcvt.s32.f32 %v2030
    %v3055 = vcvt.s32.f32 %v2031
    %v3056 = vcvt.s32.f32 %v2032
    %v3057 = vcvt.s32.f32 %v2033
    %v3058 = vcvt.s32.f32 %v2034
    %v3059 = vcvt.s32.f32 %v2035
    %v3060 = vcvt.s32.f32 %v2036
    %v3061 = vcvt.s32.f32 %v2037
    %v3062 = vcvt.s32.f32 %v2038
    %v3063 = vcvt.s32.f32 %v2039
    %v3064 = vcvt.s32.f32 %v2040
    %v3065 = vcvt.s32.f32 %v2041
    %v3066 = vcvt.s32.f32 %v2042
    %v3067 = vcvt.s32.f32 %v2043
    %v3068 = vcvt.s32.f32 %v2044
    %v3069 = vcvt.s32.f32 %v2045
    %v3070 = vcvt.s32.f32 %v2046
    %v3071 = vcvt.s32.f32 %v2047
    %v3072 = vcvt.s32.f32 %v2048
    %v3073 = vcvt.s32.f32 %v2049
    %v3074 = vcvt.s32.f32 %v2050
    %v3075 = vcvt.s32.f32 %v2051
    %v3076 = vcvt.s32.f32 %v2052
    %v3077 = vcvt.s32.f32 %v2053
    %v3078 = vcvt.s32.f32 %v2054
    %v3079 = vcvt.s32.f32 %v2055
    %v3080 = vcvt.s32.f32 %v2056
    %v3081 = vcvt.s32.f32 %v2057
    %v3082 = vcvt.s32.f32 %v2058
    %v3083 = vcvt.s32.f32 %v2059
    %v3084 = vcvt.s32.f32 %v2060
    %v3085 = vcvt.s32.f32 %v2061
    %v3086 = vcvt.s32.f32 %v2062
    %v3087 = vcvt.s32.f32 %v2063
    %v3088 = vcvt.s32.f32 %v2064
    %v3089 = vcvt.s32.f32 %v2065
    %v3090 = vcvt.s32.f32 %v2066
    %v3091 = vcvt.s32.f32 %v2067
    %v3092 = vcvt.s32.f32 %v2068
    %v3093 = vcvt.s32.f32 %v2069
    %v3094 = vcvt.s32.f32 %v2070
    %v3095 = vcvt.s32.f32 %v2071
    %v3096 = vcvt.s32.f32 %v2072
    %v3097 = vcvt.s32.f32 %v2073
    %v3098 = vcvt.s32.f32 %v2074
    %v3099 = vcvt.s32.f32 %v2075
    %v3100 = vcvt.s32.f32 %v2076
    %v3101 = vcvt.s32.f32 %v2077
    %v3102 = vcvt.s32.f32 %v2078
    %v3103 = vcvt.s32.f32 %v2079
    %v3104 = vcvt.s32.f32 %v2080
    %v3105 = vcvt.s32.f32 %v2081
    %v3106 = vcvt.s32.f32 %v2082
    %v3107 = vcvt.s32.f32 %v2083
    %v3108 = vcvt.s32.f32 %v2084
    %v3109 = vcvt.s32.f32 %v2085
    %v3110 = vcvt.s32.f32 %v2086
    %v3111 = vcvt.s32.f32 %v2087
    %v3112 = vcvt.s32.f32 %v2088
    %v3113 = vcvt.s32.f32 %v2089
    %v3114 = vcvt.s32.f32 %v2090
    %v3115 = vcvt.s32.f32 %v2091
    %v3116 = vcvt.s32.f32 %v2092
    %v3117 = vcvt.s32.f32 %v2093
    %v3118 = vcvt.s32.f32 %v2094
    %v3119 = vcvt.s32.f32 %v2095
    %v3120 = vcvt.s32.f32 %v2096
    %v3121 = vcvt.s32.f32 %v2097
    %v3122 = vcvt.s32.f32 %v2098
    %v3123 = vcvt.s32.f32 %v2099
    %v3124 = vcvt.s32.f32 %v2100
    %v3125 = vcvt.s32.f32 %v2101
    %v3126 = vcvt.s32.f32 %v2102
    %v3127 = vcvt.s32.f32 %v2103
    %v3128 = vcvt.s32.f32 %v2104
    %v3129 = vcvt.s32.f32 %v2105
    %v3130 = vcvt.s32.f32 %v2106
    %v3131 = vcvt.s32.f32 %v2107
    %v3132 = vcvt.s32.f32 %v2108
    %v3133 = vcvt.s32.f32 %v2109
    %v3134 = vcvt.s32.f32 %v2110
    %v3135 = vcvt.s32.f32 %v2111
    %v3136 = vcvt.s32.f32 %v2112
    %v3137 = vcvt.s32.f32 %v2113
    %v3138 = vcvt.s32.f32 %v2114
    %v3139 = vcvt.s32.f32 %v2115
    %v3140 = vcvt.s32.f32 %v2116
    %v3141 = vcvt.s32.f32 %v2117
    %v3142 = vcvt.s32.f32 %v2118
    %v3143 = vcvt.s32.f32 %v2119
    %v3144 = vcvt.s32.f32 %v2120
    %v3145 = vcvt.s32.f32 %v2121
    %v3146 = vcvt.s32.f32 %v2122
    %v3147 = vcvt.s32.f32 %v2123
    %v3148 = vcvt.s32.f32 %v2124
    %v3149 = vcvt.s32.f32 %v2125
    %v3150 = vcvt.s32.f32 %v2126
    %v3151 = vcvt.s32.f32 %v2127
    %v3152 = vcvt.s32.f32 %v2128
    %v3153 = vcvt.s32.f32 %v2129
    %v3154 = vcvt.s32.f32 %v2130
    %v3155 = vcvt.s32.f32 %v2131
    %v3156 = vcvt.s32.f32 %v2132
    %v3157 = vcvt.s32.f32 %v2133
    %v3158 = vcvt.s32.f32 %v2134
    %v3159 = vcvt.s32.f32 %v2135
    %v3160 = vcvt.s32.f32 %v2136
    %v3161 = vcvt.s32.f32 %v2137
    %v3162 = vcvt.s32.f32 %v2138
    %v3163 = vcvt.s32.f32 %v2139
    %v3164 = vcvt.s32.f32 %v2140
    %v3165 = vcvt.s32.f32 %v2141
    %v3166 = vcvt.s32.f32 %v2142
    %v3167 = vcvt.s32.f32 %v2143
    %v3168 = vcvt.s32.f32 %v2144
    %v3169 = vcvt.s32.f32 %v2145
    %v3170 = vcvt.s32.f32 %v2146
    %v3171 = vcvt.s32.f32 %v2147
    %v3172 = vcvt.s32.f32 %v2148
    %v3173 = vcvt.s32.f32 %v2149
    %v3174 = vcvt.s32.f32 %v2150
    %v3175 = vcvt.s32.f32 %v2151
    %v3176 = vcvt.s32.f32 %v2152
    %v3177 = vcvt.s32.f32 %v2153
    %v3178 = vcvt.s32.f32 %v2154
    %v3179 = vcvt.s32.f32 %v2155
    %v3180 = vcvt.s32.f32 %v2156
    %v3181 = vcvt.s32.f32 %v2157
    %v3182 = vcvt.s32.f32 %v2158
    %v3183 = vcvt.s32.f32 %v2159
    %v3184 = vcvt.s32.f32 %v2160
    %v3185 = vcvt.s32.f32 %v2161
    %v3186 = vcvt.s32.f32 %v2162
    %v3187 = vcvt.s32.f32 %v2163
    %v3188 = vcvt.s32.f32 %v2164
    %v3189 = vcvt.s32.f32 %v2165
    %v3190 = vcvt.s32.f32 %v2166
    %v3191 = vcvt.s32.f32 %v2167
    %v3192 = vcvt.s32.f32 %v2168
    %v3193 = vcvt.s32.f32 %v2169
    %v3194 = vcvt.s32.f32 %v2170
    %v3195 = vcvt.s32.f32 %v2171
    %v3196 = vcvt.s32.f32 %v2172
    %v3197 = vcvt.s32.f32 %v2173
    %v3198 = vcvt.s32.f32 %v2174
    %v3199 = vcvt.s32.f32 %v2175
    %v3200 = vcvt.s32.f32 %v2176
    %v3201 = vcvt.s32.f32 %v2177
    %v3202 = vcvt.s32.f32 %v2178
    %v3203 = vcvt.s32.f32 %v2179
    %v3204 = vcvt.s32.f32 %v2180
    %v3205 = vpack.c.bf16 %v2189, %v2181
    %v3206 = vpack.c.bf16 %v2190, %v2182
    %v3207 = vpack.c.bf16 %v2191, %v2183
    %v3208 = vpack.c.bf16 %v2192, %v2184
    %v3209 = vpack.c.bf16 %v2193, %v2185
    %v3210 = vpack.c.bf16 %v2194, %v2186
    %v3211 = vpack.c.bf16 %v2195, %v2187
    %v3212 = vpack.c.bf16 %v2196, %v2188
    %v3213 = vpack.c.bf16 %v2205, %v2197
    %v3214 = vpack.c.bf16 %v2206, %v2198
    %v3215 = vpack.c.bf16 %v2207, %v2199
    %v3216 = vpack.c.bf16 %v2208, %v2200
    %v3217 = vpack.c.bf16 %v2209, %v2201
    %v3218 = vpack.c.bf16 %v2210, %v2202
    %v3219 = vpack.c.bf16 %v2211, %v2203
    %v3220 = vpack.c.bf16 %v2212, %v2204
    %v3221 = vpack.c.bf16 %v2221, %v2213
    %v3222 = vpack.c.bf16 %v2222, %v2214
    %v3223 = vpack.c.bf16 %v2223, %v2215
    %v3224 = vpack.c.bf16 %v2224, %v2216
    %v3225 = vpack.c.bf16 %v2225, %v2217
    %v3226 = vpack.c.bf16 %v2226, %v2218
    %v3227 = vpack.c.bf16 %v2227, %v2219
    %v3228 = vpack.c.bf16 %v2228, %v2220
    %v3229 = vpack.c.bf16 %v2237, %v2229
    %v3230 = vpack.c.bf16 %v2238, %v2230
    %v3231 = vpack.c.bf16 %v2239, %v2231
    %v3232 = vpack.c.bf16 %v2240, %v2232
    %v3233 = vpack.c.bf16 %v2241, %v2233
    %v3234 = vpack.c.bf16 %v2242, %v2234
    %v3235 = vpack.c.bf16 %v2243, %v2235
    %v3236 = vpack.c.bf16 %v2244, %v2236
    %v3237 = vpack.c.bf16 %v2253, %v2245
    %v3238 = vpack.c.bf16 %v2254, %v2246
    %v3239 = vpack.c.bf16 %v2255, %v2247
    %v3240 = vpack.c.bf16 %v2256, %v2248
    %v3241 = vpack.c.bf16 %v2257, %v2249
    %v3242 = vpack.c.bf16 %v2258, %v2250
    %v3243 = vpack.c.bf16 %v2259, %v2251
    %v3244 = vpack.c.bf16 %v2260, %v2252
    %v3245 = vpack.c.bf16 %v2269, %v2261
    %v3246 = vpack.c.bf16 %v2270, %v2262
    %v3247 = vpack.c.bf16 %v2271, %v2263
    %v3248 = vpack.c.bf16 %v2272, %v2264
    %v3249 = vpack.c.bf16 %v2273, %v2265
    %v3250 = vpack.c.bf16 %v2274, %v2266
    %v3251 = vpack.c.bf16 %v2275, %v2267
    %v3252 = vpack.c.bf16 %v2276, %v2268
    %v3253 = vpack.c.bf16 %v2285, %v2277
    %v3254 = vpack.c.bf16 %v2286, %v2278
    %v3255 = vpack.c.bf16 %v2287, %v2279
    %v3256 = vpack.c.bf16 %v2288, %v2280
    %v3257 = vpack.c.bf16 %v2289, %v2281
    %v3258 = vpack.c.bf16 %v2290, %v2282
    %v3259 = vpack.c.bf16 %v2291, %v2283
    %v3260 = vpack.c.bf16 %v2292, %v2284
    %v3261 = vpack.c.bf16 %v2301, %v2293
    %v3262 = vpack.c.bf16 %v2302, %v2294
    %v3263 = vpack.c.bf16 %v2303, %v2295
    %v3264 = vpack.c.bf16 %v2304, %v2296
    %v3265 = vpack.c.bf16 %v2305, %v2297
    %v3266 = vpack.c.bf16 %v2306, %v2298
    %v3267 = vpack.c.bf16 %v2307, %v2299
    %v3268 = vpack.c.bf16 %v2308, %v2300
    %v3269 = vpack.c.bf16 %v2317, %v2309
    %v3270 = vpack.c.bf16 %v2318, %v2310
    %v3271 = vpack.c.bf16 %v2319, %v2311
    %v3272 = vpack.c.bf16 %v2320, %v2312
    %v3273 = vpack.c.bf16 %v2321, %v2313
    %v3274 = vpack.c.bf16 %v2322, %v2314
    %v3275 = vpack.c.bf16 %v2323, %v2315
    %v3276 = vpack.c.bf16 %v2324, %v2316
    %v3277 = vpack.c.bf16 %v2333, %v2325
    %v3278 = vpack.c.bf16 %v2334, %v2326
    %v3279 = vpack.c.bf16 %v2335, %v2327
    %v3280 = vpack.c.bf16 %v2336, %v2328
    %v3281 = vpack.c.bf16 %v2337, %v2329
    %v3282 = vpack.c.bf16 %v2338, %v2330
    %v3283 = vpack.c.bf16 %v2339, %v2331
    %v3284 = vpack.c.bf16 %v2340, %v2332
    %v3285 = vpack.c.bf16 %v2349, %v2341
    %v3286 = vpack.c.bf16 %v2350, %v2342
    %v3287 = vpack.c.bf16 %v2351, %v2343
    %v3288 = vpack.c.bf16 %v2352, %v2344
    %v3289 = vpack.c.bf16 %v2353, %v2345
    %v3290 = vpack.c.bf16 %v2354, %v2346
    %v3291 = vpack.c.bf16 %v2355, %v2347
    %v3292 = vpack.c.bf16 %v2356, %v2348
    %v3293 = vpack.c.bf16 %v2365, %v2357
    %v3294 = vpack.c.bf16 %v2366, %v2358
    %v3295 = vpack.c.bf16 %v2367, %v2359
    %v3296 = vpack.c.bf16 %v2368, %v2360
    %v3297 = vpack.c.bf16 %v2369, %v2361
    %v3298 = vpack.c.bf16 %v2370, %v2362
    %v3299 = vpack.c.bf16 %v2371, %v2363
    %v3300 = vpack.c.bf16 %v2372, %v2364
    %v3301 = vpack.c.bf16 %v2381, %v2373
    %v3302 = vpack.c.bf16 %v2382, %v2374
    %v3303 = vpack.c.bf16 %v2383, %v2375
    %v3304 = vpack.c.bf16 %v2384, %v2376
    %v3305 = vpack.c.bf16 %v2385, %v2377
    %v3306 = vpack.c.bf16 %v2386, %v2378
    %v3307 = vpack.c.bf16 %v2387, %v2379
    %v3308 = vpack.c.bf16 %v2388, %v2380
    %v3309 = vpack.c.bf16 %v2397, %v2389
    %v3310 = vpack.c.bf16 %v2398, %v2390
    %v3311 = vpack.c.bf16 %v2399, %v2391
    %v3312 = vpack.c.bf16 %v2400, %v2392
    %v3313 = vpack.c.bf16 %v2401, %v2393
    %v3314 = vpack.c.bf16 %v2402, %v2394
    %v3315 = vpack.c.bf16 %v2403, %v2395
    %v3316 = vpack.c.bf16 %v2404, %v2396
    %v3317 = vpack.c.bf16 %v2413, %v2405
    %v3318 = vpack.c.bf16 %v2414, %v2406
    %v3319 = vpack.c.bf16 %v2415, %v2407
    %v3320 = vpack.c.bf16 %v2416, %v2408
    %v3321 = vpack.c.bf16 %v2417, %v2409
    %v3322 = vpack.c.bf16 %v2418, %v2410
    %v3323 = vpack.c.bf16 %v2419, %v2411
    %v3324 = vpack.c.bf16 %v2420, %v2412
    %v3325 = vpack.c.bf16 %v2429, %v2421
    %v3326 = vpack.c.bf16 %v2430, %v2422
    %v3327 = vpack.c.bf16 %v2431, %v2423
    %v3328 = vpack.c.bf16 %v2432, %v2424
    %v3329 = vpack.c.bf16 %v2433, %v2425
    %v3330 = vpack.c.bf16 %v2434, %v2426
    %v3331 = vpack.c.bf16 %v2435, %v2427
    %v3332 = vpack.c.bf16 %v2436, %v2428
    %v3333 = vpack.c.bf16 %v2445, %v2437
    %v3334 = vpack.c.bf16 %v2446, %v2438
    %v3335 = vpack.c.bf16 %v2447, %v2439
    %v3336 = vpack.c.bf16 %v2448, %v2440
    %v3337 = vpack.c.bf16 %v2449, %v2441
    %v3338 = vpack.c.bf16 %v2450, %v2442
    %v3339 = vpack.c.bf16 %v2451, %v2443
    %v3340 = vpack.c.bf16 %v2452, %v2444
    %v3341 = vpack.c.bf16 %v2461, %v2453
    %v3342 = vpack.c.bf16 %v2462, %v2454
    %v3343 = vpack.c.bf16 %v2463, %v2455
    %v3344 = vpack.c.bf16 %v2464, %v2456
    %v3345 = vpack.c.bf16 %v2465, %v2457
    %v3346 = vpack.c.bf16 %v2466, %v2458
    %v3347 = vpack.c.bf16 %v2467, %v2459
    %v3348 = vpack.c.bf16 %v2468, %v2460
    %v3349 = vpack.c.bf16 %v2477, %v2469
    %v3350 = vpack.c.bf16 %v2478, %v2470
    %v3351 = vpack.c.bf16 %v2479, %v2471
    %v3352 = vpack.c.bf16 %v2480, %v2472
    %v3353 = vpack.c.bf16 %v2481, %v2473
    %v3354 = vpack.c.bf16 %v2482, %v2474
    %v3355 = vpack.c.bf16 %v2483, %v2475
    %v3356 = vpack.c.bf16 %v2484, %v2476
    %v3357 = vpack.c.bf16 %v2493, %v2485
    %v3358 = vpack.c.bf16 %v2494, %v2486
    %v3359 = vpack.c.bf16 %v2495, %v2487
    %v3360 = vpack.c.bf16 %v2496, %v2488
    %v3361 = vpack.c.bf16 %v2497, %v2489
    %v3362 = vpack.c.bf16 %v2498, %v2490
    %v3363 = vpack.c.bf16 %v2499, %v2491
    %v3364 = vpack.c.bf16 %v2500, %v2492
    %v3365 = vpack.c.bf16 %v2509, %v2501
    %v3366 = vpack.c.bf16 %v2510, %v2502
    %v3367 = vpack.c.bf16 %v2511, %v2503
    %v3368 = vpack.c.bf16 %v2512, %v2504
    %v3369 = vpack.c.bf16 %v2513, %v2505
    %v3370 = vpack.c.bf16 %v2514, %v2506
    %v3371 = vpack.c.bf16 %v2515, %v2507
    %v3372 = vpack.c.bf16 %v2516, %v2508
    %v3373 = vpack.c.bf16 %v2525, %v2517
    %v3374 = vpack.c.bf16 %v2526, %v2518
    %v3375 = vpack.c.bf16 %v2527, %v2519
    %v3376 = vpack.c.bf16 %v2528, %v2520
    %v3377 = vpack.c.bf16 %v2529, %v2521
    %v3378 = vpack.c.bf16 %v2530, %v2522
    %v3379 = vpack.c.bf16 %v2531, %v2523
    %v3380 = vpack.c.bf16 %v2532, %v2524
    %v3381 = vpack.c.bf16 %v2541, %v2533
    %v3382 = vpack.c.bf16 %v2542, %v2534
    %v3383 = vpack.c.bf16 %v2543, %v2535
    %v3384 = vpack.c.bf16 %v2544, %v2536
    %v3385 = vpack.c.bf16 %v2545, %v2537
    %v3386 = vpack.c.bf16 %v2546, %v2538
    %v3387 = vpack.c.bf16 %v2547, %v2539
    %v3388 = vpack.c.bf16 %v2548, %v2540
    %v3389 = vpack.c.bf16 %v2557, %v2549
    %v3390 = vpack.c.bf16 %v2558, %v2550
    %v3391 = vpack.c.bf16 %v2559, %v2551
    %v3392 = vpack.c.bf16 %v2560, %v2552
    %v3393 = vpack.c.bf16 %v2561, %v2553
    %v3394 = vpack.c.bf16 %v2562, %v2554
    %v3395 = vpack.c.bf16 %v2563, %v2555
    %v3396 = vpack.c.bf16 %v2564, %v2556
    %v3397 = vpack.c.bf16 %v2573, %v2565
    %v3398 = vpack.c.bf16 %v2574, %v2566
    %v3399 = vpack.c.bf16 %v2575, %v2567
    %v3400 = vpack.c.bf16 %v2576, %v2568
    %v3401 = vpack.c.bf16 %v2577, %v2569
    %v3402 = vpack.c.bf16 %v2578, %v2570
    %v3403 = vpack.c.bf16 %v2579, %v2571
    %v3404 = vpack.c.bf16 %v2580, %v2572
    %v3405 = vpack.c.bf16 %v2589, %v2581
    %v3406 = vpack.c.bf16 %v2590, %v2582
    %v3407 = vpack.c.bf16 %v2591, %v2583
    %v3408 = vpack.c.bf16 %v2592, %v2584
    %v3409 = vpack.c.bf16 %v2593, %v2585
    %v3410 = vpack.c.bf16 %v2594, %v2586
    %v3411 = vpack.c.bf16 %v2595, %v2587
    %v3412 = vpack.c.bf16 %v2596, %v2588
    %v3413 = vpack.c.bf16 %v2605, %v2597
    %v3414 = vpack.c.bf16 %v2606, %v2598
    %v3415 = vpack.c.bf16 %v2607, %v2599
    %v3416 = vpack.c.bf16 %v2608, %v2600
    %v3417 = vpack.c.bf16 %v2609, %v2601
    %v3418 = vpack.c.bf16 %v2610, %v2602
    %v3419 = vpack.c.bf16 %v2611, %v2603
    %v3420 = vpack.c.bf16 %v2612, %v2604
    %v3421 = vpack.c.bf16 %v2621, %v2613
    %v3422 = vpack.c.bf16 %v2622, %v2614
    %v3423 = vpack.c.bf16 %v2623, %v2615
    %v3424 = vpack.c.bf16 %v2624, %v2616
    %v3425 = vpack.c.bf16 %v2625, %v2617
    %v3426 = vpack.c.bf16 %v2626, %v2618
    %v3427 = vpack.c.bf16 %v2627, %v2619
    %v3428 = vpack.c.bf16 %v2628, %v2620
    %v3429 = vpack.c.bf16 %v2637, %v2629
    %v3430 = vpack.c.bf16 %v2638, %v2630
    %v3431 = vpack.c.bf16 %v2639, %v2631
    %v3432 = vpack.c.bf16 %v2640, %v2632
    %v3433 = vpack.c.bf16 %v2641, %v2633
    %v3434 = vpack.c.bf16 %v2642, %v2634
    %v3435 = vpack.c.bf16 %v2643, %v2635
    %v3436 = vpack.c.bf16 %v2644, %v2636
    %v3437 = vpack.c.bf16 %v2653, %v2645
    %v3438 = vpack.c.bf16 %v2654, %v2646
    %v3439 = vpack.c.bf16 %v2655, %v2647
    %v3440 = vpack.c.bf16 %v2656, %v2648
    %v3441 = vpack.c.bf16 %v2657, %v2649
    %v3442 = vpack.c.bf16 %v2658, %v2650
    %v3443 = vpack.c.bf16 %v2659, %v2651
    %v3444 = vpack.c.bf16 %v2660, %v2652
    %v3445 = vpack.c.bf16 %v2669, %v2661
    %v3446 = vpack.c.bf16 %v2670, %v2662
    %v3447 = vpack.c.bf16 %v2671, %v2663
    %v3448 = vpack.c.bf16 %v2672, %v2664
    %v3449 = vpack.c.bf16 %v2673, %v2665
    %v3450 = vpack.c.bf16 %v2674, %v2666
    %v3451 = vpack.c.bf16 %v2675, %v2667
    %v3452 = vpack.c.bf16 %v2676, %v2668
    %v3453 = vpack.c.bf16 %v2685, %v2677
    %v3454 = vpack.c.bf16 %v2686, %v2678
    %v3455 = vpack.c.bf16 %v2687, %v2679
    %v3456 = vpack.c.bf16 %v2688, %v2680
    %v3457 = vpack.c.bf16 %v2689, %v2681
    %v3458 = vpack.c.bf16 %v2690, %v2682
    %v3459 = vpack.c.bf16 %v2691, %v2683
    %v3460 = vpack.c.bf16 %v2692, %v2684
    %v3461 = vpack.c.bf16 %v2701, %v2693
    %v3462 = vpack.c.bf16 %v2702, %v2694
    %v3463 = vpack.c.bf16 %v2703, %v2695
    %v3464 = vpack.c.bf16 %v2704, %v2696
    %v3465 = vpack.c.bf16 %v2705, %v2697
    %v3466 = vpack.c.bf16 %v2706, %v2698
    %v3467 = vpack.c.bf16 %v2707, %v2699
    %v3468 = vpack.c.bf16 %v2708, %v2700
    %v3469 = vpack.c.bf16 %v2717, %v2709
    %v3470 = vpack.c.bf16 %v2718, %v2710
    %v3471 = vpack.c.bf16 %v2719, %v2711
    %v3472 = vpack.c.bf16 %v2720, %v2712
    %v3473 = vpack.c.bf16 %v2721, %v2713
    %v3474 = vpack.c.bf16 %v2722, %v2714
    %v3475 = vpack.c.bf16 %v2723, %v2715
    %v3476 = vpack.c.bf16 %v2724, %v2716
    %v3477 = vpack.c.bf16 %v2733, %v2725
    %v3478 = vpack.c.bf16 %v2734, %v2726
    %v3479 = vpack.c.bf16 %v2735, %v2727
    %v3480 = vpack.c.bf16 %v2736, %v2728
    %v3481 = vpack.c.bf16 %v2737, %v2729
    %v3482 = vpack.c.bf16 %v2738, %v2730
    %v3483 = vpack.c.bf16 %v2739, %v2731
    %v3484 = vpack.c.bf16 %v2740, %v2732
    %v3485 = vpack.c.bf16 %v2749, %v2741
    %v3486 = vpack.c.bf16 %v2750, %v2742
    %v3487 = vpack.c.bf16 %v2751, %v2743
    %v3488 = vpack.c.bf16 %v2752, %v2744
    %v3489 = vpack.c.bf16 %v2753, %v2745
    %v3490 = vpack.c.bf16 %v2754, %v2746
    %v3491 = vpack.c.bf16 %v2755, %v2747
    %v3492 = vpack.c.bf16 %v2756, %v2748
    %v3493 = vpack.c.bf16 %v2765, %v2757
    %v3494 = vpack.c.bf16 %v2766, %v2758
    %v3495 = vpack.c.bf16 %v2767, %v2759
    %v3496 = vpack.c.bf16 %v2768, %v2760
    %v3497 = vpack.c.bf16 %v2769, %v2761
    %v3498 = vpack.c.bf16 %v2770, %v2762
    %v3499 = vpack.c.bf16 %v2771, %v2763
    %v3500 = vpack.c.bf16 %v2772, %v2764
    %v3501 = vpack.c.bf16 %v2781, %v2773
    %v3502 = vpack.c.bf16 %v2782, %v2774
    %v3503 = vpack.c.bf16 %v2783, %v2775
    %v3504 = vpack.c.bf16 %v2784, %v2776
    %v3505 = vpack.c.bf16 %v2785, %v2777
    %v3506 = vpack.c.bf16 %v2786, %v2778
    %v3507 = vpack.c.bf16 %v2787, %v2779
    %v3508 = vpack.c.bf16 %v2788, %v2780
    %v3509 = vpack.c.bf16 %v2797, %v2789
    %v3510 = vpack.c.bf16 %v2798, %v2790
    %v3511 = vpack.c.bf16 %v2799, %v2791
    %v3512 = vpack.c.bf16 %v2800, %v2792
    %v3513 = vpack.c.bf16 %v2801, %v2793
    %v3514 = vpack.c.bf16 %v2802, %v2794
    %v3515 = vpack.c.bf16 %v2803, %v2795
    %v3516 = vpack.c.bf16 %v2804, %v2796
    %v3517 = vpack.c.bf16 %v2813, %v2805
    %v3518 = vpack.c.bf16 %v2814, %v2806
    %v3519 = vpack.c.bf16 %v2815, %v2807
    %v3520 = vpack.c.bf16 %v2816, %v2808
    %v3521 = vpack.c.bf16 %v2817, %v2809
    %v3522 = vpack.c.bf16 %v2818, %v2810
    %v3523 = vpack.c.bf16 %v2819, %v2811
    %v3524 = vpack.c.bf16 %v2820, %v2812
    %v3525 = vpack.c.bf16 %v2829, %v2821
    %v3526 = vpack.c.bf16 %v2830, %v2822
    %v3527 = vpack.c.bf16 %v2831, %v2823
    %v3528 = vpack.c.bf16 %v2832, %v2824
    %v3529 = vpack.c.bf16 %v2833, %v2825
    %v3530 = vpack.c.bf16 %v2834, %v2826
    %v3531 = vpack.c.bf16 %v2835, %v2827
    %v3532 = vpack.c.bf16 %v2836, %v2828
    %v3533 = vpack.c.bf16 %v2845, %v2837
    %v3534 = vpack.c.bf16 %v2846, %v2838
    %v3535 = vpack.c.bf16 %v2847, %v2839
    %v3536 = vpack.c.bf16 %v2848, %v2840
    %v3537 = vpack.c.bf16 %v2849, %v2841
    %v3538 = vpack.c.bf16 %v2850, %v2842
    %v3539 = vpack.c.bf16 %v2851, %v2843
    %v3540 = vpack.c.bf16 %v2852, %v2844
    %v3541 = vpack.c.bf16 %v2861, %v2853
    %v3542 = vpack.c.bf16 %v2862, %v2854
    %v3543 = vpack.c.bf16 %v2863, %v2855
    %v3544 = vpack.c.bf16 %v2864, %v2856
    %v3545 = vpack.c.bf16 %v2865, %v2857
    %v3546 = vpack.c.bf16 %v2866, %v2858
    %v3547 = vpack.c.bf16 %v2867, %v2859
    %v3548 = vpack.c.bf16 %v2868, %v2860
    %v3549 = vpack.c.bf16 %v2877, %v2869
    %v3550 = vpack.c.bf16 %v2878, %v2870
    %v3551 = vpack.c.bf16 %v2879, %v2871
    %v3552 = vpack.c.bf16 %v2880, %v2872
    %v3553 = vpack.c.bf16 %v2881, %v2873
    %v3554 = vpack.c.bf16 %v2882, %v2874
    %v3555 = vpack.c.bf16 %v2883, %v2875
    %v3556 = vpack.c.bf16 %v2884, %v2876
    %v3557 = vpack.c.bf16 %v2893, %v2885
    %v3558 = vpack.c.bf16 %v2894, %v2886
    %v3559 = vpack.c.bf16 %v2895, %v2887
    %v3560 = vpack.c.bf16 %v2896, %v2888
    %v3561 = vpack.c.bf16 %v2897, %v2889
    %v3562 = vpack.c.bf16 %v2898, %v2890
    %v3563 = vpack.c.bf16 %v2899, %v2891
    %v3564 = vpack.c.bf16 %v2900, %v2892
    %v3565 = vpack.c.bf16 %v2909, %v2901
    %v3566 = vpack.c.bf16 %v2910, %v2902
    %v3567 = vpack.c.bf16 %v2911, %v2903
    %v3568 = vpack.c.bf16 %v2912, %v2904
    %v3569 = vpack.c.bf16 %v2913, %v2905
    %v3570 = vpack.c.bf16 %v2914, %v2906
    %v3571 = vpack.c.bf16 %v2915, %v2907
    %v3572 = vpack.c.bf16 %v2916, %v2908
    %v3573 = vpack.c.bf16 %v2925, %v2917
    %v3574 = vpack.c.bf16 %v2926, %v2918
    %v3575 = vpack.c.bf16 %v2927, %v2919
    %v3576 = vpack.c.bf16 %v2928, %v2920
    %v3577 = vpack.c.bf16 %v2929, %v2921
    %v3578 = vpack.c.bf16 %v2930, %v2922
    %v3579 = vpack.c.bf16 %v2931, %v2923
    %v3580 = vpack.c.bf16 %v2932, %v2924
    %v3581 = vpack.c.bf16 %v2941, %v2933
    %v3582 = vpack.c.bf16 %v2942, %v2934
    %v3583 = vpack.c.bf16 %v2943, %v2935
    %v3584 = vpack.c.bf16 %v2944, %v2936
    %v3585 = vpack.c.bf16 %v2945, %v2937
    %v3586 = vpack.c.bf16 %v2946, %v2938
    %v3587 = vpack.c.bf16 %v2947, %v2939
    %v3588 = vpack.c.bf16 %v2948, %v2940
    %v3589 = vpack.c.bf16 %v2957, %v2949
    %v3590 = vpack.c.bf16 %v2958, %v2950
    %v3591 = vpack.c.bf16 %v2959, %v2951
    %v3592 = vpack.c.bf16 %v2960, %v2952
    %v3593 = vpack.c.bf16 %v2961, %v2953
    %v3594 = vpack.c.bf16 %v2962, %v2954
    %v3595 = vpack.c.bf16 %v2963, %v2955
    %v3596 = vpack.c.bf16 %v2964, %v2956
    %v3597 = vpack.c.bf16 %v2973, %v2965
    %v3598 = vpack.c.bf16 %v2974, %v2966
    %v3599 = vpack.c.bf16 %v2975, %v2967
    %v3600 = vpack.c.bf16 %v2976, %v2968
    %v3601 = vpack.c.bf16 %v2977, %v2969
    %v3602 = vpack.c.bf16 %v2978, %v2970
    %v3603 = vpack.c.bf16 %v2979, %v2971
    %v3604 = vpack.c.bf16 %v2980, %v2972
    %v3605 = vpack.c.bf16 %v2989, %v2981
    %v3606 = vpack.c.bf16 %v2990, %v2982
    %v3607 = vpack.c.bf16 %v2991, %v2983
    %v3608 = vpack.c.bf16 %v2992, %v2984
    %v3609 = vpack.c.bf16 %v2993, %v2985
    %v3610 = vpack.c.bf16 %v2994, %v2986
    %v3611 = vpack.c.bf16 %v2995, %v2987
    %v3612 = vpack.c.bf16 %v2996, %v2988
    %v3613 = vpack.c.bf16 %v3005, %v2997
    %v3614 = vpack.c.bf16 %v3006, %v2998
    %v3615 = vpack.c.bf16 %v3007, %v2999
    %v3616 = vpack.c.bf16 %v3008, %v3000
    %v3617 = vpack.c.bf16 %v3009, %v3001
    %v3618 = vpack.c.bf16 %v3010, %v3002
    %v3619 = vpack.c.bf16 %v3011, %v3003
    %v3620 = vpack.c.bf16 %v3012, %v3004
    %v3621 = vpack.c.bf16 %v3021, %v3013
    %v3622 = vpack.c.bf16 %v3022, %v3014
    %v3623 = vpack.c.bf16 %v3023, %v3015
    %v3624 = vpack.c.bf16 %v3024, %v3016
    %v3625 = vpack.c.bf16 %v3025, %v3017
    %v3626 = vpack.c.bf16 %v3026, %v3018
    %v3627 = vpack.c.bf16 %v3027, %v3019
    %v3628 = vpack.c.bf16 %v3028, %v3020
    %v3629 = vpack.c.bf16 %v3037, %v3029
    %v3630 = vpack.c.bf16 %v3038, %v3030
    %v3631 = vpack.c.bf16 %v3039, %v3031
    %v3632 = vpack.c.bf16 %v3040, %v3032
    %v3633 = vpack.c.bf16 %v3041, %v3033
    %v3634 = vpack.c.bf16 %v3042, %v3034
    %v3635 = vpack.c.bf16 %v3043, %v3035
    %v3636 = vpack.c.bf16 %v3044, %v3036
    %v3637 = vpack.c.bf16 %v3053, %v3045
    %v3638 = vpack.c.bf16 %v3054, %v3046
    %v3639 = vpack.c.bf16 %v3055, %v3047
    %v3640 = vpack.c.bf16 %v3056, %v3048
    %v3641 = vpack.c.bf16 %v3057, %v3049
    %v3642 = vpack.c.bf16 %v3058, %v3050
    %v3643 = vpack.c.bf16 %v3059, %v3051
    %v3644 = vpack.c.bf16 %v3060, %v3052
    %v3645 = vpack.c.bf16 %v3069, %v3061
    %v3646 = vpack.c.bf16 %v3070, %v3062
    %v3647 = vpack.c.bf16 %v3071, %v3063
    %v3648 = vpack.c.bf16 %v3072, %v3064
    %v3649 = vpack.c.bf16 %v3073, %v3065
    %v3650 = vpack.c.bf16 %v3074, %v3066
    %v3651 = vpack.c.bf16 %v3075, %v3067
    %v3652 = vpack.c.bf16 %v3076, %v3068
    %v3653 = vpack.c.bf16 %v3085, %v3077
    %v3654 = vpack.c.bf16 %v3086, %v3078
    %v3655 = vpack.c.bf16 %v3087, %v3079
    %v3656 = vpack.c.bf16 %v3088, %v3080
    %v3657 = vpack.c.bf16 %v3089, %v3081
    %v3658 = vpack.c.bf16 %v3090, %v3082
    %v3659 = vpack.c.bf16 %v3091, %v3083
    %v3660 = vpack.c.bf16 %v3092, %v3084
    %v3661 = vpack.c.bf16 %v3101, %v3093
    %v3662 = vpack.c.bf16 %v3102, %v3094
    %v3663 = vpack.c.bf16 %v3103, %v3095
    %v3664 = vpack.c.bf16 %v3104, %v3096
    %v3665 = vpack.c.bf16 %v3105, %v3097
    %v3666 = vpack.c.bf16 %v3106, %v3098
    %v3667 = vpack.c.bf16 %v3107, %v3099
    %v3668 = vpack.c.bf16 %v3108, %v3100
    %v3669 = vpack.c.bf16 %v3117, %v3109
    %v3670 = vpack.c.bf16 %v3118, %v3110
    %v3671 = vpack.c.bf16 %v3119, %v3111
    %v3672 = vpack.c.bf16 %v3120, %v3112
    %v3673 = vpack.c.bf16 %v3121, %v3113
    %v3674 = vpack.c.bf16 %v3122, %v3114
    %v3675 = vpack.c.bf16 %v3123, %v3115
    %v3676 = vpack.c.bf16 %v3124, %v3116
    %v3677 = vpack.c.bf16 %v3133, %v3125
    %v3678 = vpack.c.bf16 %v3134, %v3126
    %v3679 = vpack.c.bf16 %v3135, %v3127
    %v3680 = vpack.c.bf16 %v3136, %v3128
    %v3681 = vpack.c.bf16 %v3137, %v3129
    %v3682 = vpack.c.bf16 %v3138, %v3130
    %v3683 = vpack.c.bf16 %v3139, %v3131
    %v3684 = vpack.c.bf16 %v3140, %v3132
    %v3685 = vpack.c.bf16 %v3149, %v3141
    %v3686 = vpack.c.bf16 %v3150, %v3142
    %v3687 = vpack.c.bf16 %v3151, %v3143
    %v3688 = vpack.c.bf16 %v3152, %v3144
    %v3689 = vpack.c.bf16 %v3153, %v3145
    %v3690 = vpack.c.bf16 %v3154, %v3146
    %v3691 = vpack.c.bf16 %v3155, %v3147
    %v3692 = vpack.c.bf16 %v3156, %v3148
    %v3693 = vpack.c.bf16 %v3165, %v3157
    %v3694 = vpack.c.bf16 %v3166, %v3158
    %v3695 = vpack.c.bf16 %v3167, %v3159
    %v3696 = vpack.c.bf16 %v3168, %v3160
    %v3697 = vpack.c.bf16 %v3169, %v3161
    %v3698 = vpack.c.bf16 %v3170, %v3162
    %v3699 = vpack.c.bf16 %v3171, %v3163
    %v3700 = vpack.c.bf16 %v3172, %v3164
    %v3701 = vpack.c.bf16 %v3181, %v3173
    %v3702 = vpack.c.bf16 %v3182, %v3174
    %v3703 = vpack.c.bf16 %v3183, %v3175
    %v3704 = vpack.c.bf16 %v3184, %v3176
    %v3705 = vpack.c.bf16 %v3185, %v3177
    %v3706 = vpack.c.bf16 %v3186, %v3178
    %v3707 = vpack.c.bf16 %v3187, %v3179
    %v3708 = vpack.c.bf16 %v3188, %v3180
    %v3709 = vpack.c.bf16 %v3197, %v3189
    %v3710 = vpack.c.bf16 %v3198, %v3190
    %v3711 = vpack.c.bf16 %v3199, %v3191
    %v3712 = vpack.c.bf16 %v3200, %v3192
    %v3713 = vpack.c.bf16 %v3201, %v3193
    %v3714 = vpack.c.bf16 %v3202, %v3194
    %v3715 = vpack.c.bf16 %v3203, %v3195
    %v3716 = vpack.c.bf16 %v3204, %v3196
    %v3717 = vpack.c.bf16 %v889, %v881
    %v3718 = vpack.c.bf16 %v890, %v882
    %v3719 = vpack.c.bf16 %v891, %v883
    %v3720 = vpack.c.bf16 %v892, %v884
    %v3721 = vpack.c.bf16 %v893, %v885
    %v3722 = vpack.c.bf16 %v894, %v886
    %v3723 = vpack.c.bf16 %v895, %v887
    %v3724 = vpack.c.bf16 %v896, %v888
    %3725 = vmatpush.bf16.msra.mxu0 %v3261
    %3726 = vmatpush.bf16.msra.mxu0 %v3253
    %3727 = vmatpush.bf16.msra.mxu0 %v3245
    %3728 = vmatpush.bf16.msra.mxu0 %v3237
    %3729 = vmatpush.bf16.msra.mxu0 %v3229
    %3730 = vmatpush.bf16.msra.mxu0 %v3221
    %3731 = vmatpush.bf16.msra.mxu0 %v3213
    %3732 = vmatpush.bf16.msra.mxu0 %v3205
    %3733 = vmatmul.bf16.gmra.mxu0 %v3717
    %v3734 = vpop.f32.mrf.mxu0
    %v3735 = vadd.f32 0.0, %v3734
    %v3736 = vpop.f32.mrf.mxu0
    %v3737 = vadd.f32 0.0, %v3736
    %3738 = vdwg.mxu0
    %3739 = vmatpush.bf16.msra.mxu0 %v3325
    %3740 = vmatpush.bf16.msra.mxu0 %v3317
    %3741 = vmatpush.bf16.msra.mxu0 %v3309
    %3742 = vmatpush.bf16.msra.mxu0 %v3301
    %3743 = vmatpush.bf16.msra.mxu0 %v3293
    %3744 = vmatpush.bf16.msra.mxu0 %v3285
    %3745 = vmatpush.bf16.msra.mxu0 %v3277
    %3746 = vmatpush.bf16.msra.mxu0 %v3269
    %3747 = vmatmul.bf16.gmra.mxu0 %v3718
    %v3748 = vpop.f32.mrf.mxu0
    %v3749 = vadd.f32 %v3735, %v3748
    %v3750 = vpop.f32.mrf.mxu0
    %v3751 = vadd.f32 %v3737, %v3750
    %3752 = vdwg.mxu0
    %3753 = vmatpush.bf16.msra.mxu0 %v3389
    %3754 = vmatpush.bf16.msra.mxu0 %v3381
    %3755 = vmatpush.bf16.msra.mxu0 %v3373
    %3756 = vmatpush.bf16.msra.mxu0 %v3365
    %3757 = vmatpush.bf16.msra.mxu0 %v3357
    %3758 = vmatpush.bf16.msra.mxu0 %v3349
    %3759 = vmatpush.bf16.msra.mxu0 %v3341
    %3760 = vmatpush.bf16.msra.mxu0 %v3333
    %3761 = vmatmul.bf16.gmra.mxu0 %v3719
    %v3762 = vpop.f32.mrf.mxu0
    %v3763 = vadd.f32 %v3749, %v3762
    %v3764 = vpop.f32.mrf.mxu0
    %v3765 = vadd.f32 %v3751, %v3764
    %3766 = vdwg.mxu0
    %3767 = vmatpush.bf16.msra.mxu0 %v3453
    %3768 = vmatpush.bf16.msra.mxu0 %v3445
    %3769 = vmatpush.bf16.msra.mxu0 %v3437
    %3770 = vmatpush.bf16.msra.mxu0 %v3429
    %3771 = vmatpush.bf16.msra.mxu0 %v3421
    %3772 = vmatpush.bf16.msra.mxu0 %v3413
    %3773 = vmatpush.bf16.msra.mxu0 %v3405
    %3774 = vmatpush.bf16.msra.mxu0 %v3397
    %3775 = vmatmul.bf16.gmra.mxu0 %v3720
    %v3776 = vpop.f32.mrf.mxu0
    %v3777 = vadd.f32 %v3763, %v3776
    %v3778 = vpop.f32.mrf.mxu0
    %v3779 = vadd.f32 %v3765, %v3778
    %3780 = vdwg.mxu0
    %3781 = vmatpush.bf16.msra.mxu0 %v3517
    %3782 = vmatpush.bf16.msra.mxu0 %v3509
    %3783 = vmatpush.bf16.msra.mxu0 %v3501
    %3784 = vmatpush.bf16.msra.mxu0 %v3493
    %3785 = vmatpush.bf16.msra.mxu0 %v3485
    %3786 = vmatpush.bf16.msra.mxu0 %v3477
    %3787 = vmatpush.bf16.msra.mxu0 %v3469
    %3788 = vmatpush.bf16.msra.mxu0 %v3461
    %3789 = vmatmul.bf16.gmra.mxu0 %v3721
    %v3790 = vpop.f32.mrf.mxu0
    %v3791 = vadd.f32 %v3777, %v3790
    %v3792 = vpop.f32.mrf.mxu0
    %v3793 = vadd.f32 %v3779, %v3792
    %3794 = vdwg.mxu0
    %3795 = vmatpush.bf16.msra.mxu0 %v3581
    %3796 = vmatpush.bf16.msra.mxu0 %v3573
    %3797 = vmatpush.bf16.msra.mxu0 %v3565
    %3798 = vmatpush.bf16.msra.mxu0 %v3557
    %3799 = vmatpush.bf16.msra.mxu0 %v3549
    %3800 = vmatpush.bf16.msra.mxu0 %v3541
    %3801 = vmatpush.bf16.msra.mxu0 %v3533
    %3802 = vmatpush.bf16.msra.mxu0 %v3525
    %3803 = vmatmul.bf16.gmra.mxu0 %v3722
    %v3804 = vpop.f32.mrf.mxu0
    %v3805 = vadd.f32 %v3791, %v3804
    %v3806 = vpop.f32.mrf.mxu0
    %v3807 = vadd.f32 %v3793, %v3806
    %3808 = vdwg.mxu0
    %3809 = vmatpush.bf16.msra.mxu0 %v3645
    %3810 = vmatpush.bf16.msra.mxu0 %v3637
    %3811 = vmatpush.bf16.msra.mxu0 %v3629
    %3812 = vmatpush.bf16.msra.mxu0 %v3621
    %3813 = vmatpush.bf16.msra.mxu0 %v3613
    %3814 = vmatpush.bf16.msra.mxu0 %v3605
    %3815 = vmatpush.bf16.msra.mxu0 %v3597
    %3816 = vmatpush.bf16.msra.mxu0 %v3589
    %3817 = vmatmul.bf16.gmra.mxu0 %v3723
    %v3818 = vpop.f32.mrf.mxu0
    %v3819 = vadd.f32 %v3805, %v3818
    %v3820 = vpop.f32.mrf.mxu0
    %v3821 = vadd.f32 %v3807, %v3820
    %3822 = vdwg.mxu0
    %3823 = vmatpush.bf16.msra.mxu0 %v3709
    %3824 = vmatpush.bf16.msra.mxu0 %v3701
    %3825 = vmatpush.bf16.msra.mxu0 %v3693
    %3826 = vmatpush.bf16.msra.mxu0 %v3685
    %3827 = vmatpush.bf16.msra.mxu0 %v3677
    %3828 = vmatpush.bf16.msra.mxu0 %v3669
    %3829 = vmatpush.bf16.msra.mxu0 %v3661
    %3830 = vmatpush.bf16.msra.mxu0 %v3653
    %3831 = vmatmul.bf16.gmra.mxu0 %v3724
    %v3832 = vpop.f32.mrf.mxu0
    %v3833 = vadd.f32 %v3819, %v3832
    %v3834 = vpop.f32.mrf.mxu0
    %v3835 = vadd.f32 %v3821, %v3834
    %3836 = vdwg.mxu0
    %3837 = vmatpush.bf16.msra.mxu0 %v3262
    %3838 = vmatpush.bf16.msra.mxu0 %v3254
    %3839 = vmatpush.bf16.msra.mxu0 %v3246
    %3840 = vmatpush.bf16.msra.mxu0 %v3238
    %3841 = vmatpush.bf16.msra.mxu0 %v3230
    %3842 = vmatpush.bf16.msra.mxu0 %v3222
    %3843 = vmatpush.bf16.msra.mxu0 %v3214
    %3844 = vmatpush.bf16.msra.mxu0 %v3206
    %3845 = vmatmul.bf16.gmra.mxu0 %v3717
    %v3846 = vpop.f32.mrf.mxu0
    %v3847 = vadd.f32 0.0, %v3846
    %v3848 = vpop.f32.mrf.mxu0
    %v3849 = vadd.f32 0.0, %v3848
    %3850 = vdwg.mxu0
    %3851 = vmatpush.bf16.msra.mxu0 %v3326
    %3852 = vmatpush.bf16.msra.mxu0 %v3318
    %3853 = vmatpush.bf16.msra.mxu0 %v3310
    %3854 = vmatpush.bf16.msra.mxu0 %v3302
    %3855 = vmatpush.bf16.msra.mxu0 %v3294
    %3856 = vmatpush.bf16.msra.mxu0 %v3286
    %3857 = vmatpush.bf16.msra.mxu0 %v3278
    %3858 = vmatpush.bf16.msra.mxu0 %v3270
    %3859 = vmatmul.bf16.gmra.mxu0 %v3718
    %v3860 = vpop.f32.mrf.mxu0
    %v3861 = vadd.f32 %v3847, %v3860
    %v3862 = vpop.f32.mrf.mxu0
    %v3863 = vadd.f32 %v3849, %v3862
    %3864 = vdwg.mxu0
    %3865 = vmatpush.bf16.msra.mxu0 %v3390
    %3866 = vmatpush.bf16.msra.mxu0 %v3382
    %3867 = vmatpush.bf16.msra.mxu0 %v3374
    %3868 = vmatpush.bf16.msra.mxu0 %v3366
    %3869 = vmatpush.bf16.msra.mxu0 %v3358
    %3870 = vmatpush.bf16.msra.mxu0 %v3350
    %3871 = vmatpush.bf16.msra.mxu0 %v3342
    %3872 = vmatpush.bf16.msra.mxu0 %v3334
    %3873 = vmatmul.bf16.gmra.mxu0 %v3719
    %v3874 = vpop.f32.mrf.mxu0
    %v3875 = vadd.f32 %v3861, %v3874
    %v3876 = vpop.f32.mrf.mxu0
    %v3877 = vadd.f32 %v3863, %v3876
    %3878 = vdwg.mxu0
    %3879 = vmatpush.bf16.msra.mxu0 %v3454
    %3880 = vmatpush.bf16.msra.mxu0 %v3446
    %3881 = vmatpush.bf16.msra.mxu0 %v3438
    %3882 = vmatpush.bf16.msra.mxu0 %v3430
    %3883 = vmatpush.bf16.msra.mxu0 %v3422
    %3884 = vmatpush.bf16.msra.mxu0 %v3414
    %3885 = vmatpush.bf16.msra.mxu0 %v3406
    %3886 = vmatpush.bf16.msra.mxu0 %v3398
    %3887 = vmatmul.bf16.gmra.mxu0 %v3720
    %v3888 = vpop.f32.mrf.mxu0
    %v3889 = vadd.f32 %v3875, %v3888
    %v3890 = vpop.f32.mrf.mxu0
    %v3891 = vadd.f32 %v3877, %v3890
    %3892 = vdwg.mxu0
    %3893 = vmatpush.bf16.msra.mxu0 %v3518
    %3894 = vmatpush.bf16.msra.mxu0 %v3510
    %3895 = vmatpush.bf16.msra.mxu0 %v3502
    %3896 = vmatpush.bf16.msra.mxu0 %v3494
    %3897 = vmatpush.bf16.msra.mxu0 %v3486
    %3898 = vmatpush.bf16.msra.mxu0 %v3478
    %3899 = vmatpush.bf16.msra.mxu0 %v3470
    %3900 = vmatpush.bf16.msra.mxu0 %v3462
    %3901 = vmatmul.bf16.gmra.mxu0 %v3721
    %v3902 = vpop.f32.mrf.mxu0
    %v3903 = vadd.f32 %v3889, %v3902
    %v3904 = vpop.f32.mrf.mxu0
    %v3905 = vadd.f32 %v3891, %v3904
    %3906 = vdwg.mxu0
    %3907 = vmatpush.bf16.msra.mxu0 %v3582
    %3908 = vmatpush.bf16.msra.mxu0 %v3574
    %3909 = vmatpush.bf16.msra.mxu0 %v3566
    %3910 = vmatpush.bf16.msra.mxu0 %v3558
    %3911 = vmatpush.bf16.msra.mxu0 %v3550
    %3912 = vmatpush.bf16.msra.mxu0 %v3542
    %3913 = vmatpush.bf16.msra.mxu0 %v3534
    %3914 = vmatpush.bf16.msra.mxu0 %v3526
    %3915 = vmatmul.bf16.gmra.mxu0 %v3722
    %v3916 = vpop.f32.mrf.mxu0
    %v3917 = vadd.f32 %v3903, %v3916
    %v3918 = vpop.f32.mrf.mxu0
    %v3919 = vadd.f32 %v3905, %v3918
    %3920 = vdwg.mxu0
    %3921 = vmatpush.bf16.msra.mxu0 %v3646
    %3922 = vmatpush.bf16.msra.mxu0 %v3638
    %3923 = vmatpush.bf16.msra.mxu0 %v3630
    %3924 = vmatpush.bf16.msra.mxu0 %v3622
    %3925 = vmatpush.bf16.msra.mxu0 %v3614
    %3926 = vmatpush.bf16.msra.mxu0 %v3606
    %3927 = vmatpush.bf16.msra.mxu0 %v3598
    %3928 = vmatpush.bf16.msra.mxu0 %v3590
    %3929 = vmatmul.bf16.gmra.mxu0 %v3723
    %v3930 = vpop.f32.mrf.mxu0
    %v3931 = vadd.f32 %v3917, %v3930
    %v3932 = vpop.f32.mrf.mxu0
    %v3933 = vadd.f32 %v3919, %v3932
    %3934 = vdwg.mxu0
    %3935 = vmatpush.bf16.msra.mxu0 %v3710
    %3936 = vmatpush.bf16.msra.mxu0 %v3702
    %3937 = vmatpush.bf16.msra.mxu0 %v3694
    %3938 = vmatpush.bf16.msra.mxu0 %v3686
    %3939 = vmatpush.bf16.msra.mxu0 %v3678
    %3940 = vmatpush.bf16.msra.mxu0 %v3670
    %3941 = vmatpush.bf16.msra.mxu0 %v3662
    %3942 = vmatpush.bf16.msra.mxu0 %v3654
    %3943 = vmatmul.bf16.gmra.mxu0 %v3724
    %v3944 = vpop.f32.mrf.mxu0
    %v3945 = vadd.f32 %v3931, %v3944
    %v3946 = vpop.f32.mrf.mxu0
    %v3947 = vadd.f32 %v3933, %v3946
    %3948 = vdwg.mxu0
    %3949 = vmatpush.bf16.msra.mxu0 %v3263
    %3950 = vmatpush.bf16.msra.mxu0 %v3255
    %3951 = vmatpush.bf16.msra.mxu0 %v3247
    %3952 = vmatpush.bf16.msra.mxu0 %v3239
    %3953 = vmatpush.bf16.msra.mxu0 %v3231
    %3954 = vmatpush.bf16.msra.mxu0 %v3223
    %3955 = vmatpush.bf16.msra.mxu0 %v3215
    %3956 = vmatpush.bf16.msra.mxu0 %v3207
    %3957 = vmatmul.bf16.gmra.mxu0 %v3717
    %v3958 = vpop.f32.mrf.mxu0
    %v3959 = vadd.f32 0.0, %v3958
    %v3960 = vpop.f32.mrf.mxu0
    %v3961 = vadd.f32 0.0, %v3960
    %3962 = vdwg.mxu0
    %3963 = vmatpush.bf16.msra.mxu0 %v3327
    %3964 = vmatpush.bf16.msra.mxu0 %v3319
    %3965 = vmatpush.bf16.msra.mxu0 %v3311
    %3966 = vmatpush.bf16.msra.mxu0 %v3303
    %3967 = vmatpush.bf16.msra.mxu0 %v3295
    %3968 = vmatpush.bf16.msra.mxu0 %v3287
    %3969 = vmatpush.bf16.msra.mxu0 %v3279
    %3970 = vmatpush.bf16.msra.mxu0 %v3271
    %3971 = vmatmul.bf16.gmra.mxu0 %v3718
    %v3972 = vpop.f32.mrf.mxu0
    %v3973 = vadd.f32 %v3959, %v3972
    %v3974 = vpop.f32.mrf.mxu0
    %v3975 = vadd.f32 %v3961, %v3974
    %3976 = vdwg.mxu0
    %3977 = vmatpush.bf16.msra.mxu0 %v3391
    %3978 = vmatpush.bf16.msra.mxu0 %v3383
    %3979 = vmatpush.bf16.msra.mxu0 %v3375
    %3980 = vmatpush.bf16.msra.mxu0 %v3367
    %3981 = vmatpush.bf16.msra.mxu0 %v3359
    %3982 = vmatpush.bf16.msra.mxu0 %v3351
    %3983 = vmatpush.bf16.msra.mxu0 %v3343
    %3984 = vmatpush.bf16.msra.mxu0 %v3335
    %3985 = vmatmul.bf16.gmra.mxu0 %v3719
    %v3986 = vpop.f32.mrf.mxu0
    %v3987 = vadd.f32 %v3973, %v3986
    %v3988 = vpop.f32.mrf.mxu0
    %v3989 = vadd.f32 %v3975, %v3988
    %3990 = vdwg.mxu0
    %3991 = vmatpush.bf16.msra.mxu0 %v3455
    %3992 = vmatpush.bf16.msra.mxu0 %v3447
    %3993 = vmatpush.bf16.msra.mxu0 %v3439
    %3994 = vmatpush.bf16.msra.mxu0 %v3431
    %3995 = vmatpush.bf16.msra.mxu0 %v3423
    %3996 = vmatpush.bf16.msra.mxu0 %v3415
    %3997 = vmatpush.bf16.msra.mxu0 %v3407
    %3998 = vmatpush.bf16.msra.mxu0 %v3399
    %3999 = vmatmul.bf16.gmra.mxu0 %v3720
    %v4000 = vpop.f32.mrf.mxu0
    %v4001 = vadd.f32 %v3987, %v4000
    %v4002 = vpop.f32.mrf.mxu0
    %v4003 = vadd.f32 %v3989, %v4002
    %4004 = vdwg.mxu0
    %4005 = vmatpush.bf16.msra.mxu0 %v3519
    %4006 = vmatpush.bf16.msra.mxu0 %v3511
    %4007 = vmatpush.bf16.msra.mxu0 %v3503
    %4008 = vmatpush.bf16.msra.mxu0 %v3495
    %4009 = vmatpush.bf16.msra.mxu0 %v3487
    %4010 = vmatpush.bf16.msra.mxu0 %v3479
    %4011 = vmatpush.bf16.msra.mxu0 %v3471
    %4012 = vmatpush.bf16.msra.mxu0 %v3463
    %4013 = vmatmul.bf16.gmra.mxu0 %v3721
    %v4014 = vpop.f32.mrf.mxu0
    %v4015 = vadd.f32 %v4001, %v4014
    %v4016 = vpop.f32.mrf.mxu0
    %v4017 = vadd.f32 %v4003, %v4016
    %4018 = vdwg.mxu0
    %4019 = vmatpush.bf16.msra.mxu0 %v3583
    %4020 = vmatpush.bf16.msra.mxu0 %v3575
    %4021 = vmatpush.bf16.msra.mxu0 %v3567
    %4022 = vmatpush.bf16.msra.mxu0 %v3559
    %4023 = vmatpush.bf16.msra.mxu0 %v3551
    %4024 = vmatpush.bf16.msra.mxu0 %v3543
    %4025 = vmatpush.bf16.msra.mxu0 %v3535
    %4026 = vmatpush.bf16.msra.mxu0 %v3527
    %4027 = vmatmul.bf16.gmra.mxu0 %v3722
    %v4028 = vpop.f32.mrf.mxu0
    %v4029 = vadd.f32 %v4015, %v4028
    %v4030 = vpop.f32.mrf.mxu0
    %v4031 = vadd.f32 %v4017, %v4030
    %4032 = vdwg.mxu0
    %4033 = vmatpush.bf16.msra.mxu0 %v3647
    %4034 = vmatpush.bf16.msra.mxu0 %v3639
    %4035 = vmatpush.bf16.msra.mxu0 %v3631
    %4036 = vmatpush.bf16.msra.mxu0 %v3623
    %4037 = vmatpush.bf16.msra.mxu0 %v3615
    %4038 = vmatpush.bf16.msra.mxu0 %v3607
    %4039 = vmatpush.bf16.msra.mxu0 %v3599
    %4040 = vmatpush.bf16.msra.mxu0 %v3591
    %4041 = vmatmul.bf16.gmra.mxu0 %v3723
    %v4042 = vpop.f32.mrf.mxu0
    %v4043 = vadd.f32 %v4029, %v4042
    %v4044 = vpop.f32.mrf.mxu0
    %v4045 = vadd.f32 %v4031, %v4044
    %4046 = vdwg.mxu0
    %4047 = vmatpush.bf16.msra.mxu0 %v3711
    %4048 = vmatpush.bf16.msra.mxu0 %v3703
    %4049 = vmatpush.bf16.msra.mxu0 %v3695
    %4050 = vmatpush.bf16.msra.mxu0 %v3687
    %4051 = vmatpush.bf16.msra.mxu0 %v3679
    %4052 = vmatpush.bf16.msra.mxu0 %v3671
    %4053 = vmatpush.bf16.msra.mxu0 %v3663
    %4054 = vmatpush.bf16.msra.mxu0 %v3655
    %4055 = vmatmul.bf16.gmra.mxu0 %v3724
    %v4056 = vpop.f32.mrf.mxu0
    %v4057 = vadd.f32 %v4043, %v4056
    %v4058 = vpop.f32.mrf.mxu0
    %v4059 = vadd.f32 %v4045, %v4058
    %4060 = vdwg.mxu0
    %4061 = vmatpush.bf16.msra.mxu0 %v3264
    %4062 = vmatpush.bf16.msra.mxu0 %v3256
    %4063 = vmatpush.bf16.msra.mxu0 %v3248
    %4064 = vmatpush.bf16.msra.mxu0 %v3240
    %4065 = vmatpush.bf16.msra.mxu0 %v3232
    %4066 = vmatpush.bf16.msra.mxu0 %v3224
    %4067 = vmatpush.bf16.msra.mxu0 %v3216
    %4068 = vmatpush.bf16.msra.mxu0 %v3208
    %4069 = vmatmul.bf16.gmra.mxu0 %v3717
    %v4070 = vpop.f32.mrf.mxu0
    %v4071 = vadd.f32 0.0, %v4070
    %v4072 = vpop.f32.mrf.mxu0
    %v4073 = vadd.f32 0.0, %v4072
    %4074 = vdwg.mxu0
    %4075 = vmatpush.bf16.msra.mxu0 %v3328
    %4076 = vmatpush.bf16.msra.mxu0 %v3320
    %4077 = vmatpush.bf16.msra.mxu0 %v3312
    %4078 = vmatpush.bf16.msra.mxu0 %v3304
    %4079 = vmatpush.bf16.msra.mxu0 %v3296
    %4080 = vmatpush.bf16.msra.mxu0 %v3288
    %4081 = vmatpush.bf16.msra.mxu0 %v3280
    %4082 = vmatpush.bf16.msra.mxu0 %v3272
    %4083 = vmatmul.bf16.gmra.mxu0 %v3718
    %v4084 = vpop.f32.mrf.mxu0
    %v4085 = vadd.f32 %v4071, %v4084
    %v4086 = vpop.f32.mrf.mxu0
    %v4087 = vadd.f32 %v4073, %v4086
    %4088 = vdwg.mxu0
    %4089 = vmatpush.bf16.msra.mxu0 %v3392
    %4090 = vmatpush.bf16.msra.mxu0 %v3384
    %4091 = vmatpush.bf16.msra.mxu0 %v3376
    %4092 = vmatpush.bf16.msra.mxu0 %v3368
    %4093 = vmatpush.bf16.msra.mxu0 %v3360
    %4094 = vmatpush.bf16.msra.mxu0 %v3352
    %4095 = vmatpush.bf16.msra.mxu0 %v3344
    %4096 = vmatpush.bf16.msra.mxu0 %v3336
    %4097 = vmatmul.bf16.gmra.mxu0 %v3719
    %v4098 = vpop.f32.mrf.mxu0
    %v4099 = vadd.f32 %v4085, %v4098
    %v4100 = vpop.f32.mrf.mxu0
    %v4101 = vadd.f32 %v4087, %v4100
    %4102 = vdwg.mxu0
    %4103 = vmatpush.bf16.msra.mxu0 %v3456
    %4104 = vmatpush.bf16.msra.mxu0 %v3448
    %4105 = vmatpush.bf16.msra.mxu0 %v3440
    %4106 = vmatpush.bf16.msra.mxu0 %v3432
    %4107 = vmatpush.bf16.msra.mxu0 %v3424
    %4108 = vmatpush.bf16.msra.mxu0 %v3416
    %4109 = vmatpush.bf16.msra.mxu0 %v3408
    %4110 = vmatpush.bf16.msra.mxu0 %v3400
    %4111 = vmatmul.bf16.gmra.mxu0 %v3720
    %v4112 = vpop.f32.mrf.mxu0
    %v4113 = vadd.f32 %v4099, %v4112
    %v4114 = vpop.f32.mrf.mxu0
    %v4115 = vadd.f32 %v4101, %v4114
    %4116 = vdwg.mxu0
    %4117 = vmatpush.bf16.msra.mxu0 %v3520
    %4118 = vmatpush.bf16.msra.mxu0 %v3512
    %4119 = vmatpush.bf16.msra.mxu0 %v3504
    %4120 = vmatpush.bf16.msra.mxu0 %v3496
    %4121 = vmatpush.bf16.msra.mxu0 %v3488
    %4122 = vmatpush.bf16.msra.mxu0 %v3480
    %4123 = vmatpush.bf16.msra.mxu0 %v3472
    %4124 = vmatpush.bf16.msra.mxu0 %v3464
    %4125 = vmatmul.bf16.gmra.mxu0 %v3721
    %v4126 = vpop.f32.mrf.mxu0
    %v4127 = vadd.f32 %v4113, %v4126
    %v4128 = vpop.f32.mrf.mxu0
    %v4129 = vadd.f32 %v4115, %v4128
    %4130 = vdwg.mxu0
    %4131 = vmatpush.bf16.msra.mxu0 %v3584
    %4132 = vmatpush.bf16.msra.mxu0 %v3576
    %4133 = vmatpush.bf16.msra.mxu0 %v3568
    %4134 = vmatpush.bf16.msra.mxu0 %v3560
    %4135 = vmatpush.bf16.msra.mxu0 %v3552
    %4136 = vmatpush.bf16.msra.mxu0 %v3544
    %4137 = vmatpush.bf16.msra.mxu0 %v3536
    %4138 = vmatpush.bf16.msra.mxu0 %v3528
    %4139 = vmatmul.bf16.gmra.mxu0 %v3722
    %v4140 = vpop.f32.mrf.mxu0
    %v4141 = vadd.f32 %v4127, %v4140
    %v4142 = vpop.f32.mrf.mxu0
    %v4143 = vadd.f32 %v4129, %v4142
    %4144 = vdwg.mxu0
    %4145 = vmatpush.bf16.msra.mxu0 %v3648
    %4146 = vmatpush.bf16.msra.mxu0 %v3640
    %4147 = vmatpush.bf16.msra.mxu0 %v3632
    %4148 = vmatpush.bf16.msra.mxu0 %v3624
    %4149 = vmatpush.bf16.msra.mxu0 %v3616
    %4150 = vmatpush.bf16.msra.mxu0 %v3608
    %4151 = vmatpush.bf16.msra.mxu0 %v3600
    %4152 = vmatpush.bf16.msra.mxu0 %v3592
    %4153 = vmatmul.bf16.gmra.mxu0 %v3723
    %v4154 = vpop.f32.mrf.mxu0
    %v4155 = vadd.f32 %v4141, %v4154
    %v4156 = vpop.f32.mrf.mxu0
    %v4157 = vadd.f32 %v4143, %v4156
    %4158 = vdwg.mxu0
    %4159 = vmatpush.bf16.msra.mxu0 %v3712
    %4160 = vmatpush.bf16.msra.mxu0 %v3704
    %4161 = vmatpush.bf16.msra.mxu0 %v3696
    %4162 = vmatpush.bf16.msra.mxu0 %v3688
    %4163 = vmatpush.bf16.msra.mxu0 %v3680
    %4164 = vmatpush.bf16.msra.mxu0 %v3672
    %4165 = vmatpush.bf16.msra.mxu0 %v3664
    %4166 = vmatpush.bf16.msra.mxu0 %v3656
    %4167 = vmatmul.bf16.gmra.mxu0 %v3724
    %v4168 = vpop.f32.mrf.mxu0
    %v4169 = vadd.f32 %v4155, %v4168
    %v4170 = vpop.f32.mrf.mxu0
    %v4171 = vadd.f32 %v4157, %v4170
    %4172 = vdwg.mxu0
    %4173 = vmatpush.bf16.msra.mxu0 %v3265
    %4174 = vmatpush.bf16.msra.mxu0 %v3257
    %4175 = vmatpush.bf16.msra.mxu0 %v3249
    %4176 = vmatpush.bf16.msra.mxu0 %v3241
    %4177 = vmatpush.bf16.msra.mxu0 %v3233
    %4178 = vmatpush.bf16.msra.mxu0 %v3225
    %4179 = vmatpush.bf16.msra.mxu0 %v3217
    %4180 = vmatpush.bf16.msra.mxu0 %v3209
    %4181 = vmatmul.bf16.gmra.mxu0 %v3717
    %v4182 = vpop.f32.mrf.mxu0
    %v4183 = vadd.f32 0.0, %v4182
    %v4184 = vpop.f32.mrf.mxu0
    %v4185 = vadd.f32 0.0, %v4184
    %4186 = vdwg.mxu0
    %4187 = vmatpush.bf16.msra.mxu0 %v3329
    %4188 = vmatpush.bf16.msra.mxu0 %v3321
    %4189 = vmatpush.bf16.msra.mxu0 %v3313
    %4190 = vmatpush.bf16.msra.mxu0 %v3305
    %4191 = vmatpush.bf16.msra.mxu0 %v3297
    %4192 = vmatpush.bf16.msra.mxu0 %v3289
    %4193 = vmatpush.bf16.msra.mxu0 %v3281
    %4194 = vmatpush.bf16.msra.mxu0 %v3273
    %4195 = vmatmul.bf16.gmra.mxu0 %v3718
    %v4196 = vpop.f32.mrf.mxu0
    %v4197 = vadd.f32 %v4183, %v4196
    %v4198 = vpop.f32.mrf.mxu0
    %v4199 = vadd.f32 %v4185, %v4198
    %4200 = vdwg.mxu0
    %4201 = vmatpush.bf16.msra.mxu0 %v3393
    %4202 = vmatpush.bf16.msra.mxu0 %v3385
    %4203 = vmatpush.bf16.msra.mxu0 %v3377
    %4204 = vmatpush.bf16.msra.mxu0 %v3369
    %4205 = vmatpush.bf16.msra.mxu0 %v3361
    %4206 = vmatpush.bf16.msra.mxu0 %v3353
    %4207 = vmatpush.bf16.msra.mxu0 %v3345
    %4208 = vmatpush.bf16.msra.mxu0 %v3337
    %4209 = vmatmul.bf16.gmra.mxu0 %v3719
    %v4210 = vpop.f32.mrf.mxu0
    %v4211 = vadd.f32 %v4197, %v4210
    %v4212 = vpop.f32.mrf.mxu0
    %v4213 = vadd.f32 %v4199, %v4212
    %4214 = vdwg.mxu0
    %4215 = vmatpush.bf16.msra.mxu0 %v3457
    %4216 = vmatpush.bf16.msra.mxu0 %v3449
    %4217 = vmatpush.bf16.msra.mxu0 %v3441
    %4218 = vmatpush.bf16.msra.mxu0 %v3433
    %4219 = vmatpush.bf16.msra.mxu0 %v3425
    %4220 = vmatpush.bf16.msra.mxu0 %v3417
    %4221 = vmatpush.bf16.msra.mxu0 %v3409
    %4222 = vmatpush.bf16.msra.mxu0 %v3401
    %4223 = vmatmul.bf16.gmra.mxu0 %v3720
    %v4224 = vpop.f32.mrf.mxu0
    %v4225 = vadd.f32 %v4211, %v4224
    %v4226 = vpop.f32.mrf.mxu0
    %v4227 = vadd.f32 %v4213, %v4226
    %4228 = vdwg.mxu0
    %4229 = vmatpush.bf16.msra.mxu0 %v3521
    %4230 = vmatpush.bf16.msra.mxu0 %v3513
    %4231 = vmatpush.bf16.msra.mxu0 %v3505
    %4232 = vmatpush.bf16.msra.mxu0 %v3497
    %4233 = vmatpush.bf16.msra.mxu0 %v3489
    %4234 = vmatpush.bf16.msra.mxu0 %v3481
    %4235 = vmatpush.bf16.msra.mxu0 %v3473
    %4236 = vmatpush.bf16.msra.mxu0 %v3465
    %4237 = vmatmul.bf16.gmra.mxu0 %v3721
    %v4238 = vpop.f32.mrf.mxu0
    %v4239 = vadd.f32 %v4225, %v4238
    %v4240 = vpop.f32.mrf.mxu0
    %v4241 = vadd.f32 %v4227, %v4240
    %4242 = vdwg.mxu0
    %4243 = vmatpush.bf16.msra.mxu0 %v3585
    %4244 = vmatpush.bf16.msra.mxu0 %v3577
    %4245 = vmatpush.bf16.msra.mxu0 %v3569
    %4246 = vmatpush.bf16.msra.mxu0 %v3561
    %4247 = vmatpush.bf16.msra.mxu0 %v3553
    %4248 = vmatpush.bf16.msra.mxu0 %v3545
    %4249 = vmatpush.bf16.msra.mxu0 %v3537
    %4250 = vmatpush.bf16.msra.mxu0 %v3529
    %4251 = vmatmul.bf16.gmra.mxu0 %v3722
    %v4252 = vpop.f32.mrf.mxu0
    %v4253 = vadd.f32 %v4239, %v4252
    %v4254 = vpop.f32.mrf.mxu0
    %v4255 = vadd.f32 %v4241, %v4254
    %4256 = vdwg.mxu0
    %4257 = vmatpush.bf16.msra.mxu0 %v3649
    %4258 = vmatpush.bf16.msra.mxu0 %v3641
    %4259 = vmatpush.bf16.msra.mxu0 %v3633
    %4260 = vmatpush.bf16.msra.mxu0 %v3625
    %4261 = vmatpush.bf16.msra.mxu0 %v3617
    %4262 = vmatpush.bf16.msra.mxu0 %v3609
    %4263 = vmatpush.bf16.msra.mxu0 %v3601
    %4264 = vmatpush.bf16.msra.mxu0 %v3593
    %4265 = vmatmul.bf16.gmra.mxu0 %v3723
    %v4266 = vpop.f32.mrf.mxu0
    %v4267 = vadd.f32 %v4253, %v4266
    %v4268 = vpop.f32.mrf.mxu0
    %v4269 = vadd.f32 %v4255, %v4268
    %4270 = vdwg.mxu0
    %4271 = vmatpush.bf16.msra.mxu0 %v3713
    %4272 = vmatpush.bf16.msra.mxu0 %v3705
    %4273 = vmatpush.bf16.msra.mxu0 %v3697
    %4274 = vmatpush.bf16.msra.mxu0 %v3689
    %4275 = vmatpush.bf16.msra.mxu0 %v3681
    %4276 = vmatpush.bf16.msra.mxu0 %v3673
    %4277 = vmatpush.bf16.msra.mxu0 %v3665
    %4278 = vmatpush.bf16.msra.mxu0 %v3657
    %4279 = vmatmul.bf16.gmra.mxu0 %v3724
    %v4280 = vpop.f32.mrf.mxu0
    %v4281 = vadd.f32 %v4267, %v4280
    %v4282 = vpop.f32.mrf.mxu0
    %v4283 = vadd.f32 %v4269, %v4282
    %4284 = vdwg.mxu0
    %4285 = vmatpush.bf16.msra.mxu0 %v3266
    %4286 = vmatpush.bf16.msra.mxu0 %v3258
    %4287 = vmatpush.bf16.msra.mxu0 %v3250
    %4288 = vmatpush.bf16.msra.mxu0 %v3242
    %4289 = vmatpush.bf16.msra.mxu0 %v3234
    %4290 = vmatpush.bf16.msra.mxu0 %v3226
    %4291 = vmatpush.bf16.msra.mxu0 %v3218
    %4292 = vmatpush.bf16.msra.mxu0 %v3210
    %4293 = vmatmul.bf16.gmra.mxu0 %v3717
    %v4294 = vpop.f32.mrf.mxu0
    %v4295 = vadd.f32 0.0, %v4294
    %v4296 = vpop.f32.mrf.mxu0
    %v4297 = vadd.f32 0.0, %v4296
    %4298 = vdwg.mxu0
    %4299 = vmatpush.bf16.msra.mxu0 %v3330
    %4300 = vmatpush.bf16.msra.mxu0 %v3322
    %4301 = vmatpush.bf16.msra.mxu0 %v3314
    %4302 = vmatpush.bf16.msra.mxu0 %v3306
    %4303 = vmatpush.bf16.msra.mxu0 %v3298
    %4304 = vmatpush.bf16.msra.mxu0 %v3290
    %4305 = vmatpush.bf16.msra.mxu0 %v3282
    %4306 = vmatpush.bf16.msra.mxu0 %v3274
    %4307 = vmatmul.bf16.gmra.mxu0 %v3718
    %v4308 = vpop.f32.mrf.mxu0
    %v4309 = vadd.f32 %v4295, %v4308
    %v4310 = vpop.f32.mrf.mxu0
    %v4311 = vadd.f32 %v4297, %v4310
    %4312 = vdwg.mxu0
    %4313 = vmatpush.bf16.msra.mxu0 %v3394
    %4314 = vmatpush.bf16.msra.mxu0 %v3386
    %4315 = vmatpush.bf16.msra.mxu0 %v3378
    %4316 = vmatpush.bf16.msra.mxu0 %v3370
    %4317 = vmatpush.bf16.msra.mxu0 %v3362
    %4318 = vmatpush.bf16.msra.mxu0 %v3354
    %4319 = vmatpush.bf16.msra.mxu0 %v3346
    %4320 = vmatpush.bf16.msra.mxu0 %v3338
    %4321 = vmatmul.bf16.gmra.mxu0 %v3719
    %v4322 = vpop.f32.mrf.mxu0
    %v4323 = vadd.f32 %v4309, %v4322
    %v4324 = vpop.f32.mrf.mxu0
    %v4325 = vadd.f32 %v4311, %v4324
    %4326 = vdwg.mxu0
    %4327 = vmatpush.bf16.msra.mxu0 %v3458
    %4328 = vmatpush.bf16.msra.mxu0 %v3450
    %4329 = vmatpush.bf16.msra.mxu0 %v3442
    %4330 = vmatpush.bf16.msra.mxu0 %v3434
    %4331 = vmatpush.bf16.msra.mxu0 %v3426
    %4332 = vmatpush.bf16.msra.mxu0 %v3418
    %4333 = vmatpush.bf16.msra.mxu0 %v3410
    %4334 = vmatpush.bf16.msra.mxu0 %v3402
    %4335 = vmatmul.bf16.gmra.mxu0 %v3720
    %v4336 = vpop.f32.mrf.mxu0
    %v4337 = vadd.f32 %v4323, %v4336
    %v4338 = vpop.f32.mrf.mxu0
    %v4339 = vadd.f32 %v4325, %v4338
    %4340 = vdwg.mxu0
    %4341 = vmatpush.bf16.msra.mxu0 %v3522
    %4342 = vmatpush.bf16.msra.mxu0 %v3514
    %4343 = vmatpush.bf16.msra.mxu0 %v3506
    %4344 = vmatpush.bf16.msra.mxu0 %v3498
    %4345 = vmatpush.bf16.msra.mxu0 %v3490
    %4346 = vmatpush.bf16.msra.mxu0 %v3482
    %4347 = vmatpush.bf16.msra.mxu0 %v3474
    %4348 = vmatpush.bf16.msra.mxu0 %v3466
    %4349 = vmatmul.bf16.gmra.mxu0 %v3721
    %v4350 = vpop.f32.mrf.mxu0
    %v4351 = vadd.f32 %v4337, %v4350
    %v4352 = vpop.f32.mrf.mxu0
    %v4353 = vadd.f32 %v4339, %v4352
    %4354 = vdwg.mxu0
    %4355 = vmatpush.bf16.msra.mxu0 %v3586
    %4356 = vmatpush.bf16.msra.mxu0 %v3578
    %4357 = vmatpush.bf16.msra.mxu0 %v3570
    %4358 = vmatpush.bf16.msra.mxu0 %v3562
    %4359 = vmatpush.bf16.msra.mxu0 %v3554
    %4360 = vmatpush.bf16.msra.mxu0 %v3546
    %4361 = vmatpush.bf16.msra.mxu0 %v3538
    %4362 = vmatpush.bf16.msra.mxu0 %v3530
    %4363 = vmatmul.bf16.gmra.mxu0 %v3722
    %v4364 = vpop.f32.mrf.mxu0
    %v4365 = vadd.f32 %v4351, %v4364
    %v4366 = vpop.f32.mrf.mxu0
    %v4367 = vadd.f32 %v4353, %v4366
    %4368 = vdwg.mxu0
    %4369 = vmatpush.bf16.msra.mxu0 %v3650
    %4370 = vmatpush.bf16.msra.mxu0 %v3642
    %4371 = vmatpush.bf16.msra.mxu0 %v3634
    %4372 = vmatpush.bf16.msra.mxu0 %v3626
    %4373 = vmatpush.bf16.msra.mxu0 %v3618
    %4374 = vmatpush.bf16.msra.mxu0 %v3610
    %4375 = vmatpush.bf16.msra.mxu0 %v3602
    %4376 = vmatpush.bf16.msra.mxu0 %v3594
    %4377 = vmatmul.bf16.gmra.mxu0 %v3723
    %v4378 = vpop.f32.mrf.mxu0
    %v4379 = vadd.f32 %v4365, %v4378
    %v4380 = vpop.f32.mrf.mxu0
    %v4381 = vadd.f32 %v4367, %v4380
    %4382 = vdwg.mxu0
    %4383 = vmatpush.bf16.msra.mxu0 %v3714
    %4384 = vmatpush.bf16.msra.mxu0 %v3706
    %4385 = vmatpush.bf16.msra.mxu0 %v3698
    %4386 = vmatpush.bf16.msra.mxu0 %v3690
    %4387 = vmatpush.bf16.msra.mxu0 %v3682
    %4388 = vmatpush.bf16.msra.mxu0 %v3674
    %4389 = vmatpush.bf16.msra.mxu0 %v3666
    %4390 = vmatpush.bf16.msra.mxu0 %v3658
    %4391 = vmatmul.bf16.gmra.mxu0 %v3724
    %v4392 = vpop.f32.mrf.mxu0
    %v4393 = vadd.f32 %v4379, %v4392
    %v4394 = vpop.f32.mrf.mxu0
    %v4395 = vadd.f32 %v4381, %v4394
    %4396 = vdwg.mxu0
    %4397 = vmatpush.bf16.msra.mxu0 %v3267
    %4398 = vmatpush.bf16.msra.mxu0 %v3259
    %4399 = vmatpush.bf16.msra.mxu0 %v3251
    %4400 = vmatpush.bf16.msra.mxu0 %v3243
    %4401 = vmatpush.bf16.msra.mxu0 %v3235
    %4402 = vmatpush.bf16.msra.mxu0 %v3227
    %4403 = vmatpush.bf16.msra.mxu0 %v3219
    %4404 = vmatpush.bf16.msra.mxu0 %v3211
    %4405 = vmatmul.bf16.gmra.mxu0 %v3717
    %v4406 = vpop.f32.mrf.mxu0
    %v4407 = vadd.f32 0.0, %v4406
    %v4408 = vpop.f32.mrf.mxu0
    %v4409 = vadd.f32 0.0, %v4408
    %4410 = vdwg.mxu0
    %4411 = vmatpush.bf16.msra.mxu0 %v3331
    %4412 = vmatpush.bf16.msra.mxu0 %v3323
    %4413 = vmatpush.bf16.msra.mxu0 %v3315
    %4414 = vmatpush.bf16.msra.mxu0 %v3307
    %4415 = vmatpush.bf16.msra.mxu0 %v3299
    %4416 = vmatpush.bf16.msra.mxu0 %v3291
    %4417 = vmatpush.bf16.msra.mxu0 %v3283
    %4418 = vmatpush.bf16.msra.mxu0 %v3275
    %4419 = vmatmul.bf16.gmra.mxu0 %v3718
    %v4420 = vpop.f32.mrf.mxu0
    %v4421 = vadd.f32 %v4407, %v4420
    %v4422 = vpop.f32.mrf.mxu0
    %v4423 = vadd.f32 %v4409, %v4422
    %4424 = vdwg.mxu0
    %4425 = vmatpush.bf16.msra.mxu0 %v3395
    %4426 = vmatpush.bf16.msra.mxu0 %v3387
    %4427 = vmatpush.bf16.msra.mxu0 %v3379
    %4428 = vmatpush.bf16.msra.mxu0 %v3371
    %4429 = vmatpush.bf16.msra.mxu0 %v3363
    %4430 = vmatpush.bf16.msra.mxu0 %v3355
    %4431 = vmatpush.bf16.msra.mxu0 %v3347
    %4432 = vmatpush.bf16.msra.mxu0 %v3339
    %4433 = vmatmul.bf16.gmra.mxu0 %v3719
    %v4434 = vpop.f32.mrf.mxu0
    %v4435 = vadd.f32 %v4421, %v4434
    %v4436 = vpop.f32.mrf.mxu0
    %v4437 = vadd.f32 %v4423, %v4436
    %4438 = vdwg.mxu0
    %4439 = vmatpush.bf16.msra.mxu0 %v3459
    %4440 = vmatpush.bf16.msra.mxu0 %v3451
    %4441 = vmatpush.bf16.msra.mxu0 %v3443
    %4442 = vmatpush.bf16.msra.mxu0 %v3435
    %4443 = vmatpush.bf16.msra.mxu0 %v3427
    %4444 = vmatpush.bf16.msra.mxu0 %v3419
    %4445 = vmatpush.bf16.msra.mxu0 %v3411
    %4446 = vmatpush.bf16.msra.mxu0 %v3403
    %4447 = vmatmul.bf16.gmra.mxu0 %v3720
    %v4448 = vpop.f32.mrf.mxu0
    %v4449 = vadd.f32 %v4435, %v4448
    %v4450 = vpop.f32.mrf.mxu0
    %v4451 = vadd.f32 %v4437, %v4450
    %4452 = vdwg.mxu0
    %4453 = vmatpush.bf16.msra.mxu0 %v3523
    %4454 = vmatpush.bf16.msra.mxu0 %v3515
    %4455 = vmatpush.bf16.msra.mxu0 %v3507
    %4456 = vmatpush.bf16.msra.mxu0 %v3499
    %4457 = vmatpush.bf16.msra.mxu0 %v3491
    %4458 = vmatpush.bf16.msra.mxu0 %v3483
    %4459 = vmatpush.bf16.msra.mxu0 %v3475
    %4460 = vmatpush.bf16.msra.mxu0 %v3467
    %4461 = vmatmul.bf16.gmra.mxu0 %v3721
    %v4462 = vpop.f32.mrf.mxu0
    %v4463 = vadd.f32 %v4449, %v4462
    %v4464 = vpop.f32.mrf.mxu0
    %v4465 = vadd.f32 %v4451, %v4464
    %4466 = vdwg.mxu0
    %4467 = vmatpush.bf16.msra.mxu0 %v3587
    %4468 = vmatpush.bf16.msra.mxu0 %v3579
    %4469 = vmatpush.bf16.msra.mxu0 %v3571
    %4470 = vmatpush.bf16.msra.mxu0 %v3563
    %4471 = vmatpush.bf16.msra.mxu0 %v3555
    %4472 = vmatpush.bf16.msra.mxu0 %v3547
    %4473 = vmatpush.bf16.msra.mxu0 %v3539
    %4474 = vmatpush.bf16.msra.mxu0 %v3531
    %4475 = vmatmul.bf16.gmra.mxu0 %v3722
    %v4476 = vpop.f32.mrf.mxu0
    %v4477 = vadd.f32 %v4463, %v4476
    %v4478 = vpop.f32.mrf.mxu0
    %v4479 = vadd.f32 %v4465, %v4478
    %4480 = vdwg.mxu0
    %4481 = vmatpush.bf16.msra.mxu0 %v3651
    %4482 = vmatpush.bf16.msra.mxu0 %v3643
    %4483 = vmatpush.bf16.msra.mxu0 %v3635
    %4484 = vmatpush.bf16.msra.mxu0 %v3627
    %4485 = vmatpush.bf16.msra.mxu0 %v3619
    %4486 = vmatpush.bf16.msra.mxu0 %v3611
    %4487 = vmatpush.bf16.msra.mxu0 %v3603
    %4488 = vmatpush.bf16.msra.mxu0 %v3595
    %4489 = vmatmul.bf16.gmra.mxu0 %v3723
    %v4490 = vpop.f32.mrf.mxu0
    %v4491 = vadd.f32 %v4477, %v4490
    %v4492 = vpop.f32.mrf.mxu0
    %v4493 = vadd.f32 %v4479, %v4492
    %4494 = vdwg.mxu0
    %4495 = vmatpush.bf16.msra.mxu0 %v3715
    %4496 = vmatpush.bf16.msra.mxu0 %v3707
    %4497 = vmatpush.bf16.msra.mxu0 %v3699
    %4498 = vmatpush.bf16.msra.mxu0 %v3691
    %4499 = vmatpush.bf16.msra.mxu0 %v3683
    %4500 = vmatpush.bf16.msra.mxu0 %v3675
    %4501 = vmatpush.bf16.msra.mxu0 %v3667
    %4502 = vmatpush.bf16.msra.mxu0 %v3659
    %4503 = vmatmul.bf16.gmra.mxu0 %v3724
    %v4504 = vpop.f32.mrf.mxu0
    %v4505 = vadd.f32 %v4491, %v4504
    %v4506 = vpop.f32.mrf.mxu0
    %v4507 = vadd.f32 %v4493, %v4506
    %4508 = vdwg.mxu0
    %4509 = vmatpush.bf16.msra.mxu0 %v3268
    %4510 = vmatpush.bf16.msra.mxu0 %v3260
    %4511 = vmatpush.bf16.msra.mxu0 %v3252
    %4512 = vmatpush.bf16.msra.mxu0 %v3244
    %4513 = vmatpush.bf16.msra.mxu0 %v3236
    %4514 = vmatpush.bf16.msra.mxu0 %v3228
    %4515 = vmatpush.bf16.msra.mxu0 %v3220
    %4516 = vmatpush.bf16.msra.mxu0 %v3212
    %4517 = vmatmul.bf16.gmra.mxu0 %v3717
    %v4518 = vpop.f32.mrf.mxu0
    %v4519 = vadd.f32 0.0, %v4518
    %v4520 = vpop.f32.mrf.mxu0
    %v4521 = vadd.f32 0.0, %v4520
    %4522 = vdwg.mxu0
    %4523 = vmatpush.bf16.msra.mxu0 %v3332
    %4524 = vmatpush.bf16.msra.mxu0 %v3324
    %4525 = vmatpush.bf16.msra.mxu0 %v3316
    %4526 = vmatpush.bf16.msra.mxu0 %v3308
    %4527 = vmatpush.bf16.msra.mxu0 %v3300
    %4528 = vmatpush.bf16.msra.mxu0 %v3292
    %4529 = vmatpush.bf16.msra.mxu0 %v3284
    %4530 = vmatpush.bf16.msra.mxu0 %v3276
    %4531 = vmatmul.bf16.gmra.mxu0 %v3718
    %v4532 = vpop.f32.mrf.mxu0
    %v4533 = vadd.f32 %v4519, %v4532
    %v4534 = vpop.f32.mrf.mxu0
    %v4535 = vadd.f32 %v4521, %v4534
    %4536 = vdwg.mxu0
    %4537 = vmatpush.bf16.msra.mxu0 %v3396
    %4538 = vmatpush.bf16.msra.mxu0 %v3388
    %4539 = vmatpush.bf16.msra.mxu0 %v3380
    %4540 = vmatpush.bf16.msra.mxu0 %v3372
    %4541 = vmatpush.bf16.msra.mxu0 %v3364
    %4542 = vmatpush.bf16.msra.mxu0 %v3356
    %4543 = vmatpush.bf16.msra.mxu0 %v3348
    %4544 = vmatpush.bf16.msra.mxu0 %v3340
    %4545 = vmatmul.bf16.gmra.mxu0 %v3719
    %v4546 = vpop.f32.mrf.mxu0
    %v4547 = vadd.f32 %v4533, %v4546
    %v4548 = vpop.f32.mrf.mxu0
    %v4549 = vadd.f32 %v4535, %v4548
    %4550 = vdwg.mxu0
    %4551 = vmatpush.bf16.msra.mxu0 %v3460
    %4552 = vmatpush.bf16.msra.mxu0 %v3452
    %4553 = vmatpush.bf16.msra.mxu0 %v3444
    %4554 = vmatpush.bf16.msra.mxu0 %v3436
    %4555 = vmatpush.bf16.msra.mxu0 %v3428
    %4556 = vmatpush.bf16.msra.mxu0 %v3420
    %4557 = vmatpush.bf16.msra.mxu0 %v3412
    %4558 = vmatpush.bf16.msra.mxu0 %v3404
    %4559 = vmatmul.bf16.gmra.mxu0 %v3720
    %v4560 = vpop.f32.mrf.mxu0
    %v4561 = vadd.f32 %v4547, %v4560
    %v4562 = vpop.f32.mrf.mxu0
    %v4563 = vadd.f32 %v4549, %v4562
    %4564 = vdwg.mxu0
    %4565 = vmatpush.bf16.msra.mxu0 %v3524
    %4566 = vmatpush.bf16.msra.mxu0 %v3516
    %4567 = vmatpush.bf16.msra.mxu0 %v3508
    %4568 = vmatpush.bf16.msra.mxu0 %v3500
    %4569 = vmatpush.bf16.msra.mxu0 %v3492
    %4570 = vmatpush.bf16.msra.mxu0 %v3484
    %4571 = vmatpush.bf16.msra.mxu0 %v3476
    %4572 = vmatpush.bf16.msra.mxu0 %v3468
    %4573 = vmatmul.bf16.gmra.mxu0 %v3721
    %v4574 = vpop.f32.mrf.mxu0
    %v4575 = vadd.f32 %v4561, %v4574
    %v4576 = vpop.f32.mrf.mxu0
    %v4577 = vadd.f32 %v4563, %v4576
    %4578 = vdwg.mxu0
    %4579 = vmatpush.bf16.msra.mxu0 %v3588
    %4580 = vmatpush.bf16.msra.mxu0 %v3580
    %4581 = vmatpush.bf16.msra.mxu0 %v3572
    %4582 = vmatpush.bf16.msra.mxu0 %v3564
    %4583 = vmatpush.bf16.msra.mxu0 %v3556
    %4584 = vmatpush.bf16.msra.mxu0 %v3548
    %4585 = vmatpush.bf16.msra.mxu0 %v3540
    %4586 = vmatpush.bf16.msra.mxu0 %v3532
    %4587 = vmatmul.bf16.gmra.mxu0 %v3722
    %v4588 = vpop.f32.mrf.mxu0
    %v4589 = vadd.f32 %v4575, %v4588
    %v4590 = vpop.f32.mrf.mxu0
    %v4591 = vadd.f32 %v4577, %v4590
    %4592 = vdwg.mxu0
    %4593 = vmatpush.bf16.msra.mxu0 %v3652
    %4594 = vmatpush.bf16.msra.mxu0 %v3644
    %4595 = vmatpush.bf16.msra.mxu0 %v3636
    %4596 = vmatpush.bf16.msra.mxu0 %v3628
    %4597 = vmatpush.bf16.msra.mxu0 %v3620
    %4598 = vmatpush.bf16.msra.mxu0 %v3612
    %4599 = vmatpush.bf16.msra.mxu0 %v3604
    %4600 = vmatpush.bf16.msra.mxu0 %v3596
    %4601 = vmatmul.bf16.gmra.mxu0 %v3723
    %v4602 = vpop.f32.mrf.mxu0
    %v4603 = vadd.f32 %v4589, %v4602
    %v4604 = vpop.f32.mrf.mxu0
    %v4605 = vadd.f32 %v4591, %v4604
    %4606 = vdwg.mxu0
    %4607 = vmatpush.bf16.msra.mxu0 %v3716
    %4608 = vmatpush.bf16.msra.mxu0 %v3708
    %4609 = vmatpush.bf16.msra.mxu0 %v3700
    %4610 = vmatpush.bf16.msra.mxu0 %v3692
    %4611 = vmatpush.bf16.msra.mxu0 %v3684
    %4612 = vmatpush.bf16.msra.mxu0 %v3676
    %4613 = vmatpush.bf16.msra.mxu0 %v3668
    %4614 = vmatpush.bf16.msra.mxu0 %v3660
    %4615 = vmatmul.bf16.gmra.mxu0 %v3724
    %v4616 = vpop.f32.mrf.mxu0
    %v4617 = vadd.f32 %v4603, %v4616
    %v4618 = vpop.f32.mrf.mxu0
    %v4619 = vadd.f32 %v4605, %v4618
    %4620 = vdwg.mxu0
    %v4621 = vld [vmem:[#allocation12] ss:$2 sm:$0xff]
    %v4623 = vperm.slane %v4621, 0
    %v4624 = vperm.slane %v4621, 1
    %v4625 = vperm.slane %v4621, 2
    %v4626 = vperm.slane %v4621, 3
    %v4627 = vperm.slane %v4621, 4
    %v4628 = vperm.slane %v4621, 5
    %v4629 = vperm.slane %v4621, 6
    %v4630 = vperm.slane %v4621, 7
    %v4639 = vmul.f32 %v3833, %v4623
    %v4640 = vmul.f32 %v3945, %v4624
    %v4641 = vmul.f32 %v4057, %v4625
    %v4642 = vmul.f32 %v4169, %v4626
    %v4643 = vmul.f32 %v4281, %v4627
    %v4644 = vmul.f32 %v4393, %v4628
    %v4645 = vmul.f32 %v4505, %v4629
    %v4646 = vmul.f32 %v4617, %v4630
    %v4647 = vmul.f32 %v3835, %v4623
    %v4648 = vmul.f32 %v3947, %v4624
    %v4649 = vmul.f32 %v4059, %v4625
    %v4650 = vmul.f32 %v4171, %v4626
    %v4651 = vmul.f32 %v4283, %v4627
    %v4652 = vmul.f32 %v4395, %v4628
    %v4653 = vmul.f32 %v4507, %v4629
    %v4654 = vmul.f32 %v4619, %v4630
    %s4655 = scalar_lea.vmem [#allocation15], 1
    %v4656 = vld [vmem:[%s4655] ss:$4 sm:$0xff]
    %v4658 = vperm.slane %v4656, 0
    %v4659 = vperm.slane %v4656, 1
    %v4660 = vperm.slane %v4656, 2
    %v4661 = vperm.slane %v4656, 3
    %v4662 = vperm.slane %v4656, 4
    %v4663 = vperm.slane %v4656, 5
    %v4664 = vperm.slane %v4656, 6
    %v4665 = vperm.slane %v4656, 7
    %v4674 = vadd.f32 %v4639, %v4658
    %v4675 = vadd.f32 %v4640, %v4659
    %v4676 = vadd.f32 %v4641, %v4660
    %v4677 = vadd.f32 %v4642, %v4661
    %v4678 = vadd.f32 %v4643, %v4662
    %v4679 = vadd.f32 %v4644, %v4663
    %v4680 = vadd.f32 %v4645, %v4664
    %v4681 = vadd.f32 %v4646, %v4665
    %v4682 = vadd.f32 %v4647, %v4658
    %v4683 = vadd.f32 %v4648, %v4659
    %v4684 = vadd.f32 %v4649, %v4660
    %v4685 = vadd.f32 %v4650, %v4661
    %v4686 = vadd.f32 %v4651, %v4662
    %v4687 = vadd.f32 %v4652, %v4663
    %v4688 = vadd.f32 %v4653, %v4664
    %v4689 = vadd.f32 %v4654, %v4665
    %v4690 = vmax.f32 %v4674, 0.0
    %v4691 = vmax.f32 %v4675, 0.0
    %v4692 = vmax.f32 %v4676, 0.0
    %v4693 = vmax.f32 %v4677, 0.0
    %v4694 = vmax.f32 %v4678, 0.0
    %v4695 = vmax.f32 %v4679, 0.0
    %v4696 = vmax.f32 %v4680, 0.0
    %v4697 = vmax.f32 %v4681, 0.0
    %v4698 = vmax.f32 %v4682, 0.0
    %v4699 = vmax.f32 %v4683, 0.0
    %v4700 = vmax.f32 %v4684, 0.0
    %v4701 = vmax.f32 %v4685, 0.0
    %v4702 = vmax.f32 %v4686, 0.0
    %v4703 = vmax.f32 %v4687, 0.0
    %v4704 = vmax.f32 %v4688, 0.0
    %v4705 = vmax.f32 %v4689, 0.0
    %s4706 = sshll.u32 %s898, 4
    %4707 = dma.done %s144, %s4706
    %v4708 = vld [vmem:[#allocation3] sm:$0xff]
    %v4709 = vld [vmem:[#allocation3 + $0x8] sm:$0xff]
    %v4710 = vld [vmem:[#allocation3 + $0x10] sm:$0xff]
    %v4711 = vld [vmem:[#allocation3 + $0x18] sm:$0xff]
    %v4712 = vld [vmem:[#allocation3 + $0x20] sm:$0xff]
    %v4713 = vld [vmem:[#allocation3 + $0x28] sm:$0xff]
    %v4714 = vld [vmem:[#allocation3 + $0x30] sm:$0xff]
    %v4715 = vld [vmem:[#allocation3 + $0x38] sm:$0xff]
    %v4716 = vld [vmem:[#allocation3 + $0x40] sm:$0xff]
    %v4717 = vld [vmem:[#allocation3 + $0x48] sm:$0xff]
    %v4718 = vld [vmem:[#allocation3 + $0x50] sm:$0xff]
    %v4719 = vld [vmem:[#allocation3 + $0x58] sm:$0xff]
    %v4720 = vld [vmem:[#allocation3 + $0x60] sm:$0xff]
    %v4721 = vld [vmem:[#allocation3 + $0x68] sm:$0xff]
    %v4722 = vld [vmem:[#allocation3 + $0x70] sm:$0xff]
    %v4723 = vld [vmem:[#allocation3 + $0x78] sm:$0xff]
    %v4724 = vld [vmem:[#allocation3 + $0x80] sm:$0xff]
    %v4725 = vld [vmem:[#allocation3 + $0x88] sm:$0xff]
    %v4726 = vld [vmem:[#allocation3 + $0x90] sm:$0xff]
    %v4727 = vld [vmem:[#allocation3 + $0x98] sm:$0xff]
    %v4728 = vld [vmem:[#allocation3 + $0xa0] sm:$0xff]
    %v4729 = vld [vmem:[#allocation3 + $0xa8] sm:$0xff]
    %v4730 = vld [vmem:[#allocation3 + $0xb0] sm:$0xff]
    %v4731 = vld [vmem:[#allocation3 + $0xb8] sm:$0xff]
    %v4732 = vld [vmem:[#allocation3 + $0xc0] sm:$0xff]
    %v4733 = vld [vmem:[#allocation3 + $0xc8] sm:$0xff]
    %v4734 = vld [vmem:[#allocation3 + $0xd0] sm:$0xff]
    %v4735 = vld [vmem:[#allocation3 + $0xd8] sm:$0xff]
    %v4736 = vld [vmem:[#allocation3 + $0xe0] sm:$0xff]
    %v4737 = vld [vmem:[#allocation3 + $0xe8] sm:$0xff]
    %v4738 = vld [vmem:[#allocation3 + $0xf0] sm:$0xff]
    %v4739 = vld [vmem:[#allocation3 + $0xf8] sm:$0xff]
    %v4740 = vld [vmem:[#allocation3 + $0x100] sm:$0xff]
    %v4741 = vld [vmem:[#allocation3 + $0x108] sm:$0xff]
    %v4742 = vld [vmem:[#allocation3 + $0x110] sm:$0xff]
    %v4743 = vld [vmem:[#allocation3 + $0x118] sm:$0xff]
    %v4744 = vld [vmem:[#allocation3 + $0x120] sm:$0xff]
    %v4745 = vld [vmem:[#allocation3 + $0x128] sm:$0xff]
    %v4746 = vld [vmem:[#allocation3 + $0x130] sm:$0xff]
    %v4747 = vld [vmem:[#allocation3 + $0x138] sm:$0xff]
    %v4748 = vld [vmem:[#allocation3 + $0x140] sm:$0xff]
    %v4749 = vld [vmem:[#allocation3 + $0x148] sm:$0xff]
    %v4750 = vld [vmem:[#allocation3 + $0x150] sm:$0xff]
    %v4751 = vld [vmem:[#allocation3 + $0x158] sm:$0xff]
    %v4752 = vld [vmem:[#allocation3 + $0x160] sm:$0xff]
    %v4753 = vld [vmem:[#allocation3 + $0x168] sm:$0xff]
    %v4754 = vld [vmem:[#allocation3 + $0x170] sm:$0xff]
    %v4755 = vld [vmem:[#allocation3 + $0x178] sm:$0xff]
    %v4756 = vld [vmem:[#allocation3 + $0x180] sm:$0xff]
    %v4757 = vld [vmem:[#allocation3 + $0x188] sm:$0xff]
    %v4758 = vld [vmem:[#allocation3 + $0x190] sm:$0xff]
    %v4759 = vld [vmem:[#allocation3 + $0x198] sm:$0xff]
    %v4760 = vld [vmem:[#allocation3 + $0x1a0] sm:$0xff]
    %v4761 = vld [vmem:[#allocation3 + $0x1a8] sm:$0xff]
    %v4762 = vld [vmem:[#allocation3 + $0x1b0] sm:$0xff]
    %v4763 = vld [vmem:[#allocation3 + $0x1b8] sm:$0xff]
    %v4764 = vld [vmem:[#allocation3 + $0x1c0] sm:$0xff]
    %v4765 = vld [vmem:[#allocation3 + $0x1c8] sm:$0xff]
    %v4766 = vld [vmem:[#allocation3 + $0x1d0] sm:$0xff]
    %v4767 = vld [vmem:[#allocation3 + $0x1d8] sm:$0xff]
    %v4768 = vld [vmem:[#allocation3 + $0x1e0] sm:$0xff]
    %v4769 = vld [vmem:[#allocation3 + $0x1e8] sm:$0xff]
    %v4770 = vld [vmem:[#allocation3 + $0x1f0] sm:$0xff]
    %v4771 = vld [vmem:[#allocation3 + $0x1f8] sm:$0xff]
    %v4772 = vld [vmem:[#allocation3 + $0x200] sm:$0xff]
    %v4773 = vld [vmem:[#allocation3 + $0x208] sm:$0xff]
    %v4774 = vld [vmem:[#allocation3 + $0x210] sm:$0xff]
    %v4775 = vld [vmem:[#allocation3 + $0x218] sm:$0xff]
    %v4776 = vld [vmem:[#allocation3 + $0x220] sm:$0xff]
    %v4777 = vld [vmem:[#allocation3 + $0x228] sm:$0xff]
    %v4778 = vld [vmem:[#allocation3 + $0x230] sm:$0xff]
    %v4779 = vld [vmem:[#allocation3 + $0x238] sm:$0xff]
    %v4780 = vld [vmem:[#allocation3 + $0x240] sm:$0xff]
    %v4781 = vld [vmem:[#allocation3 + $0x248] sm:$0xff]
    %v4782 = vld [vmem:[#allocation3 + $0x250] sm:$0xff]
    %v4783 = vld [vmem:[#allocation3 + $0x258] sm:$0xff]
    %v4784 = vld [vmem:[#allocation3 + $0x260] sm:$0xff]
    %v4785 = vld [vmem:[#allocation3 + $0x268] sm:$0xff]
    %v4786 = vld [vmem:[#allocation3 + $0x270] sm:$0xff]
    %v4787 = vld [vmem:[#allocation3 + $0x278] sm:$0xff]
    %v4788 = vld [vmem:[#allocation3 + $0x280] sm:$0xff]
    %v4789 = vld [vmem:[#allocation3 + $0x288] sm:$0xff]
    %v4790 = vld [vmem:[#allocation3 + $0x290] sm:$0xff]
    %v4791 = vld [vmem:[#allocation3 + $0x298] sm:$0xff]
    %v4792 = vld [vmem:[#allocation3 + $0x2a0] sm:$0xff]
    %v4793 = vld [vmem:[#allocation3 + $0x2a8] sm:$0xff]
    %v4794 = vld [vmem:[#allocation3 + $0x2b0] sm:$0xff]
    %v4795 = vld [vmem:[#allocation3 + $0x2b8] sm:$0xff]
    %v4796 = vld [vmem:[#allocation3 + $0x2c0] sm:$0xff]
    %v4797 = vld [vmem:[#allocation3 + $0x2c8] sm:$0xff]
    %v4798 = vld [vmem:[#allocation3 + $0x2d0] sm:$0xff]
    %v4799 = vld [vmem:[#allocation3 + $0x2d8] sm:$0xff]
    %v4800 = vld [vmem:[#allocation3 + $0x2e0] sm:$0xff]
    %v4801 = vld [vmem:[#allocation3 + $0x2e8] sm:$0xff]
    %v4802 = vld [vmem:[#allocation3 + $0x2f0] sm:$0xff]
    %v4803 = vld [vmem:[#allocation3 + $0x2f8] sm:$0xff]
    %v4804 = vld [vmem:[#allocation3 + $0x300] sm:$0xff]
    %v4805 = vld [vmem:[#allocation3 + $0x308] sm:$0xff]
    %v4806 = vld [vmem:[#allocation3 + $0x310] sm:$0xff]
    %v4807 = vld [vmem:[#allocation3 + $0x318] sm:$0xff]
    %v4808 = vld [vmem:[#allocation3 + $0x320] sm:$0xff]
    %v4809 = vld [vmem:[#allocation3 + $0x328] sm:$0xff]
    %v4810 = vld [vmem:[#allocation3 + $0x330] sm:$0xff]
    %v4811 = vld [vmem:[#allocation3 + $0x338] sm:$0xff]
    %v4812 = vld [vmem:[#allocation3 + $0x340] sm:$0xff]
    %v4813 = vld [vmem:[#allocation3 + $0x348] sm:$0xff]
    %v4814 = vld [vmem:[#allocation3 + $0x350] sm:$0xff]
    %v4815 = vld [vmem:[#allocation3 + $0x358] sm:$0xff]
    %v4816 = vld [vmem:[#allocation3 + $0x360] sm:$0xff]
    %v4817 = vld [vmem:[#allocation3 + $0x368] sm:$0xff]
    %v4818 = vld [vmem:[#allocation3 + $0x370] sm:$0xff]
    %v4819 = vld [vmem:[#allocation3 + $0x378] sm:$0xff]
    %v4820 = vld [vmem:[#allocation3 + $0x380] sm:$0xff]
    %v4821 = vld [vmem:[#allocation3 + $0x388] sm:$0xff]
    %v4822 = vld [vmem:[#allocation3 + $0x390] sm:$0xff]
    %v4823 = vld [vmem:[#allocation3 + $0x398] sm:$0xff]
    %v4824 = vld [vmem:[#allocation3 + $0x3a0] sm:$0xff]
    %v4825 = vld [vmem:[#allocation3 + $0x3a8] sm:$0xff]
    %v4826 = vld [vmem:[#allocation3 + $0x3b0] sm:$0xff]
    %v4827 = vld [vmem:[#allocation3 + $0x3b8] sm:$0xff]
    %v4828 = vld [vmem:[#allocation3 + $0x3c0] sm:$0xff]
    %v4829 = vld [vmem:[#allocation3 + $0x3c8] sm:$0xff]
    %v4830 = vld [vmem:[#allocation3 + $0x3d0] sm:$0xff]
    %v4831 = vld [vmem:[#allocation3 + $0x3d8] sm:$0xff]
    %v4832 = vld [vmem:[#allocation3 + $0x3e0] sm:$0xff]
    %v4833 = vld [vmem:[#allocation3 + $0x3e8] sm:$0xff]
    %v4834 = vld [vmem:[#allocation3 + $0x3f0] sm:$0xff]
    %v4835 = vld [vmem:[#allocation3 + $0x3f8] sm:$0xff]
    %v4836 = vld [vmem:[#allocation3 + $0x400] sm:$0xff]
    %v4837 = vld [vmem:[#allocation3 + $0x408] sm:$0xff]
    %v4838 = vld [vmem:[#allocation3 + $0x410] sm:$0xff]
    %v4839 = vld [vmem:[#allocation3 + $0x418] sm:$0xff]
    %v4840 = vld [vmem:[#allocation3 + $0x420] sm:$0xff]
    %v4841 = vld [vmem:[#allocation3 + $0x428] sm:$0xff]
    %v4842 = vld [vmem:[#allocation3 + $0x430] sm:$0xff]
    %v4843 = vld [vmem:[#allocation3 + $0x438] sm:$0xff]
    %v4844 = vld [vmem:[#allocation3 + $0x440] sm:$0xff]
    %v4845 = vld [vmem:[#allocation3 + $0x448] sm:$0xff]
    %v4846 = vld [vmem:[#allocation3 + $0x450] sm:$0xff]
    %v4847 = vld [vmem:[#allocation3 + $0x458] sm:$0xff]
    %v4848 = vld [vmem:[#allocation3 + $0x460] sm:$0xff]
    %v4849 = vld [vmem:[#allocation3 + $0x468] sm:$0xff]
    %v4850 = vld [vmem:[#allocation3 + $0x470] sm:$0xff]
    %v4851 = vld [vmem:[#allocation3 + $0x478] sm:$0xff]
    %v4852 = vld [vmem:[#allocation3 + $0x480] sm:$0xff]
    %v4853 = vld [vmem:[#allocation3 + $0x488] sm:$0xff]
    %v4854 = vld [vmem:[#allocation3 + $0x490] sm:$0xff]
    %v4855 = vld [vmem:[#allocation3 + $0x498] sm:$0xff]
    %v4856 = vld [vmem:[#allocation3 + $0x4a0] sm:$0xff]
    %v4857 = vld [vmem:[#allocation3 + $0x4a8] sm:$0xff]
    %v4858 = vld [vmem:[#allocation3 + $0x4b0] sm:$0xff]
    %v4859 = vld [vmem:[#allocation3 + $0x4b8] sm:$0xff]
    %v4860 = vld [vmem:[#allocation3 + $0x4c0] sm:$0xff]
    %v4861 = vld [vmem:[#allocation3 + $0x4c8] sm:$0xff]
    %v4862 = vld [vmem:[#allocation3 + $0x4d0] sm:$0xff]
    %v4863 = vld [vmem:[#allocation3 + $0x4d8] sm:$0xff]
    %v4864 = vld [vmem:[#allocation3 + $0x4e0] sm:$0xff]
    %v4865 = vld [vmem:[#allocation3 + $0x4e8] sm:$0xff]
    %v4866 = vld [vmem:[#allocation3 + $0x4f0] sm:$0xff]
    %v4867 = vld [vmem:[#allocation3 + $0x4f8] sm:$0xff]
    %v4868 = vld [vmem:[#allocation3 + $0x500] sm:$0xff]
    %v4869 = vld [vmem:[#allocation3 + $0x508] sm:$0xff]
    %v4870 = vld [vmem:[#allocation3 + $0x510] sm:$0xff]
    %v4871 = vld [vmem:[#allocation3 + $0x518] sm:$0xff]
    %v4872 = vld [vmem:[#allocation3 + $0x520] sm:$0xff]
    %v4873 = vld [vmem:[#allocation3 + $0x528] sm:$0xff]
    %v4874 = vld [vmem:[#allocation3 + $0x530] sm:$0xff]
    %v4875 = vld [vmem:[#allocation3 + $0x538] sm:$0xff]
    %v4876 = vld [vmem:[#allocation3 + $0x540] sm:$0xff]
    %v4877 = vld [vmem:[#allocation3 + $0x548] sm:$0xff]
    %v4878 = vld [vmem:[#allocation3 + $0x550] sm:$0xff]
    %v4879 = vld [vmem:[#allocation3 + $0x558] sm:$0xff]
    %v4880 = vld [vmem:[#allocation3 + $0x560] sm:$0xff]
    %v4881 = vld [vmem:[#allocation3 + $0x568] sm:$0xff]
    %v4882 = vld [vmem:[#allocation3 + $0x570] sm:$0xff]
    %v4883 = vld [vmem:[#allocation3 + $0x578] sm:$0xff]
    %v4884 = vld [vmem:[#allocation3 + $0x580] sm:$0xff]
    %v4885 = vld [vmem:[#allocation3 + $0x588] sm:$0xff]
    %v4886 = vld [vmem:[#allocation3 + $0x590] sm:$0xff]
    %v4887 = vld [vmem:[#allocation3 + $0x598] sm:$0xff]
    %v4888 = vld [vmem:[#allocation3 + $0x5a0] sm:$0xff]
    %v4889 = vld [vmem:[#allocation3 + $0x5a8] sm:$0xff]
    %v4890 = vld [vmem:[#allocation3 + $0x5b0] sm:$0xff]
    %v4891 = vld [vmem:[#allocation3 + $0x5b8] sm:$0xff]
    %v4892 = vld [vmem:[#allocation3 + $0x5c0] sm:$0xff]
    %v4893 = vld [vmem:[#allocation3 + $0x5c8] sm:$0xff]
    %v4894 = vld [vmem:[#allocation3 + $0x5d0] sm:$0xff]
    %v4895 = vld [vmem:[#allocation3 + $0x5d8] sm:$0xff]
    %v4896 = vld [vmem:[#allocation3 + $0x5e0] sm:$0xff]
    %v4897 = vld [vmem:[#allocation3 + $0x5e8] sm:$0xff]
    %v4898 = vld [vmem:[#allocation3 + $0x5f0] sm:$0xff]
    %v4899 = vld [vmem:[#allocation3 + $0x5f8] sm:$0xff]
    %v4900 = vld [vmem:[#allocation3 + $0x600] sm:$0xff]
    %v4901 = vld [vmem:[#allocation3 + $0x608] sm:$0xff]
    %v4902 = vld [vmem:[#allocation3 + $0x610] sm:$0xff]
    %v4903 = vld [vmem:[#allocation3 + $0x618] sm:$0xff]
    %v4904 = vld [vmem:[#allocation3 + $0x620] sm:$0xff]
    %v4905 = vld [vmem:[#allocation3 + $0x628] sm:$0xff]
    %v4906 = vld [vmem:[#allocation3 + $0x630] sm:$0xff]
    %v4907 = vld [vmem:[#allocation3 + $0x638] sm:$0xff]
    %v4908 = vld [vmem:[#allocation3 + $0x640] sm:$0xff]
    %v4909 = vld [vmem:[#allocation3 + $0x648] sm:$0xff]
    %v4910 = vld [vmem:[#allocation3 + $0x650] sm:$0xff]
    %v4911 = vld [vmem:[#allocation3 + $0x658] sm:$0xff]
    %v4912 = vld [vmem:[#allocation3 + $0x660] sm:$0xff]
    %v4913 = vld [vmem:[#allocation3 + $0x668] sm:$0xff]
    %v4914 = vld [vmem:[#allocation3 + $0x670] sm:$0xff]
    %v4915 = vld [vmem:[#allocation3 + $0x678] sm:$0xff]
    %v4916 = vld [vmem:[#allocation3 + $0x680] sm:$0xff]
    %v4917 = vld [vmem:[#allocation3 + $0x688] sm:$0xff]
    %v4918 = vld [vmem:[#allocation3 + $0x690] sm:$0xff]
    %v4919 = vld [vmem:[#allocation3 + $0x698] sm:$0xff]
    %v4920 = vld [vmem:[#allocation3 + $0x6a0] sm:$0xff]
    %v4921 = vld [vmem:[#allocation3 + $0x6a8] sm:$0xff]
    %v4922 = vld [vmem:[#allocation3 + $0x6b0] sm:$0xff]
    %v4923 = vld [vmem:[#allocation3 + $0x6b8] sm:$0xff]
    %v4924 = vld [vmem:[#allocation3 + $0x6c0] sm:$0xff]
    %v4925 = vld [vmem:[#allocation3 + $0x6c8] sm:$0xff]
    %v4926 = vld [vmem:[#allocation3 + $0x6d0] sm:$0xff]
    %v4927 = vld [vmem:[#allocation3 + $0x6d8] sm:$0xff]
    %v4928 = vld [vmem:[#allocation3 + $0x6e0] sm:$0xff]
    %v4929 = vld [vmem:[#allocation3 + $0x6e8] sm:$0xff]
    %v4930 = vld [vmem:[#allocation3 + $0x6f0] sm:$0xff]
    %v4931 = vld [vmem:[#allocation3 + $0x6f8] sm:$0xff]
    %v4932 = vld [vmem:[#allocation3 + $0x700] sm:$0xff]
    %v4933 = vld [vmem:[#allocation3 + $0x708] sm:$0xff]
    %v4934 = vld [vmem:[#allocation3 + $0x710] sm:$0xff]
    %v4935 = vld [vmem:[#allocation3 + $0x718] sm:$0xff]
    %v4936 = vld [vmem:[#allocation3 + $0x720] sm:$0xff]
    %v4937 = vld [vmem:[#allocation3 + $0x728] sm:$0xff]
    %v4938 = vld [vmem:[#allocation3 + $0x730] sm:$0xff]
    %v4939 = vld [vmem:[#allocation3 + $0x738] sm:$0xff]
    %v4940 = vld [vmem:[#allocation3 + $0x740] sm:$0xff]
    %v4941 = vld [vmem:[#allocation3 + $0x748] sm:$0xff]
    %v4942 = vld [vmem:[#allocation3 + $0x750] sm:$0xff]
    %v4943 = vld [vmem:[#allocation3 + $0x758] sm:$0xff]
    %v4944 = vld [vmem:[#allocation3 + $0x760] sm:$0xff]
    %v4945 = vld [vmem:[#allocation3 + $0x768] sm:$0xff]
    %v4946 = vld [vmem:[#allocation3 + $0x770] sm:$0xff]
    %v4947 = vld [vmem:[#allocation3 + $0x778] sm:$0xff]
    %v4948 = vld [vmem:[#allocation3 + $0x780] sm:$0xff]
    %v4949 = vld [vmem:[#allocation3 + $0x788] sm:$0xff]
    %v4950 = vld [vmem:[#allocation3 + $0x790] sm:$0xff]
    %v4951 = vld [vmem:[#allocation3 + $0x798] sm:$0xff]
    %v4952 = vld [vmem:[#allocation3 + $0x7a0] sm:$0xff]
    %v4953 = vld [vmem:[#allocation3 + $0x7a8] sm:$0xff]
    %v4954 = vld [vmem:[#allocation3 + $0x7b0] sm:$0xff]
    %v4955 = vld [vmem:[#allocation3 + $0x7b8] sm:$0xff]
    %v4956 = vld [vmem:[#allocation3 + $0x7c0] sm:$0xff]
    %v4957 = vld [vmem:[#allocation3 + $0x7c8] sm:$0xff]
    %v4958 = vld [vmem:[#allocation3 + $0x7d0] sm:$0xff]
    %v4959 = vld [vmem:[#allocation3 + $0x7d8] sm:$0xff]
    %v4960 = vld [vmem:[#allocation3 + $0x7e0] sm:$0xff]
    %v4961 = vld [vmem:[#allocation3 + $0x7e8] sm:$0xff]
    %v4962 = vld [vmem:[#allocation3 + $0x7f0] sm:$0xff]
    %v4963 = vld [vmem:[#allocation3 + $0x7f8] sm:$0xff]
    %v4964 = vunpack.c.0.s8 %v4708
    %v4965 = vunpack.c.0.s8 %v4709
    %v4966 = vunpack.c.0.s8 %v4710
    %v4967 = vunpack.c.0.s8 %v4711
    %v4968 = vunpack.c.0.s8 %v4712
    %v4969 = vunpack.c.0.s8 %v4713
    %v4970 = vunpack.c.0.s8 %v4714
    %v4971 = vunpack.c.0.s8 %v4715
    %v4972 = vunpack.c.1.s8 %v4708
    %v4973 = vunpack.c.1.s8 %v4709
    %v4974 = vunpack.c.1.s8 %v4710
    %v4975 = vunpack.c.1.s8 %v4711
    %v4976 = vunpack.c.1.s8 %v4712
    %v4977 = vunpack.c.1.s8 %v4713
    %v4978 = vunpack.c.1.s8 %v4714
    %v4979 = vunpack.c.1.s8 %v4715
    %v4980 = vunpack.c.2.s8 %v4708
    %v4981 = vunpack.c.2.s8 %v4709
    %v4982 = vunpack.c.2.s8 %v4710
    %v4983 = vunpack.c.2.s8 %v4711
    %v4984 = vunpack.c.2.s8 %v4712
    %v4985 = vunpack.c.2.s8 %v4713
    %v4986 = vunpack.c.2.s8 %v4714
    %v4987 = vunpack.c.2.s8 %v4715
    %v4988 = vunpack.c.3.s8 %v4708
    %v4989 = vunpack.c.3.s8 %v4709
    %v4990 = vunpack.c.3.s8 %v4710
    %v4991 = vunpack.c.3.s8 %v4711
    %v4992 = vunpack.c.3.s8 %v4712
    %v4993 = vunpack.c.3.s8 %v4713
    %v4994 = vunpack.c.3.s8 %v4714
    %v4995 = vunpack.c.3.s8 %v4715
    %v4996 = vunpack.c.0.s8 %v4716
    %v4997 = vunpack.c.0.s8 %v4717
    %v4998 = vunpack.c.0.s8 %v4718
    %v4999 = vunpack.c.0.s8 %v4719
    %v5000 = vunpack.c.0.s8 %v4720
    %v5001 = vunpack.c.0.s8 %v4721
    %v5002 = vunpack.c.0.s8 %v4722
    %v5003 = vunpack.c.0.s8 %v4723
    %v5004 = vunpack.c.1.s8 %v4716
    %v5005 = vunpack.c.1.s8 %v4717
    %v5006 = vunpack.c.1.s8 %v4718
    %v5007 = vunpack.c.1.s8 %v4719
    %v5008 = vunpack.c.1.s8 %v4720
    %v5009 = vunpack.c.1.s8 %v4721
    %v5010 = vunpack.c.1.s8 %v4722
    %v5011 = vunpack.c.1.s8 %v4723
    %v5012 = vunpack.c.2.s8 %v4716
    %v5013 = vunpack.c.2.s8 %v4717
    %v5014 = vunpack.c.2.s8 %v4718
    %v5015 = vunpack.c.2.s8 %v4719
    %v5016 = vunpack.c.2.s8 %v4720
    %v5017 = vunpack.c.2.s8 %v4721
    %v5018 = vunpack.c.2.s8 %v4722
    %v5019 = vunpack.c.2.s8 %v4723
    %v5020 = vunpack.c.3.s8 %v4716
    %v5021 = vunpack.c.3.s8 %v4717
    %v5022 = vunpack.c.3.s8 %v4718
    %v5023 = vunpack.c.3.s8 %v4719
    %v5024 = vunpack.c.3.s8 %v4720
    %v5025 = vunpack.c.3.s8 %v4721
    %v5026 = vunpack.c.3.s8 %v4722
    %v5027 = vunpack.c.3.s8 %v4723
    %v5028 = vunpack.c.0.s8 %v4724
    %v5029 = vunpack.c.0.s8 %v4725
    %v5030 = vunpack.c.0.s8 %v4726
    %v5031 = vunpack.c.0.s8 %v4727
    %v5032 = vunpack.c.0.s8 %v4728
    %v5033 = vunpack.c.0.s8 %v4729
    %v5034 = vunpack.c.0.s8 %v4730
    %v5035 = vunpack.c.0.s8 %v4731
    %v5036 = vunpack.c.1.s8 %v4724
    %v5037 = vunpack.c.1.s8 %v4725
    %v5038 = vunpack.c.1.s8 %v4726
    %v5039 = vunpack.c.1.s8 %v4727
    %v5040 = vunpack.c.1.s8 %v4728
    %v5041 = vunpack.c.1.s8 %v4729
    %v5042 = vunpack.c.1.s8 %v4730
    %v5043 = vunpack.c.1.s8 %v4731
    %v5044 = vunpack.c.2.s8 %v4724
    %v5045 = vunpack.c.2.s8 %v4725
    %v5046 = vunpack.c.2.s8 %v4726
    %v5047 = vunpack.c.2.s8 %v4727
    %v5048 = vunpack.c.2.s8 %v4728
    %v5049 = vunpack.c.2.s8 %v4729
    %v5050 = vunpack.c.2.s8 %v4730
    %v5051 = vunpack.c.2.s8 %v4731
    %v5052 = vunpack.c.3.s8 %v4724
    %v5053 = vunpack.c.3.s8 %v4725
    %v5054 = vunpack.c.3.s8 %v4726
    %v5055 = vunpack.c.3.s8 %v4727
    %v5056 = vunpack.c.3.s8 %v4728
    %v5057 = vunpack.c.3.s8 %v4729
    %v5058 = vunpack.c.3.s8 %v4730
    %v5059 = vunpack.c.3.s8 %v4731
    %v5060 = vunpack.c.0.s8 %v4732
    %v5061 = vunpack.c.0.s8 %v4733
    %v5062 = vunpack.c.0.s8 %v4734
    %v5063 = vunpack.c.0.s8 %v4735
    %v5064 = vunpack.c.0.s8 %v4736
    %v5065 = vunpack.c.0.s8 %v4737
    %v5066 = vunpack.c.0.s8 %v4738
    %v5067 = vunpack.c.0.s8 %v4739
    %v5068 = vunpack.c.1.s8 %v4732
    %v5069 = vunpack.c.1.s8 %v4733
    %v5070 = vunpack.c.1.s8 %v4734
    %v5071 = vunpack.c.1.s8 %v4735
    %v5072 = vunpack.c.1.s8 %v4736
    %v5073 = vunpack.c.1.s8 %v4737
    %v5074 = vunpack.c.1.s8 %v4738
    %v5075 = vunpack.c.1.s8 %v4739
    %v5076 = vunpack.c.2.s8 %v4732
    %v5077 = vunpack.c.2.s8 %v4733
    %v5078 = vunpack.c.2.s8 %v4734
    %v5079 = vunpack.c.2.s8 %v4735
    %v5080 = vunpack.c.2.s8 %v4736
    %v5081 = vunpack.c.2.s8 %v4737
    %v5082 = vunpack.c.2.s8 %v4738
    %v5083 = vunpack.c.2.s8 %v4739
    %v5084 = vunpack.c.3.s8 %v4732
    %v5085 = vunpack.c.3.s8 %v4733
    %v5086 = vunpack.c.3.s8 %v4734
    %v5087 = vunpack.c.3.s8 %v4735
    %v5088 = vunpack.c.3.s8 %v4736
    %v5089 = vunpack.c.3.s8 %v4737
    %v5090 = vunpack.c.3.s8 %v4738
    %v5091 = vunpack.c.3.s8 %v4739
    %v5092 = vunpack.c.0.s8 %v4740
    %v5093 = vunpack.c.0.s8 %v4741
    %v5094 = vunpack.c.0.s8 %v4742
    %v5095 = vunpack.c.0.s8 %v4743
    %v5096 = vunpack.c.0.s8 %v4744
    %v5097 = vunpack.c.0.s8 %v4745
    %v5098 = vunpack.c.0.s8 %v4746
    %v5099 = vunpack.c.0.s8 %v4747
    %v5100 = vunpack.c.1.s8 %v4740
    %v5101 = vunpack.c.1.s8 %v4741
    %v5102 = vunpack.c.1.s8 %v4742
    %v5103 = vunpack.c.1.s8 %v4743
    %v5104 = vunpack.c.1.s8 %v4744
    %v5105 = vunpack.c.1.s8 %v4745
    %v5106 = vunpack.c.1.s8 %v4746
    %v5107 = vunpack.c.1.s8 %v4747
    %v5108 = vunpack.c.2.s8 %v4740
    %v5109 = vunpack.c.2.s8 %v4741
    %v5110 = vunpack.c.2.s8 %v4742
    %v5111 = vunpack.c.2.s8 %v4743
    %v5112 = vunpack.c.2.s8 %v4744
    %v5113 = vunpack.c.2.s8 %v4745
    %v5114 = vunpack.c.2.s8 %v4746
    %v5115 = vunpack.c.2.s8 %v4747
    %v5116 = vunpack.c.3.s8 %v4740
    %v5117 = vunpack.c.3.s8 %v4741
    %v5118 = vunpack.c.3.s8 %v4742
    %v5119 = vunpack.c.3.s8 %v4743
    %v5120 = vunpack.c.3.s8 %v4744
    %v5121 = vunpack.c.3.s8 %v4745
    %v5122 = vunpack.c.3.s8 %v4746
    %v5123 = vunpack.c.3.s8 %v4747
    %v5124 = vunpack.c.0.s8 %v4748
    %v5125 = vunpack.c.0.s8 %v4749
    %v5126 = vunpack.c.0.s8 %v4750
    %v5127 = vunpack.c.0.s8 %v4751
    %v5128 = vunpack.c.0.s8 %v4752
    %v5129 = vunpack.c.0.s8 %v4753
    %v5130 = vunpack.c.0.s8 %v4754
    %v5131 = vunpack.c.0.s8 %v4755
    %v5132 = vunpack.c.1.s8 %v4748
    %v5133 = vunpack.c.1.s8 %v4749
    %v5134 = vunpack.c.1.s8 %v4750
    %v5135 = vunpack.c.1.s8 %v4751
    %v5136 = vunpack.c.1.s8 %v4752
    %v5137 = vunpack.c.1.s8 %v4753
    %v5138 = vunpack.c.1.s8 %v4754
    %v5139 = vunpack.c.1.s8 %v4755
    %v5140 = vunpack.c.2.s8 %v4748
    %v5141 = vunpack.c.2.s8 %v4749
    %v5142 = vunpack.c.2.s8 %v4750
    %v5143 = vunpack.c.2.s8 %v4751
    %v5144 = vunpack.c.2.s8 %v4752
    %v5145 = vunpack.c.2.s8 %v4753
    %v5146 = vunpack.c.2.s8 %v4754
    %v5147 = vunpack.c.2.s8 %v4755
    %v5148 = vunpack.c.3.s8 %v4748
    %v5149 = vunpack.c.3.s8 %v4749
    %v5150 = vunpack.c.3.s8 %v4750
    %v5151 = vunpack.c.3.s8 %v4751
    %v5152 = vunpack.c.3.s8 %v4752
    %v5153 = vunpack.c.3.s8 %v4753
    %v5154 = vunpack.c.3.s8 %v4754
    %v5155 = vunpack.c.3.s8 %v4755
    %v5156 = vunpack.c.0.s8 %v4756
    %v5157 = vunpack.c.0.s8 %v4757
    %v5158 = vunpack.c.0.s8 %v4758
    %v5159 = vunpack.c.0.s8 %v4759
    %v5160 = vunpack.c.0.s8 %v4760
    %v5161 = vunpack.c.0.s8 %v4761
    %v5162 = vunpack.c.0.s8 %v4762
    %v5163 = vunpack.c.0.s8 %v4763
    %v5164 = vunpack.c.1.s8 %v4756
    %v5165 = vunpack.c.1.s8 %v4757
    %v5166 = vunpack.c.1.s8 %v4758
    %v5167 = vunpack.c.1.s8 %v4759
    %v5168 = vunpack.c.1.s8 %v4760
    %v5169 = vunpack.c.1.s8 %v4761
    %v5170 = vunpack.c.1.s8 %v4762
    %v5171 = vunpack.c.1.s8 %v4763
    %v5172 = vunpack.c.2.s8 %v4756
    %v5173 = vunpack.c.2.s8 %v4757
    %v5174 = vunpack.c.2.s8 %v4758
    %v5175 = vunpack.c.2.s8 %v4759
    %v5176 = vunpack.c.2.s8 %v4760
    %v5177 = vunpack.c.2.s8 %v4761
    %v5178 = vunpack.c.2.s8 %v4762
    %v5179 = vunpack.c.2.s8 %v4763
    %v5180 = vunpack.c.3.s8 %v4756
    %v5181 = vunpack.c.3.s8 %v4757
    %v5182 = vunpack.c.3.s8 %v4758
    %v5183 = vunpack.c.3.s8 %v4759
    %v5184 = vunpack.c.3.s8 %v4760
    %v5185 = vunpack.c.3.s8 %v4761
    %v5186 = vunpack.c.3.s8 %v4762
    %v5187 = vunpack.c.3.s8 %v4763
    %v5188 = vunpack.c.0.s8 %v4764
    %v5189 = vunpack.c.0.s8 %v4765
    %v5190 = vunpack.c.0.s8 %v4766
    %v5191 = vunpack.c.0.s8 %v4767
    %v5192 = vunpack.c.0.s8 %v4768
    %v5193 = vunpack.c.0.s8 %v4769
    %v5194 = vunpack.c.0.s8 %v4770
    %v5195 = vunpack.c.0.s8 %v4771
    %v5196 = vunpack.c.1.s8 %v4764
    %v5197 = vunpack.c.1.s8 %v4765
    %v5198 = vunpack.c.1.s8 %v4766
    %v5199 = vunpack.c.1.s8 %v4767
    %v5200 = vunpack.c.1.s8 %v4768
    %v5201 = vunpack.c.1.s8 %v4769
    %v5202 = vunpack.c.1.s8 %v4770
    %v5203 = vunpack.c.1.s8 %v4771
    %v5204 = vunpack.c.2.s8 %v4764
    %v5205 = vunpack.c.2.s8 %v4765
    %v5206 = vunpack.c.2.s8 %v4766
    %v5207 = vunpack.c.2.s8 %v4767
    %v5208 = vunpack.c.2.s8 %v4768
    %v5209 = vunpack.c.2.s8 %v4769
    %v5210 = vunpack.c.2.s8 %v4770
    %v5211 = vunpack.c.2.s8 %v4771
    %v5212 = vunpack.c.3.s8 %v4764
    %v5213 = vunpack.c.3.s8 %v4765
    %v5214 = vunpack.c.3.s8 %v4766
    %v5215 = vunpack.c.3.s8 %v4767
    %v5216 = vunpack.c.3.s8 %v4768
    %v5217 = vunpack.c.3.s8 %v4769
    %v5218 = vunpack.c.3.s8 %v4770
    %v5219 = vunpack.c.3.s8 %v4771
    %v5220 = vunpack.c.0.s8 %v4772
    %v5221 = vunpack.c.0.s8 %v4773
    %v5222 = vunpack.c.0.s8 %v4774
    %v5223 = vunpack.c.0.s8 %v4775
    %v5224 = vunpack.c.0.s8 %v4776
    %v5225 = vunpack.c.0.s8 %v4777
    %v5226 = vunpack.c.0.s8 %v4778
    %v5227 = vunpack.c.0.s8 %v4779
    %v5228 = vunpack.c.1.s8 %v4772
    %v5229 = vunpack.c.1.s8 %v4773
    %v5230 = vunpack.c.1.s8 %v4774
    %v5231 = vunpack.c.1.s8 %v4775
    %v5232 = vunpack.c.1.s8 %v4776
    %v5233 = vunpack.c.1.s8 %v4777
    %v5234 = vunpack.c.1.s8 %v4778
    %v5235 = vunpack.c.1.s8 %v4779
    %v5236 = vunpack.c.2.s8 %v4772
    %v5237 = vunpack.c.2.s8 %v4773
    %v5238 = vunpack.c.2.s8 %v4774
    %v5239 = vunpack.c.2.s8 %v4775
    %v5240 = vunpack.c.2.s8 %v4776
    %v5241 = vunpack.c.2.s8 %v4777
    %v5242 = vunpack.c.2.s8 %v4778
    %v5243 = vunpack.c.2.s8 %v4779
    %v5244 = vunpack.c.3.s8 %v4772
    %v5245 = vunpack.c.3.s8 %v4773
    %v5246 = vunpack.c.3.s8 %v4774
    %v5247 = vunpack.c.3.s8 %v4775
    %v5248 = vunpack.c.3.s8 %v4776
    %v5249 = vunpack.c.3.s8 %v4777
    %v5250 = vunpack.c.3.s8 %v4778
    %v5251 = vunpack.c.3.s8 %v4779
    %v5252 = vunpack.c.0.s8 %v4780
    %v5253 = vunpack.c.0.s8 %v4781
    %v5254 = vunpack.c.0.s8 %v4782
    %v5255 = vunpack.c.0.s8 %v4783
    %v5256 = vunpack.c.0.s8 %v4784
    %v5257 = vunpack.c.0.s8 %v4785
    %v5258 = vunpack.c.0.s8 %v4786
    %v5259 = vunpack.c.0.s8 %v4787
    %v5260 = vunpack.c.1.s8 %v4780
    %v5261 = vunpack.c.1.s8 %v4781
    %v5262 = vunpack.c.1.s8 %v4782
    %v5263 = vunpack.c.1.s8 %v4783
    %v5264 = vunpack.c.1.s8 %v4784
    %v5265 = vunpack.c.1.s8 %v4785
    %v5266 = vunpack.c.1.s8 %v4786
    %v5267 = vunpack.c.1.s8 %v4787
    %v5268 = vunpack.c.2.s8 %v4780
    %v5269 = vunpack.c.2.s8 %v4781
    %v5270 = vunpack.c.2.s8 %v4782
    %v5271 = vunpack.c.2.s8 %v4783
    %v5272 = vunpack.c.2.s8 %v4784
    %v5273 = vunpack.c.2.s8 %v4785
    %v5274 = vunpack.c.2.s8 %v4786
    %v5275 = vunpack.c.2.s8 %v4787
    %v5276 = vunpack.c.3.s8 %v4780
    %v5277 = vunpack.c.3.s8 %v4781
    %v5278 = vunpack.c.3.s8 %v4782
    %v5279 = vunpack.c.3.s8 %v4783
    %v5280 = vunpack.c.3.s8 %v4784
    %v5281 = vunpack.c.3.s8 %v4785
    %v5282 = vunpack.c.3.s8 %v4786
    %v5283 = vunpack.c.3.s8 %v4787
    %v5284 = vunpack.c.0.s8 %v4788
    %v5285 = vunpack.c.0.s8 %v4789
    %v5286 = vunpack.c.0.s8 %v4790
    %v5287 = vunpack.c.0.s8 %v4791
    %v5288 = vunpack.c.0.s8 %v4792
    %v5289 = vunpack.c.0.s8 %v4793
    %v5290 = vunpack.c.0.s8 %v4794
    %v5291 = vunpack.c.0.s8 %v4795
    %v5292 = vunpack.c.1.s8 %v4788
    %v5293 = vunpack.c.1.s8 %v4789
    %v5294 = vunpack.c.1.s8 %v4790
    %v5295 = vunpack.c.1.s8 %v4791
    %v5296 = vunpack.c.1.s8 %v4792
    %v5297 = vunpack.c.1.s8 %v4793
    %v5298 = vunpack.c.1.s8 %v4794
    %v5299 = vunpack.c.1.s8 %v4795
    %v5300 = vunpack.c.2.s8 %v4788
    %v5301 = vunpack.c.2.s8 %v4789
    %v5302 = vunpack.c.2.s8 %v4790
    %v5303 = vunpack.c.2.s8 %v4791
    %v5304 = vunpack.c.2.s8 %v4792
    %v5305 = vunpack.c.2.s8 %v4793
    %v5306 = vunpack.c.2.s8 %v4794
    %v5307 = vunpack.c.2.s8 %v4795
    %v5308 = vunpack.c.3.s8 %v4788
    %v5309 = vunpack.c.3.s8 %v4789
    %v5310 = vunpack.c.3.s8 %v4790
    %v5311 = vunpack.c.3.s8 %v4791
    %v5312 = vunpack.c.3.s8 %v4792
    %v5313 = vunpack.c.3.s8 %v4793
    %v5314 = vunpack.c.3.s8 %v4794
    %v5315 = vunpack.c.3.s8 %v4795
    %v5316 = vunpack.c.0.s8 %v4796
    %v5317 = vunpack.c.0.s8 %v4797
    %v5318 = vunpack.c.0.s8 %v4798
    %v5319 = vunpack.c.0.s8 %v4799
    %v5320 = vunpack.c.0.s8 %v4800
    %v5321 = vunpack.c.0.s8 %v4801
    %v5322 = vunpack.c.0.s8 %v4802
    %v5323 = vunpack.c.0.s8 %v4803
    %v5324 = vunpack.c.1.s8 %v4796
    %v5325 = vunpack.c.1.s8 %v4797
    %v5326 = vunpack.c.1.s8 %v4798
    %v5327 = vunpack.c.1.s8 %v4799
    %v5328 = vunpack.c.1.s8 %v4800
    %v5329 = vunpack.c.1.s8 %v4801
    %v5330 = vunpack.c.1.s8 %v4802
    %v5331 = vunpack.c.1.s8 %v4803
    %v5332 = vunpack.c.2.s8 %v4796
    %v5333 = vunpack.c.2.s8 %v4797
    %v5334 = vunpack.c.2.s8 %v4798
    %v5335 = vunpack.c.2.s8 %v4799
    %v5336 = vunpack.c.2.s8 %v4800
    %v5337 = vunpack.c.2.s8 %v4801
    %v5338 = vunpack.c.2.s8 %v4802
    %v5339 = vunpack.c.2.s8 %v4803
    %v5340 = vunpack.c.3.s8 %v4796
    %v5341 = vunpack.c.3.s8 %v4797
    %v5342 = vunpack.c.3.s8 %v4798
    %v5343 = vunpack.c.3.s8 %v4799
    %v5344 = vunpack.c.3.s8 %v4800
    %v5345 = vunpack.c.3.s8 %v4801
    %v5346 = vunpack.c.3.s8 %v4802
    %v5347 = vunpack.c.3.s8 %v4803
    %v5348 = vunpack.c.0.s8 %v4804
    %v5349 = vunpack.c.0.s8 %v4805
    %v5350 = vunpack.c.0.s8 %v4806
    %v5351 = vunpack.c.0.s8 %v4807
    %v5352 = vunpack.c.0.s8 %v4808
    %v5353 = vunpack.c.0.s8 %v4809
    %v5354 = vunpack.c.0.s8 %v4810
    %v5355 = vunpack.c.0.s8 %v4811
    %v5356 = vunpack.c.1.s8 %v4804
    %v5357 = vunpack.c.1.s8 %v4805
    %v5358 = vunpack.c.1.s8 %v4806
    %v5359 = vunpack.c.1.s8 %v4807
    %v5360 = vunpack.c.1.s8 %v4808
    %v5361 = vunpack.c.1.s8 %v4809
    %v5362 = vunpack.c.1.s8 %v4810
    %v5363 = vunpack.c.1.s8 %v4811
    %v5364 = vunpack.c.2.s8 %v4804
    %v5365 = vunpack.c.2.s8 %v4805
    %v5366 = vunpack.c.2.s8 %v4806
    %v5367 = vunpack.c.2.s8 %v4807
    %v5368 = vunpack.c.2.s8 %v4808
    %v5369 = vunpack.c.2.s8 %v4809
    %v5370 = vunpack.c.2.s8 %v4810
    %v5371 = vunpack.c.2.s8 %v4811
    %v5372 = vunpack.c.3.s8 %v4804
    %v5373 = vunpack.c.3.s8 %v4805
    %v5374 = vunpack.c.3.s8 %v4806
    %v5375 = vunpack.c.3.s8 %v4807
    %v5376 = vunpack.c.3.s8 %v4808
    %v5377 = vunpack.c.3.s8 %v4809
    %v5378 = vunpack.c.3.s8 %v4810
    %v5379 = vunpack.c.3.s8 %v4811
    %v5380 = vunpack.c.0.s8 %v4812
    %v5381 = vunpack.c.0.s8 %v4813
    %v5382 = vunpack.c.0.s8 %v4814
    %v5383 = vunpack.c.0.s8 %v4815
    %v5384 = vunpack.c.0.s8 %v4816
    %v5385 = vunpack.c.0.s8 %v4817
    %v5386 = vunpack.c.0.s8 %v4818
    %v5387 = vunpack.c.0.s8 %v4819
    %v5388 = vunpack.c.1.s8 %v4812
    %v5389 = vunpack.c.1.s8 %v4813
    %v5390 = vunpack.c.1.s8 %v4814
    %v5391 = vunpack.c.1.s8 %v4815
    %v5392 = vunpack.c.1.s8 %v4816
    %v5393 = vunpack.c.1.s8 %v4817
    %v5394 = vunpack.c.1.s8 %v4818
    %v5395 = vunpack.c.1.s8 %v4819
    %v5396 = vunpack.c.2.s8 %v4812
    %v5397 = vunpack.c.2.s8 %v4813
    %v5398 = vunpack.c.2.s8 %v4814
    %v5399 = vunpack.c.2.s8 %v4815
    %v5400 = vunpack.c.2.s8 %v4816
    %v5401 = vunpack.c.2.s8 %v4817
    %v5402 = vunpack.c.2.s8 %v4818
    %v5403 = vunpack.c.2.s8 %v4819
    %v5404 = vunpack.c.3.s8 %v4812
    %v5405 = vunpack.c.3.s8 %v4813
    %v5406 = vunpack.c.3.s8 %v4814
    %v5407 = vunpack.c.3.s8 %v4815
    %v5408 = vunpack.c.3.s8 %v4816
    %v5409 = vunpack.c.3.s8 %v4817
    %v5410 = vunpack.c.3.s8 %v4818
    %v5411 = vunpack.c.3.s8 %v4819
    %v5412 = vunpack.c.0.s8 %v4820
    %v5413 = vunpack.c.0.s8 %v4821
    %v5414 = vunpack.c.0.s8 %v4822
    %v5415 = vunpack.c.0.s8 %v4823
    %v5416 = vunpack.c.0.s8 %v4824
    %v5417 = vunpack.c.0.s8 %v4825
    %v5418 = vunpack.c.0.s8 %v4826
    %v5419 = vunpack.c.0.s8 %v4827
    %v5420 = vunpack.c.1.s8 %v4820
    %v5421 = vunpack.c.1.s8 %v4821
    %v5422 = vunpack.c.1.s8 %v4822
    %v5423 = vunpack.c.1.s8 %v4823
    %v5424 = vunpack.c.1.s8 %v4824
    %v5425 = vunpack.c.1.s8 %v4825
    %v5426 = vunpack.c.1.s8 %v4826
    %v5427 = vunpack.c.1.s8 %v4827
    %v5428 = vunpack.c.2.s8 %v4820
    %v5429 = vunpack.c.2.s8 %v4821
    %v5430 = vunpack.c.2.s8 %v4822
    %v5431 = vunpack.c.2.s8 %v4823
    %v5432 = vunpack.c.2.s8 %v4824
    %v5433 = vunpack.c.2.s8 %v4825
    %v5434 = vunpack.c.2.s8 %v4826
    %v5435 = vunpack.c.2.s8 %v4827
    %v5436 = vunpack.c.3.s8 %v4820
    %v5437 = vunpack.c.3.s8 %v4821
    %v5438 = vunpack.c.3.s8 %v4822
    %v5439 = vunpack.c.3.s8 %v4823
    %v5440 = vunpack.c.3.s8 %v4824
    %v5441 = vunpack.c.3.s8 %v4825
    %v5442 = vunpack.c.3.s8 %v4826
    %v5443 = vunpack.c.3.s8 %v4827
    %v5444 = vunpack.c.0.s8 %v4828
    %v5445 = vunpack.c.0.s8 %v4829
    %v5446 = vunpack.c.0.s8 %v4830
    %v5447 = vunpack.c.0.s8 %v4831
    %v5448 = vunpack.c.0.s8 %v4832
    %v5449 = vunpack.c.0.s8 %v4833
    %v5450 = vunpack.c.0.s8 %v4834
    %v5451 = vunpack.c.0.s8 %v4835
    %v5452 = vunpack.c.1.s8 %v4828
    %v5453 = vunpack.c.1.s8 %v4829
    %v5454 = vunpack.c.1.s8 %v4830
    %v5455 = vunpack.c.1.s8 %v4831
    %v5456 = vunpack.c.1.s8 %v4832
    %v5457 = vunpack.c.1.s8 %v4833
    %v5458 = vunpack.c.1.s8 %v4834
    %v5459 = vunpack.c.1.s8 %v4835
    %v5460 = vunpack.c.2.s8 %v4828
    %v5461 = vunpack.c.2.s8 %v4829
    %v5462 = vunpack.c.2.s8 %v4830
    %v5463 = vunpack.c.2.s8 %v4831
    %v5464 = vunpack.c.2.s8 %v4832
    %v5465 = vunpack.c.2.s8 %v4833
    %v5466 = vunpack.c.2.s8 %v4834
    %v5467 = vunpack.c.2.s8 %v4835
    %v5468 = vunpack.c.3.s8 %v4828
    %v5469 = vunpack.c.3.s8 %v4829
    %v5470 = vunpack.c.3.s8 %v4830
    %v5471 = vunpack.c.3.s8 %v4831
    %v5472 = vunpack.c.3.s8 %v4832
    %v5473 = vunpack.c.3.s8 %v4833
    %v5474 = vunpack.c.3.s8 %v4834
    %v5475 = vunpack.c.3.s8 %v4835
    %v5476 = vunpack.c.0.s8 %v4836
    %v5477 = vunpack.c.0.s8 %v4837
    %v5478 = vunpack.c.0.s8 %v4838
    %v5479 = vunpack.c.0.s8 %v4839
    %v5480 = vunpack.c.0.s8 %v4840
    %v5481 = vunpack.c.0.s8 %v4841
    %v5482 = vunpack.c.0.s8 %v4842
    %v5483 = vunpack.c.0.s8 %v4843
    %v5484 = vunpack.c.1.s8 %v4836
    %v5485 = vunpack.c.1.s8 %v4837
    %v5486 = vunpack.c.1.s8 %v4838
    %v5487 = vunpack.c.1.s8 %v4839
    %v5488 = vunpack.c.1.s8 %v4840
    %v5489 = vunpack.c.1.s8 %v4841
    %v5490 = vunpack.c.1.s8 %v4842
    %v5491 = vunpack.c.1.s8 %v4843
    %v5492 = vunpack.c.2.s8 %v4836
    %v5493 = vunpack.c.2.s8 %v4837
    %v5494 = vunpack.c.2.s8 %v4838
    %v5495 = vunpack.c.2.s8 %v4839
    %v5496 = vunpack.c.2.s8 %v4840
    %v5497 = vunpack.c.2.s8 %v4841
    %v5498 = vunpack.c.2.s8 %v4842
    %v5499 = vunpack.c.2.s8 %v4843
    %v5500 = vunpack.c.3.s8 %v4836
    %v5501 = vunpack.c.3.s8 %v4837
    %v5502 = vunpack.c.3.s8 %v4838
    %v5503 = vunpack.c.3.s8 %v4839
    %v5504 = vunpack.c.3.s8 %v4840
    %v5505 = vunpack.c.3.s8 %v4841
    %v5506 = vunpack.c.3.s8 %v4842
    %v5507 = vunpack.c.3.s8 %v4843
    %v5508 = vunpack.c.0.s8 %v4844
    %v5509 = vunpack.c.0.s8 %v4845
    %v5510 = vunpack.c.0.s8 %v4846
    %v5511 = vunpack.c.0.s8 %v4847
    %v5512 = vunpack.c.0.s8 %v4848
    %v5513 = vunpack.c.0.s8 %v4849
    %v5514 = vunpack.c.0.s8 %v4850
    %v5515 = vunpack.c.0.s8 %v4851
    %v5516 = vunpack.c.1.s8 %v4844
    %v5517 = vunpack.c.1.s8 %v4845
    %v5518 = vunpack.c.1.s8 %v4846
    %v5519 = vunpack.c.1.s8 %v4847
    %v5520 = vunpack.c.1.s8 %v4848
    %v5521 = vunpack.c.1.s8 %v4849
    %v5522 = vunpack.c.1.s8 %v4850
    %v5523 = vunpack.c.1.s8 %v4851
    %v5524 = vunpack.c.2.s8 %v4844
    %v5525 = vunpack.c.2.s8 %v4845
    %v5526 = vunpack.c.2.s8 %v4846
    %v5527 = vunpack.c.2.s8 %v4847
    %v5528 = vunpack.c.2.s8 %v4848
    %v5529 = vunpack.c.2.s8 %v4849
    %v5530 = vunpack.c.2.s8 %v4850
    %v5531 = vunpack.c.2.s8 %v4851
    %v5532 = vunpack.c.3.s8 %v4844
    %v5533 = vunpack.c.3.s8 %v4845
    %v5534 = vunpack.c.3.s8 %v4846
    %v5535 = vunpack.c.3.s8 %v4847
    %v5536 = vunpack.c.3.s8 %v4848
    %v5537 = vunpack.c.3.s8 %v4849
    %v5538 = vunpack.c.3.s8 %v4850
    %v5539 = vunpack.c.3.s8 %v4851
    %v5540 = vunpack.c.0.s8 %v4852
    %v5541 = vunpack.c.0.s8 %v4853
    %v5542 = vunpack.c.0.s8 %v4854
    %v5543 = vunpack.c.0.s8 %v4855
    %v5544 = vunpack.c.0.s8 %v4856
    %v5545 = vunpack.c.0.s8 %v4857
    %v5546 = vunpack.c.0.s8 %v4858
    %v5547 = vunpack.c.0.s8 %v4859
    %v5548 = vunpack.c.1.s8 %v4852
    %v5549 = vunpack.c.1.s8 %v4853
    %v5550 = vunpack.c.1.s8 %v4854
    %v5551 = vunpack.c.1.s8 %v4855
    %v5552 = vunpack.c.1.s8 %v4856
    %v5553 = vunpack.c.1.s8 %v4857
    %v5554 = vunpack.c.1.s8 %v4858
    %v5555 = vunpack.c.1.s8 %v4859
    %v5556 = vunpack.c.2.s8 %v4852
    %v5557 = vunpack.c.2.s8 %v4853
    %v5558 = vunpack.c.2.s8 %v4854
    %v5559 = vunpack.c.2.s8 %v4855
    %v5560 = vunpack.c.2.s8 %v4856
    %v5561 = vunpack.c.2.s8 %v4857
    %v5562 = vunpack.c.2.s8 %v4858
    %v5563 = vunpack.c.2.s8 %v4859
    %v5564 = vunpack.c.3.s8 %v4852
    %v5565 = vunpack.c.3.s8 %v4853
    %v5566 = vunpack.c.3.s8 %v4854
    %v5567 = vunpack.c.3.s8 %v4855
    %v5568 = vunpack.c.3.s8 %v4856
    %v5569 = vunpack.c.3.s8 %v4857
    %v5570 = vunpack.c.3.s8 %v4858
    %v5571 = vunpack.c.3.s8 %v4859
    %v5572 = vunpack.c.0.s8 %v4860
    %v5573 = vunpack.c.0.s8 %v4861
    %v5574 = vunpack.c.0.s8 %v4862
    %v5575 = vunpack.c.0.s8 %v4863
    %v5576 = vunpack.c.0.s8 %v4864
    %v5577 = vunpack.c.0.s8 %v4865
    %v5578 = vunpack.c.0.s8 %v4866
    %v5579 = vunpack.c.0.s8 %v4867
    %v5580 = vunpack.c.1.s8 %v4860
    %v5581 = vunpack.c.1.s8 %v4861
    %v5582 = vunpack.c.1.s8 %v4862
    %v5583 = vunpack.c.1.s8 %v4863
    %v5584 = vunpack.c.1.s8 %v4864
    %v5585 = vunpack.c.1.s8 %v4865
    %v5586 = vunpack.c.1.s8 %v4866
    %v5587 = vunpack.c.1.s8 %v4867
    %v5588 = vunpack.c.2.s8 %v4860
    %v5589 = vunpack.c.2.s8 %v4861
    %v5590 = vunpack.c.2.s8 %v4862
    %v5591 = vunpack.c.2.s8 %v4863
    %v5592 = vunpack.c.2.s8 %v4864
    %v5593 = vunpack.c.2.s8 %v4865
    %v5594 = vunpack.c.2.s8 %v4866
    %v5595 = vunpack.c.2.s8 %v4867
    %v5596 = vunpack.c.3.s8 %v4860
    %v5597 = vunpack.c.3.s8 %v4861
    %v5598 = vunpack.c.3.s8 %v4862
    %v5599 = vunpack.c.3.s8 %v4863
    %v5600 = vunpack.c.3.s8 %v4864
    %v5601 = vunpack.c.3.s8 %v4865
    %v5602 = vunpack.c.3.s8 %v4866
    %v5603 = vunpack.c.3.s8 %v4867
    %v5604 = vunpack.c.0.s8 %v4868
    %v5605 = vunpack.c.0.s8 %v4869
    %v5606 = vunpack.c.0.s8 %v4870
    %v5607 = vunpack.c.0.s8 %v4871
    %v5608 = vunpack.c.0.s8 %v4872
    %v5609 = vunpack.c.0.s8 %v4873
    %v5610 = vunpack.c.0.s8 %v4874
    %v5611 = vunpack.c.0.s8 %v4875
    %v5612 = vunpack.c.1.s8 %v4868
    %v5613 = vunpack.c.1.s8 %v4869
    %v5614 = vunpack.c.1.s8 %v4870
    %v5615 = vunpack.c.1.s8 %v4871
    %v5616 = vunpack.c.1.s8 %v4872
    %v5617 = vunpack.c.1.s8 %v4873
    %v5618 = vunpack.c.1.s8 %v4874
    %v5619 = vunpack.c.1.s8 %v4875
    %v5620 = vunpack.c.2.s8 %v4868
    %v5621 = vunpack.c.2.s8 %v4869
    %v5622 = vunpack.c.2.s8 %v4870
    %v5623 = vunpack.c.2.s8 %v4871
    %v5624 = vunpack.c.2.s8 %v4872
    %v5625 = vunpack.c.2.s8 %v4873
    %v5626 = vunpack.c.2.s8 %v4874
    %v5627 = vunpack.c.2.s8 %v4875
    %v5628 = vunpack.c.3.s8 %v4868
    %v5629 = vunpack.c.3.s8 %v4869
    %v5630 = vunpack.c.3.s8 %v4870
    %v5631 = vunpack.c.3.s8 %v4871
    %v5632 = vunpack.c.3.s8 %v4872
    %v5633 = vunpack.c.3.s8 %v4873
    %v5634 = vunpack.c.3.s8 %v4874
    %v5635 = vunpack.c.3.s8 %v4875
    %v5636 = vunpack.c.0.s8 %v4876
    %v5637 = vunpack.c.0.s8 %v4877
    %v5638 = vunpack.c.0.s8 %v4878
    %v5639 = vunpack.c.0.s8 %v4879
    %v5640 = vunpack.c.0.s8 %v4880
    %v5641 = vunpack.c.0.s8 %v4881
    %v5642 = vunpack.c.0.s8 %v4882
    %v5643 = vunpack.c.0.s8 %v4883
    %v5644 = vunpack.c.1.s8 %v4876
    %v5645 = vunpack.c.1.s8 %v4877
    %v5646 = vunpack.c.1.s8 %v4878
    %v5647 = vunpack.c.1.s8 %v4879
    %v5648 = vunpack.c.1.s8 %v4880
    %v5649 = vunpack.c.1.s8 %v4881
    %v5650 = vunpack.c.1.s8 %v4882
    %v5651 = vunpack.c.1.s8 %v4883
    %v5652 = vunpack.c.2.s8 %v4876
    %v5653 = vunpack.c.2.s8 %v4877
    %v5654 = vunpack.c.2.s8 %v4878
    %v5655 = vunpack.c.2.s8 %v4879
    %v5656 = vunpack.c.2.s8 %v4880
    %v5657 = vunpack.c.2.s8 %v4881
    %v5658 = vunpack.c.2.s8 %v4882
    %v5659 = vunpack.c.2.s8 %v4883
    %v5660 = vunpack.c.3.s8 %v4876
    %v5661 = vunpack.c.3.s8 %v4877
    %v5662 = vunpack.c.3.s8 %v4878
    %v5663 = vunpack.c.3.s8 %v4879
    %v5664 = vunpack.c.3.s8 %v4880
    %v5665 = vunpack.c.3.s8 %v4881
    %v5666 = vunpack.c.3.s8 %v4882
    %v5667 = vunpack.c.3.s8 %v4883
    %v5668 = vunpack.c.0.s8 %v4884
    %v5669 = vunpack.c.0.s8 %v4885
    %v5670 = vunpack.c.0.s8 %v4886
    %v5671 = vunpack.c.0.s8 %v4887
    %v5672 = vunpack.c.0.s8 %v4888
    %v5673 = vunpack.c.0.s8 %v4889
    %v5674 = vunpack.c.0.s8 %v4890
    %v5675 = vunpack.c.0.s8 %v4891
    %v5676 = vunpack.c.1.s8 %v4884
    %v5677 = vunpack.c.1.s8 %v4885
    %v5678 = vunpack.c.1.s8 %v4886
    %v5679 = vunpack.c.1.s8 %v4887
    %v5680 = vunpack.c.1.s8 %v4888
    %v5681 = vunpack.c.1.s8 %v4889
    %v5682 = vunpack.c.1.s8 %v4890
    %v5683 = vunpack.c.1.s8 %v4891
    %v5684 = vunpack.c.2.s8 %v4884
    %v5685 = vunpack.c.2.s8 %v4885
    %v5686 = vunpack.c.2.s8 %v4886
    %v5687 = vunpack.c.2.s8 %v4887
    %v5688 = vunpack.c.2.s8 %v4888
    %v5689 = vunpack.c.2.s8 %v4889
    %v5690 = vunpack.c.2.s8 %v4890
    %v5691 = vunpack.c.2.s8 %v4891
    %v5692 = vunpack.c.3.s8 %v4884
    %v5693 = vunpack.c.3.s8 %v4885
    %v5694 = vunpack.c.3.s8 %v4886
    %v5695 = vunpack.c.3.s8 %v4887
    %v5696 = vunpack.c.3.s8 %v4888
    %v5697 = vunpack.c.3.s8 %v4889
    %v5698 = vunpack.c.3.s8 %v4890
    %v5699 = vunpack.c.3.s8 %v4891
    %v5700 = vunpack.c.0.s8 %v4892
    %v5701 = vunpack.c.0.s8 %v4893
    %v5702 = vunpack.c.0.s8 %v4894
    %v5703 = vunpack.c.0.s8 %v4895
    %v5704 = vunpack.c.0.s8 %v4896
    %v5705 = vunpack.c.0.s8 %v4897
    %v5706 = vunpack.c.0.s8 %v4898
    %v5707 = vunpack.c.0.s8 %v4899
    %v5708 = vunpack.c.1.s8 %v4892
    %v5709 = vunpack.c.1.s8 %v4893
    %v5710 = vunpack.c.1.s8 %v4894
    %v5711 = vunpack.c.1.s8 %v4895
    %v5712 = vunpack.c.1.s8 %v4896
    %v5713 = vunpack.c.1.s8 %v4897
    %v5714 = vunpack.c.1.s8 %v4898
    %v5715 = vunpack.c.1.s8 %v4899
    %v5716 = vunpack.c.2.s8 %v4892
    %v5717 = vunpack.c.2.s8 %v4893
    %v5718 = vunpack.c.2.s8 %v4894
    %v5719 = vunpack.c.2.s8 %v4895
    %v5720 = vunpack.c.2.s8 %v4896
    %v5721 = vunpack.c.2.s8 %v4897
    %v5722 = vunpack.c.2.s8 %v4898
    %v5723 = vunpack.c.2.s8 %v4899
    %v5724 = vunpack.c.3.s8 %v4892
    %v5725 = vunpack.c.3.s8 %v4893
    %v5726 = vunpack.c.3.s8 %v4894
    %v5727 = vunpack.c.3.s8 %v4895
    %v5728 = vunpack.c.3.s8 %v4896
    %v5729 = vunpack.c.3.s8 %v4897
    %v5730 = vunpack.c.3.s8 %v4898
    %v5731 = vunpack.c.3.s8 %v4899
    %v5732 = vunpack.c.0.s8 %v4900
    %v5733 = vunpack.c.0.s8 %v4901
    %v5734 = vunpack.c.0.s8 %v4902
    %v5735 = vunpack.c.0.s8 %v4903
    %v5736 = vunpack.c.0.s8 %v4904
    %v5737 = vunpack.c.0.s8 %v4905
    %v5738 = vunpack.c.0.s8 %v4906
    %v5739 = vunpack.c.0.s8 %v4907
    %v5740 = vunpack.c.1.s8 %v4900
    %v5741 = vunpack.c.1.s8 %v4901
    %v5742 = vunpack.c.1.s8 %v4902
    %v5743 = vunpack.c.1.s8 %v4903
    %v5744 = vunpack.c.1.s8 %v4904
    %v5745 = vunpack.c.1.s8 %v4905
    %v5746 = vunpack.c.1.s8 %v4906
    %v5747 = vunpack.c.1.s8 %v4907
    %v5748 = vunpack.c.2.s8 %v4900
    %v5749 = vunpack.c.2.s8 %v4901
    %v5750 = vunpack.c.2.s8 %v4902
    %v5751 = vunpack.c.2.s8 %v4903
    %v5752 = vunpack.c.2.s8 %v4904
    %v5753 = vunpack.c.2.s8 %v4905
    %v5754 = vunpack.c.2.s8 %v4906
    %v5755 = vunpack.c.2.s8 %v4907
    %v5756 = vunpack.c.3.s8 %v4900
    %v5757 = vunpack.c.3.s8 %v4901
    %v5758 = vunpack.c.3.s8 %v4902
    %v5759 = vunpack.c.3.s8 %v4903
    %v5760 = vunpack.c.3.s8 %v4904
    %v5761 = vunpack.c.3.s8 %v4905
    %v5762 = vunpack.c.3.s8 %v4906
    %v5763 = vunpack.c.3.s8 %v4907
    %v5764 = vunpack.c.0.s8 %v4908
    %v5765 = vunpack.c.0.s8 %v4909
    %v5766 = vunpack.c.0.s8 %v4910
    %v5767 = vunpack.c.0.s8 %v4911
    %v5768 = vunpack.c.0.s8 %v4912
    %v5769 = vunpack.c.0.s8 %v4913
    %v5770 = vunpack.c.0.s8 %v4914
    %v5771 = vunpack.c.0.s8 %v4915
    %v5772 = vunpack.c.1.s8 %v4908
    %v5773 = vunpack.c.1.s8 %v4909
    %v5774 = vunpack.c.1.s8 %v4910
    %v5775 = vunpack.c.1.s8 %v4911
    %v5776 = vunpack.c.1.s8 %v4912
    %v5777 = vunpack.c.1.s8 %v4913
    %v5778 = vunpack.c.1.s8 %v4914
    %v5779 = vunpack.c.1.s8 %v4915
    %v5780 = vunpack.c.2.s8 %v4908
    %v5781 = vunpack.c.2.s8 %v4909
    %v5782 = vunpack.c.2.s8 %v4910
    %v5783 = vunpack.c.2.s8 %v4911
    %v5784 = vunpack.c.2.s8 %v4912
    %v5785 = vunpack.c.2.s8 %v4913
    %v5786 = vunpack.c.2.s8 %v4914
    %v5787 = vunpack.c.2.s8 %v4915
    %v5788 = vunpack.c.3.s8 %v4908
    %v5789 = vunpack.c.3.s8 %v4909
    %v5790 = vunpack.c.3.s8 %v4910
    %v5791 = vunpack.c.3.s8 %v4911
    %v5792 = vunpack.c.3.s8 %v4912
    %v5793 = vunpack.c.3.s8 %v4913
    %v5794 = vunpack.c.3.s8 %v4914
    %v5795 = vunpack.c.3.s8 %v4915
    %v5796 = vunpack.c.0.s8 %v4916
    %v5797 = vunpack.c.0.s8 %v4917
    %v5798 = vunpack.c.0.s8 %v4918
    %v5799 = vunpack.c.0.s8 %v4919
    %v5800 = vunpack.c.0.s8 %v4920
    %v5801 = vunpack.c.0.s8 %v4921
    %v5802 = vunpack.c.0.s8 %v4922
    %v5803 = vunpack.c.0.s8 %v4923
    %v5804 = vunpack.c.1.s8 %v4916
    %v5805 = vunpack.c.1.s8 %v4917
    %v5806 = vunpack.c.1.s8 %v4918
    %v5807 = vunpack.c.1.s8 %v4919
    %v5808 = vunpack.c.1.s8 %v4920
    %v5809 = vunpack.c.1.s8 %v4921
    %v5810 = vunpack.c.1.s8 %v4922
    %v5811 = vunpack.c.1.s8 %v4923
    %v5812 = vunpack.c.2.s8 %v4916
    %v5813 = vunpack.c.2.s8 %v4917
    %v5814 = vunpack.c.2.s8 %v4918
    %v5815 = vunpack.c.2.s8 %v4919
    %v5816 = vunpack.c.2.s8 %v4920
    %v5817 = vunpack.c.2.s8 %v4921
    %v5818 = vunpack.c.2.s8 %v4922
    %v5819 = vunpack.c.2.s8 %v4923
    %v5820 = vunpack.c.3.s8 %v4916
    %v5821 = vunpack.c.3.s8 %v4917
    %v5822 = vunpack.c.3.s8 %v4918
    %v5823 = vunpack.c.3.s8 %v4919
    %v5824 = vunpack.c.3.s8 %v4920
    %v5825 = vunpack.c.3.s8 %v4921
    %v5826 = vunpack.c.3.s8 %v4922
    %v5827 = vunpack.c.3.s8 %v4923
    %v5828 = vunpack.c.0.s8 %v4924
    %v5829 = vunpack.c.0.s8 %v4925
    %v5830 = vunpack.c.0.s8 %v4926
    %v5831 = vunpack.c.0.s8 %v4927
    %v5832 = vunpack.c.0.s8 %v4928
    %v5833 = vunpack.c.0.s8 %v4929
    %v5834 = vunpack.c.0.s8 %v4930
    %v5835 = vunpack.c.0.s8 %v4931
    %v5836 = vunpack.c.1.s8 %v4924
    %v5837 = vunpack.c.1.s8 %v4925
    %v5838 = vunpack.c.1.s8 %v4926
    %v5839 = vunpack.c.1.s8 %v4927
    %v5840 = vunpack.c.1.s8 %v4928
    %v5841 = vunpack.c.1.s8 %v4929
    %v5842 = vunpack.c.1.s8 %v4930
    %v5843 = vunpack.c.1.s8 %v4931
    %v5844 = vunpack.c.2.s8 %v4924
    %v5845 = vunpack.c.2.s8 %v4925
    %v5846 = vunpack.c.2.s8 %v4926
    %v5847 = vunpack.c.2.s8 %v4927
    %v5848 = vunpack.c.2.s8 %v4928
    %v5849 = vunpack.c.2.s8 %v4929
    %v5850 = vunpack.c.2.s8 %v4930
    %v5851 = vunpack.c.2.s8 %v4931
    %v5852 = vunpack.c.3.s8 %v4924
    %v5853 = vunpack.c.3.s8 %v4925
    %v5854 = vunpack.c.3.s8 %v4926
    %v5855 = vunpack.c.3.s8 %v4927
    %v5856 = vunpack.c.3.s8 %v4928
    %v5857 = vunpack.c.3.s8 %v4929
    %v5858 = vunpack.c.3.s8 %v4930
    %v5859 = vunpack.c.3.s8 %v4931
    %v5860 = vunpack.c.0.s8 %v4932
    %v5861 = vunpack.c.0.s8 %v4933
    %v5862 = vunpack.c.0.s8 %v4934
    %v5863 = vunpack.c.0.s8 %v4935
    %v5864 = vunpack.c.0.s8 %v4936
    %v5865 = vunpack.c.0.s8 %v4937
    %v5866 = vunpack.c.0.s8 %v4938
    %v5867 = vunpack.c.0.s8 %v4939
    %v5868 = vunpack.c.1.s8 %v4932
    %v5869 = vunpack.c.1.s8 %v4933
    %v5870 = vunpack.c.1.s8 %v4934
    %v5871 = vunpack.c.1.s8 %v4935
    %v5872 = vunpack.c.1.s8 %v4936
    %v5873 = vunpack.c.1.s8 %v4937
    %v5874 = vunpack.c.1.s8 %v4938
    %v5875 = vunpack.c.1.s8 %v4939
    %v5876 = vunpack.c.2.s8 %v4932
    %v5877 = vunpack.c.2.s8 %v4933
    %v5878 = vunpack.c.2.s8 %v4934
    %v5879 = vunpack.c.2.s8 %v4935
    %v5880 = vunpack.c.2.s8 %v4936
    %v5881 = vunpack.c.2.s8 %v4937
    %v5882 = vunpack.c.2.s8 %v4938
    %v5883 = vunpack.c.2.s8 %v4939
    %v5884 = vunpack.c.3.s8 %v4932
    %v5885 = vunpack.c.3.s8 %v4933
    %v5886 = vunpack.c.3.s8 %v4934
    %v5887 = vunpack.c.3.s8 %v4935
    %v5888 = vunpack.c.3.s8 %v4936
    %v5889 = vunpack.c.3.s8 %v4937
    %v5890 = vunpack.c.3.s8 %v4938
    %v5891 = vunpack.c.3.s8 %v4939
    %v5892 = vunpack.c.0.s8 %v4940
    %v5893 = vunpack.c.0.s8 %v4941
    %v5894 = vunpack.c.0.s8 %v4942
    %v5895 = vunpack.c.0.s8 %v4943
    %v5896 = vunpack.c.0.s8 %v4944
    %v5897 = vunpack.c.0.s8 %v4945
    %v5898 = vunpack.c.0.s8 %v4946
    %v5899 = vunpack.c.0.s8 %v4947
    %v5900 = vunpack.c.1.s8 %v4940
    %v5901 = vunpack.c.1.s8 %v4941
    %v5902 = vunpack.c.1.s8 %v4942
    %v5903 = vunpack.c.1.s8 %v4943
    %v5904 = vunpack.c.1.s8 %v4944
    %v5905 = vunpack.c.1.s8 %v4945
    %v5906 = vunpack.c.1.s8 %v4946
    %v5907 = vunpack.c.1.s8 %v4947
    %v5908 = vunpack.c.2.s8 %v4940
    %v5909 = vunpack.c.2.s8 %v4941
    %v5910 = vunpack.c.2.s8 %v4942
    %v5911 = vunpack.c.2.s8 %v4943
    %v5912 = vunpack.c.2.s8 %v4944
    %v5913 = vunpack.c.2.s8 %v4945
    %v5914 = vunpack.c.2.s8 %v4946
    %v5915 = vunpack.c.2.s8 %v4947
    %v5916 = vunpack.c.3.s8 %v4940
    %v5917 = vunpack.c.3.s8 %v4941
    %v5918 = vunpack.c.3.s8 %v4942
    %v5919 = vunpack.c.3.s8 %v4943
    %v5920 = vunpack.c.3.s8 %v4944
    %v5921 = vunpack.c.3.s8 %v4945
    %v5922 = vunpack.c.3.s8 %v4946
    %v5923 = vunpack.c.3.s8 %v4947
    %v5924 = vunpack.c.0.s8 %v4948
    %v5925 = vunpack.c.0.s8 %v4949
    %v5926 = vunpack.c.0.s8 %v4950
    %v5927 = vunpack.c.0.s8 %v4951
    %v5928 = vunpack.c.0.s8 %v4952
    %v5929 = vunpack.c.0.s8 %v4953
    %v5930 = vunpack.c.0.s8 %v4954
    %v5931 = vunpack.c.0.s8 %v4955
    %v5932 = vunpack.c.1.s8 %v4948
    %v5933 = vunpack.c.1.s8 %v4949
    %v5934 = vunpack.c.1.s8 %v4950
    %v5935 = vunpack.c.1.s8 %v4951
    %v5936 = vunpack.c.1.s8 %v4952
    %v5937 = vunpack.c.1.s8 %v4953
    %v5938 = vunpack.c.1.s8 %v4954
    %v5939 = vunpack.c.1.s8 %v4955
    %v5940 = vunpack.c.2.s8 %v4948
    %v5941 = vunpack.c.2.s8 %v4949
    %v5942 = vunpack.c.2.s8 %v4950
    %v5943 = vunpack.c.2.s8 %v4951
    %v5944 = vunpack.c.2.s8 %v4952
    %v5945 = vunpack.c.2.s8 %v4953
    %v5946 = vunpack.c.2.s8 %v4954
    %v5947 = vunpack.c.2.s8 %v4955
    %v5948 = vunpack.c.3.s8 %v4948
    %v5949 = vunpack.c.3.s8 %v4949
    %v5950 = vunpack.c.3.s8 %v4950
    %v5951 = vunpack.c.3.s8 %v4951
    %v5952 = vunpack.c.3.s8 %v4952
    %v5953 = vunpack.c.3.s8 %v4953
    %v5954 = vunpack.c.3.s8 %v4954
    %v5955 = vunpack.c.3.s8 %v4955
    %v5956 = vunpack.c.0.s8 %v4956
    %v5957 = vunpack.c.0.s8 %v4957
    %v5958 = vunpack.c.0.s8 %v4958
    %v5959 = vunpack.c.0.s8 %v4959
    %v5960 = vunpack.c.0.s8 %v4960
    %v5961 = vunpack.c.0.s8 %v4961
    %v5962 = vunpack.c.0.s8 %v4962
    %v5963 = vunpack.c.0.s8 %v4963
    %v5964 = vunpack.c.1.s8 %v4956
    %v5965 = vunpack.c.1.s8 %v4957
    %v5966 = vunpack.c.1.s8 %v4958
    %v5967 = vunpack.c.1.s8 %v4959
    %v5968 = vunpack.c.1.s8 %v4960
    %v5969 = vunpack.c.1.s8 %v4961
    %v5970 = vunpack.c.1.s8 %v4962
    %v5971 = vunpack.c.1.s8 %v4963
    %v5972 = vunpack.c.2.s8 %v4956
    %v5973 = vunpack.c.2.s8 %v4957
    %v5974 = vunpack.c.2.s8 %v4958
    %v5975 = vunpack.c.2.s8 %v4959
    %v5976 = vunpack.c.2.s8 %v4960
    %v5977 = vunpack.c.2.s8 %v4961
    %v5978 = vunpack.c.2.s8 %v4962
    %v5979 = vunpack.c.2.s8 %v4963
    %v5980 = vunpack.c.3.s8 %v4956
    %v5981 = vunpack.c.3.s8 %v4957
    %v5982 = vunpack.c.3.s8 %v4958
    %v5983 = vunpack.c.3.s8 %v4959
    %v5984 = vunpack.c.3.s8 %v4960
    %v5985 = vunpack.c.3.s8 %v4961
    %v5986 = vunpack.c.3.s8 %v4962
    %v5987 = vunpack.c.3.s8 %v4963
    %v5988 = vcvt.s32.f32 %v4964
    %v5989 = vcvt.s32.f32 %v4965
    %v5990 = vcvt.s32.f32 %v4966
    %v5991 = vcvt.s32.f32 %v4967
    %v5992 = vcvt.s32.f32 %v4968
    %v5993 = vcvt.s32.f32 %v4969
    %v5994 = vcvt.s32.f32 %v4970
    %v5995 = vcvt.s32.f32 %v4971
    %v5996 = vcvt.s32.f32 %v4972
    %v5997 = vcvt.s32.f32 %v4973
    %v5998 = vcvt.s32.f32 %v4974
    %v5999 = vcvt.s32.f32 %v4975
    %v6000 = vcvt.s32.f32 %v4976
    %v6001 = vcvt.s32.f32 %v4977
    %v6002 = vcvt.s32.f32 %v4978
    %v6003 = vcvt.s32.f32 %v4979
    %v6004 = vcvt.s32.f32 %v4980
    %v6005 = vcvt.s32.f32 %v4981
    %v6006 = vcvt.s32.f32 %v4982
    %v6007 = vcvt.s32.f32 %v4983
    %v6008 = vcvt.s32.f32 %v4984
    %v6009 = vcvt.s32.f32 %v4985
    %v6010 = vcvt.s32.f32 %v4986
    %v6011 = vcvt.s32.f32 %v4987
    %v6012 = vcvt.s32.f32 %v4988
    %v6013 = vcvt.s32.f32 %v4989
    %v6014 = vcvt.s32.f32 %v4990
    %v6015 = vcvt.s32.f32 %v4991
    %v6016 = vcvt.s32.f32 %v4992
    %v6017 = vcvt.s32.f32 %v4993
    %v6018 = vcvt.s32.f32 %v4994
    %v6019 = vcvt.s32.f32 %v4995
    %v6020 = vcvt.s32.f32 %v4996
    %v6021 = vcvt.s32.f32 %v4997
    %v6022 = vcvt.s32.f32 %v4998
    %v6023 = vcvt.s32.f32 %v4999
    %v6024 = vcvt.s32.f32 %v5000
    %v6025 = vcvt.s32.f32 %v5001
    %v6026 = vcvt.s32.f32 %v5002
    %v6027 = vcvt.s32.f32 %v5003
    %v6028 = vcvt.s32.f32 %v5004
    %v6029 = vcvt.s32.f32 %v5005
    %v6030 = vcvt.s32.f32 %v5006
    %v6031 = vcvt.s32.f32 %v5007
    %v6032 = vcvt.s32.f32 %v5008
    %v6033 = vcvt.s32.f32 %v5009
    %v6034 = vcvt.s32.f32 %v5010
    %v6035 = vcvt.s32.f32 %v5011
    %v6036 = vcvt.s32.f32 %v5012
    %v6037 = vcvt.s32.f32 %v5013
    %v6038 = vcvt.s32.f32 %v5014
    %v6039 = vcvt.s32.f32 %v5015
    %v6040 = vcvt.s32.f32 %v5016
    %v6041 = vcvt.s32.f32 %v5017
    %v6042 = vcvt.s32.f32 %v5018
    %v6043 = vcvt.s32.f32 %v5019
    %v6044 = vcvt.s32.f32 %v5020
    %v6045 = vcvt.s32.f32 %v5021
    %v6046 = vcvt.s32.f32 %v5022
    %v6047 = vcvt.s32.f32 %v5023
    %v6048 = vcvt.s32.f32 %v5024
    %v6049 = vcvt.s32.f32 %v5025
    %v6050 = vcvt.s32.f32 %v5026
    %v6051 = vcvt.s32.f32 %v5027
    %v6052 = vcvt.s32.f32 %v5028
    %v6053 = vcvt.s32.f32 %v5029
    %v6054 = vcvt.s32.f32 %v5030
    %v6055 = vcvt.s32.f32 %v5031
    %v6056 = vcvt.s32.f32 %v5032
    %v6057 = vcvt.s32.f32 %v5033
    %v6058 = vcvt.s32.f32 %v5034
    %v6059 = vcvt.s32.f32 %v5035
    %v6060 = vcvt.s32.f32 %v5036
    %v6061 = vcvt.s32.f32 %v5037
    %v6062 = vcvt.s32.f32 %v5038
    %v6063 = vcvt.s32.f32 %v5039
    %v6064 = vcvt.s32.f32 %v5040
    %v6065 = vcvt.s32.f32 %v5041
    %v6066 = vcvt.s32.f32 %v5042
    %v6067 = vcvt.s32.f32 %v5043
    %v6068 = vcvt.s32.f32 %v5044
    %v6069 = vcvt.s32.f32 %v5045
    %v6070 = vcvt.s32.f32 %v5046
    %v6071 = vcvt.s32.f32 %v5047
    %v6072 = vcvt.s32.f32 %v5048
    %v6073 = vcvt.s32.f32 %v5049
    %v6074 = vcvt.s32.f32 %v5050
    %v6075 = vcvt.s32.f32 %v5051
    %v6076 = vcvt.s32.f32 %v5052
    %v6077 = vcvt.s32.f32 %v5053
    %v6078 = vcvt.s32.f32 %v5054
    %v6079 = vcvt.s32.f32 %v5055
    %v6080 = vcvt.s32.f32 %v5056
    %v6081 = vcvt.s32.f32 %v5057
    %v6082 = vcvt.s32.f32 %v5058
    %v6083 = vcvt.s32.f32 %v5059
    %v6084 = vcvt.s32.f32 %v5060
    %v6085 = vcvt.s32.f32 %v5061
    %v6086 = vcvt.s32.f32 %v5062
    %v6087 = vcvt.s32.f32 %v5063
    %v6088 = vcvt.s32.f32 %v5064
    %v6089 = vcvt.s32.f32 %v5065
    %v6090 = vcvt.s32.f32 %v5066
    %v6091 = vcvt.s32.f32 %v5067
    %v6092 = vcvt.s32.f32 %v5068
    %v6093 = vcvt.s32.f32 %v5069
    %v6094 = vcvt.s32.f32 %v5070
    %v6095 = vcvt.s32.f32 %v5071
    %v6096 = vcvt.s32.f32 %v5072
    %v6097 = vcvt.s32.f32 %v5073
    %v6098 = vcvt.s32.f32 %v5074
    %v6099 = vcvt.s32.f32 %v5075
    %v6100 = vcvt.s32.f32 %v5076
    %v6101 = vcvt.s32.f32 %v5077
    %v6102 = vcvt.s32.f32 %v5078
    %v6103 = vcvt.s32.f32 %v5079
    %v6104 = vcvt.s32.f32 %v5080
    %v6105 = vcvt.s32.f32 %v5081
    %v6106 = vcvt.s32.f32 %v5082
    %v6107 = vcvt.s32.f32 %v5083
    %v6108 = vcvt.s32.f32 %v5084
    %v6109 = vcvt.s32.f32 %v5085
    %v6110 = vcvt.s32.f32 %v5086
    %v6111 = vcvt.s32.f32 %v5087
    %v6112 = vcvt.s32.f32 %v5088
    %v6113 = vcvt.s32.f32 %v5089
    %v6114 = vcvt.s32.f32 %v5090
    %v6115 = vcvt.s32.f32 %v5091
    %v6116 = vcvt.s32.f32 %v5092
    %v6117 = vcvt.s32.f32 %v5093
    %v6118 = vcvt.s32.f32 %v5094
    %v6119 = vcvt.s32.f32 %v5095
    %v6120 = vcvt.s32.f32 %v5096
    %v6121 = vcvt.s32.f32 %v5097
    %v6122 = vcvt.s32.f32 %v5098
    %v6123 = vcvt.s32.f32 %v5099
    %v6124 = vcvt.s32.f32 %v5100
    %v6125 = vcvt.s32.f32 %v5101
    %v6126 = vcvt.s32.f32 %v5102
    %v6127 = vcvt.s32.f32 %v5103
    %v6128 = vcvt.s32.f32 %v5104
    %v6129 = vcvt.s32.f32 %v5105
    %v6130 = vcvt.s32.f32 %v5106
    %v6131 = vcvt.s32.f32 %v5107
    %v6132 = vcvt.s32.f32 %v5108
    %v6133 = vcvt.s32.f32 %v5109
    %v6134 = vcvt.s32.f32 %v5110
    %v6135 = vcvt.s32.f32 %v5111
    %v6136 = vcvt.s32.f32 %v5112
    %v6137 = vcvt.s32.f32 %v5113
    %v6138 = vcvt.s32.f32 %v5114
    %v6139 = vcvt.s32.f32 %v5115
    %v6140 = vcvt.s32.f32 %v5116
    %v6141 = vcvt.s32.f32 %v5117
    %v6142 = vcvt.s32.f32 %v5118
    %v6143 = vcvt.s32.f32 %v5119
    %v6144 = vcvt.s32.f32 %v5120
    %v6145 = vcvt.s32.f32 %v5121
    %v6146 = vcvt.s32.f32 %v5122
    %v6147 = vcvt.s32.f32 %v5123
    %v6148 = vcvt.s32.f32 %v5124
    %v6149 = vcvt.s32.f32 %v5125
    %v6150 = vcvt.s32.f32 %v5126
    %v6151 = vcvt.s32.f32 %v5127
    %v6152 = vcvt.s32.f32 %v5128
    %v6153 = vcvt.s32.f32 %v5129
    %v6154 = vcvt.s32.f32 %v5130
    %v6155 = vcvt.s32.f32 %v5131
    %v6156 = vcvt.s32.f32 %v5132
    %v6157 = vcvt.s32.f32 %v5133
    %v6158 = vcvt.s32.f32 %v5134
    %v6159 = vcvt.s32.f32 %v5135
    %v6160 = vcvt.s32.f32 %v5136
    %v6161 = vcvt.s32.f32 %v5137
    %v6162 = vcvt.s32.f32 %v5138
    %v6163 = vcvt.s32.f32 %v5139
    %v6164 = vcvt.s32.f32 %v5140
    %v6165 = vcvt.s32.f32 %v5141
    %v6166 = vcvt.s32.f32 %v5142
    %v6167 = vcvt.s32.f32 %v5143
    %v6168 = vcvt.s32.f32 %v5144
    %v6169 = vcvt.s32.f32 %v5145
    %v6170 = vcvt.s32.f32 %v5146
    %v6171 = vcvt.s32.f32 %v5147
    %v6172 = vcvt.s32.f32 %v5148
    %v6173 = vcvt.s32.f32 %v5149
    %v6174 = vcvt.s32.f32 %v5150
    %v6175 = vcvt.s32.f32 %v5151
    %v6176 = vcvt.s32.f32 %v5152
    %v6177 = vcvt.s32.f32 %v5153
    %v6178 = vcvt.s32.f32 %v5154
    %v6179 = vcvt.s32.f32 %v5155
    %v6180 = vcvt.s32.f32 %v5156
    %v6181 = vcvt.s32.f32 %v5157
    %v6182 = vcvt.s32.f32 %v5158
    %v6183 = vcvt.s32.f32 %v5159
    %v6184 = vcvt.s32.f32 %v5160
    %v6185 = vcvt.s32.f32 %v5161
    %v6186 = vcvt.s32.f32 %v5162
    %v6187 = vcvt.s32.f32 %v5163
    %v6188 = vcvt.s32.f32 %v5164
    %v6189 = vcvt.s32.f32 %v5165
    %v6190 = vcvt.s32.f32 %v5166
    %v6191 = vcvt.s32.f32 %v5167
    %v6192 = vcvt.s32.f32 %v5168
    %v6193 = vcvt.s32.f32 %v5169
    %v6194 = vcvt.s32.f32 %v5170
    %v6195 = vcvt.s32.f32 %v5171
    %v6196 = vcvt.s32.f32 %v5172
    %v6197 = vcvt.s32.f32 %v5173
    %v6198 = vcvt.s32.f32 %v5174
    %v6199 = vcvt.s32.f32 %v5175
    %v6200 = vcvt.s32.f32 %v5176
    %v6201 = vcvt.s32.f32 %v5177
    %v6202 = vcvt.s32.f32 %v5178
    %v6203 = vcvt.s32.f32 %v5179
    %v6204 = vcvt.s32.f32 %v5180
    %v6205 = vcvt.s32.f32 %v5181
    %v6206 = vcvt.s32.f32 %v5182
    %v6207 = vcvt.s32.f32 %v5183
    %v6208 = vcvt.s32.f32 %v5184
    %v6209 = vcvt.s32.f32 %v5185
    %v6210 = vcvt.s32.f32 %v5186
    %v6211 = vcvt.s32.f32 %v5187
    %v6212 = vcvt.s32.f32 %v5188
    %v6213 = vcvt.s32.f32 %v5189
    %v6214 = vcvt.s32.f32 %v5190
    %v6215 = vcvt.s32.f32 %v5191
    %v6216 = vcvt.s32.f32 %v5192
    %v6217 = vcvt.s32.f32 %v5193
    %v6218 = vcvt.s32.f32 %v5194
    %v6219 = vcvt.s32.f32 %v5195
    %v6220 = vcvt.s32.f32 %v5196
    %v6221 = vcvt.s32.f32 %v5197
    %v6222 = vcvt.s32.f32 %v5198
    %v6223 = vcvt.s32.f32 %v5199
    %v6224 = vcvt.s32.f32 %v5200
    %v6225 = vcvt.s32.f32 %v5201
    %v6226 = vcvt.s32.f32 %v5202
    %v6227 = vcvt.s32.f32 %v5203
    %v6228 = vcvt.s32.f32 %v5204
    %v6229 = vcvt.s32.f32 %v5205
    %v6230 = vcvt.s32.f32 %v5206
    %v6231 = vcvt.s32.f32 %v5207
    %v6232 = vcvt.s32.f32 %v5208
    %v6233 = vcvt.s32.f32 %v5209
    %v6234 = vcvt.s32.f32 %v5210
    %v6235 = vcvt.s32.f32 %v5211
    %v6236 = vcvt.s32.f32 %v5212
    %v6237 = vcvt.s32.f32 %v5213
    %v6238 = vcvt.s32.f32 %v5214
    %v6239 = vcvt.s32.f32 %v5215
    %v6240 = vcvt.s32.f32 %v5216
    %v6241 = vcvt.s32.f32 %v5217
    %v6242 = vcvt.s32.f32 %v5218
    %v6243 = vcvt.s32.f32 %v5219
    %v6244 = vcvt.s32.f32 %v5220
    %v6245 = vcvt.s32.f32 %v5221
    %v6246 = vcvt.s32.f32 %v5222
    %v6247 = vcvt.s32.f32 %v5223
    %v6248 = vcvt.s32.f32 %v5224
    %v6249 = vcvt.s32.f32 %v5225
    %v6250 = vcvt.s32.f32 %v5226
    %v6251 = vcvt.s32.f32 %v5227
    %v6252 = vcvt.s32.f32 %v5228
    %v6253 = vcvt.s32.f32 %v5229
    %v6254 = vcvt.s32.f32 %v5230
    %v6255 = vcvt.s32.f32 %v5231
    %v6256 = vcvt.s32.f32 %v5232
    %v6257 = vcvt.s32.f32 %v5233
    %v6258 = vcvt.s32.f32 %v5234
    %v6259 = vcvt.s32.f32 %v5235
    %v6260 = vcvt.s32.f32 %v5236
    %v6261 = vcvt.s32.f32 %v5237
    %v6262 = vcvt.s32.f32 %v5238
    %v6263 = vcvt.s32.f32 %v5239
    %v6264 = vcvt.s32.f32 %v5240
    %v6265 = vcvt.s32.f32 %v5241
    %v6266 = vcvt.s32.f32 %v5242
    %v6267 = vcvt.s32.f32 %v5243
    %v6268 = vcvt.s32.f32 %v5244
    %v6269 = vcvt.s32.f32 %v5245
    %v6270 = vcvt.s32.f32 %v5246
    %v6271 = vcvt.s32.f32 %v5247
    %v6272 = vcvt.s32.f32 %v5248
    %v6273 = vcvt.s32.f32 %v5249
    %v6274 = vcvt.s32.f32 %v5250
    %v6275 = vcvt.s32.f32 %v5251
    %v6276 = vcvt.s32.f32 %v5252
    %v6277 = vcvt.s32.f32 %v5253
    %v6278 = vcvt.s32.f32 %v5254
    %v6279 = vcvt.s32.f32 %v5255
    %v6280 = vcvt.s32.f32 %v5256
    %v6281 = vcvt.s32.f32 %v5257
    %v6282 = vcvt.s32.f32 %v5258
    %v6283 = vcvt.s32.f32 %v5259
    %v6284 = vcvt.s32.f32 %v5260
    %v6285 = vcvt.s32.f32 %v5261
    %v6286 = vcvt.s32.f32 %v5262
    %v6287 = vcvt.s32.f32 %v5263
    %v6288 = vcvt.s32.f32 %v5264
    %v6289 = vcvt.s32.f32 %v5265
    %v6290 = vcvt.s32.f32 %v5266
    %v6291 = vcvt.s32.f32 %v5267
    %v6292 = vcvt.s32.f32 %v5268
    %v6293 = vcvt.s32.f32 %v5269
    %v6294 = vcvt.s32.f32 %v5270
    %v6295 = vcvt.s32.f32 %v5271
    %v6296 = vcvt.s32.f32 %v5272
    %v6297 = vcvt.s32.f32 %v5273
    %v6298 = vcvt.s32.f32 %v5274
    %v6299 = vcvt.s32.f32 %v5275
    %v6300 = vcvt.s32.f32 %v5276
    %v6301 = vcvt.s32.f32 %v5277
    %v6302 = vcvt.s32.f32 %v5278
    %v6303 = vcvt.s32.f32 %v5279
    %v6304 = vcvt.s32.f32 %v5280
    %v6305 = vcvt.s32.f32 %v5281
    %v6306 = vcvt.s32.f32 %v5282
    %v6307 = vcvt.s32.f32 %v5283
    %v6308 = vcvt.s32.f32 %v5284
    %v6309 = vcvt.s32.f32 %v5285
    %v6310 = vcvt.s32.f32 %v5286
    %v6311 = vcvt.s32.f32 %v5287
    %v6312 = vcvt.s32.f32 %v5288
    %v6313 = vcvt.s32.f32 %v5289
    %v6314 = vcvt.s32.f32 %v5290
    %v6315 = vcvt.s32.f32 %v5291
    %v6316 = vcvt.s32.f32 %v5292
    %v6317 = vcvt.s32.f32 %v5293
    %v6318 = vcvt.s32.f32 %v5294
    %v6319 = vcvt.s32.f32 %v5295
    %v6320 = vcvt.s32.f32 %v5296
    %v6321 = vcvt.s32.f32 %v5297
    %v6322 = vcvt.s32.f32 %v5298
    %v6323 = vcvt.s32.f32 %v5299
    %v6324 = vcvt.s32.f32 %v5300
    %v6325 = vcvt.s32.f32 %v5301
    %v6326 = vcvt.s32.f32 %v5302
    %v6327 = vcvt.s32.f32 %v5303
    %v6328 = vcvt.s32.f32 %v5304
    %v6329 = vcvt.s32.f32 %v5305
    %v6330 = vcvt.s32.f32 %v5306
    %v6331 = vcvt.s32.f32 %v5307
    %v6332 = vcvt.s32.f32 %v5308
    %v6333 = vcvt.s32.f32 %v5309
    %v6334 = vcvt.s32.f32 %v5310
    %v6335 = vcvt.s32.f32 %v5311
    %v6336 = vcvt.s32.f32 %v5312
    %v6337 = vcvt.s32.f32 %v5313
    %v6338 = vcvt.s32.f32 %v5314
    %v6339 = vcvt.s32.f32 %v5315
    %v6340 = vcvt.s32.f32 %v5316
    %v6341 = vcvt.s32.f32 %v5317
    %v6342 = vcvt.s32.f32 %v5318
    %v6343 = vcvt.s32.f32 %v5319
    %v6344 = vcvt.s32.f32 %v5320
    %v6345 = vcvt.s32.f32 %v5321
    %v6346 = vcvt.s32.f32 %v5322
    %v6347 = vcvt.s32.f32 %v5323
    %v6348 = vcvt.s32.f32 %v5324
    %v6349 = vcvt.s32.f32 %v5325
    %v6350 = vcvt.s32.f32 %v5326
    %v6351 = vcvt.s32.f32 %v5327
    %v6352 = vcvt.s32.f32 %v5328
    %v6353 = vcvt.s32.f32 %v5329
    %v6354 = vcvt.s32.f32 %v5330
    %v6355 = vcvt.s32.f32 %v5331
    %v6356 = vcvt.s32.f32 %v5332
    %v6357 = vcvt.s32.f32 %v5333
    %v6358 = vcvt.s32.f32 %v5334
    %v6359 = vcvt.s32.f32 %v5335
    %v6360 = vcvt.s32.f32 %v5336
    %v6361 = vcvt.s32.f32 %v5337
    %v6362 = vcvt.s32.f32 %v5338
    %v6363 = vcvt.s32.f32 %v5339
    %v6364 = vcvt.s32.f32 %v5340
    %v6365 = vcvt.s32.f32 %v5341
    %v6366 = vcvt.s32.f32 %v5342
    %v6367 = vcvt.s32.f32 %v5343
    %v6368 = vcvt.s32.f32 %v5344
    %v6369 = vcvt.s32.f32 %v5345
    %v6370 = vcvt.s32.f32 %v5346
    %v6371 = vcvt.s32.f32 %v5347
    %v6372 = vcvt.s32.f32 %v5348
    %v6373 = vcvt.s32.f32 %v5349
    %v6374 = vcvt.s32.f32 %v5350
    %v6375 = vcvt.s32.f32 %v5351
    %v6376 = vcvt.s32.f32 %v5352
    %v6377 = vcvt.s32.f32 %v5353
    %v6378 = vcvt.s32.f32 %v5354
    %v6379 = vcvt.s32.f32 %v5355
    %v6380 = vcvt.s32.f32 %v5356
    %v6381 = vcvt.s32.f32 %v5357
    %v6382 = vcvt.s32.f32 %v5358
    %v6383 = vcvt.s32.f32 %v5359
    %v6384 = vcvt.s32.f32 %v5360
    %v6385 = vcvt.s32.f32 %v5361
    %v6386 = vcvt.s32.f32 %v5362
    %v6387 = vcvt.s32.f32 %v5363
    %v6388 = vcvt.s32.f32 %v5364
    %v6389 = vcvt.s32.f32 %v5365
    %v6390 = vcvt.s32.f32 %v5366
    %v6391 = vcvt.s32.f32 %v5367
    %v6392 = vcvt.s32.f32 %v5368
    %v6393 = vcvt.s32.f32 %v5369
    %v6394 = vcvt.s32.f32 %v5370
    %v6395 = vcvt.s32.f32 %v5371
    %v6396 = vcvt.s32.f32 %v5372
    %v6397 = vcvt.s32.f32 %v5373
    %v6398 = vcvt.s32.f32 %v5374
    %v6399 = vcvt.s32.f32 %v5375
    %v6400 = vcvt.s32.f32 %v5376
    %v6401 = vcvt.s32.f32 %v5377
    %v6402 = vcvt.s32.f32 %v5378
    %v6403 = vcvt.s32.f32 %v5379
    %v6404 = vcvt.s32.f32 %v5380
    %v6405 = vcvt.s32.f32 %v5381
    %v6406 = vcvt.s32.f32 %v5382
    %v6407 = vcvt.s32.f32 %v5383
    %v6408 = vcvt.s32.f32 %v5384
    %v6409 = vcvt.s32.f32 %v5385
    %v6410 = vcvt.s32.f32 %v5386
    %v6411 = vcvt.s32.f32 %v5387
    %v6412 = vcvt.s32.f32 %v5388
    %v6413 = vcvt.s32.f32 %v5389
    %v6414 = vcvt.s32.f32 %v5390
    %v6415 = vcvt.s32.f32 %v5391
    %v6416 = vcvt.s32.f32 %v5392
    %v6417 = vcvt.s32.f32 %v5393
    %v6418 = vcvt.s32.f32 %v5394
    %v6419 = vcvt.s32.f32 %v5395
    %v6420 = vcvt.s32.f32 %v5396
    %v6421 = vcvt.s32.f32 %v5397
    %v6422 = vcvt.s32.f32 %v5398
    %v6423 = vcvt.s32.f32 %v5399
    %v6424 = vcvt.s32.f32 %v5400
    %v6425 = vcvt.s32.f32 %v5401
    %v6426 = vcvt.s32.f32 %v5402
    %v6427 = vcvt.s32.f32 %v5403
    %v6428 = vcvt.s32.f32 %v5404
    %v6429 = vcvt.s32.f32 %v5405
    %v6430 = vcvt.s32.f32 %v5406
    %v6431 = vcvt.s32.f32 %v5407
    %v6432 = vcvt.s32.f32 %v5408
    %v6433 = vcvt.s32.f32 %v5409
    %v6434 = vcvt.s32.f32 %v5410
    %v6435 = vcvt.s32.f32 %v5411
    %v6436 = vcvt.s32.f32 %v5412
    %v6437 = vcvt.s32.f32 %v5413
    %v6438 = vcvt.s32.f32 %v5414
    %v6439 = vcvt.s32.f32 %v5415
    %v6440 = vcvt.s32.f32 %v5416
    %v6441 = vcvt.s32.f32 %v5417
    %v6442 = vcvt.s32.f32 %v5418
    %v6443 = vcvt.s32.f32 %v5419
    %v6444 = vcvt.s32.f32 %v5420
    %v6445 = vcvt.s32.f32 %v5421
    %v6446 = vcvt.s32.f32 %v5422
    %v6447 = vcvt.s32.f32 %v5423
    %v6448 = vcvt.s32.f32 %v5424
    %v6449 = vcvt.s32.f32 %v5425
    %v6450 = vcvt.s32.f32 %v5426
    %v6451 = vcvt.s32.f32 %v5427
    %v6452 = vcvt.s32.f32 %v5428
    %v6453 = vcvt.s32.f32 %v5429
    %v6454 = vcvt.s32.f32 %v5430
    %v6455 = vcvt.s32.f32 %v5431
    %v6456 = vcvt.s32.f32 %v5432
    %v6457 = vcvt.s32.f32 %v5433
    %v6458 = vcvt.s32.f32 %v5434
    %v6459 = vcvt.s32.f32 %v5435
    %v6460 = vcvt.s32.f32 %v5436
    %v6461 = vcvt.s32.f32 %v5437
    %v6462 = vcvt.s32.f32 %v5438
    %v6463 = vcvt.s32.f32 %v5439
    %v6464 = vcvt.s32.f32 %v5440
    %v6465 = vcvt.s32.f32 %v5441
    %v6466 = vcvt.s32.f32 %v5442
    %v6467 = vcvt.s32.f32 %v5443
    %v6468 = vcvt.s32.f32 %v5444
    %v6469 = vcvt.s32.f32 %v5445
    %v6470 = vcvt.s32.f32 %v5446
    %v6471 = vcvt.s32.f32 %v5447
    %v6472 = vcvt.s32.f32 %v5448
    %v6473 = vcvt.s32.f32 %v5449
    %v6474 = vcvt.s32.f32 %v5450
    %v6475 = vcvt.s32.f32 %v5451
    %v6476 = vcvt.s32.f32 %v5452
    %v6477 = vcvt.s32.f32 %v5453
    %v6478 = vcvt.s32.f32 %v5454
    %v6479 = vcvt.s32.f32 %v5455
    %v6480 = vcvt.s32.f32 %v5456
    %v6481 = vcvt.s32.f32 %v5457
    %v6482 = vcvt.s32.f32 %v5458
    %v6483 = vcvt.s32.f32 %v5459
    %v6484 = vcvt.s32.f32 %v5460
    %v6485 = vcvt.s32.f32 %v5461
    %v6486 = vcvt.s32.f32 %v5462
    %v6487 = vcvt.s32.f32 %v5463
    %v6488 = vcvt.s32.f32 %v5464
    %v6489 = vcvt.s32.f32 %v5465
    %v6490 = vcvt.s32.f32 %v5466
    %v6491 = vcvt.s32.f32 %v5467
    %v6492 = vcvt.s32.f32 %v5468
    %v6493 = vcvt.s32.f32 %v5469
    %v6494 = vcvt.s32.f32 %v5470
    %v6495 = vcvt.s32.f32 %v5471
    %v6496 = vcvt.s32.f32 %v5472
    %v6497 = vcvt.s32.f32 %v5473
    %v6498 = vcvt.s32.f32 %v5474
    %v6499 = vcvt.s32.f32 %v5475
    %v6500 = vcvt.s32.f32 %v5476
    %v6501 = vcvt.s32.f32 %v5477
    %v6502 = vcvt.s32.f32 %v5478
    %v6503 = vcvt.s32.f32 %v5479
    %v6504 = vcvt.s32.f32 %v5480
    %v6505 = vcvt.s32.f32 %v5481
    %v6506 = vcvt.s32.f32 %v5482
    %v6507 = vcvt.s32.f32 %v5483
    %v6508 = vcvt.s32.f32 %v5484
    %v6509 = vcvt.s32.f32 %v5485
    %v6510 = vcvt.s32.f32 %v5486
    %v6511 = vcvt.s32.f32 %v5487
    %v6512 = vcvt.s32.f32 %v5488
    %v6513 = vcvt.s32.f32 %v5489
    %v6514 = vcvt.s32.f32 %v5490
    %v6515 = vcvt.s32.f32 %v5491
    %v6516 = vcvt.s32.f32 %v5492
    %v6517 = vcvt.s32.f32 %v5493
    %v6518 = vcvt.s32.f32 %v5494
    %v6519 = vcvt.s32.f32 %v5495
    %v6520 = vcvt.s32.f32 %v5496
    %v6521 = vcvt.s32.f32 %v5497
    %v6522 = vcvt.s32.f32 %v5498
    %v6523 = vcvt.s32.f32 %v5499
    %v6524 = vcvt.s32.f32 %v5500
    %v6525 = vcvt.s32.f32 %v5501
    %v6526 = vcvt.s32.f32 %v5502
    %v6527 = vcvt.s32.f32 %v5503
    %v6528 = vcvt.s32.f32 %v5504
    %v6529 = vcvt.s32.f32 %v5505
    %v6530 = vcvt.s32.f32 %v5506
    %v6531 = vcvt.s32.f32 %v5507
    %v6532 = vcvt.s32.f32 %v5508
    %v6533 = vcvt.s32.f32 %v5509
    %v6534 = vcvt.s32.f32 %v5510
    %v6535 = vcvt.s32.f32 %v5511
    %v6536 = vcvt.s32.f32 %v5512
    %v6537 = vcvt.s32.f32 %v5513
    %v6538 = vcvt.s32.f32 %v5514
    %v6539 = vcvt.s32.f32 %v5515
    %v6540 = vcvt.s32.f32 %v5516
    %v6541 = vcvt.s32.f32 %v5517
    %v6542 = vcvt.s32.f32 %v5518
    %v6543 = vcvt.s32.f32 %v5519
    %v6544 = vcvt.s32.f32 %v5520
    %v6545 = vcvt.s32.f32 %v5521
    %v6546 = vcvt.s32.f32 %v5522
    %v6547 = vcvt.s32.f32 %v5523
    %v6548 = vcvt.s32.f32 %v5524
    %v6549 = vcvt.s32.f32 %v5525
    %v6550 = vcvt.s32.f32 %v5526
    %v6551 = vcvt.s32.f32 %v5527
    %v6552 = vcvt.s32.f32 %v5528
    %v6553 = vcvt.s32.f32 %v5529
    %v6554 = vcvt.s32.f32 %v5530
    %v6555 = vcvt.s32.f32 %v5531
    %v6556 = vcvt.s32.f32 %v5532
    %v6557 = vcvt.s32.f32 %v5533
    %v6558 = vcvt.s32.f32 %v5534
    %v6559 = vcvt.s32.f32 %v5535
    %v6560 = vcvt.s32.f32 %v5536
    %v6561 = vcvt.s32.f32 %v5537
    %v6562 = vcvt.s32.f32 %v5538
    %v6563 = vcvt.s32.f32 %v5539
    %v6564 = vcvt.s32.f32 %v5540
    %v6565 = vcvt.s32.f32 %v5541
    %v6566 = vcvt.s32.f32 %v5542
    %v6567 = vcvt.s32.f32 %v5543
    %v6568 = vcvt.s32.f32 %v5544
    %v6569 = vcvt.s32.f32 %v5545
    %v6570 = vcvt.s32.f32 %v5546
    %v6571 = vcvt.s32.f32 %v5547
    %v6572 = vcvt.s32.f32 %v5548
    %v6573 = vcvt.s32.f32 %v5549
    %v6574 = vcvt.s32.f32 %v5550
    %v6575 = vcvt.s32.f32 %v5551
    %v6576 = vcvt.s32.f32 %v5552
    %v6577 = vcvt.s32.f32 %v5553
    %v6578 = vcvt.s32.f32 %v5554
    %v6579 = vcvt.s32.f32 %v5555
    %v6580 = vcvt.s32.f32 %v5556
    %v6581 = vcvt.s32.f32 %v5557
    %v6582 = vcvt.s32.f32 %v5558
    %v6583 = vcvt.s32.f32 %v5559
    %v6584 = vcvt.s32.f32 %v5560
    %v6585 = vcvt.s32.f32 %v5561
    %v6586 = vcvt.s32.f32 %v5562
    %v6587 = vcvt.s32.f32 %v5563
    %v6588 = vcvt.s32.f32 %v5564
    %v6589 = vcvt.s32.f32 %v5565
    %v6590 = vcvt.s32.f32 %v5566
    %v6591 = vcvt.s32.f32 %v5567
    %v6592 = vcvt.s32.f32 %v5568
    %v6593 = vcvt.s32.f32 %v5569
    %v6594 = vcvt.s32.f32 %v5570
    %v6595 = vcvt.s32.f32 %v5571
    %v6596 = vcvt.s32.f32 %v5572
    %v6597 = vcvt.s32.f32 %v5573
    %v6598 = vcvt.s32.f32 %v5574
    %v6599 = vcvt.s32.f32 %v5575
    %v6600 = vcvt.s32.f32 %v5576
    %v6601 = vcvt.s32.f32 %v5577
    %v6602 = vcvt.s32.f32 %v5578
    %v6603 = vcvt.s32.f32 %v5579
    %v6604 = vcvt.s32.f32 %v5580
    %v6605 = vcvt.s32.f32 %v5581
    %v6606 = vcvt.s32.f32 %v5582
    %v6607 = vcvt.s32.f32 %v5583
    %v6608 = vcvt.s32.f32 %v5584
    %v6609 = vcvt.s32.f32 %v5585
    %v6610 = vcvt.s32.f32 %v5586
    %v6611 = vcvt.s32.f32 %v5587
    %v6612 = vcvt.s32.f32 %v5588
    %v6613 = vcvt.s32.f32 %v5589
    %v6614 = vcvt.s32.f32 %v5590
    %v6615 = vcvt.s32.f32 %v5591
    %v6616 = vcvt.s32.f32 %v5592
    %v6617 = vcvt.s32.f32 %v5593
    %v6618 = vcvt.s32.f32 %v5594
    %v6619 = vcvt.s32.f32 %v5595
    %v6620 = vcvt.s32.f32 %v5596
    %v6621 = vcvt.s32.f32 %v5597
    %v6622 = vcvt.s32.f32 %v5598
    %v6623 = vcvt.s32.f32 %v5599
    %v6624 = vcvt.s32.f32 %v5600
    %v6625 = vcvt.s32.f32 %v5601
    %v6626 = vcvt.s32.f32 %v5602
    %v6627 = vcvt.s32.f32 %v5603
    %v6628 = vcvt.s32.f32 %v5604
    %v6629 = vcvt.s32.f32 %v5605
    %v6630 = vcvt.s32.f32 %v5606
    %v6631 = vcvt.s32.f32 %v5607
    %v6632 = vcvt.s32.f32 %v5608
    %v6633 = vcvt.s32.f32 %v5609
    %v6634 = vcvt.s32.f32 %v5610
    %v6635 = vcvt.s32.f32 %v5611
    %v6636 = vcvt.s32.f32 %v5612
    %v6637 = vcvt.s32.f32 %v5613
    %v6638 = vcvt.s32.f32 %v5614
    %v6639 = vcvt.s32.f32 %v5615
    %v6640 = vcvt.s32.f32 %v5616
    %v6641 = vcvt.s32.f32 %v5617
    %v6642 = vcvt.s32.f32 %v5618
    %v6643 = vcvt.s32.f32 %v5619
    %v6644 = vcvt.s32.f32 %v5620
    %v6645 = vcvt.s32.f32 %v5621
    %v6646 = vcvt.s32.f32 %v5622
    %v6647 = vcvt.s32.f32 %v5623
    %v6648 = vcvt.s32.f32 %v5624
    %v6649 = vcvt.s32.f32 %v5625
    %v6650 = vcvt.s32.f32 %v5626
    %v6651 = vcvt.s32.f32 %v5627
    %v6652 = vcvt.s32.f32 %v5628
    %v6653 = vcvt.s32.f32 %v5629
    %v6654 = vcvt.s32.f32 %v5630
    %v6655 = vcvt.s32.f32 %v5631
    %v6656 = vcvt.s32.f32 %v5632
    %v6657 = vcvt.s32.f32 %v5633
    %v6658 = vcvt.s32.f32 %v5634
    %v6659 = vcvt.s32.f32 %v5635
    %v6660 = vcvt.s32.f32 %v5636
    %v6661 = vcvt.s32.f32 %v5637
    %v6662 = vcvt.s32.f32 %v5638
    %v6663 = vcvt.s32.f32 %v5639
    %v6664 = vcvt.s32.f32 %v5640
    %v6665 = vcvt.s32.f32 %v5641
    %v6666 = vcvt.s32.f32 %v5642
    %v6667 = vcvt.s32.f32 %v5643
    %v6668 = vcvt.s32.f32 %v5644
    %v6669 = vcvt.s32.f32 %v5645
    %v6670 = vcvt.s32.f32 %v5646
    %v6671 = vcvt.s32.f32 %v5647
    %v6672 = vcvt.s32.f32 %v5648
    %v6673 = vcvt.s32.f32 %v5649
    %v6674 = vcvt.s32.f32 %v5650
    %v6675 = vcvt.s32.f32 %v5651
    %v6676 = vcvt.s32.f32 %v5652
    %v6677 = vcvt.s32.f32 %v5653
    %v6678 = vcvt.s32.f32 %v5654
    %v6679 = vcvt.s32.f32 %v5655
    %v6680 = vcvt.s32.f32 %v5656
    %v6681 = vcvt.s32.f32 %v5657
    %v6682 = vcvt.s32.f32 %v5658
    %v6683 = vcvt.s32.f32 %v5659
    %v6684 = vcvt.s32.f32 %v5660
    %v6685 = vcvt.s32.f32 %v5661
    %v6686 = vcvt.s32.f32 %v5662
    %v6687 = vcvt.s32.f32 %v5663
    %v6688 = vcvt.s32.f32 %v5664
    %v6689 = vcvt.s32.f32 %v5665
    %v6690 = vcvt.s32.f32 %v5666
    %v6691 = vcvt.s32.f32 %v5667
    %v6692 = vcvt.s32.f32 %v5668
    %v6693 = vcvt.s32.f32 %v5669
    %v6694 = vcvt.s32.f32 %v5670
    %v6695 = vcvt.s32.f32 %v5671
    %v6696 = vcvt.s32.f32 %v5672
    %v6697 = vcvt.s32.f32 %v5673
    %v6698 = vcvt.s32.f32 %v5674
    %v6699 = vcvt.s32.f32 %v5675
    %v6700 = vcvt.s32.f32 %v5676
    %v6701 = vcvt.s32.f32 %v5677
    %v6702 = vcvt.s32.f32 %v5678
    %v6703 = vcvt.s32.f32 %v5679
    %v6704 = vcvt.s32.f32 %v5680
    %v6705 = vcvt.s32.f32 %v5681
    %v6706 = vcvt.s32.f32 %v5682
    %v6707 = vcvt.s32.f32 %v5683
    %v6708 = vcvt.s32.f32 %v5684
    %v6709 = vcvt.s32.f32 %v5685
    %v6710 = vcvt.s32.f32 %v5686
    %v6711 = vcvt.s32.f32 %v5687
    %v6712 = vcvt.s32.f32 %v5688
    %v6713 = vcvt.s32.f32 %v5689
    %v6714 = vcvt.s32.f32 %v5690
    %v6715 = vcvt.s32.f32 %v5691
    %v6716 = vcvt.s32.f32 %v5692
    %v6717 = vcvt.s32.f32 %v5693
    %v6718 = vcvt.s32.f32 %v5694
    %v6719 = vcvt.s32.f32 %v5695
    %v6720 = vcvt.s32.f32 %v5696
    %v6721 = vcvt.s32.f32 %v5697
    %v6722 = vcvt.s32.f32 %v5698
    %v6723 = vcvt.s32.f32 %v5699
    %v6724 = vcvt.s32.f32 %v5700
    %v6725 = vcvt.s32.f32 %v5701
    %v6726 = vcvt.s32.f32 %v5702
    %v6727 = vcvt.s32.f32 %v5703
    %v6728 = vcvt.s32.f32 %v5704
    %v6729 = vcvt.s32.f32 %v5705
    %v6730 = vcvt.s32.f32 %v5706
    %v6731 = vcvt.s32.f32 %v5707
    %v6732 = vcvt.s32.f32 %v5708
    %v6733 = vcvt.s32.f32 %v5709
    %v6734 = vcvt.s32.f32 %v5710
    %v6735 = vcvt.s32.f32 %v5711
    %v6736 = vcvt.s32.f32 %v5712
    %v6737 = vcvt.s32.f32 %v5713
    %v6738 = vcvt.s32.f32 %v5714
    %v6739 = vcvt.s32.f32 %v5715
    %v6740 = vcvt.s32.f32 %v5716
    %v6741 = vcvt.s32.f32 %v5717
    %v6742 = vcvt.s32.f32 %v5718
    %v6743 = vcvt.s32.f32 %v5719
    %v6744 = vcvt.s32.f32 %v5720
    %v6745 = vcvt.s32.f32 %v5721
    %v6746 = vcvt.s32.f32 %v5722
    %v6747 = vcvt.s32.f32 %v5723
    %v6748 = vcvt.s32.f32 %v5724
    %v6749 = vcvt.s32.f32 %v5725
    %v6750 = vcvt.s32.f32 %v5726
    %v6751 = vcvt.s32.f32 %v5727
    %v6752 = vcvt.s32.f32 %v5728
    %v6753 = vcvt.s32.f32 %v5729
    %v6754 = vcvt.s32.f32 %v5730
    %v6755 = vcvt.s32.f32 %v5731
    %v6756 = vcvt.s32.f32 %v5732
    %v6757 = vcvt.s32.f32 %v5733
    %v6758 = vcvt.s32.f32 %v5734
    %v6759 = vcvt.s32.f32 %v5735
    %v6760 = vcvt.s32.f32 %v5736
    %v6761 = vcvt.s32.f32 %v5737
    %v6762 = vcvt.s32.f32 %v5738
    %v6763 = vcvt.s32.f32 %v5739
    %v6764 = vcvt.s32.f32 %v5740
    %v6765 = vcvt.s32.f32 %v5741
    %v6766 = vcvt.s32.f32 %v5742
    %v6767 = vcvt.s32.f32 %v5743
    %v6768 = vcvt.s32.f32 %v5744
    %v6769 = vcvt.s32.f32 %v5745
    %v6770 = vcvt.s32.f32 %v5746
    %v6771 = vcvt.s32.f32 %v5747
    %v6772 = vcvt.s32.f32 %v5748
    %v6773 = vcvt.s32.f32 %v5749
    %v6774 = vcvt.s32.f32 %v5750
    %v6775 = vcvt.s32.f32 %v5751
    %v6776 = vcvt.s32.f32 %v5752
    %v6777 = vcvt.s32.f32 %v5753
    %v6778 = vcvt.s32.f32 %v5754
    %v6779 = vcvt.s32.f32 %v5755
    %v6780 = vcvt.s32.f32 %v5756
    %v6781 = vcvt.s32.f32 %v5757
    %v6782 = vcvt.s32.f32 %v5758
    %v6783 = vcvt.s32.f32 %v5759
    %v6784 = vcvt.s32.f32 %v5760
    %v6785 = vcvt.s32.f32 %v5761
    %v6786 = vcvt.s32.f32 %v5762
    %v6787 = vcvt.s32.f32 %v5763
    %v6788 = vcvt.s32.f32 %v5764
    %v6789 = vcvt.s32.f32 %v5765
    %v6790 = vcvt.s32.f32 %v5766
    %v6791 = vcvt.s32.f32 %v5767
    %v6792 = vcvt.s32.f32 %v5768
    %v6793 = vcvt.s32.f32 %v5769
    %v6794 = vcvt.s32.f32 %v5770
    %v6795 = vcvt.s32.f32 %v5771
    %v6796 = vcvt.s32.f32 %v5772
    %v6797 = vcvt.s32.f32 %v5773
    %v6798 = vcvt.s32.f32 %v5774
    %v6799 = vcvt.s32.f32 %v5775
    %v6800 = vcvt.s32.f32 %v5776
    %v6801 = vcvt.s32.f32 %v5777
    %v6802 = vcvt.s32.f32 %v5778
    %v6803 = vcvt.s32.f32 %v5779
    %v6804 = vcvt.s32.f32 %v5780
    %v6805 = vcvt.s32.f32 %v5781
    %v6806 = vcvt.s32.f32 %v5782
    %v6807 = vcvt.s32.f32 %v5783
    %v6808 = vcvt.s32.f32 %v5784
    %v6809 = vcvt.s32.f32 %v5785
    %v6810 = vcvt.s32.f32 %v5786
    %v6811 = vcvt.s32.f32 %v5787
    %v6812 = vcvt.s32.f32 %v5788
    %v6813 = vcvt.s32.f32 %v5789
    %v6814 = vcvt.s32.f32 %v5790
    %v6815 = vcvt.s32.f32 %v5791
    %v6816 = vcvt.s32.f32 %v5792
    %v6817 = vcvt.s32.f32 %v5793
    %v6818 = vcvt.s32.f32 %v5794
    %v6819 = vcvt.s32.f32 %v5795
    %v6820 = vcvt.s32.f32 %v5796
    %v6821 = vcvt.s32.f32 %v5797
    %v6822 = vcvt.s32.f32 %v5798
    %v6823 = vcvt.s32.f32 %v5799
    %v6824 = vcvt.s32.f32 %v5800
    %v6825 = vcvt.s32.f32 %v5801
    %v6826 = vcvt.s32.f32 %v5802
    %v6827 = vcvt.s32.f32 %v5803
    %v6828 = vcvt.s32.f32 %v5804
    %v6829 = vcvt.s32.f32 %v5805
    %v6830 = vcvt.s32.f32 %v5806
    %v6831 = vcvt.s32.f32 %v5807
    %v6832 = vcvt.s32.f32 %v5808
    %v6833 = vcvt.s32.f32 %v5809
    %v6834 = vcvt.s32.f32 %v5810
    %v6835 = vcvt.s32.f32 %v5811
    %v6836 = vcvt.s32.f32 %v5812
    %v6837 = vcvt.s32.f32 %v5813
    %v6838 = vcvt.s32.f32 %v5814
    %v6839 = vcvt.s32.f32 %v5815
    %v6840 = vcvt.s32.f32 %v5816
    %v6841 = vcvt.s32.f32 %v5817
    %v6842 = vcvt.s32.f32 %v5818
    %v6843 = vcvt.s32.f32 %v5819
    %v6844 = vcvt.s32.f32 %v5820
    %v6845 = vcvt.s32.f32 %v5821
    %v6846 = vcvt.s32.f32 %v5822
    %v6847 = vcvt.s32.f32 %v5823
    %v6848 = vcvt.s32.f32 %v5824
    %v6849 = vcvt.s32.f32 %v5825
    %v6850 = vcvt.s32.f32 %v5826
    %v6851 = vcvt.s32.f32 %v5827
    %v6852 = vcvt.s32.f32 %v5828
    %v6853 = vcvt.s32.f32 %v5829
    %v6854 = vcvt.s32.f32 %v5830
    %v6855 = vcvt.s32.f32 %v5831
    %v6856 = vcvt.s32.f32 %v5832
    %v6857 = vcvt.s32.f32 %v5833
    %v6858 = vcvt.s32.f32 %v5834
    %v6859 = vcvt.s32.f32 %v5835
    %v6860 = vcvt.s32.f32 %v5836
    %v6861 = vcvt.s32.f32 %v5837
    %v6862 = vcvt.s32.f32 %v5838
    %v6863 = vcvt.s32.f32 %v5839
    %v6864 = vcvt.s32.f32 %v5840
    %v6865 = vcvt.s32.f32 %v5841
    %v6866 = vcvt.s32.f32 %v5842
    %v6867 = vcvt.s32.f32 %v5843
    %v6868 = vcvt.s32.f32 %v5844
    %v6869 = vcvt.s32.f32 %v5845
    %v6870 = vcvt.s32.f32 %v5846
    %v6871 = vcvt.s32.f32 %v5847
    %v6872 = vcvt.s32.f32 %v5848
    %v6873 = vcvt.s32.f32 %v5849
    %v6874 = vcvt.s32.f32 %v5850
    %v6875 = vcvt.s32.f32 %v5851
    %v6876 = vcvt.s32.f32 %v5852
    %v6877 = vcvt.s32.f32 %v5853
    %v6878 = vcvt.s32.f32 %v5854
    %v6879 = vcvt.s32.f32 %v5855
    %v6880 = vcvt.s32.f32 %v5856
    %v6881 = vcvt.s32.f32 %v5857
    %v6882 = vcvt.s32.f32 %v5858
    %v6883 = vcvt.s32.f32 %v5859
    %v6884 = vcvt.s32.f32 %v5860
    %v6885 = vcvt.s32.f32 %v5861
    %v6886 = vcvt.s32.f32 %v5862
    %v6887 = vcvt.s32.f32 %v5863
    %v6888 = vcvt.s32.f32 %v5864
    %v6889 = vcvt.s32.f32 %v5865
    %v6890 = vcvt.s32.f32 %v5866
    %v6891 = vcvt.s32.f32 %v5867
    %v6892 = vcvt.s32.f32 %v5868
    %v6893 = vcvt.s32.f32 %v5869
    %v6894 = vcvt.s32.f32 %v5870
    %v6895 = vcvt.s32.f32 %v5871
    %v6896 = vcvt.s32.f32 %v5872
    %v6897 = vcvt.s32.f32 %v5873
    %v6898 = vcvt.s32.f32 %v5874
    %v6899 = vcvt.s32.f32 %v5875
    %v6900 = vcvt.s32.f32 %v5876
    %v6901 = vcvt.s32.f32 %v5877
    %v6902 = vcvt.s32.f32 %v5878
    %v6903 = vcvt.s32.f32 %v5879
    %v6904 = vcvt.s32.f32 %v5880
    %v6905 = vcvt.s32.f32 %v5881
    %v6906 = vcvt.s32.f32 %v5882
    %v6907 = vcvt.s32.f32 %v5883
    %v6908 = vcvt.s32.f32 %v5884
    %v6909 = vcvt.s32.f32 %v5885
    %v6910 = vcvt.s32.f32 %v5886
    %v6911 = vcvt.s32.f32 %v5887
    %v6912 = vcvt.s32.f32 %v5888
    %v6913 = vcvt.s32.f32 %v5889
    %v6914 = vcvt.s32.f32 %v5890
    %v6915 = vcvt.s32.f32 %v5891
    %v6916 = vcvt.s32.f32 %v5892
    %v6917 = vcvt.s32.f32 %v5893
    %v6918 = vcvt.s32.f32 %v5894
    %v6919 = vcvt.s32.f32 %v5895
    %v6920 = vcvt.s32.f32 %v5896
    %v6921 = vcvt.s32.f32 %v5897
    %v6922 = vcvt.s32.f32 %v5898
    %v6923 = vcvt.s32.f32 %v5899
    %v6924 = vcvt.s32.f32 %v5900
    %v6925 = vcvt.s32.f32 %v5901
    %v6926 = vcvt.s32.f32 %v5902
    %v6927 = vcvt.s32.f32 %v5903
    %v6928 = vcvt.s32.f32 %v5904
    %v6929 = vcvt.s32.f32 %v5905
    %v6930 = vcvt.s32.f32 %v5906
    %v6931 = vcvt.s32.f32 %v5907
    %v6932 = vcvt.s32.f32 %v5908
    %v6933 = vcvt.s32.f32 %v5909
    %v6934 = vcvt.s32.f32 %v5910
    %v6935 = vcvt.s32.f32 %v5911
    %v6936 = vcvt.s32.f32 %v5912
    %v6937 = vcvt.s32.f32 %v5913
    %v6938 = vcvt.s32.f32 %v5914
    %v6939 = vcvt.s32.f32 %v5915
    %v6940 = vcvt.s32.f32 %v5916
    %v6941 = vcvt.s32.f32 %v5917
    %v6942 = vcvt.s32.f32 %v5918
    %v6943 = vcvt.s32.f32 %v5919
    %v6944 = vcvt.s32.f32 %v5920
    %v6945 = vcvt.s32.f32 %v5921
    %v6946 = vcvt.s32.f32 %v5922
    %v6947 = vcvt.s32.f32 %v5923
    %v6948 = vcvt.s32.f32 %v5924
    %v6949 = vcvt.s32.f32 %v5925
    %v6950 = vcvt.s32.f32 %v5926
    %v6951 = vcvt.s32.f32 %v5927
    %v6952 = vcvt.s32.f32 %v5928
    %v6953 = vcvt.s32.f32 %v5929
    %v6954 = vcvt.s32.f32 %v5930
    %v6955 = vcvt.s32.f32 %v5931
    %v6956 = vcvt.s32.f32 %v5932
    %v6957 = vcvt.s32.f32 %v5933
    %v6958 = vcvt.s32.f32 %v5934
    %v6959 = vcvt.s32.f32 %v5935
    %v6960 = vcvt.s32.f32 %v5936
    %v6961 = vcvt.s32.f32 %v5937
    %v6962 = vcvt.s32.f32 %v5938
    %v6963 = vcvt.s32.f32 %v5939
    %v6964 = vcvt.s32.f32 %v5940
    %v6965 = vcvt.s32.f32 %v5941
    %v6966 = vcvt.s32.f32 %v5942
    %v6967 = vcvt.s32.f32 %v5943
    %v6968 = vcvt.s32.f32 %v5944
    %v6969 = vcvt.s32.f32 %v5945
    %v6970 = vcvt.s32.f32 %v5946
    %v6971 = vcvt.s32.f32 %v5947
    %v6972 = vcvt.s32.f32 %v5948
    %v6973 = vcvt.s32.f32 %v5949
    %v6974 = vcvt.s32.f32 %v5950
    %v6975 = vcvt.s32.f32 %v5951
    %v6976 = vcvt.s32.f32 %v5952
    %v6977 = vcvt.s32.f32 %v5953
    %v6978 = vcvt.s32.f32 %v5954
    %v6979 = vcvt.s32.f32 %v5955
    %v6980 = vcvt.s32.f32 %v5956
    %v6981 = vcvt.s32.f32 %v5957
    %v6982 = vcvt.s32.f32 %v5958
    %v6983 = vcvt.s32.f32 %v5959
    %v6984 = vcvt.s32.f32 %v5960
    %v6985 = vcvt.s32.f32 %v5961
    %v6986 = vcvt.s32.f32 %v5962
    %v6987 = vcvt.s32.f32 %v5963
    %v6988 = vcvt.s32.f32 %v5964
    %v6989 = vcvt.s32.f32 %v5965
    %v6990 = vcvt.s32.f32 %v5966
    %v6991 = vcvt.s32.f32 %v5967
    %v6992 = vcvt.s32.f32 %v5968
    %v6993 = vcvt.s32.f32 %v5969
    %v6994 = vcvt.s32.f32 %v5970
    %v6995 = vcvt.s32.f32 %v5971
    %v6996 = vcvt.s32.f32 %v5972
    %v6997 = vcvt.s32.f32 %v5973
    %v6998 = vcvt.s32.f32 %v5974
    %v6999 = vcvt.s32.f32 %v5975
    %v7000 = vcvt.s32.f32 %v5976
    %v7001 = vcvt.s32.f32 %v5977
    %v7002 = vcvt.s32.f32 %v5978
    %v7003 = vcvt.s32.f32 %v5979
    %v7004 = vcvt.s32.f32 %v5980
    %v7005 = vcvt.s32.f32 %v5981
    %v7006 = vcvt.s32.f32 %v5982
    %v7007 = vcvt.s32.f32 %v5983
    %v7008 = vcvt.s32.f32 %v5984
    %v7009 = vcvt.s32.f32 %v5985
    %v7010 = vcvt.s32.f32 %v5986
    %v7011 = vcvt.s32.f32 %v5987
    %v7012 = vpack.c.bf16 %v5996, %v5988
    %v7013 = vpack.c.bf16 %v5997, %v5989
    %v7014 = vpack.c.bf16 %v5998, %v5990
    %v7015 = vpack.c.bf16 %v5999, %v5991
    %v7016 = vpack.c.bf16 %v6000, %v5992
    %v7017 = vpack.c.bf16 %v6001, %v5993
    %v7018 = vpack.c.bf16 %v6002, %v5994
    %v7019 = vpack.c.bf16 %v6003, %v5995
    %v7020 = vpack.c.bf16 %v6012, %v6004
    %v7021 = vpack.c.bf16 %v6013, %v6005
    %v7022 = vpack.c.bf16 %v6014, %v6006
    %v7023 = vpack.c.bf16 %v6015, %v6007
    %v7024 = vpack.c.bf16 %v6016, %v6008
    %v7025 = vpack.c.bf16 %v6017, %v6009
    %v7026 = vpack.c.bf16 %v6018, %v6010
    %v7027 = vpack.c.bf16 %v6019, %v6011
    %v7028 = vpack.c.bf16 %v6028, %v6020
    %v7029 = vpack.c.bf16 %v6029, %v6021
    %v7030 = vpack.c.bf16 %v6030, %v6022
    %v7031 = vpack.c.bf16 %v6031, %v6023
    %v7032 = vpack.c.bf16 %v6032, %v6024
    %v7033 = vpack.c.bf16 %v6033, %v6025
    %v7034 = vpack.c.bf16 %v6034, %v6026
    %v7035 = vpack.c.bf16 %v6035, %v6027
    %v7036 = vpack.c.bf16 %v6044, %v6036
    %v7037 = vpack.c.bf16 %v6045, %v6037
    %v7038 = vpack.c.bf16 %v6046, %v6038
    %v7039 = vpack.c.bf16 %v6047, %v6039
    %v7040 = vpack.c.bf16 %v6048, %v6040
    %v7041 = vpack.c.bf16 %v6049, %v6041
    %v7042 = vpack.c.bf16 %v6050, %v6042
    %v7043 = vpack.c.bf16 %v6051, %v6043
    %v7044 = vpack.c.bf16 %v6060, %v6052
    %v7045 = vpack.c.bf16 %v6061, %v6053
    %v7046 = vpack.c.bf16 %v6062, %v6054
    %v7047 = vpack.c.bf16 %v6063, %v6055
    %v7048 = vpack.c.bf16 %v6064, %v6056
    %v7049 = vpack.c.bf16 %v6065, %v6057
    %v7050 = vpack.c.bf16 %v6066, %v6058
    %v7051 = vpack.c.bf16 %v6067, %v6059
    %v7052 = vpack.c.bf16 %v6076, %v6068
    %v7053 = vpack.c.bf16 %v6077, %v6069
    %v7054 = vpack.c.bf16 %v6078, %v6070
    %v7055 = vpack.c.bf16 %v6079, %v6071
    %v7056 = vpack.c.bf16 %v6080, %v6072
    %v7057 = vpack.c.bf16 %v6081, %v6073
    %v7058 = vpack.c.bf16 %v6082, %v6074
    %v7059 = vpack.c.bf16 %v6083, %v6075
    %v7060 = vpack.c.bf16 %v6092, %v6084
    %v7061 = vpack.c.bf16 %v6093, %v6085
    %v7062 = vpack.c.bf16 %v6094, %v6086
    %v7063 = vpack.c.bf16 %v6095, %v6087
    %v7064 = vpack.c.bf16 %v6096, %v6088
    %v7065 = vpack.c.bf16 %v6097, %v6089
    %v7066 = vpack.c.bf16 %v6098, %v6090
    %v7067 = vpack.c.bf16 %v6099, %v6091
    %v7068 = vpack.c.bf16 %v6108, %v6100
    %v7069 = vpack.c.bf16 %v6109, %v6101
    %v7070 = vpack.c.bf16 %v6110, %v6102
    %v7071 = vpack.c.bf16 %v6111, %v6103
    %v7072 = vpack.c.bf16 %v6112, %v6104
    %v7073 = vpack.c.bf16 %v6113, %v6105
    %v7074 = vpack.c.bf16 %v6114, %v6106
    %v7075 = vpack.c.bf16 %v6115, %v6107
    %v7076 = vpack.c.bf16 %v6124, %v6116
    %v7077 = vpack.c.bf16 %v6125, %v6117
    %v7078 = vpack.c.bf16 %v6126, %v6118
    %v7079 = vpack.c.bf16 %v6127, %v6119
    %v7080 = vpack.c.bf16 %v6128, %v6120
    %v7081 = vpack.c.bf16 %v6129, %v6121
    %v7082 = vpack.c.bf16 %v6130, %v6122
    %v7083 = vpack.c.bf16 %v6131, %v6123
    %v7084 = vpack.c.bf16 %v6140, %v6132
    %v7085 = vpack.c.bf16 %v6141, %v6133
    %v7086 = vpack.c.bf16 %v6142, %v6134
    %v7087 = vpack.c.bf16 %v6143, %v6135
    %v7088 = vpack.c.bf16 %v6144, %v6136
    %v7089 = vpack.c.bf16 %v6145, %v6137
    %v7090 = vpack.c.bf16 %v6146, %v6138
    %v7091 = vpack.c.bf16 %v6147, %v6139
    %v7092 = vpack.c.bf16 %v6156, %v6148
    %v7093 = vpack.c.bf16 %v6157, %v6149
    %v7094 = vpack.c.bf16 %v6158, %v6150
    %v7095 = vpack.c.bf16 %v6159, %v6151
    %v7096 = vpack.c.bf16 %v6160, %v6152
    %v7097 = vpack.c.bf16 %v6161, %v6153
    %v7098 = vpack.c.bf16 %v6162, %v6154
    %v7099 = vpack.c.bf16 %v6163, %v6155
    %v7100 = vpack.c.bf16 %v6172, %v6164
    %v7101 = vpack.c.bf16 %v6173, %v6165
    %v7102 = vpack.c.bf16 %v6174, %v6166
    %v7103 = vpack.c.bf16 %v6175, %v6167
    %v7104 = vpack.c.bf16 %v6176, %v6168
    %v7105 = vpack.c.bf16 %v6177, %v6169
    %v7106 = vpack.c.bf16 %v6178, %v6170
    %v7107 = vpack.c.bf16 %v6179, %v6171
    %v7108 = vpack.c.bf16 %v6188, %v6180
    %v7109 = vpack.c.bf16 %v6189, %v6181
    %v7110 = vpack.c.bf16 %v6190, %v6182
    %v7111 = vpack.c.bf16 %v6191, %v6183
    %v7112 = vpack.c.bf16 %v6192, %v6184
    %v7113 = vpack.c.bf16 %v6193, %v6185
    %v7114 = vpack.c.bf16 %v6194, %v6186
    %v7115 = vpack.c.bf16 %v6195, %v6187
    %v7116 = vpack.c.bf16 %v6204, %v6196
    %v7117 = vpack.c.bf16 %v6205, %v6197
    %v7118 = vpack.c.bf16 %v6206, %v6198
    %v7119 = vpack.c.bf16 %v6207, %v6199
    %v7120 = vpack.c.bf16 %v6208, %v6200
    %v7121 = vpack.c.bf16 %v6209, %v6201
    %v7122 = vpack.c.bf16 %v6210, %v6202
    %v7123 = vpack.c.bf16 %v6211, %v6203
    %v7124 = vpack.c.bf16 %v6220, %v6212
    %v7125 = vpack.c.bf16 %v6221, %v6213
    %v7126 = vpack.c.bf16 %v6222, %v6214
    %v7127 = vpack.c.bf16 %v6223, %v6215
    %v7128 = vpack.c.bf16 %v6224, %v6216
    %v7129 = vpack.c.bf16 %v6225, %v6217
    %v7130 = vpack.c.bf16 %v6226, %v6218
    %v7131 = vpack.c.bf16 %v6227, %v6219
    %v7132 = vpack.c.bf16 %v6236, %v6228
    %v7133 = vpack.c.bf16 %v6237, %v6229
    %v7134 = vpack.c.bf16 %v6238, %v6230
    %v7135 = vpack.c.bf16 %v6239, %v6231
    %v7136 = vpack.c.bf16 %v6240, %v6232
    %v7137 = vpack.c.bf16 %v6241, %v6233
    %v7138 = vpack.c.bf16 %v6242, %v6234
    %v7139 = vpack.c.bf16 %v6243, %v6235
    %v7140 = vpack.c.bf16 %v6252, %v6244
    %v7141 = vpack.c.bf16 %v6253, %v6245
    %v7142 = vpack.c.bf16 %v6254, %v6246
    %v7143 = vpack.c.bf16 %v6255, %v6247
    %v7144 = vpack.c.bf16 %v6256, %v6248
    %v7145 = vpack.c.bf16 %v6257, %v6249
    %v7146 = vpack.c.bf16 %v6258, %v6250
    %v7147 = vpack.c.bf16 %v6259, %v6251
    %v7148 = vpack.c.bf16 %v6268, %v6260
    %v7149 = vpack.c.bf16 %v6269, %v6261
    %v7150 = vpack.c.bf16 %v6270, %v6262
    %v7151 = vpack.c.bf16 %v6271, %v6263
    %v7152 = vpack.c.bf16 %v6272, %v6264
    %v7153 = vpack.c.bf16 %v6273, %v6265
    %v7154 = vpack.c.bf16 %v6274, %v6266
    %v7155 = vpack.c.bf16 %v6275, %v6267
    %v7156 = vpack.c.bf16 %v6284, %v6276
    %v7157 = vpack.c.bf16 %v6285, %v6277
    %v7158 = vpack.c.bf16 %v6286, %v6278
    %v7159 = vpack.c.bf16 %v6287, %v6279
    %v7160 = vpack.c.bf16 %v6288, %v6280
    %v7161 = vpack.c.bf16 %v6289, %v6281
    %v7162 = vpack.c.bf16 %v6290, %v6282
    %v7163 = vpack.c.bf16 %v6291, %v6283
    %v7164 = vpack.c.bf16 %v6300, %v6292
    %v7165 = vpack.c.bf16 %v6301, %v6293
    %v7166 = vpack.c.bf16 %v6302, %v6294
    %v7167 = vpack.c.bf16 %v6303, %v6295
    %v7168 = vpack.c.bf16 %v6304, %v6296
    %v7169 = vpack.c.bf16 %v6305, %v6297
    %v7170 = vpack.c.bf16 %v6306, %v6298
    %v7171 = vpack.c.bf16 %v6307, %v6299
    %v7172 = vpack.c.bf16 %v6316, %v6308
    %v7173 = vpack.c.bf16 %v6317, %v6309
    %v7174 = vpack.c.bf16 %v6318, %v6310
    %v7175 = vpack.c.bf16 %v6319, %v6311
    %v7176 = vpack.c.bf16 %v6320, %v6312
    %v7177 = vpack.c.bf16 %v6321, %v6313
    %v7178 = vpack.c.bf16 %v6322, %v6314
    %v7179 = vpack.c.bf16 %v6323, %v6315
    %v7180 = vpack.c.bf16 %v6332, %v6324
    %v7181 = vpack.c.bf16 %v6333, %v6325
    %v7182 = vpack.c.bf16 %v6334, %v6326
    %v7183 = vpack.c.bf16 %v6335, %v6327
    %v7184 = vpack.c.bf16 %v6336, %v6328
    %v7185 = vpack.c.bf16 %v6337, %v6329
    %v7186 = vpack.c.bf16 %v6338, %v6330
    %v7187 = vpack.c.bf16 %v6339, %v6331
    %v7188 = vpack.c.bf16 %v6348, %v6340
    %v7189 = vpack.c.bf16 %v6349, %v6341
    %v7190 = vpack.c.bf16 %v6350, %v6342
    %v7191 = vpack.c.bf16 %v6351, %v6343
    %v7192 = vpack.c.bf16 %v6352, %v6344
    %v7193 = vpack.c.bf16 %v6353, %v6345
    %v7194 = vpack.c.bf16 %v6354, %v6346
    %v7195 = vpack.c.bf16 %v6355, %v6347
    %v7196 = vpack.c.bf16 %v6364, %v6356
    %v7197 = vpack.c.bf16 %v6365, %v6357
    %v7198 = vpack.c.bf16 %v6366, %v6358
    %v7199 = vpack.c.bf16 %v6367, %v6359
    %v7200 = vpack.c.bf16 %v6368, %v6360
    %v7201 = vpack.c.bf16 %v6369, %v6361
    %v7202 = vpack.c.bf16 %v6370, %v6362
    %v7203 = vpack.c.bf16 %v6371, %v6363
    %v7204 = vpack.c.bf16 %v6380, %v6372
    %v7205 = vpack.c.bf16 %v6381, %v6373
    %v7206 = vpack.c.bf16 %v6382, %v6374
    %v7207 = vpack.c.bf16 %v6383, %v6375
    %v7208 = vpack.c.bf16 %v6384, %v6376
    %v7209 = vpack.c.bf16 %v6385, %v6377
    %v7210 = vpack.c.bf16 %v6386, %v6378
    %v7211 = vpack.c.bf16 %v6387, %v6379
    %v7212 = vpack.c.bf16 %v6396, %v6388
    %v7213 = vpack.c.bf16 %v6397, %v6389
    %v7214 = vpack.c.bf16 %v6398, %v6390
    %v7215 = vpack.c.bf16 %v6399, %v6391
    %v7216 = vpack.c.bf16 %v6400, %v6392
    %v7217 = vpack.c.bf16 %v6401, %v6393
    %v7218 = vpack.c.bf16 %v6402, %v6394
    %v7219 = vpack.c.bf16 %v6403, %v6395
    %v7220 = vpack.c.bf16 %v6412, %v6404
    %v7221 = vpack.c.bf16 %v6413, %v6405
    %v7222 = vpack.c.bf16 %v6414, %v6406
    %v7223 = vpack.c.bf16 %v6415, %v6407
    %v7224 = vpack.c.bf16 %v6416, %v6408
    %v7225 = vpack.c.bf16 %v6417, %v6409
    %v7226 = vpack.c.bf16 %v6418, %v6410
    %v7227 = vpack.c.bf16 %v6419, %v6411
    %v7228 = vpack.c.bf16 %v6428, %v6420
    %v7229 = vpack.c.bf16 %v6429, %v6421
    %v7230 = vpack.c.bf16 %v6430, %v6422
    %v7231 = vpack.c.bf16 %v6431, %v6423
    %v7232 = vpack.c.bf16 %v6432, %v6424
    %v7233 = vpack.c.bf16 %v6433, %v6425
    %v7234 = vpack.c.bf16 %v6434, %v6426
    %v7235 = vpack.c.bf16 %v6435, %v6427
    %v7236 = vpack.c.bf16 %v6444, %v6436
    %v7237 = vpack.c.bf16 %v6445, %v6437
    %v7238 = vpack.c.bf16 %v6446, %v6438
    %v7239 = vpack.c.bf16 %v6447, %v6439
    %v7240 = vpack.c.bf16 %v6448, %v6440
    %v7241 = vpack.c.bf16 %v6449, %v6441
    %v7242 = vpack.c.bf16 %v6450, %v6442
    %v7243 = vpack.c.bf16 %v6451, %v6443
    %v7244 = vpack.c.bf16 %v6460, %v6452
    %v7245 = vpack.c.bf16 %v6461, %v6453
    %v7246 = vpack.c.bf16 %v6462, %v6454
    %v7247 = vpack.c.bf16 %v6463, %v6455
    %v7248 = vpack.c.bf16 %v6464, %v6456
    %v7249 = vpack.c.bf16 %v6465, %v6457
    %v7250 = vpack.c.bf16 %v6466, %v6458
    %v7251 = vpack.c.bf16 %v6467, %v6459
    %v7252 = vpack.c.bf16 %v6476, %v6468
    %v7253 = vpack.c.bf16 %v6477, %v6469
    %v7254 = vpack.c.bf16 %v6478, %v6470
    %v7255 = vpack.c.bf16 %v6479, %v6471
    %v7256 = vpack.c.bf16 %v6480, %v6472
    %v7257 = vpack.c.bf16 %v6481, %v6473
    %v7258 = vpack.c.bf16 %v6482, %v6474
    %v7259 = vpack.c.bf16 %v6483, %v6475
    %v7260 = vpack.c.bf16 %v6492, %v6484
    %v7261 = vpack.c.bf16 %v6493, %v6485
    %v7262 = vpack.c.bf16 %v6494, %v6486
    %v7263 = vpack.c.bf16 %v6495, %v6487
    %v7264 = vpack.c.bf16 %v6496, %v6488
    %v7265 = vpack.c.bf16 %v6497, %v6489
    %v7266 = vpack.c.bf16 %v6498, %v6490
    %v7267 = vpack.c.bf16 %v6499, %v6491
    %v7268 = vpack.c.bf16 %v6508, %v6500
    %v7269 = vpack.c.bf16 %v6509, %v6501
    %v7270 = vpack.c.bf16 %v6510, %v6502
    %v7271 = vpack.c.bf16 %v6511, %v6503
    %v7272 = vpack.c.bf16 %v6512, %v6504
    %v7273 = vpack.c.bf16 %v6513, %v6505
    %v7274 = vpack.c.bf16 %v6514, %v6506
    %v7275 = vpack.c.bf16 %v6515, %v6507
    %v7276 = vpack.c.bf16 %v6524, %v6516
    %v7277 = vpack.c.bf16 %v6525, %v6517
    %v7278 = vpack.c.bf16 %v6526, %v6518
    %v7279 = vpack.c.bf16 %v6527, %v6519
    %v7280 = vpack.c.bf16 %v6528, %v6520
    %v7281 = vpack.c.bf16 %v6529, %v6521
    %v7282 = vpack.c.bf16 %v6530, %v6522
    %v7283 = vpack.c.bf16 %v6531, %v6523
    %v7284 = vpack.c.bf16 %v6540, %v6532
    %v7285 = vpack.c.bf16 %v6541, %v6533
    %v7286 = vpack.c.bf16 %v6542, %v6534
    %v7287 = vpack.c.bf16 %v6543, %v6535
    %v7288 = vpack.c.bf16 %v6544, %v6536
    %v7289 = vpack.c.bf16 %v6545, %v6537
    %v7290 = vpack.c.bf16 %v6546, %v6538
    %v7291 = vpack.c.bf16 %v6547, %v6539
    %v7292 = vpack.c.bf16 %v6556, %v6548
    %v7293 = vpack.c.bf16 %v6557, %v6549
    %v7294 = vpack.c.bf16 %v6558, %v6550
    %v7295 = vpack.c.bf16 %v6559, %v6551
    %v7296 = vpack.c.bf16 %v6560, %v6552
    %v7297 = vpack.c.bf16 %v6561, %v6553
    %v7298 = vpack.c.bf16 %v6562, %v6554
    %v7299 = vpack.c.bf16 %v6563, %v6555
    %v7300 = vpack.c.bf16 %v6572, %v6564
    %v7301 = vpack.c.bf16 %v6573, %v6565
    %v7302 = vpack.c.bf16 %v6574, %v6566
    %v7303 = vpack.c.bf16 %v6575, %v6567
    %v7304 = vpack.c.bf16 %v6576, %v6568
    %v7305 = vpack.c.bf16 %v6577, %v6569
    %v7306 = vpack.c.bf16 %v6578, %v6570
    %v7307 = vpack.c.bf16 %v6579, %v6571
    %v7308 = vpack.c.bf16 %v6588, %v6580
    %v7309 = vpack.c.bf16 %v6589, %v6581
    %v7310 = vpack.c.bf16 %v6590, %v6582
    %v7311 = vpack.c.bf16 %v6591, %v6583
    %v7312 = vpack.c.bf16 %v6592, %v6584
    %v7313 = vpack.c.bf16 %v6593, %v6585
    %v7314 = vpack.c.bf16 %v6594, %v6586
    %v7315 = vpack.c.bf16 %v6595, %v6587
    %v7316 = vpack.c.bf16 %v6604, %v6596
    %v7317 = vpack.c.bf16 %v6605, %v6597
    %v7318 = vpack.c.bf16 %v6606, %v6598
    %v7319 = vpack.c.bf16 %v6607, %v6599
    %v7320 = vpack.c.bf16 %v6608, %v6600
    %v7321 = vpack.c.bf16 %v6609, %v6601
    %v7322 = vpack.c.bf16 %v6610, %v6602
    %v7323 = vpack.c.bf16 %v6611, %v6603
    %v7324 = vpack.c.bf16 %v6620, %v6612
    %v7325 = vpack.c.bf16 %v6621, %v6613
    %v7326 = vpack.c.bf16 %v6622, %v6614
    %v7327 = vpack.c.bf16 %v6623, %v6615
    %v7328 = vpack.c.bf16 %v6624, %v6616
    %v7329 = vpack.c.bf16 %v6625, %v6617
    %v7330 = vpack.c.bf16 %v6626, %v6618
    %v7331 = vpack.c.bf16 %v6627, %v6619
    %v7332 = vpack.c.bf16 %v6636, %v6628
    %v7333 = vpack.c.bf16 %v6637, %v6629
    %v7334 = vpack.c.bf16 %v6638, %v6630
    %v7335 = vpack.c.bf16 %v6639, %v6631
    %v7336 = vpack.c.bf16 %v6640, %v6632
    %v7337 = vpack.c.bf16 %v6641, %v6633
    %v7338 = vpack.c.bf16 %v6642, %v6634
    %v7339 = vpack.c.bf16 %v6643, %v6635
    %v7340 = vpack.c.bf16 %v6652, %v6644
    %v7341 = vpack.c.bf16 %v6653, %v6645
    %v7342 = vpack.c.bf16 %v6654, %v6646
    %v7343 = vpack.c.bf16 %v6655, %v6647
    %v7344 = vpack.c.bf16 %v6656, %v6648
    %v7345 = vpack.c.bf16 %v6657, %v6649
    %v7346 = vpack.c.bf16 %v6658, %v6650
    %v7347 = vpack.c.bf16 %v6659, %v6651
    %v7348 = vpack.c.bf16 %v6668, %v6660
    %v7349 = vpack.c.bf16 %v6669, %v6661
    %v7350 = vpack.c.bf16 %v6670, %v6662
    %v7351 = vpack.c.bf16 %v6671, %v6663
    %v7352 = vpack.c.bf16 %v6672, %v6664
    %v7353 = vpack.c.bf16 %v6673, %v6665
    %v7354 = vpack.c.bf16 %v6674, %v6666
    %v7355 = vpack.c.bf16 %v6675, %v6667
    %v7356 = vpack.c.bf16 %v6684, %v6676
    %v7357 = vpack.c.bf16 %v6685, %v6677
    %v7358 = vpack.c.bf16 %v6686, %v6678
    %v7359 = vpack.c.bf16 %v6687, %v6679
    %v7360 = vpack.c.bf16 %v6688, %v6680
    %v7361 = vpack.c.bf16 %v6689, %v6681
    %v7362 = vpack.c.bf16 %v6690, %v6682
    %v7363 = vpack.c.bf16 %v6691, %v6683
    %v7364 = vpack.c.bf16 %v6700, %v6692
    %v7365 = vpack.c.bf16 %v6701, %v6693
    %v7366 = vpack.c.bf16 %v6702, %v6694
    %v7367 = vpack.c.bf16 %v6703, %v6695
    %v7368 = vpack.c.bf16 %v6704, %v6696
    %v7369 = vpack.c.bf16 %v6705, %v6697
    %v7370 = vpack.c.bf16 %v6706, %v6698
    %v7371 = vpack.c.bf16 %v6707, %v6699
    %v7372 = vpack.c.bf16 %v6716, %v6708
    %v7373 = vpack.c.bf16 %v6717, %v6709
    %v7374 = vpack.c.bf16 %v6718, %v6710
    %v7375 = vpack.c.bf16 %v6719, %v6711
    %v7376 = vpack.c.bf16 %v6720, %v6712
    %v7377 = vpack.c.bf16 %v6721, %v6713
    %v7378 = vpack.c.bf16 %v6722, %v6714
    %v7379 = vpack.c.bf16 %v6723, %v6715
    %v7380 = vpack.c.bf16 %v6732, %v6724
    %v7381 = vpack.c.bf16 %v6733, %v6725
    %v7382 = vpack.c.bf16 %v6734, %v6726
    %v7383 = vpack.c.bf16 %v6735, %v6727
    %v7384 = vpack.c.bf16 %v6736, %v6728
    %v7385 = vpack.c.bf16 %v6737, %v6729
    %v7386 = vpack.c.bf16 %v6738, %v6730
    %v7387 = vpack.c.bf16 %v6739, %v6731
    %v7388 = vpack.c.bf16 %v6748, %v6740
    %v7389 = vpack.c.bf16 %v6749, %v6741
    %v7390 = vpack.c.bf16 %v6750, %v6742
    %v7391 = vpack.c.bf16 %v6751, %v6743
    %v7392 = vpack.c.bf16 %v6752, %v6744
    %v7393 = vpack.c.bf16 %v6753, %v6745
    %v7394 = vpack.c.bf16 %v6754, %v6746
    %v7395 = vpack.c.bf16 %v6755, %v6747
    %v7396 = vpack.c.bf16 %v6764, %v6756
    %v7397 = vpack.c.bf16 %v6765, %v6757
    %v7398 = vpack.c.bf16 %v6766, %v6758
    %v7399 = vpack.c.bf16 %v6767, %v6759
    %v7400 = vpack.c.bf16 %v6768, %v6760
    %v7401 = vpack.c.bf16 %v6769, %v6761
    %v7402 = vpack.c.bf16 %v6770, %v6762
    %v7403 = vpack.c.bf16 %v6771, %v6763
    %v7404 = vpack.c.bf16 %v6780, %v6772
    %v7405 = vpack.c.bf16 %v6781, %v6773
    %v7406 = vpack.c.bf16 %v6782, %v6774
    %v7407 = vpack.c.bf16 %v6783, %v6775
    %v7408 = vpack.c.bf16 %v6784, %v6776
    %v7409 = vpack.c.bf16 %v6785, %v6777
    %v7410 = vpack.c.bf16 %v6786, %v6778
    %v7411 = vpack.c.bf16 %v6787, %v6779
    %v7412 = vpack.c.bf16 %v6796, %v6788
    %v7413 = vpack.c.bf16 %v6797, %v6789
    %v7414 = vpack.c.bf16 %v6798, %v6790
    %v7415 = vpack.c.bf16 %v6799, %v6791
    %v7416 = vpack.c.bf16 %v6800, %v6792
    %v7417 = vpack.c.bf16 %v6801, %v6793
    %v7418 = vpack.c.bf16 %v6802, %v6794
    %v7419 = vpack.c.bf16 %v6803, %v6795
    %v7420 = vpack.c.bf16 %v6812, %v6804
    %v7421 = vpack.c.bf16 %v6813, %v6805
    %v7422 = vpack.c.bf16 %v6814, %v6806
    %v7423 = vpack.c.bf16 %v6815, %v6807
    %v7424 = vpack.c.bf16 %v6816, %v6808
    %v7425 = vpack.c.bf16 %v6817, %v6809
    %v7426 = vpack.c.bf16 %v6818, %v6810
    %v7427 = vpack.c.bf16 %v6819, %v6811
    %v7428 = vpack.c.bf16 %v6828, %v6820
    %v7429 = vpack.c.bf16 %v6829, %v6821
    %v7430 = vpack.c.bf16 %v6830, %v6822
    %v7431 = vpack.c.bf16 %v6831, %v6823
    %v7432 = vpack.c.bf16 %v6832, %v6824
    %v7433 = vpack.c.bf16 %v6833, %v6825
    %v7434 = vpack.c.bf16 %v6834, %v6826
    %v7435 = vpack.c.bf16 %v6835, %v6827
    %v7436 = vpack.c.bf16 %v6844, %v6836
    %v7437 = vpack.c.bf16 %v6845, %v6837
    %v7438 = vpack.c.bf16 %v6846, %v6838
    %v7439 = vpack.c.bf16 %v6847, %v6839
    %v7440 = vpack.c.bf16 %v6848, %v6840
    %v7441 = vpack.c.bf16 %v6849, %v6841
    %v7442 = vpack.c.bf16 %v6850, %v6842
    %v7443 = vpack.c.bf16 %v6851, %v6843
    %v7444 = vpack.c.bf16 %v6860, %v6852
    %v7445 = vpack.c.bf16 %v6861, %v6853
    %v7446 = vpack.c.bf16 %v6862, %v6854
    %v7447 = vpack.c.bf16 %v6863, %v6855
    %v7448 = vpack.c.bf16 %v6864, %v6856
    %v7449 = vpack.c.bf16 %v6865, %v6857
    %v7450 = vpack.c.bf16 %v6866, %v6858
    %v7451 = vpack.c.bf16 %v6867, %v6859
    %v7452 = vpack.c.bf16 %v6876, %v6868
    %v7453 = vpack.c.bf16 %v6877, %v6869
    %v7454 = vpack.c.bf16 %v6878, %v6870
    %v7455 = vpack.c.bf16 %v6879, %v6871
    %v7456 = vpack.c.bf16 %v6880, %v6872
    %v7457 = vpack.c.bf16 %v6881, %v6873
    %v7458 = vpack.c.bf16 %v6882, %v6874
    %v7459 = vpack.c.bf16 %v6883, %v6875
    %v7460 = vpack.c.bf16 %v6892, %v6884
    %v7461 = vpack.c.bf16 %v6893, %v6885
    %v7462 = vpack.c.bf16 %v6894, %v6886
    %v7463 = vpack.c.bf16 %v6895, %v6887
    %v7464 = vpack.c.bf16 %v6896, %v6888
    %v7465 = vpack.c.bf16 %v6897, %v6889
    %v7466 = vpack.c.bf16 %v6898, %v6890
    %v7467 = vpack.c.bf16 %v6899, %v6891
    %v7468 = vpack.c.bf16 %v6908, %v6900
    %v7469 = vpack.c.bf16 %v6909, %v6901
    %v7470 = vpack.c.bf16 %v6910, %v6902
    %v7471 = vpack.c.bf16 %v6911, %v6903
    %v7472 = vpack.c.bf16 %v6912, %v6904
    %v7473 = vpack.c.bf16 %v6913, %v6905
    %v7474 = vpack.c.bf16 %v6914, %v6906
    %v7475 = vpack.c.bf16 %v6915, %v6907
    %v7476 = vpack.c.bf16 %v6924, %v6916
    %v7477 = vpack.c.bf16 %v6925, %v6917
    %v7478 = vpack.c.bf16 %v6926, %v6918
    %v7479 = vpack.c.bf16 %v6927, %v6919
    %v7480 = vpack.c.bf16 %v6928, %v6920
    %v7481 = vpack.c.bf16 %v6929, %v6921
    %v7482 = vpack.c.bf16 %v6930, %v6922
    %v7483 = vpack.c.bf16 %v6931, %v6923
    %v7484 = vpack.c.bf16 %v6940, %v6932
    %v7485 = vpack.c.bf16 %v6941, %v6933
    %v7486 = vpack.c.bf16 %v6942, %v6934
    %v7487 = vpack.c.bf16 %v6943, %v6935
    %v7488 = vpack.c.bf16 %v6944, %v6936
    %v7489 = vpack.c.bf16 %v6945, %v6937
    %v7490 = vpack.c.bf16 %v6946, %v6938
    %v7491 = vpack.c.bf16 %v6947, %v6939
    %v7492 = vpack.c.bf16 %v6956, %v6948
    %v7493 = vpack.c.bf16 %v6957, %v6949
    %v7494 = vpack.c.bf16 %v6958, %v6950
    %v7495 = vpack.c.bf16 %v6959, %v6951
    %v7496 = vpack.c.bf16 %v6960, %v6952
    %v7497 = vpack.c.bf16 %v6961, %v6953
    %v7498 = vpack.c.bf16 %v6962, %v6954
    %v7499 = vpack.c.bf16 %v6963, %v6955
    %v7500 = vpack.c.bf16 %v6972, %v6964
    %v7501 = vpack.c.bf16 %v6973, %v6965
    %v7502 = vpack.c.bf16 %v6974, %v6966
    %v7503 = vpack.c.bf16 %v6975, %v6967
    %v7504 = vpack.c.bf16 %v6976, %v6968
    %v7505 = vpack.c.bf16 %v6977, %v6969
    %v7506 = vpack.c.bf16 %v6978, %v6970
    %v7507 = vpack.c.bf16 %v6979, %v6971
    %v7508 = vpack.c.bf16 %v6988, %v6980
    %v7509 = vpack.c.bf16 %v6989, %v6981
    %v7510 = vpack.c.bf16 %v6990, %v6982
    %v7511 = vpack.c.bf16 %v6991, %v6983
    %v7512 = vpack.c.bf16 %v6992, %v6984
    %v7513 = vpack.c.bf16 %v6993, %v6985
    %v7514 = vpack.c.bf16 %v6994, %v6986
    %v7515 = vpack.c.bf16 %v6995, %v6987
    %v7516 = vpack.c.bf16 %v7004, %v6996
    %v7517 = vpack.c.bf16 %v7005, %v6997
    %v7518 = vpack.c.bf16 %v7006, %v6998
    %v7519 = vpack.c.bf16 %v7007, %v6999
    %v7520 = vpack.c.bf16 %v7008, %v7000
    %v7521 = vpack.c.bf16 %v7009, %v7001
    %v7522 = vpack.c.bf16 %v7010, %v7002
    %v7523 = vpack.c.bf16 %v7011, %v7003
    %v7524 = vpack.c.bf16 %v4698, %v4690
    %v7525 = vpack.c.bf16 %v4699, %v4691
    %v7526 = vpack.c.bf16 %v4700, %v4692
    %v7527 = vpack.c.bf16 %v4701, %v4693
    %v7528 = vpack.c.bf16 %v4702, %v4694
    %v7529 = vpack.c.bf16 %v4703, %v4695
    %v7530 = vpack.c.bf16 %v4704, %v4696
    %v7531 = vpack.c.bf16 %v4705, %v4697
    %7532 = vmatpush.bf16.msra.mxu0 %v7068
    %7533 = vmatpush.bf16.msra.mxu0 %v7060
    %7534 = vmatpush.bf16.msra.mxu0 %v7052
    %7535 = vmatpush.bf16.msra.mxu0 %v7044
    %7536 = vmatpush.bf16.msra.mxu0 %v7036
    %7537 = vmatpush.bf16.msra.mxu0 %v7028
    %7538 = vmatpush.bf16.msra.mxu0 %v7020
    %7539 = vmatpush.bf16.msra.mxu0 %v7012
    %7540 = vmatmul.bf16.gmra.mxu0 %v7524
    %v7541 = vpop.f32.mrf.mxu0
    %v7542 = vadd.f32 0.0, %v7541
    %v7543 = vpop.f32.mrf.mxu0
    %v7544 = vadd.f32 0.0, %v7543
    %7545 = vdwg.mxu0
    %7546 = vmatpush.bf16.msra.mxu0 %v7132
    %7547 = vmatpush.bf16.msra.mxu0 %v7124
    %7548 = vmatpush.bf16.msra.mxu0 %v7116
    %7549 = vmatpush.bf16.msra.mxu0 %v7108
    %7550 = vmatpush.bf16.msra.mxu0 %v7100
    %7551 = vmatpush.bf16.msra.mxu0 %v7092
    %7552 = vmatpush.bf16.msra.mxu0 %v7084
    %7553 = vmatpush.bf16.msra.mxu0 %v7076
    %7554 = vmatmul.bf16.gmra.mxu0 %v7525
    %v7555 = vpop.f32.mrf.mxu0
    %v7556 = vadd.f32 %v7542, %v7555
    %v7557 = vpop.f32.mrf.mxu0
    %v7558 = vadd.f32 %v7544, %v7557
    %7559 = vdwg.mxu0
    %7560 = vmatpush.bf16.msra.mxu0 %v7196
    %7561 = vmatpush.bf16.msra.mxu0 %v7188
    %7562 = vmatpush.bf16.msra.mxu0 %v7180
    %7563 = vmatpush.bf16.msra.mxu0 %v7172
    %7564 = vmatpush.bf16.msra.mxu0 %v7164
    %7565 = vmatpush.bf16.msra.mxu0 %v7156
    %7566 = vmatpush.bf16.msra.mxu0 %v7148
    %7567 = vmatpush.bf16.msra.mxu0 %v7140
    %7568 = vmatmul.bf16.gmra.mxu0 %v7526
    %v7569 = vpop.f32.mrf.mxu0
    %v7570 = vadd.f32 %v7556, %v7569
    %v7571 = vpop.f32.mrf.mxu0
    %v7572 = vadd.f32 %v7558, %v7571
    %7573 = vdwg.mxu0
    %7574 = vmatpush.bf16.msra.mxu0 %v7260
    %7575 = vmatpush.bf16.msra.mxu0 %v7252
    %7576 = vmatpush.bf16.msra.mxu0 %v7244
    %7577 = vmatpush.bf16.msra.mxu0 %v7236
    %7578 = vmatpush.bf16.msra.mxu0 %v7228
    %7579 = vmatpush.bf16.msra.mxu0 %v7220
    %7580 = vmatpush.bf16.msra.mxu0 %v7212
    %7581 = vmatpush.bf16.msra.mxu0 %v7204
    %7582 = vmatmul.bf16.gmra.mxu0 %v7527
    %v7583 = vpop.f32.mrf.mxu0
    %v7584 = vadd.f32 %v7570, %v7583
    %v7585 = vpop.f32.mrf.mxu0
    %v7586 = vadd.f32 %v7572, %v7585
    %7587 = vdwg.mxu0
    %7588 = vmatpush.bf16.msra.mxu0 %v7324
    %7589 = vmatpush.bf16.msra.mxu0 %v7316
    %7590 = vmatpush.bf16.msra.mxu0 %v7308
    %7591 = vmatpush.bf16.msra.mxu0 %v7300
    %7592 = vmatpush.bf16.msra.mxu0 %v7292
    %7593 = vmatpush.bf16.msra.mxu0 %v7284
    %7594 = vmatpush.bf16.msra.mxu0 %v7276
    %7595 = vmatpush.bf16.msra.mxu0 %v7268
    %7596 = vmatmul.bf16.gmra.mxu0 %v7528
    %v7597 = vpop.f32.mrf.mxu0
    %v7598 = vadd.f32 %v7584, %v7597
    %v7599 = vpop.f32.mrf.mxu0
    %v7600 = vadd.f32 %v7586, %v7599
    %7601 = vdwg.mxu0
    %7602 = vmatpush.bf16.msra.mxu0 %v7388
    %7603 = vmatpush.bf16.msra.mxu0 %v7380
    %7604 = vmatpush.bf16.msra.mxu0 %v7372
    %7605 = vmatpush.bf16.msra.mxu0 %v7364
    %7606 = vmatpush.bf16.msra.mxu0 %v7356
    %7607 = vmatpush.bf16.msra.mxu0 %v7348
    %7608 = vmatpush.bf16.msra.mxu0 %v7340
    %7609 = vmatpush.bf16.msra.mxu0 %v7332
    %7610 = vmatmul.bf16.gmra.mxu0 %v7529
    %v7611 = vpop.f32.mrf.mxu0
    %v7612 = vadd.f32 %v7598, %v7611
    %v7613 = vpop.f32.mrf.mxu0
    %v7614 = vadd.f32 %v7600, %v7613
    %7615 = vdwg.mxu0
    %7616 = vmatpush.bf16.msra.mxu0 %v7452
    %7617 = vmatpush.bf16.msra.mxu0 %v7444
    %7618 = vmatpush.bf16.msra.mxu0 %v7436
    %7619 = vmatpush.bf16.msra.mxu0 %v7428
    %7620 = vmatpush.bf16.msra.mxu0 %v7420
    %7621 = vmatpush.bf16.msra.mxu0 %v7412
    %7622 = vmatpush.bf16.msra.mxu0 %v7404
    %7623 = vmatpush.bf16.msra.mxu0 %v7396
    %7624 = vmatmul.bf16.gmra.mxu0 %v7530
    %v7625 = vpop.f32.mrf.mxu0
    %v7626 = vadd.f32 %v7612, %v7625
    %v7627 = vpop.f32.mrf.mxu0
    %v7628 = vadd.f32 %v7614, %v7627
    %7629 = vdwg.mxu0
    %7630 = vmatpush.bf16.msra.mxu0 %v7516
    %7631 = vmatpush.bf16.msra.mxu0 %v7508
    %7632 = vmatpush.bf16.msra.mxu0 %v7500
    %7633 = vmatpush.bf16.msra.mxu0 %v7492
    %7634 = vmatpush.bf16.msra.mxu0 %v7484
    %7635 = vmatpush.bf16.msra.mxu0 %v7476
    %7636 = vmatpush.bf16.msra.mxu0 %v7468
    %7637 = vmatpush.bf16.msra.mxu0 %v7460
    %7638 = vmatmul.bf16.gmra.mxu0 %v7531
    %v7639 = vpop.f32.mrf.mxu0
    %v7640 = vadd.f32 %v7626, %v7639
    %v7641 = vpop.f32.mrf.mxu0
    %v7642 = vadd.f32 %v7628, %v7641
    %7643 = vdwg.mxu0
    %7644 = vmatpush.bf16.msra.mxu0 %v7069
    %7645 = vmatpush.bf16.msra.mxu0 %v7061
    %7646 = vmatpush.bf16.msra.mxu0 %v7053
    %7647 = vmatpush.bf16.msra.mxu0 %v7045
    %7648 = vmatpush.bf16.msra.mxu0 %v7037
    %7649 = vmatpush.bf16.msra.mxu0 %v7029
    %7650 = vmatpush.bf16.msra.mxu0 %v7021
    %7651 = vmatpush.bf16.msra.mxu0 %v7013
    %7652 = vmatmul.bf16.gmra.mxu0 %v7524
    %v7653 = vpop.f32.mrf.mxu0
    %v7654 = vadd.f32 0.0, %v7653
    %v7655 = vpop.f32.mrf.mxu0
    %v7656 = vadd.f32 0.0, %v7655
    %7657 = vdwg.mxu0
    %7658 = vmatpush.bf16.msra.mxu0 %v7133
    %7659 = vmatpush.bf16.msra.mxu0 %v7125
    %7660 = vmatpush.bf16.msra.mxu0 %v7117
    %7661 = vmatpush.bf16.msra.mxu0 %v7109
    %7662 = vmatpush.bf16.msra.mxu0 %v7101
    %7663 = vmatpush.bf16.msra.mxu0 %v7093
    %7664 = vmatpush.bf16.msra.mxu0 %v7085
    %7665 = vmatpush.bf16.msra.mxu0 %v7077
    %7666 = vmatmul.bf16.gmra.mxu0 %v7525
    %v7667 = vpop.f32.mrf.mxu0
    %v7668 = vadd.f32 %v7654, %v7667
    %v7669 = vpop.f32.mrf.mxu0
    %v7670 = vadd.f32 %v7656, %v7669
    %7671 = vdwg.mxu0
    %7672 = vmatpush.bf16.msra.mxu0 %v7197
    %7673 = vmatpush.bf16.msra.mxu0 %v7189
    %7674 = vmatpush.bf16.msra.mxu0 %v7181
    %7675 = vmatpush.bf16.msra.mxu0 %v7173
    %7676 = vmatpush.bf16.msra.mxu0 %v7165
    %7677 = vmatpush.bf16.msra.mxu0 %v7157
    %7678 = vmatpush.bf16.msra.mxu0 %v7149
    %7679 = vmatpush.bf16.msra.mxu0 %v7141
    %7680 = vmatmul.bf16.gmra.mxu0 %v7526
    %v7681 = vpop.f32.mrf.mxu0
    %v7682 = vadd.f32 %v7668, %v7681
    %v7683 = vpop.f32.mrf.mxu0
    %v7684 = vadd.f32 %v7670, %v7683
    %7685 = vdwg.mxu0
    %7686 = vmatpush.bf16.msra.mxu0 %v7261
    %7687 = vmatpush.bf16.msra.mxu0 %v7253
    %7688 = vmatpush.bf16.msra.mxu0 %v7245
    %7689 = vmatpush.bf16.msra.mxu0 %v7237
    %7690 = vmatpush.bf16.msra.mxu0 %v7229
    %7691 = vmatpush.bf16.msra.mxu0 %v7221
    %7692 = vmatpush.bf16.msra.mxu0 %v7213
    %7693 = vmatpush.bf16.msra.mxu0 %v7205
    %7694 = vmatmul.bf16.gmra.mxu0 %v7527
    %v7695 = vpop.f32.mrf.mxu0
    %v7696 = vadd.f32 %v7682, %v7695
    %v7697 = vpop.f32.mrf.mxu0
    %v7698 = vadd.f32 %v7684, %v7697
    %7699 = vdwg.mxu0
    %7700 = vmatpush.bf16.msra.mxu0 %v7325
    %7701 = vmatpush.bf16.msra.mxu0 %v7317
    %7702 = vmatpush.bf16.msra.mxu0 %v7309
    %7703 = vmatpush.bf16.msra.mxu0 %v7301
    %7704 = vmatpush.bf16.msra.mxu0 %v7293
    %7705 = vmatpush.bf16.msra.mxu0 %v7285
    %7706 = vmatpush.bf16.msra.mxu0 %v7277
    %7707 = vmatpush.bf16.msra.mxu0 %v7269
    %7708 = vmatmul.bf16.gmra.mxu0 %v7528
    %v7709 = vpop.f32.mrf.mxu0
    %v7710 = vadd.f32 %v7696, %v7709
    %v7711 = vpop.f32.mrf.mxu0
    %v7712 = vadd.f32 %v7698, %v7711
    %7713 = vdwg.mxu0
    %7714 = vmatpush.bf16.msra.mxu0 %v7389
    %7715 = vmatpush.bf16.msra.mxu0 %v7381
    %7716 = vmatpush.bf16.msra.mxu0 %v7373
    %7717 = vmatpush.bf16.msra.mxu0 %v7365
    %7718 = vmatpush.bf16.msra.mxu0 %v7357
    %7719 = vmatpush.bf16.msra.mxu0 %v7349
    %7720 = vmatpush.bf16.msra.mxu0 %v7341
    %7721 = vmatpush.bf16.msra.mxu0 %v7333
    %7722 = vmatmul.bf16.gmra.mxu0 %v7529
    %v7723 = vpop.f32.mrf.mxu0
    %v7724 = vadd.f32 %v7710, %v7723
    %v7725 = vpop.f32.mrf.mxu0
    %v7726 = vadd.f32 %v7712, %v7725
    %7727 = vdwg.mxu0
    %7728 = vmatpush.bf16.msra.mxu0 %v7453
    %7729 = vmatpush.bf16.msra.mxu0 %v7445
    %7730 = vmatpush.bf16.msra.mxu0 %v7437
    %7731 = vmatpush.bf16.msra.mxu0 %v7429
    %7732 = vmatpush.bf16.msra.mxu0 %v7421
    %7733 = vmatpush.bf16.msra.mxu0 %v7413
    %7734 = vmatpush.bf16.msra.mxu0 %v7405
    %7735 = vmatpush.bf16.msra.mxu0 %v7397
    %7736 = vmatmul.bf16.gmra.mxu0 %v7530
    %v7737 = vpop.f32.mrf.mxu0
    %v7738 = vadd.f32 %v7724, %v7737
    %v7739 = vpop.f32.mrf.mxu0
    %v7740 = vadd.f32 %v7726, %v7739
    %7741 = vdwg.mxu0
    %7742 = vmatpush.bf16.msra.mxu0 %v7517
    %7743 = vmatpush.bf16.msra.mxu0 %v7509
    %7744 = vmatpush.bf16.msra.mxu0 %v7501
    %7745 = vmatpush.bf16.msra.mxu0 %v7493
    %7746 = vmatpush.bf16.msra.mxu0 %v7485
    %7747 = vmatpush.bf16.msra.mxu0 %v7477
    %7748 = vmatpush.bf16.msra.mxu0 %v7469
    %7749 = vmatpush.bf16.msra.mxu0 %v7461
    %7750 = vmatmul.bf16.gmra.mxu0 %v7531
    %v7751 = vpop.f32.mrf.mxu0
    %v7752 = vadd.f32 %v7738, %v7751
    %v7753 = vpop.f32.mrf.mxu0
    %v7754 = vadd.f32 %v7740, %v7753
    %7755 = vdwg.mxu0
    %7756 = vmatpush.bf16.msra.mxu0 %v7070
    %7757 = vmatpush.bf16.msra.mxu0 %v7062
    %7758 = vmatpush.bf16.msra.mxu0 %v7054
    %7759 = vmatpush.bf16.msra.mxu0 %v7046
    %7760 = vmatpush.bf16.msra.mxu0 %v7038
    %7761 = vmatpush.bf16.msra.mxu0 %v7030
    %7762 = vmatpush.bf16.msra.mxu0 %v7022
    %7763 = vmatpush.bf16.msra.mxu0 %v7014
    %7764 = vmatmul.bf16.gmra.mxu0 %v7524
    %v7765 = vpop.f32.mrf.mxu0
    %v7766 = vadd.f32 0.0, %v7765
    %v7767 = vpop.f32.mrf.mxu0
    %v7768 = vadd.f32 0.0, %v7767
    %7769 = vdwg.mxu0
    %7770 = vmatpush.bf16.msra.mxu0 %v7134
    %7771 = vmatpush.bf16.msra.mxu0 %v7126
    %7772 = vmatpush.bf16.msra.mxu0 %v7118
    %7773 = vmatpush.bf16.msra.mxu0 %v7110
    %7774 = vmatpush.bf16.msra.mxu0 %v7102
    %7775 = vmatpush.bf16.msra.mxu0 %v7094
    %7776 = vmatpush.bf16.msra.mxu0 %v7086
    %7777 = vmatpush.bf16.msra.mxu0 %v7078
    %7778 = vmatmul.bf16.gmra.mxu0 %v7525
    %v7779 = vpop.f32.mrf.mxu0
    %v7780 = vadd.f32 %v7766, %v7779
    %v7781 = vpop.f32.mrf.mxu0
    %v7782 = vadd.f32 %v7768, %v7781
    %7783 = vdwg.mxu0
    %7784 = vmatpush.bf16.msra.mxu0 %v7198
    %7785 = vmatpush.bf16.msra.mxu0 %v7190
    %7786 = vmatpush.bf16.msra.mxu0 %v7182
    %7787 = vmatpush.bf16.msra.mxu0 %v7174
    %7788 = vmatpush.bf16.msra.mxu0 %v7166
    %7789 = vmatpush.bf16.msra.mxu0 %v7158
    %7790 = vmatpush.bf16.msra.mxu0 %v7150
    %7791 = vmatpush.bf16.msra.mxu0 %v7142
    %7792 = vmatmul.bf16.gmra.mxu0 %v7526
    %v7793 = vpop.f32.mrf.mxu0
    %v7794 = vadd.f32 %v7780, %v7793
    %v7795 = vpop.f32.mrf.mxu0
    %v7796 = vadd.f32 %v7782, %v7795
    %7797 = vdwg.mxu0
    %7798 = vmatpush.bf16.msra.mxu0 %v7262
    %7799 = vmatpush.bf16.msra.mxu0 %v7254
    %7800 = vmatpush.bf16.msra.mxu0 %v7246
    %7801 = vmatpush.bf16.msra.mxu0 %v7238
    %7802 = vmatpush.bf16.msra.mxu0 %v7230
    %7803 = vmatpush.bf16.msra.mxu0 %v7222
    %7804 = vmatpush.bf16.msra.mxu0 %v7214
    %7805 = vmatpush.bf16.msra.mxu0 %v7206
    %7806 = vmatmul.bf16.gmra.mxu0 %v7527
    %v7807 = vpop.f32.mrf.mxu0
    %v7808 = vadd.f32 %v7794, %v7807
    %v7809 = vpop.f32.mrf.mxu0
    %v7810 = vadd.f32 %v7796, %v7809
    %7811 = vdwg.mxu0
    %7812 = vmatpush.bf16.msra.mxu0 %v7326
    %7813 = vmatpush.bf16.msra.mxu0 %v7318
    %7814 = vmatpush.bf16.msra.mxu0 %v7310
    %7815 = vmatpush.bf16.msra.mxu0 %v7302
    %7816 = vmatpush.bf16.msra.mxu0 %v7294
    %7817 = vmatpush.bf16.msra.mxu0 %v7286
    %7818 = vmatpush.bf16.msra.mxu0 %v7278
    %7819 = vmatpush.bf16.msra.mxu0 %v7270
    %7820 = vmatmul.bf16.gmra.mxu0 %v7528
    %v7821 = vpop.f32.mrf.mxu0
    %v7822 = vadd.f32 %v7808, %v7821
    %v7823 = vpop.f32.mrf.mxu0
    %v7824 = vadd.f32 %v7810, %v7823
    %7825 = vdwg.mxu0
    %7826 = vmatpush.bf16.msra.mxu0 %v7390
    %7827 = vmatpush.bf16.msra.mxu0 %v7382
    %7828 = vmatpush.bf16.msra.mxu0 %v7374
    %7829 = vmatpush.bf16.msra.mxu0 %v7366
    %7830 = vmatpush.bf16.msra.mxu0 %v7358
    %7831 = vmatpush.bf16.msra.mxu0 %v7350
    %7832 = vmatpush.bf16.msra.mxu0 %v7342
    %7833 = vmatpush.bf16.msra.mxu0 %v7334
    %7834 = vmatmul.bf16.gmra.mxu0 %v7529
    %v7835 = vpop.f32.mrf.mxu0
    %v7836 = vadd.f32 %v7822, %v7835
    %v7837 = vpop.f32.mrf.mxu0
    %v7838 = vadd.f32 %v7824, %v7837
    %7839 = vdwg.mxu0
    %7840 = vmatpush.bf16.msra.mxu0 %v7454
    %7841 = vmatpush.bf16.msra.mxu0 %v7446
    %7842 = vmatpush.bf16.msra.mxu0 %v7438
    %7843 = vmatpush.bf16.msra.mxu0 %v7430
    %7844 = vmatpush.bf16.msra.mxu0 %v7422
    %7845 = vmatpush.bf16.msra.mxu0 %v7414
    %7846 = vmatpush.bf16.msra.mxu0 %v7406
    %7847 = vmatpush.bf16.msra.mxu0 %v7398
    %7848 = vmatmul.bf16.gmra.mxu0 %v7530
    %v7849 = vpop.f32.mrf.mxu0
    %v7850 = vadd.f32 %v7836, %v7849
    %v7851 = vpop.f32.mrf.mxu0
    %v7852 = vadd.f32 %v7838, %v7851
    %7853 = vdwg.mxu0
    %7854 = vmatpush.bf16.msra.mxu0 %v7518
    %7855 = vmatpush.bf16.msra.mxu0 %v7510
    %7856 = vmatpush.bf16.msra.mxu0 %v7502
    %7857 = vmatpush.bf16.msra.mxu0 %v7494
    %7858 = vmatpush.bf16.msra.mxu0 %v7486
    %7859 = vmatpush.bf16.msra.mxu0 %v7478
    %7860 = vmatpush.bf16.msra.mxu0 %v7470
    %7861 = vmatpush.bf16.msra.mxu0 %v7462
    %7862 = vmatmul.bf16.gmra.mxu0 %v7531
    %v7863 = vpop.f32.mrf.mxu0
    %v7864 = vadd.f32 %v7850, %v7863
    %v7865 = vpop.f32.mrf.mxu0
    %v7866 = vadd.f32 %v7852, %v7865
    %7867 = vdwg.mxu0
    %7868 = vmatpush.bf16.msra.mxu0 %v7071
    %7869 = vmatpush.bf16.msra.mxu0 %v7063
    %7870 = vmatpush.bf16.msra.mxu0 %v7055
    %7871 = vmatpush.bf16.msra.mxu0 %v7047
    %7872 = vmatpush.bf16.msra.mxu0 %v7039
    %7873 = vmatpush.bf16.msra.mxu0 %v7031
    %7874 = vmatpush.bf16.msra.mxu0 %v7023
    %7875 = vmatpush.bf16.msra.mxu0 %v7015
    %7876 = vmatmul.bf16.gmra.mxu0 %v7524
    %v7877 = vpop.f32.mrf.mxu0
    %v7878 = vadd.f32 0.0, %v7877
    %v7879 = vpop.f32.mrf.mxu0
    %v7880 = vadd.f32 0.0, %v7879
    %7881 = vdwg.mxu0
    %7882 = vmatpush.bf16.msra.mxu0 %v7135
    %7883 = vmatpush.bf16.msra.mxu0 %v7127
    %7884 = vmatpush.bf16.msra.mxu0 %v7119
    %7885 = vmatpush.bf16.msra.mxu0 %v7111
    %7886 = vmatpush.bf16.msra.mxu0 %v7103
    %7887 = vmatpush.bf16.msra.mxu0 %v7095
    %7888 = vmatpush.bf16.msra.mxu0 %v7087
    %7889 = vmatpush.bf16.msra.mxu0 %v7079
    %7890 = vmatmul.bf16.gmra.mxu0 %v7525
    %v7891 = vpop.f32.mrf.mxu0
    %v7892 = vadd.f32 %v7878, %v7891
    %v7893 = vpop.f32.mrf.mxu0
    %v7894 = vadd.f32 %v7880, %v7893
    %7895 = vdwg.mxu0
    %7896 = vmatpush.bf16.msra.mxu0 %v7199
    %7897 = vmatpush.bf16.msra.mxu0 %v7191
    %7898 = vmatpush.bf16.msra.mxu0 %v7183
    %7899 = vmatpush.bf16.msra.mxu0 %v7175
    %7900 = vmatpush.bf16.msra.mxu0 %v7167
    %7901 = vmatpush.bf16.msra.mxu0 %v7159
    %7902 = vmatpush.bf16.msra.mxu0 %v7151
    %7903 = vmatpush.bf16.msra.mxu0 %v7143
    %7904 = vmatmul.bf16.gmra.mxu0 %v7526
    %v7905 = vpop.f32.mrf.mxu0
    %v7906 = vadd.f32 %v7892, %v7905
    %v7907 = vpop.f32.mrf.mxu0
    %v7908 = vadd.f32 %v7894, %v7907
    %7909 = vdwg.mxu0
    %7910 = vmatpush.bf16.msra.mxu0 %v7263
    %7911 = vmatpush.bf16.msra.mxu0 %v7255
    %7912 = vmatpush.bf16.msra.mxu0 %v7247
    %7913 = vmatpush.bf16.msra.mxu0 %v7239
    %7914 = vmatpush.bf16.msra.mxu0 %v7231
    %7915 = vmatpush.bf16.msra.mxu0 %v7223
    %7916 = vmatpush.bf16.msra.mxu0 %v7215
    %7917 = vmatpush.bf16.msra.mxu0 %v7207
    %7918 = vmatmul.bf16.gmra.mxu0 %v7527
    %v7919 = vpop.f32.mrf.mxu0
    %v7920 = vadd.f32 %v7906, %v7919
    %v7921 = vpop.f32.mrf.mxu0
    %v7922 = vadd.f32 %v7908, %v7921
    %7923 = vdwg.mxu0
    %7924 = vmatpush.bf16.msra.mxu0 %v7327
    %7925 = vmatpush.bf16.msra.mxu0 %v7319
    %7926 = vmatpush.bf16.msra.mxu0 %v7311
    %7927 = vmatpush.bf16.msra.mxu0 %v7303
    %7928 = vmatpush.bf16.msra.mxu0 %v7295
    %7929 = vmatpush.bf16.msra.mxu0 %v7287
    %7930 = vmatpush.bf16.msra.mxu0 %v7279
    %7931 = vmatpush.bf16.msra.mxu0 %v7271
    %7932 = vmatmul.bf16.gmra.mxu0 %v7528
    %v7933 = vpop.f32.mrf.mxu0
    %v7934 = vadd.f32 %v7920, %v7933
    %v7935 = vpop.f32.mrf.mxu0
    %v7936 = vadd.f32 %v7922, %v7935
    %7937 = vdwg.mxu0
    %7938 = vmatpush.bf16.msra.mxu0 %v7391
    %7939 = vmatpush.bf16.msra.mxu0 %v7383
    %7940 = vmatpush.bf16.msra.mxu0 %v7375
    %7941 = vmatpush.bf16.msra.mxu0 %v7367
    %7942 = vmatpush.bf16.msra.mxu0 %v7359
    %7943 = vmatpush.bf16.msra.mxu0 %v7351
    %7944 = vmatpush.bf16.msra.mxu0 %v7343
    %7945 = vmatpush.bf16.msra.mxu0 %v7335
    %7946 = vmatmul.bf16.gmra.mxu0 %v7529
    %v7947 = vpop.f32.mrf.mxu0
    %v7948 = vadd.f32 %v7934, %v7947
    %v7949 = vpop.f32.mrf.mxu0
    %v7950 = vadd.f32 %v7936, %v7949
    %7951 = vdwg.mxu0
    %7952 = vmatpush.bf16.msra.mxu0 %v7455
    %7953 = vmatpush.bf16.msra.mxu0 %v7447
    %7954 = vmatpush.bf16.msra.mxu0 %v7439
    %7955 = vmatpush.bf16.msra.mxu0 %v7431
    %7956 = vmatpush.bf16.msra.mxu0 %v7423
    %7957 = vmatpush.bf16.msra.mxu0 %v7415
    %7958 = vmatpush.bf16.msra.mxu0 %v7407
    %7959 = vmatpush.bf16.msra.mxu0 %v7399
    %7960 = vmatmul.bf16.gmra.mxu0 %v7530
    %v7961 = vpop.f32.mrf.mxu0
    %v7962 = vadd.f32 %v7948, %v7961
    %v7963 = vpop.f32.mrf.mxu0
    %v7964 = vadd.f32 %v7950, %v7963
    %7965 = vdwg.mxu0
    %7966 = vmatpush.bf16.msra.mxu0 %v7519
    %7967 = vmatpush.bf16.msra.mxu0 %v7511
    %7968 = vmatpush.bf16.msra.mxu0 %v7503
    %7969 = vmatpush.bf16.msra.mxu0 %v7495
    %7970 = vmatpush.bf16.msra.mxu0 %v7487
    %7971 = vmatpush.bf16.msra.mxu0 %v7479
    %7972 = vmatpush.bf16.msra.mxu0 %v7471
    %7973 = vmatpush.bf16.msra.mxu0 %v7463
    %7974 = vmatmul.bf16.gmra.mxu0 %v7531
    %v7975 = vpop.f32.mrf.mxu0
    %v7976 = vadd.f32 %v7962, %v7975
    %v7977 = vpop.f32.mrf.mxu0
    %v7978 = vadd.f32 %v7964, %v7977
    %7979 = vdwg.mxu0
    %7980 = vmatpush.bf16.msra.mxu0 %v7072
    %7981 = vmatpush.bf16.msra.mxu0 %v7064
    %7982 = vmatpush.bf16.msra.mxu0 %v7056
    %7983 = vmatpush.bf16.msra.mxu0 %v7048
    %7984 = vmatpush.bf16.msra.mxu0 %v7040
    %7985 = vmatpush.bf16.msra.mxu0 %v7032
    %7986 = vmatpush.bf16.msra.mxu0 %v7024
    %7987 = vmatpush.bf16.msra.mxu0 %v7016
    %7988 = vmatmul.bf16.gmra.mxu0 %v7524
    %v7989 = vpop.f32.mrf.mxu0
    %v7990 = vadd.f32 0.0, %v7989
    %v7991 = vpop.f32.mrf.mxu0
    %v7992 = vadd.f32 0.0, %v7991
    %7993 = vdwg.mxu0
    %7994 = vmatpush.bf16.msra.mxu0 %v7136
    %7995 = vmatpush.bf16.msra.mxu0 %v7128
    %7996 = vmatpush.bf16.msra.mxu0 %v7120
    %7997 = vmatpush.bf16.msra.mxu0 %v7112
    %7998 = vmatpush.bf16.msra.mxu0 %v7104
    %7999 = vmatpush.bf16.msra.mxu0 %v7096
    %8000 = vmatpush.bf16.msra.mxu0 %v7088
    %8001 = vmatpush.bf16.msra.mxu0 %v7080
    %8002 = vmatmul.bf16.gmra.mxu0 %v7525
    %v8003 = vpop.f32.mrf.mxu0
    %v8004 = vadd.f32 %v7990, %v8003
    %v8005 = vpop.f32.mrf.mxu0
    %v8006 = vadd.f32 %v7992, %v8005
    %8007 = vdwg.mxu0
    %8008 = vmatpush.bf16.msra.mxu0 %v7200
    %8009 = vmatpush.bf16.msra.mxu0 %v7192
    %8010 = vmatpush.bf16.msra.mxu0 %v7184
    %8011 = vmatpush.bf16.msra.mxu0 %v7176
    %8012 = vmatpush.bf16.msra.mxu0 %v7168
    %8013 = vmatpush.bf16.msra.mxu0 %v7160
    %8014 = vmatpush.bf16.msra.mxu0 %v7152
    %8015 = vmatpush.bf16.msra.mxu0 %v7144
    %8016 = vmatmul.bf16.gmra.mxu0 %v7526
    %v8017 = vpop.f32.mrf.mxu0
    %v8018 = vadd.f32 %v8004, %v8017
    %v8019 = vpop.f32.mrf.mxu0
    %v8020 = vadd.f32 %v8006, %v8019
    %8021 = vdwg.mxu0
    %8022 = vmatpush.bf16.msra.mxu0 %v7264
    %8023 = vmatpush.bf16.msra.mxu0 %v7256
    %8024 = vmatpush.bf16.msra.mxu0 %v7248
    %8025 = vmatpush.bf16.msra.mxu0 %v7240
    %8026 = vmatpush.bf16.msra.mxu0 %v7232
    %8027 = vmatpush.bf16.msra.mxu0 %v7224
    %8028 = vmatpush.bf16.msra.mxu0 %v7216
    %8029 = vmatpush.bf16.msra.mxu0 %v7208
    %8030 = vmatmul.bf16.gmra.mxu0 %v7527
    %v8031 = vpop.f32.mrf.mxu0
    %v8032 = vadd.f32 %v8018, %v8031
    %v8033 = vpop.f32.mrf.mxu0
    %v8034 = vadd.f32 %v8020, %v8033
    %8035 = vdwg.mxu0
    %8036 = vmatpush.bf16.msra.mxu0 %v7328
    %8037 = vmatpush.bf16.msra.mxu0 %v7320
    %8038 = vmatpush.bf16.msra.mxu0 %v7312
    %8039 = vmatpush.bf16.msra.mxu0 %v7304
    %8040 = vmatpush.bf16.msra.mxu0 %v7296
    %8041 = vmatpush.bf16.msra.mxu0 %v7288
    %8042 = vmatpush.bf16.msra.mxu0 %v7280
    %8043 = vmatpush.bf16.msra.mxu0 %v7272
    %8044 = vmatmul.bf16.gmra.mxu0 %v7528
    %v8045 = vpop.f32.mrf.mxu0
    %v8046 = vadd.f32 %v8032, %v8045
    %v8047 = vpop.f32.mrf.mxu0
    %v8048 = vadd.f32 %v8034, %v8047
    %8049 = vdwg.mxu0
    %8050 = vmatpush.bf16.msra.mxu0 %v7392
    %8051 = vmatpush.bf16.msra.mxu0 %v7384
    %8052 = vmatpush.bf16.msra.mxu0 %v7376
    %8053 = vmatpush.bf16.msra.mxu0 %v7368
    %8054 = vmatpush.bf16.msra.mxu0 %v7360
    %8055 = vmatpush.bf16.msra.mxu0 %v7352
    %8056 = vmatpush.bf16.msra.mxu0 %v7344
    %8057 = vmatpush.bf16.msra.mxu0 %v7336
    %8058 = vmatmul.bf16.gmra.mxu0 %v7529
    %v8059 = vpop.f32.mrf.mxu0
    %v8060 = vadd.f32 %v8046, %v8059
    %v8061 = vpop.f32.mrf.mxu0
    %v8062 = vadd.f32 %v8048, %v8061
    %8063 = vdwg.mxu0
    %8064 = vmatpush.bf16.msra.mxu0 %v7456
    %8065 = vmatpush.bf16.msra.mxu0 %v7448
    %8066 = vmatpush.bf16.msra.mxu0 %v7440
    %8067 = vmatpush.bf16.msra.mxu0 %v7432
    %8068 = vmatpush.bf16.msra.mxu0 %v7424
    %8069 = vmatpush.bf16.msra.mxu0 %v7416
    %8070 = vmatpush.bf16.msra.mxu0 %v7408
    %8071 = vmatpush.bf16.msra.mxu0 %v7400
    %8072 = vmatmul.bf16.gmra.mxu0 %v7530
    %v8073 = vpop.f32.mrf.mxu0
    %v8074 = vadd.f32 %v8060, %v8073
    %v8075 = vpop.f32.mrf.mxu0
    %v8076 = vadd.f32 %v8062, %v8075
    %8077 = vdwg.mxu0
    %8078 = vmatpush.bf16.msra.mxu0 %v7520
    %8079 = vmatpush.bf16.msra.mxu0 %v7512
    %8080 = vmatpush.bf16.msra.mxu0 %v7504
    %8081 = vmatpush.bf16.msra.mxu0 %v7496
    %8082 = vmatpush.bf16.msra.mxu0 %v7488
    %8083 = vmatpush.bf16.msra.mxu0 %v7480
    %8084 = vmatpush.bf16.msra.mxu0 %v7472
    %8085 = vmatpush.bf16.msra.mxu0 %v7464
    %8086 = vmatmul.bf16.gmra.mxu0 %v7531
    %v8087 = vpop.f32.mrf.mxu0
    %v8088 = vadd.f32 %v8074, %v8087
    %v8089 = vpop.f32.mrf.mxu0
    %v8090 = vadd.f32 %v8076, %v8089
    %8091 = vdwg.mxu0
    %8092 = vmatpush.bf16.msra.mxu0 %v7073
    %8093 = vmatpush.bf16.msra.mxu0 %v7065
    %8094 = vmatpush.bf16.msra.mxu0 %v7057
    %8095 = vmatpush.bf16.msra.mxu0 %v7049
    %8096 = vmatpush.bf16.msra.mxu0 %v7041
    %8097 = vmatpush.bf16.msra.mxu0 %v7033
    %8098 = vmatpush.bf16.msra.mxu0 %v7025
    %8099 = vmatpush.bf16.msra.mxu0 %v7017
    %8100 = vmatmul.bf16.gmra.mxu0 %v7524
    %v8101 = vpop.f32.mrf.mxu0
    %v8102 = vadd.f32 0.0, %v8101
    %v8103 = vpop.f32.mrf.mxu0
    %v8104 = vadd.f32 0.0, %v8103
    %8105 = vdwg.mxu0
    %8106 = vmatpush.bf16.msra.mxu0 %v7137
    %8107 = vmatpush.bf16.msra.mxu0 %v7129
    %8108 = vmatpush.bf16.msra.mxu0 %v7121
    %8109 = vmatpush.bf16.msra.mxu0 %v7113
    %8110 = vmatpush.bf16.msra.mxu0 %v7105
    %8111 = vmatpush.bf16.msra.mxu0 %v7097
    %8112 = vmatpush.bf16.msra.mxu0 %v7089
    %8113 = vmatpush.bf16.msra.mxu0 %v7081
    %8114 = vmatmul.bf16.gmra.mxu0 %v7525
    %v8115 = vpop.f32.mrf.mxu0
    %v8116 = vadd.f32 %v8102, %v8115
    %v8117 = vpop.f32.mrf.mxu0
    %v8118 = vadd.f32 %v8104, %v8117
    %8119 = vdwg.mxu0
    %8120 = vmatpush.bf16.msra.mxu0 %v7201
    %8121 = vmatpush.bf16.msra.mxu0 %v7193
    %8122 = vmatpush.bf16.msra.mxu0 %v7185
    %8123 = vmatpush.bf16.msra.mxu0 %v7177
    %8124 = vmatpush.bf16.msra.mxu0 %v7169
    %8125 = vmatpush.bf16.msra.mxu0 %v7161
    %8126 = vmatpush.bf16.msra.mxu0 %v7153
    %8127 = vmatpush.bf16.msra.mxu0 %v7145
    %8128 = vmatmul.bf16.gmra.mxu0 %v7526
    %v8129 = vpop.f32.mrf.mxu0
    %v8130 = vadd.f32 %v8116, %v8129
    %v8131 = vpop.f32.mrf.mxu0
    %v8132 = vadd.f32 %v8118, %v8131
    %8133 = vdwg.mxu0
    %8134 = vmatpush.bf16.msra.mxu0 %v7265
    %8135 = vmatpush.bf16.msra.mxu0 %v7257
    %8136 = vmatpush.bf16.msra.mxu0 %v7249
    %8137 = vmatpush.bf16.msra.mxu0 %v7241
    %8138 = vmatpush.bf16.msra.mxu0 %v7233
    %8139 = vmatpush.bf16.msra.mxu0 %v7225
    %8140 = vmatpush.bf16.msra.mxu0 %v7217
    %8141 = vmatpush.bf16.msra.mxu0 %v7209
    %8142 = vmatmul.bf16.gmra.mxu0 %v7527
    %v8143 = vpop.f32.mrf.mxu0
    %v8144 = vadd.f32 %v8130, %v8143
    %v8145 = vpop.f32.mrf.mxu0
    %v8146 = vadd.f32 %v8132, %v8145
    %8147 = vdwg.mxu0
    %8148 = vmatpush.bf16.msra.mxu0 %v7329
    %8149 = vmatpush.bf16.msra.mxu0 %v7321
    %8150 = vmatpush.bf16.msra.mxu0 %v7313
    %8151 = vmatpush.bf16.msra.mxu0 %v7305
    %8152 = vmatpush.bf16.msra.mxu0 %v7297
    %8153 = vmatpush.bf16.msra.mxu0 %v7289
    %8154 = vmatpush.bf16.msra.mxu0 %v7281
    %8155 = vmatpush.bf16.msra.mxu0 %v7273
    %8156 = vmatmul.bf16.gmra.mxu0 %v7528
    %v8157 = vpop.f32.mrf.mxu0
    %v8158 = vadd.f32 %v8144, %v8157
    %v8159 = vpop.f32.mrf.mxu0
    %v8160 = vadd.f32 %v8146, %v8159
    %8161 = vdwg.mxu0
    %8162 = vmatpush.bf16.msra.mxu0 %v7393
    %8163 = vmatpush.bf16.msra.mxu0 %v7385
    %8164 = vmatpush.bf16.msra.mxu0 %v7377
    %8165 = vmatpush.bf16.msra.mxu0 %v7369
    %8166 = vmatpush.bf16.msra.mxu0 %v7361
    %8167 = vmatpush.bf16.msra.mxu0 %v7353
    %8168 = vmatpush.bf16.msra.mxu0 %v7345
    %8169 = vmatpush.bf16.msra.mxu0 %v7337
    %8170 = vmatmul.bf16.gmra.mxu0 %v7529
    %v8171 = vpop.f32.mrf.mxu0
    %v8172 = vadd.f32 %v8158, %v8171
    %v8173 = vpop.f32.mrf.mxu0
    %v8174 = vadd.f32 %v8160, %v8173
    %8175 = vdwg.mxu0
    %8176 = vmatpush.bf16.msra.mxu0 %v7457
    %8177 = vmatpush.bf16.msra.mxu0 %v7449
    %8178 = vmatpush.bf16.msra.mxu0 %v7441
    %8179 = vmatpush.bf16.msra.mxu0 %v7433
    %8180 = vmatpush.bf16.msra.mxu0 %v7425
    %8181 = vmatpush.bf16.msra.mxu0 %v7417
    %8182 = vmatpush.bf16.msra.mxu0 %v7409
    %8183 = vmatpush.bf16.msra.mxu0 %v7401
    %8184 = vmatmul.bf16.gmra.mxu0 %v7530
    %v8185 = vpop.f32.mrf.mxu0
    %v8186 = vadd.f32 %v8172, %v8185
    %v8187 = vpop.f32.mrf.mxu0
    %v8188 = vadd.f32 %v8174, %v8187
    %8189 = vdwg.mxu0
    %8190 = vmatpush.bf16.msra.mxu0 %v7521
    %8191 = vmatpush.bf16.msra.mxu0 %v7513
    %8192 = vmatpush.bf16.msra.mxu0 %v7505
    %8193 = vmatpush.bf16.msra.mxu0 %v7497
    %8194 = vmatpush.bf16.msra.mxu0 %v7489
    %8195 = vmatpush.bf16.msra.mxu0 %v7481
    %8196 = vmatpush.bf16.msra.mxu0 %v7473
    %8197 = vmatpush.bf16.msra.mxu0 %v7465
    %8198 = vmatmul.bf16.gmra.mxu0 %v7531
    %v8199 = vpop.f32.mrf.mxu0
    %v8200 = vadd.f32 %v8186, %v8199
    %v8201 = vpop.f32.mrf.mxu0
    %v8202 = vadd.f32 %v8188, %v8201
    %8203 = vdwg.mxu0
    %8204 = vmatpush.bf16.msra.mxu0 %v7074
    %8205 = vmatpush.bf16.msra.mxu0 %v7066
    %8206 = vmatpush.bf16.msra.mxu0 %v7058
    %8207 = vmatpush.bf16.msra.mxu0 %v7050
    %8208 = vmatpush.bf16.msra.mxu0 %v7042
    %8209 = vmatpush.bf16.msra.mxu0 %v7034
    %8210 = vmatpush.bf16.msra.mxu0 %v7026
    %8211 = vmatpush.bf16.msra.mxu0 %v7018
    %8212 = vmatmul.bf16.gmra.mxu0 %v7524
    %v8213 = vpop.f32.mrf.mxu0
    %v8214 = vadd.f32 0.0, %v8213
    %v8215 = vpop.f32.mrf.mxu0
    %v8216 = vadd.f32 0.0, %v8215
    %8217 = vdwg.mxu0
    %8218 = vmatpush.bf16.msra.mxu0 %v7138
    %8219 = vmatpush.bf16.msra.mxu0 %v7130
    %8220 = vmatpush.bf16.msra.mxu0 %v7122
    %8221 = vmatpush.bf16.msra.mxu0 %v7114
    %8222 = vmatpush.bf16.msra.mxu0 %v7106
    %8223 = vmatpush.bf16.msra.mxu0 %v7098
    %8224 = vmatpush.bf16.msra.mxu0 %v7090
    %8225 = vmatpush.bf16.msra.mxu0 %v7082
    %8226 = vmatmul.bf16.gmra.mxu0 %v7525
    %v8227 = vpop.f32.mrf.mxu0
    %v8228 = vadd.f32 %v8214, %v8227
    %v8229 = vpop.f32.mrf.mxu0
    %v8230 = vadd.f32 %v8216, %v8229
    %8231 = vdwg.mxu0
    %8232 = vmatpush.bf16.msra.mxu0 %v7202
    %8233 = vmatpush.bf16.msra.mxu0 %v7194
    %8234 = vmatpush.bf16.msra.mxu0 %v7186
    %8235 = vmatpush.bf16.msra.mxu0 %v7178
    %8236 = vmatpush.bf16.msra.mxu0 %v7170
    %8237 = vmatpush.bf16.msra.mxu0 %v7162
    %8238 = vmatpush.bf16.msra.mxu0 %v7154
    %8239 = vmatpush.bf16.msra.mxu0 %v7146
    %8240 = vmatmul.bf16.gmra.mxu0 %v7526
    %v8241 = vpop.f32.mrf.mxu0
    %v8242 = vadd.f32 %v8228, %v8241
    %v8243 = vpop.f32.mrf.mxu0
    %v8244 = vadd.f32 %v8230, %v8243
    %8245 = vdwg.mxu0
    %8246 = vmatpush.bf16.msra.mxu0 %v7266
    %8247 = vmatpush.bf16.msra.mxu0 %v7258
    %8248 = vmatpush.bf16.msra.mxu0 %v7250
    %8249 = vmatpush.bf16.msra.mxu0 %v7242
    %8250 = vmatpush.bf16.msra.mxu0 %v7234
    %8251 = vmatpush.bf16.msra.mxu0 %v7226
    %8252 = vmatpush.bf16.msra.mxu0 %v7218
    %8253 = vmatpush.bf16.msra.mxu0 %v7210
    %8254 = vmatmul.bf16.gmra.mxu0 %v7527
    %v8255 = vpop.f32.mrf.mxu0
    %v8256 = vadd.f32 %v8242, %v8255
    %v8257 = vpop.f32.mrf.mxu0
    %v8258 = vadd.f32 %v8244, %v8257
    %8259 = vdwg.mxu0
    %8260 = vmatpush.bf16.msra.mxu0 %v7330
    %8261 = vmatpush.bf16.msra.mxu0 %v7322
    %8262 = vmatpush.bf16.msra.mxu0 %v7314
    %8263 = vmatpush.bf16.msra.mxu0 %v7306
    %8264 = vmatpush.bf16.msra.mxu0 %v7298
    %8265 = vmatpush.bf16.msra.mxu0 %v7290
    %8266 = vmatpush.bf16.msra.mxu0 %v7282
    %8267 = vmatpush.bf16.msra.mxu0 %v7274
    %8268 = vmatmul.bf16.gmra.mxu0 %v7528
    %v8269 = vpop.f32.mrf.mxu0
    %v8270 = vadd.f32 %v8256, %v8269
    %v8271 = vpop.f32.mrf.mxu0
    %v8272 = vadd.f32 %v8258, %v8271
    %8273 = vdwg.mxu0
    %8274 = vmatpush.bf16.msra.mxu0 %v7394
    %8275 = vmatpush.bf16.msra.mxu0 %v7386
    %8276 = vmatpush.bf16.msra.mxu0 %v7378
    %8277 = vmatpush.bf16.msra.mxu0 %v7370
    %8278 = vmatpush.bf16.msra.mxu0 %v7362
    %8279 = vmatpush.bf16.msra.mxu0 %v7354
    %8280 = vmatpush.bf16.msra.mxu0 %v7346
    %8281 = vmatpush.bf16.msra.mxu0 %v7338
    %8282 = vmatmul.bf16.gmra.mxu0 %v7529
    %v8283 = vpop.f32.mrf.mxu0
    %v8284 = vadd.f32 %v8270, %v8283
    %v8285 = vpop.f32.mrf.mxu0
    %v8286 = vadd.f32 %v8272, %v8285
    %8287 = vdwg.mxu0
    %8288 = vmatpush.bf16.msra.mxu0 %v7458
    %8289 = vmatpush.bf16.msra.mxu0 %v7450
    %8290 = vmatpush.bf16.msra.mxu0 %v7442
    %8291 = vmatpush.bf16.msra.mxu0 %v7434
    %8292 = vmatpush.bf16.msra.mxu0 %v7426
    %8293 = vmatpush.bf16.msra.mxu0 %v7418
    %8294 = vmatpush.bf16.msra.mxu0 %v7410
    %8295 = vmatpush.bf16.msra.mxu0 %v7402
    %8296 = vmatmul.bf16.gmra.mxu0 %v7530
    %v8297 = vpop.f32.mrf.mxu0
    %v8298 = vadd.f32 %v8284, %v8297
    %v8299 = vpop.f32.mrf.mxu0
    %v8300 = vadd.f32 %v8286, %v8299
    %8301 = vdwg.mxu0
    %8302 = vmatpush.bf16.msra.mxu0 %v7522
    %8303 = vmatpush.bf16.msra.mxu0 %v7514
    %8304 = vmatpush.bf16.msra.mxu0 %v7506
    %8305 = vmatpush.bf16.msra.mxu0 %v7498
    %8306 = vmatpush.bf16.msra.mxu0 %v7490
    %8307 = vmatpush.bf16.msra.mxu0 %v7482
    %8308 = vmatpush.bf16.msra.mxu0 %v7474
    %8309 = vmatpush.bf16.msra.mxu0 %v7466
    %8310 = vmatmul.bf16.gmra.mxu0 %v7531
    %v8311 = vpop.f32.mrf.mxu0
    %v8312 = vadd.f32 %v8298, %v8311
    %v8313 = vpop.f32.mrf.mxu0
    %v8314 = vadd.f32 %v8300, %v8313
    %8315 = vdwg.mxu0
    %8316 = vmatpush.bf16.msra.mxu0 %v7075
    %8317 = vmatpush.bf16.msra.mxu0 %v7067
    %8318 = vmatpush.bf16.msra.mxu0 %v7059
    %8319 = vmatpush.bf16.msra.mxu0 %v7051
    %8320 = vmatpush.bf16.msra.mxu0 %v7043
    %8321 = vmatpush.bf16.msra.mxu0 %v7035
    %8322 = vmatpush.bf16.msra.mxu0 %v7027
    %8323 = vmatpush.bf16.msra.mxu0 %v7019
    %8324 = vmatmul.bf16.gmra.mxu0 %v7524
    %v8325 = vpop.f32.mrf.mxu0
    %v8326 = vadd.f32 0.0, %v8325
    %v8327 = vpop.f32.mrf.mxu0
    %v8328 = vadd.f32 0.0, %v8327
    %8329 = vdwg.mxu0
    %8330 = vmatpush.bf16.msra.mxu0 %v7139
    %8331 = vmatpush.bf16.msra.mxu0 %v7131
    %8332 = vmatpush.bf16.msra.mxu0 %v7123
    %8333 = vmatpush.bf16.msra.mxu0 %v7115
    %8334 = vmatpush.bf16.msra.mxu0 %v7107
    %8335 = vmatpush.bf16.msra.mxu0 %v7099
    %8336 = vmatpush.bf16.msra.mxu0 %v7091
    %8337 = vmatpush.bf16.msra.mxu0 %v7083
    %8338 = vmatmul.bf16.gmra.mxu0 %v7525
    %v8339 = vpop.f32.mrf.mxu0
    %v8340 = vadd.f32 %v8326, %v8339
    %v8341 = vpop.f32.mrf.mxu0
    %v8342 = vadd.f32 %v8328, %v8341
    %8343 = vdwg.mxu0
    %8344 = vmatpush.bf16.msra.mxu0 %v7203
    %8345 = vmatpush.bf16.msra.mxu0 %v7195
    %8346 = vmatpush.bf16.msra.mxu0 %v7187
    %8347 = vmatpush.bf16.msra.mxu0 %v7179
    %8348 = vmatpush.bf16.msra.mxu0 %v7171
    %8349 = vmatpush.bf16.msra.mxu0 %v7163
    %8350 = vmatpush.bf16.msra.mxu0 %v7155
    %8351 = vmatpush.bf16.msra.mxu0 %v7147
    %8352 = vmatmul.bf16.gmra.mxu0 %v7526
    %v8353 = vpop.f32.mrf.mxu0
    %v8354 = vadd.f32 %v8340, %v8353
    %v8355 = vpop.f32.mrf.mxu0
    %v8356 = vadd.f32 %v8342, %v8355
    %8357 = vdwg.mxu0
    %8358 = vmatpush.bf16.msra.mxu0 %v7267
    %8359 = vmatpush.bf16.msra.mxu0 %v7259
    %8360 = vmatpush.bf16.msra.mxu0 %v7251
    %8361 = vmatpush.bf16.msra.mxu0 %v7243
    %8362 = vmatpush.bf16.msra.mxu0 %v7235
    %8363 = vmatpush.bf16.msra.mxu0 %v7227
    %8364 = vmatpush.bf16.msra.mxu0 %v7219
    %8365 = vmatpush.bf16.msra.mxu0 %v7211
    %8366 = vmatmul.bf16.gmra.mxu0 %v7527
    %v8367 = vpop.f32.mrf.mxu0
    %v8368 = vadd.f32 %v8354, %v8367
    %v8369 = vpop.f32.mrf.mxu0
    %v8370 = vadd.f32 %v8356, %v8369
    %8371 = vdwg.mxu0
    %8372 = vmatpush.bf16.msra.mxu0 %v7331
    %8373 = vmatpush.bf16.msra.mxu0 %v7323
    %8374 = vmatpush.bf16.msra.mxu0 %v7315
    %8375 = vmatpush.bf16.msra.mxu0 %v7307
    %8376 = vmatpush.bf16.msra.mxu0 %v7299
    %8377 = vmatpush.bf16.msra.mxu0 %v7291
    %8378 = vmatpush.bf16.msra.mxu0 %v7283
    %8379 = vmatpush.bf16.msra.mxu0 %v7275
    %8380 = vmatmul.bf16.gmra.mxu0 %v7528
    %v8381 = vpop.f32.mrf.mxu0
    %v8382 = vadd.f32 %v8368, %v8381
    %v8383 = vpop.f32.mrf.mxu0
    %v8384 = vadd.f32 %v8370, %v8383
    %8385 = vdwg.mxu0
    %8386 = vmatpush.bf16.msra.mxu0 %v7395
    %8387 = vmatpush.bf16.msra.mxu0 %v7387
    %8388 = vmatpush.bf16.msra.mxu0 %v7379
    %8389 = vmatpush.bf16.msra.mxu0 %v7371
    %8390 = vmatpush.bf16.msra.mxu0 %v7363
    %8391 = vmatpush.bf16.msra.mxu0 %v7355
    %8392 = vmatpush.bf16.msra.mxu0 %v7347
    %8393 = vmatpush.bf16.msra.mxu0 %v7339
    %8394 = vmatmul.bf16.gmra.mxu0 %v7529
    %v8395 = vpop.f32.mrf.mxu0
    %v8396 = vadd.f32 %v8382, %v8395
    %v8397 = vpop.f32.mrf.mxu0
    %v8398 = vadd.f32 %v8384, %v8397
    %8399 = vdwg.mxu0
    %8400 = vmatpush.bf16.msra.mxu0 %v7459
    %8401 = vmatpush.bf16.msra.mxu0 %v7451
    %8402 = vmatpush.bf16.msra.mxu0 %v7443
    %8403 = vmatpush.bf16.msra.mxu0 %v7435
    %8404 = vmatpush.bf16.msra.mxu0 %v7427
    %8405 = vmatpush.bf16.msra.mxu0 %v7419
    %8406 = vmatpush.bf16.msra.mxu0 %v7411
    %8407 = vmatpush.bf16.msra.mxu0 %v7403
    %8408 = vmatmul.bf16.gmra.mxu0 %v7530
    %v8409 = vpop.f32.mrf.mxu0
    %v8410 = vadd.f32 %v8396, %v8409
    %v8411 = vpop.f32.mrf.mxu0
    %v8412 = vadd.f32 %v8398, %v8411
    %8413 = vdwg.mxu0
    %8414 = vmatpush.bf16.msra.mxu0 %v7523
    %8415 = vmatpush.bf16.msra.mxu0 %v7515
    %8416 = vmatpush.bf16.msra.mxu0 %v7507
    %8417 = vmatpush.bf16.msra.mxu0 %v7499
    %8418 = vmatpush.bf16.msra.mxu0 %v7491
    %8419 = vmatpush.bf16.msra.mxu0 %v7483
    %8420 = vmatpush.bf16.msra.mxu0 %v7475
    %8421 = vmatpush.bf16.msra.mxu0 %v7467
    %8422 = vmatmul.bf16.gmra.mxu0 %v7531
    %v8423 = vpop.f32.mrf.mxu0
    %v8424 = vadd.f32 %v8410, %v8423
    %v8425 = vpop.f32.mrf.mxu0
    %v8426 = vadd.f32 %v8412, %v8425
    %8427 = vdwg.mxu0
    %s8428 = scalar_lea.vmem [#allocation12], 1
    %v8429 = vld [vmem:[%s8428] ss:$2 sm:$0xff]
    %v8431 = vperm.slane %v8429, 0
    %v8432 = vperm.slane %v8429, 1
    %v8433 = vperm.slane %v8429, 2
    %v8434 = vperm.slane %v8429, 3
    %v8435 = vperm.slane %v8429, 4
    %v8436 = vperm.slane %v8429, 5
    %v8437 = vperm.slane %v8429, 6
    %v8438 = vperm.slane %v8429, 7
    %v8447 = vmul.f32 %v7640, %v8431
    %v8448 = vmul.f32 %v7752, %v8432
    %v8449 = vmul.f32 %v7864, %v8433
    %v8450 = vmul.f32 %v7976, %v8434
    %v8451 = vmul.f32 %v8088, %v8435
    %v8452 = vmul.f32 %v8200, %v8436
    %v8453 = vmul.f32 %v8312, %v8437
    %v8454 = vmul.f32 %v8424, %v8438
    %v8455 = vmul.f32 %v7642, %v8431
    %v8456 = vmul.f32 %v7754, %v8432
    %v8457 = vmul.f32 %v7866, %v8433
    %v8458 = vmul.f32 %v7978, %v8434
    %v8459 = vmul.f32 %v8090, %v8435
    %v8460 = vmul.f32 %v8202, %v8436
    %v8461 = vmul.f32 %v8314, %v8437
    %v8462 = vmul.f32 %v8426, %v8438
    %s8463 = scalar_lea.vmem [#allocation15], 2
    %v8464 = vld [vmem:[%s8463] ss:$4 sm:$0xff]
    %v8466 = vperm.slane %v8464, 0
    %v8467 = vperm.slane %v8464, 1
    %v8468 = vperm.slane %v8464, 2
    %v8469 = vperm.slane %v8464, 3
    %v8470 = vperm.slane %v8464, 4
    %v8471 = vperm.slane %v8464, 5
    %v8472 = vperm.slane %v8464, 6
    %v8473 = vperm.slane %v8464, 7
    %v8482 = vadd.f32 %v8447, %v8466
    %v8483 = vadd.f32 %v8448, %v8467
    %v8484 = vadd.f32 %v8449, %v8468
    %v8485 = vadd.f32 %v8450, %v8469
    %v8486 = vadd.f32 %v8451, %v8470
    %v8487 = vadd.f32 %v8452, %v8471
    %v8488 = vadd.f32 %v8453, %v8472
    %v8489 = vadd.f32 %v8454, %v8473
    %v8490 = vadd.f32 %v8455, %v8466
    %v8491 = vadd.f32 %v8456, %v8467
    %v8492 = vadd.f32 %v8457, %v8468
    %v8493 = vadd.f32 %v8458, %v8469
    %v8494 = vadd.f32 %v8459, %v8470
    %v8495 = vadd.f32 %v8460, %v8471
    %v8496 = vadd.f32 %v8461, %v8472
    %v8497 = vadd.f32 %v8462, %v8473
    %v8498 = vmax.f32 %v8482, 0.0
    %v8499 = vmax.f32 %v8483, 0.0
    %v8500 = vmax.f32 %v8484, 0.0
    %v8501 = vmax.f32 %v8485, 0.0
    %v8502 = vmax.f32 %v8486, 0.0
    %v8503 = vmax.f32 %v8487, 0.0
    %v8504 = vmax.f32 %v8488, 0.0
    %v8505 = vmax.f32 %v8489, 0.0
    %v8506 = vmax.f32 %v8490, 0.0
    %v8507 = vmax.f32 %v8491, 0.0
    %v8508 = vmax.f32 %v8492, 0.0
    %v8509 = vmax.f32 %v8493, 0.0
    %v8510 = vmax.f32 %v8494, 0.0
    %v8511 = vmax.f32 %v8495, 0.0
    %v8512 = vmax.f32 %v8496, 0.0
    %v8513 = vmax.f32 %v8497, 0.0
    %v8514 = vld [vmem:[#allocation13] sm:$0xff]
    %v8516 = vperm.slane %v8514, 0
    %v8517 = vperm.slane %v8514, 1
    %v8518 = vperm.slane %v8514, 2
    %v8519 = vperm.slane %v8514, 3
    %v8520 = vperm.slane %v8514, 4
    %v8521 = vperm.slane %v8514, 5
    %v8522 = vperm.slane %v8514, 6
    %v8523 = vperm.slane %v8514, 7
    %v8532 = vmul.f32 %v8498, %v8516
    %v8533 = vmul.f32 %v8499, %v8517
    %v8534 = vmul.f32 %v8500, %v8518
    %v8535 = vmul.f32 %v8501, %v8519
    %v8536 = vmul.f32 %v8502, %v8520
    %v8537 = vmul.f32 %v8503, %v8521
    %v8538 = vmul.f32 %v8504, %v8522
    %v8539 = vmul.f32 %v8505, %v8523
    %v8540 = vmul.f32 %v8506, %v8516
    %v8541 = vmul.f32 %v8507, %v8517
    %v8542 = vmul.f32 %v8508, %v8518
    %v8543 = vmul.f32 %v8509, %v8519
    %v8544 = vmul.f32 %v8510, %v8520
    %v8545 = vmul.f32 %v8511, %v8521
    %v8546 = vmul.f32 %v8512, %v8522
    %v8547 = vmul.f32 %v8513, %v8523
    %v8548 = vadd.f32 %v8532, %v8533
    %v8549 = vadd.f32 %v8548, %v8534
    %v8550 = vadd.f32 %v8549, %v8535
    %v8551 = vadd.f32 %v8550, %v8536
    %v8552 = vadd.f32 %v8551, %v8537
    %v8553 = vadd.f32 %v8552, %v8538
    %v8554 = vadd.f32 %v8553, %v8539
    %8555 = vadd.xlane.f32.xlu0 %v8554
    %v8556 = vpop.xlane.xlu0 %8555
    %v8557 = vadd.f32 %v8540, %v8541
    %v8558 = vadd.f32 %v8557, %v8542
    %v8559 = vadd.f32 %v8558, %v8543
    %v8560 = vadd.f32 %v8559, %v8544
    %v8561 = vadd.f32 %v8560, %v8545
    %v8562 = vadd.f32 %v8561, %v8546
    %v8563 = vadd.f32 %v8562, %v8547
    %8564 = vadd.xlane.f32.xlu0 %v8563
    %v8565 = vpop.xlane.xlu0 %8564
    %v8566 = vld [vmem:[#allocation15 + $0x3] sm:$0x1]
    %v8567 = vperm.slane %v8566, 0
    %v8568 = vadd.f32 %v8556, %v8567
    %v8569 = vadd.f32 %v8565, %v8567
    %v8570 = vmax.f32 %v8568, 0.0
    %v8571 = vmax.f32 %v8569, 0.0
    %vm8572 = vcmask 7168
    %8573 = vst.msk [vmem:[%s9] sm:$0xff] %vm8572, %v8570
    %8574 = vst.msk [vmem:[%s9 + $0x8] sm:$0xff] %vm8572, %v8571
    // Predicated region
    $region66: #{tpu_custom_call.1} parent=1 // pred_check
      _
    $region67: #{tpu_custom_call.1} parent=1 // pred_check_branch
      %8576 = sbr.rel (0) target = $region69
    $region68: #{tpu_custom_call.1} parent=1 // pred_region
      _
    $region69: #{tpu_custom_call.1} parent=1 // pred_fallthru
      _
    // Predicated region
    $region70: #{tpu_custom_call.1} parent=1 // pred_check
      _
    $region71: #{tpu_custom_call.1} parent=1 // pred_check_branch
      %8578 = sbr.rel (0) target = $region73
    $region72: #{tpu_custom_call.1} parent=1 // pred_region
      _
    $region73: #{tpu_custom_call.1} parent=1 // pred_fallthru
      _
    %8579 = vsyncpa [#allocation6], 1
    %8580 = vsyncpa [#allocation8], 1
    %8581 = vsyncpa [#allocation11], 1
    %8582 = vsyncpa [#allocation14], 1
  %8583 = vsyncmov [#allocation4]
  %s8584 = vpop.sfrf %8583
  %p8585 = scmp.eq.s32.totalorder %s8584, 0
  %p8586 = pneg %p8585
  %8588 = shalt.err (%p8586)
  %s8589 = scalar_lea.sflag [#allocation4], 1
  %8590 = vsyncmov %s8589
  %s8591 = vpop.sfrf %8590
  %p8592 = scmp.eq.s32.totalorder %s8591, 0
  %p8593 = pneg %p8592
  %8595 = shalt.err (%p8593)

</llo_original>
